<compile_context>
chip_gen: v7x
topology: tpu7x:2x2x1
jax: 0.10.0
libtpu: 0.0.40
codegen_flags: <defaults>
</compile_context>

<pallas_src>
import jax
import jax.numpy as jnp
from jax.experimental import pallas as pl
from jax.experimental.pallas import tpu as pltpu

IN_DIM = 3 * 3 + 2 + 1 + 2   # 14
HID = 2048
OUT_DIM = 9

N_SPLIT = 2                      # leading "parallel" grid axis (2 TCs on v7x)
TN = 1024                        # W2 column-tile width / W3 row-tile height
TILES_PER_SPLIT = HID // (N_SPLIT * TN)
assert HID % (N_SPLIT * TN) == 0


def mlp_kernel(x_ref, w1_ref, b1_ref, w2_ref, b2_ref, w3_ref,
               o_ref, h1_scr, acc_scr):
    j = pl.program_id(1)          # tile index within this split (reduction axis)

    # Layer 1: computed once per split (tiny: K = 14), kept resident in VMEM.
    @pl.when(j == 0)
    def _():
        h1 = jnp.dot(x_ref[...], w1_ref[...],
                     preferred_element_type=jnp.float32) + b1_ref[...]
        h1_scr[...] = jnp.maximum(h1, 0.0)
        acc_scr[...] = jnp.zeros_like(acc_scr)

    # Layer 2: one column-tile of W2 (bf16 operands, f32 accumulation) + ReLU.
    h2_j = jnp.dot(h1_scr[...].astype(jnp.bfloat16), w2_ref[...],
                   preferred_element_type=jnp.float32) + b2_ref[...]
    h2_j = jnp.maximum(h2_j, 0.0)

    # Layer 3: accumulate this tile's contribution to the partial output.
    acc_scr[...] += jnp.dot(h2_j.astype(jnp.bfloat16), w3_ref[...],
                            preferred_element_type=jnp.float32)

    # Write this split's partial sum on its last tile.
    @pl.when(j == pl.num_programs(1) - 1)
    def _():
        o_ref[...] = acc_scr[...][None].astype(o_ref.dtype)


def mlp_forward(x, w1, b1, w2, b2, w3, b3):
    """x: (B, 14).  Weights (in, out), streamed as bf16.  Biases f32."""
    w1 = w1.astype(jnp.bfloat16)
    w2 = w2.astype(jnp.bfloat16)
    w3 = w3.astype(jnp.bfloat16)
    b1 = b1.reshape(1, HID).astype(jnp.float32)
    b2 = b2.reshape(1, HID).astype(jnp.float32)
    b3 = b3.reshape(1, OUT_DIM).astype(jnp.float32)

    B = x.shape[0]
    B_pad = max(8, ((B + 7) // 8) * 8)          # sublane alignment
    if B_pad != B:
        x = jnp.pad(x, ((0, B_pad - B), (0, 0)))
    x = x.astype(jnp.bfloat16)                  # single tiny cast in the wrapper

    partials = pl.pallas_call(
        mlp_kernel,
        out_shape=jax.ShapeDtypeStruct((N_SPLIT, B_pad, OUT_DIM), jnp.float32),
        grid_spec=pltpu.PrefetchScalarGridSpec(
            num_scalar_prefetch=0,
            grid=(N_SPLIT, TILES_PER_SPLIT),
            in_specs=[
                pl.BlockSpec((B_pad, IN_DIM), lambda c, j: (0, 0)),                        # x
                pl.BlockSpec((IN_DIM, HID),   lambda c, j: (0, 0)),                        # W1
                pl.BlockSpec((1, HID),        lambda c, j: (0, 0)),                        # b1
                pl.BlockSpec((HID, TN),       lambda c, j: (0, c * TILES_PER_SPLIT + j)),  # W2 tile
                pl.BlockSpec((1, TN),         lambda c, j: (0, c * TILES_PER_SPLIT + j)),  # b2 tile
                pl.BlockSpec((TN, OUT_DIM),   lambda c, j: (c * TILES_PER_SPLIT + j, 0)),  # W3 tile
            ],
            out_specs=pl.BlockSpec((1, B_pad, OUT_DIM), lambda c, j: (c, 0, 0)),
            scratch_shapes=[
                pltpu.VMEM((B_pad, HID), jnp.float32),      # layer-1 activations
                pltpu.VMEM((B_pad, OUT_DIM), jnp.float32),  # layer-3 partial accumulator
            ],
        ),
        compiler_params=pltpu.CompilerParams(
            dimension_semantics=("parallel", "arbitrary"),
            vmem_limit_bytes=32 << 20,
        ),
    )(x, w1, b1, w2, b2, w3)

    out = partials.sum(axis=0) + b3             # combine splits, add final bias
    return out[:B]


def init_params(key):
    # Deterministic init mimicking nn.Linear's U(-1/sqrt(fan_in), 1/sqrt(fan_in)).
    ks = jax.random.split(key, 6)

    def lin(kw, kb, fan_in, fan_out):
        bound = 1.0 / jnp.sqrt(fan_in)
        w = jax.random.uniform(kw, (fan_in, fan_out), jnp.float32, -bound, bound)
        b = jax.random.uniform(kb, (1, fan_out), jnp.float32, -bound, bound)
        # Weights stored in bf16 (what the kernel streams); biases stay f32.
        return w.astype(jnp.bfloat16), b

    w1, b1 = lin(ks[0], ks[1], IN_DIM, HID)
    w2, b2 = lin(ks[2], ks[3], HID, HID)
    w3, b3 = lin(ks[4], ks[5], HID, OUT_DIM)
    return w1, b1, w2, b2, w3, b3


if __name__ == "__main__":
    key = jax.random.PRNGKey(0)
    k_param, k_x = jax.random.split(key)
    w1, b1, w2, b2, w3, b3 = init_params(k_param)

    B = 8
    x = jax.random.normal(k_x, (B, IN_DIM), jnp.float32)

    out = mlp_forward(x, w1, b1, w2, b2, w3, b3)
    out = jax.block_until_ready(out)

    # Pure-JAX reference with the same bf16-weight / f32-accumulate recipe.
    h1 = jnp.maximum(jnp.dot(x.astype(jnp.bfloat16), w1,
                             preferred_element_type=jnp.float32) + b1, 0.0)
    h2 = jnp.maximum(jnp.dot(h1.astype(jnp.bfloat16), w2,
                             preferred_element_type=jnp.float32) + b2, 0.0)
    ref = jnp.dot(h2.astype(jnp.bfloat16), w3,
                  preferred_element_type=jnp.float32) + b3

    assert out.shape == (B, OUT_DIM)
    assert jnp.allclose(out, ref, atol=1e-2, rtol=1e-2)

    print("KERNEL_OK")
</pallas_src>

<mosaic_0001>
module attributes {stable_mosaic.version = 11 : i64} {
  func.func @mlp_kernel(%arg0: i32, %arg1: i32, %arg2: memref<8x14xbf16, #tpu.memory_space<vmem>>, %arg3: memref<14x2048xbf16, #tpu.memory_space<vmem>>, %arg4: memref<1x2048xf32, #tpu.memory_space<vmem>>, %arg5: memref<2048x1024xbf16, #tpu.memory_space<vmem>>, %arg6: memref<1x1024xf32, #tpu.memory_space<vmem>>, %arg7: memref<1024x9xbf16, #tpu.memory_space<vmem>>, %arg8: memref<1x8x9xf32, #tpu.memory_space<vmem>>, %arg9: memref<8x2048xf32, #tpu.memory_space<vmem>>, %arg10: memref<8x9xf32, #tpu.memory_space<vmem>>) attributes {dimension_semantics = [#tpu.dimension_semantics<parallel>, #tpu.dimension_semantics<arbitrary>], iteration_bounds = array<i64: 2, 1>, scalar_prefetch = 0 : i64, scratch_operands = 2 : i64, tpu.core_type = #tpu.core_type<tc>, window_params = [{pipeline_mode = #tpu.pipeline_mode<synchronous>, transform_indices = @transform_0, window_bounds = array<i64: 8, 14>}, {pipeline_mode = #tpu.pipeline_mode<synchronous>, transform_indices = @transform_1, window_bounds = array<i64: 14, 2048>}, {pipeline_mode = #tpu.pipeline_mode<synchronous>, transform_indices = @transform_2, window_bounds = array<i64: 1, 2048>}, {transform_indices = @transform_3, window_bounds = array<i64: 2048, 1024>}, {transform_indices = @transform_4, window_bounds = array<i64: 1, 1024>}, {transform_indices = @transform_5, window_bounds = array<i64: 1024, 9>}, {transform_indices = @transform_6, window_bounds = array<i64: 1, 8, 9>}]} {
    %c0_i32 = arith.constant 0 : i32
    %0 = arith.cmpi eq, %arg1, %c0_i32 : i32
    %1 = arith.extui %0 : i1 to i32
    %c0_i32_0 = arith.constant 0 : i32
    %2 = arith.cmpi ne, %1, %c0_i32_0 : i32
    scf.if %2 {
      %c0_16 = arith.constant 0 : index
      %c0_17 = arith.constant 0 : index
      %21 = vector.load %arg2[%c0_16, %c0_17] : memref<8x14xbf16, #tpu.memory_space<vmem>>, vector<8x14xbf16>
      %c0_18 = arith.constant 0 : index
      %c0_19 = arith.constant 0 : index
      %22 = vector.load %arg3[%c0_18, %c0_19] : memref<14x2048xbf16, #tpu.memory_space<vmem>>, vector<14x2048xbf16>
      %cst_20 = arith.constant dense<0.000000e+00> : vector<8x2048xf32>
      %23 = tpu.matmul %21, %22, %cst_20 {dimension_numbers = #tpu.dot_dimension_numbers<[1], [0], [0], [1], [0, 0, 1, 1], [], []>} : vector<8x14xbf16>, vector<14x2048xbf16>, vector<8x2048xf32> -> vector<8x2048xf32>
      %c0_21 = arith.constant 0 : index
      %c0_22 = arith.constant 0 : index
      %24 = vector.load %arg4[%c0_21, %c0_22] : memref<1x2048xf32, #tpu.memory_space<vmem>>, vector<1x2048xf32>
      %25 = vector.broadcast %24 : vector<1x2048xf32> to vector<8x2048xf32>
      %26 = arith.addf %23, %25 : vector<8x2048xf32>
      %cst_23 = arith.constant 0.000000e+00 : f32
      %27 = vector.broadcast %cst_23 : f32 to vector<8x2048xf32>
      %28 = arith.maximumf %26, %27 : vector<8x2048xf32>
      %c0_24 = arith.constant 0 : index
      %c0_25 = arith.constant 0 : index
      %29 = vector.load %arg9[%c0_24, %c0_25] : memref<8x2048xf32, #tpu.memory_space<vmem>>, vector<8x2048xf32>
      tpu.vector_store %arg9[%c0_24, %c0_25], %28 {strides = array<i32>} : memref<8x2048xf32, #tpu.memory_space<vmem>>, vector<8x2048xf32>,
      %cst_26 = arith.constant 0.000000e+00 : f32
      %30 = vector.broadcast %cst_26 : f32 to vector<8x9xf32>
      %c0_27 = arith.constant 0 : index
      %c0_28 = arith.constant 0 : index
      %31 = vector.load %arg10[%c0_27, %c0_28] : memref<8x9xf32, #tpu.memory_space<vmem>>, vector<8x9xf32>
      tpu.vector_store %arg10[%c0_27, %c0_28], %30 {strides = array<i32>} : memref<8x9xf32, #tpu.memory_space<vmem>>, vector<8x9xf32>,
    } else {
    }
    %c0 = arith.constant 0 : index
    %c0_1 = arith.constant 0 : index
    %3 = vector.load %arg9[%c0, %c0_1] : memref<8x2048xf32, #tpu.memory_space<vmem>>, vector<8x2048xf32>
    %4 = arith.truncf %3 : vector<8x2048xf32> to vector<8x2048xbf16>
    %c0_2 = arith.constant 0 : index
    %c0_3 = arith.constant 0 : index
    %5 = vector.load %arg5[%c0_2, %c0_3] : memref<2048x1024xbf16, #tpu.memory_space<vmem>>, vector<2048x1024xbf16>
    %cst = arith.constant dense<0.000000e+00> : vector<8x1024xf32>
    %6 = tpu.matmul %4, %5, %cst {dimension_numbers = #tpu.dot_dimension_numbers<[1], [0], [0], [1], [0, 0, 1, 1], [], []>} : vector<8x2048xbf16>, vector<2048x1024xbf16>, vector<8x1024xf32> -> vector<8x1024xf32>
    %c0_4 = arith.constant 0 : index
    %c0_5 = arith.constant 0 : index
    %7 = vector.load %arg6[%c0_4, %c0_5] : memref<1x1024xf32, #tpu.memory_space<vmem>>, vector<1x1024xf32>
    %8 = vector.broadcast %7 : vector<1x1024xf32> to vector<8x1024xf32>
    %9 = arith.addf %6, %8 : vector<8x1024xf32>
    %cst_6 = arith.constant 0.000000e+00 : f32
    %10 = vector.broadcast %cst_6 : f32 to vector<8x1024xf32>
    %11 = arith.maximumf %9, %10 : vector<8x1024xf32>
    %c0_7 = arith.constant 0 : index
    %c0_8 = arith.constant 0 : index
    %12 = vector.load %arg10[%c0_7, %c0_8] : memref<8x9xf32, #tpu.memory_space<vmem>>, vector<8x9xf32>
    %13 = arith.truncf %11 : vector<8x1024xf32> to vector<8x1024xbf16>
    %c0_9 = arith.constant 0 : index
    %c0_10 = arith.constant 0 : index
    %14 = vector.load %arg7[%c0_9, %c0_10] : memref<1024x9xbf16, #tpu.memory_space<vmem>>, vector<1024x9xbf16>
    %cst_11 = arith.constant dense<0.000000e+00> : vector<8x9xf32>
    %15 = tpu.matmul %13, %14, %cst_11 {dimension_numbers = #tpu.dot_dimension_numbers<[1], [0], [0], [1], [0, 0, 1, 1], [], []>} : vector<8x1024xbf16>, vector<1024x9xbf16>, vector<8x9xf32> -> vector<8x9xf32>
    %16 = arith.addf %12, %15 : vector<8x9xf32>
    %c0_12 = arith.constant 0 : index
    %c0_13 = arith.constant 0 : index
    %17 = vector.load %arg10[%c0_12, %c0_13] : memref<8x9xf32, #tpu.memory_space<vmem>>, vector<8x9xf32>
    tpu.vector_store %arg10[%c0_12, %c0_13], %16 {strides = array<i32>} : memref<8x9xf32, #tpu.memory_space<vmem>>, vector<8x9xf32>,
    %c0_i32_14 = arith.constant 0 : i32
    %18 = arith.cmpi eq, %arg1, %c0_i32_14 : i32
    %19 = arith.extui %18 : i1 to i32
    %c0_i32_15 = arith.constant 0 : i32
    %20 = arith.cmpi ne, %19, %c0_i32_15 : i32
    scf.if %20 {
      %c0_16 = arith.constant 0 : index
      %c0_17 = arith.constant 0 : index
      %21 = vector.load %arg10[%c0_16, %c0_17] : memref<8x9xf32, #tpu.memory_space<vmem>>, vector<8x9xf32>
      %22 = vector.shape_cast %21 : vector<8x9xf32> to vector<1x8x9xf32>
      %c0_18 = arith.constant 0 : index
      %c0_19 = arith.constant 0 : index
      %c0_20 = arith.constant 0 : index
      %23 = vector.load %arg8[%c0_18, %c0_19, %c0_20] : memref<1x8x9xf32, #tpu.memory_space<vmem>>, vector<1x8x9xf32>
      tpu.vector_store %arg8[%c0_18, %c0_19, %c0_20], %22 {strides = array<i32>} : memref<1x8x9xf32, #tpu.memory_space<vmem>>, vector<1x8x9xf32>,
    } else {
    }
    return
  }
  func.func @transform_0(%arg0: i32, %arg1: i32) -> (i32, i32) {
    %c0_i32 = arith.constant 0 : i32
    %c0_i32_0 = arith.constant 0 : i32
    %c0_i32_1 = arith.constant 0 : i32
    return %c0_i32, %c0_i32_0 : i32, i32
  }
  func.func @transform_1(%arg0: i32, %arg1: i32) -> (i32, i32) {
    %c0_i32 = arith.constant 0 : i32
    %c0_i32_0 = arith.constant 0 : i32
    %c0_i32_1 = arith.constant 0 : i32
    return %c0_i32, %c0_i32_0 : i32, i32
  }
  func.func @transform_2(%arg0: i32, %arg1: i32) -> (i32, i32) {
    %c0_i32 = arith.constant 0 : i32
    %c0_i32_0 = arith.constant 0 : i32
    %c0_i32_1 = arith.constant 0 : i32
    return %c0_i32, %c0_i32_0 : i32, i32
  }
  func.func @transform_3(%arg0: i32, %arg1: i32) -> (i32, i32) {
    %c1_i32 = arith.constant 1 : i32
    %0 = arith.muli %arg0, %c1_i32 : i32
    %1 = arith.addi %0, %arg1 : i32
    %c0_i32 = arith.constant 0 : i32
    %c0_i32_0 = arith.constant 0 : i32
    return %c0_i32, %1 : i32, i32
  }
  func.func @transform_4(%arg0: i32, %arg1: i32) -> (i32, i32) {
    %c1_i32 = arith.constant 1 : i32
    %0 = arith.muli %arg0, %c1_i32 : i32
    %1 = arith.addi %0, %arg1 : i32
    %c0_i32 = arith.constant 0 : i32
    %c0_i32_0 = arith.constant 0 : i32
    return %c0_i32, %1 : i32, i32
  }
  func.func @transform_5(%arg0: i32, %arg1: i32) -> (i32, i32) {
    %c1_i32 = arith.constant 1 : i32
    %0 = arith.muli %arg0, %c1_i32 : i32
    %1 = arith.addi %0, %arg1 : i32
    %c0_i32 = arith.constant 0 : i32
    %c0_i32_0 = arith.constant 0 : i32
    return %1, %c0_i32 : i32, i32
  }
  func.func @transform_6(%arg0: i32, %arg1: i32) -> (i32, i32, i32) {
    %c0_i32 = arith.constant 0 : i32
    %c0_i32_0 = arith.constant 0 : i32
    %c0_i32_1 = arith.constant 0 : i32
    return %arg0, %c0_i32, %c0_i32_0 : i32, i32, i32
  }
}

</mosaic_0001>

<llo_original>
// kernel: tpu_custom_call.1
$region0: #{tpu_custom_call.1}
  #allocation0 [shape = 'u32[]', space=smem, size = 0x4, offset = 0x4, fixed_abs, tag = 'smem constant byte address 0x4 - core index']
  #allocation1 [shape = 'u32[144,128]{1,0:T(1,128)}', space=vmem, size = 0x12000, scoped, tag = 'internal scratch']
  #allocation2 [shape = 'f32[8,2048]{1,0:T(8,128)}', space=vmem, size = 0x10000, scoped, tag = 'scratch operand']
  #allocation3 [shape = 'f32[8,9]{1,0:T(8,128)}', space=vmem, size = 0x1000, scoped, tag = 'scratch operand']
  %s0 = inlined_call_operand.hbm [shape: bf16[8,14], index: 0, kind: input, shape index: {}]
  %s1 = inlined_call_operand.hbm [shape: bf16[14,2048], index: 1, kind: input, shape index: {}]
  %s2 = inlined_call_operand.hbm [shape: f32[1,2048], index: 2, kind: input, shape index: {}]
  %s3 = inlined_call_operand.hbm [shape: bf16[2048,2048], index: 3, kind: input, shape index: {}]
  %s4 = inlined_call_operand.hbm [shape: f32[1,2048], index: 4, kind: input, shape index: {}]
  %s5 = inlined_call_operand.vmem [shape: bf16[2048,9], index: 5, kind: input, shape index: {}]
  %s6 = inlined_call_operand.hbm [shape: f32[2,8,9], index: 6, kind: output, shape index: {}]
  %s7 = sld [smem:[#allocation0]]
  $region85: #{tpu_custom_call.1} parent=0
    _
  %s9 = ssub.s32 1, %s7
  %s10 = scalar_select 0, %s9, %s7
  $region1: #{tpu_custom_call.1} parent=0
    #allocation4 [shape = 'u8[2048]{0}', space=vmem, size = 0x800, scoped, tag = 'input window, operand 0, single buffered']
    #allocation5 [shape = 's32[2]{0}', space=sflag, size = 0x8, scoped, tag = 'scoped memory for tpu_custom_call.1']
    #allocation6 [shape = 's32[2]{0}', space=sflag, size = 0x8, scoped, tag = 'scoped memory for tpu_custom_call.1']
    #allocation7 [shape = 'u8[65536]{0}', space=vmem, size = 0x10000, scoped, tag = 'input window, operand 1, single buffered']
    #allocation8 [shape = 's32[1]{0}', space=sflag, size = 0x4, scoped, tag = 'scoped memory for tpu_custom_call.1']
    #allocation9 [shape = 'u8[8192]{0}', space=vmem, size = 0x2000, scoped, tag = 'input window, operand 2, single buffered']
    #allocation10 [shape = 'u8[8388608]{0}', space=vmem, size = 0x800000, scoped, tag = 'input window, operand 3']
    #allocation11 [shape = 's32[2]{0}', space=sflag, size = 0x8, scoped, tag = 'scoped memory for tpu_custom_call.1']
    #allocation12 [shape = 'u8[8192]{0}', space=vmem, size = 0x2000, scoped, tag = 'input window, operand 4']
    #allocation13 [shape = 'u8[8192]{0}', space=vmem, size = 0x2000, scoped, tag = 'output window, operand 0']
    %11 = vsyncpa [#allocation5], 0
    %12 = vsyncpa [#allocation8], 0
    %13 = vsyncpa [#allocation11], 0
    %s14 = scalar_lea.sflag [#allocation11], 1
    %15 = vsyncpa %s14, 0
    %16 = vsyncpa [#allocation6], 0
    %s17 = scalar_lea.sflag [#allocation6], 1
    %18 = vsyncpa %s17, 0
    loop: start=0, step=1, limit=4
    $region2: #{tpu_custom_call.1} parent=1 // loop_pre_header
      _
    $region3: #{tpu_custom_call.1} parent=1 // loop_header
      %s20 = sphi 0, %s24
      %p21 = scmp.ge.s32.totalorder %s20, 4
      %s27 = sphi 0, %s39
      %s28 = sphi 0, %s35
      %s29 = sphi 0, %s27
      %s30 = sphi 0, %s28
      %s31 = sphi 0, %s29
      %s32 = sphi 0, %s30
      %s40 = sphi 0, %s40
      %s42 = sphi 0, %s40
      %s43 = sphi 0, %s42
      %s57 = sphi 0, %s43
      %s61 = sphi 0, %s61
      %s63 = sphi 0, %s61
      %s64 = sphi 0, %s63
      %s78 = sphi 0, %s64
      %s82 = sphi 0, %s82
      %s84 = sphi 0, %s82
      %s85 = sphi 0, %s84
      %s99 = sphi 0, %s85
      %s107 = sphi 0, %s109
      %s110 = sphi 0, %s107
      %s111 = sphi 0, %s110
      %s127 = sphi 0, %s111
      %s135 = sphi 0, %s137
      %s138 = sphi 0, %s135
      %s139 = sphi 0, %s138
      %s155 = sphi 0, %s139
      %s163 = sphi 0, %s165
      %s166 = sphi 0, %s163
      %s167 = sphi 0, %s166
      %s183 = sphi 0, %s167
      %s189 = sphi 0, %s191
      %s192 = sphi 0, %s189
      %s193 = sphi 0, %s192
      %s209 = sphi 0, %s193
    $region4: #{tpu_custom_call.1} parent=1 // loop_header_branch
      %23 = sbr.rel (%p21) target = $region8
    $region5: #{tpu_custom_call.1} parent=1 // loop_body
      %s25 = ssub.s32 %s20, 1
      %s26 = ssub.s32 %s20, 2
      %s33 = sadd.s32 1, %s28
      %p34 = scmp.ge.s32.totalorder %s33, 1
      %s35 = scalar_select %p34, 0, %s33
      %s36 = sadd.s32 1, %s27
      %s37 = scalar_select %p34, %s36, %s27
      %p38 = scmp.ge.s32.totalorder %s37, 2
      %s39 = scalar_select %p38, 0, %s37
      %s41 = sadd.s32 %s40, 1
      %p44 = scmp.eq.s32.totalorder %s20, 1
      %p45 = scmp.ne.s32.totalorder %s40, %s42
      %p46 = scmp.eq.s32.totalorder %s20, 0
      %p47 = por %p45, %p46
      %p48 = scmp.ne.s32.totalorder %s40, %s42
      %p49 = scmp.eq.s32.totalorder %s25, 1
      %p50 = por %p48, %p49
      %p51 = scmp.ne.s32.totalorder %s42, %s43
      %p52 = scmp.eq.s32.totalorder %s25, 0
      %p53 = por %p51, %p52
      %p54 = scmp.ne.s32.totalorder %s42, %s43
      %p55 = scmp.eq.s32.totalorder %s26, 1
      %p56 = por %p54, %p55
      %p58 = scmp.ne.s32.totalorder %s43, %s57
      %p59 = scmp.eq.s32.totalorder %s26, 0
      %p60 = por %p58, %p59
      %s62 = sadd.s32 %s61, 1
      %p65 = scmp.eq.s32.totalorder %s20, 1
      %p66 = scmp.ne.s32.totalorder %s61, %s63
      %p67 = scmp.eq.s32.totalorder %s20, 0
      %p68 = por %p66, %p67
      %p69 = scmp.ne.s32.totalorder %s61, %s63
      %p70 = scmp.eq.s32.totalorder %s25, 1
      %p71 = por %p69, %p70
      %p72 = scmp.ne.s32.totalorder %s63, %s64
      %p73 = scmp.eq.s32.totalorder %s25, 0
      %p74 = por %p72, %p73
      %p75 = scmp.ne.s32.totalorder %s63, %s64
      %p76 = scmp.eq.s32.totalorder %s26, 1
      %p77 = por %p75, %p76
      %p79 = scmp.ne.s32.totalorder %s64, %s78
      %p80 = scmp.eq.s32.totalorder %s26, 0
      %p81 = por %p79, %p80
      %s83 = sadd.s32 %s82, 1
      %p86 = scmp.eq.s32.totalorder %s20, 1
      %p87 = scmp.ne.s32.totalorder %s82, %s84
      %p88 = scmp.eq.s32.totalorder %s20, 0
      %p89 = por %p87, %p88
      %p90 = scmp.ne.s32.totalorder %s82, %s84
      %p91 = scmp.eq.s32.totalorder %s25, 1
      %p92 = por %p90, %p91
      %p93 = scmp.ne.s32.totalorder %s84, %s85
      %p94 = scmp.eq.s32.totalorder %s25, 0
      %p95 = por %p93, %p94
      %p96 = scmp.ne.s32.totalorder %s84, %s85
      %p97 = scmp.eq.s32.totalorder %s26, 1
      %p98 = por %p96, %p97
      %p100 = scmp.ne.s32.totalorder %s85, %s99
      %p101 = scmp.eq.s32.totalorder %s26, 0
      %p102 = por %p100, %p101
      %s103 = sadd.s32 %s27, %s28
      %s104 = sadd.s32 %s39, %s35
      %s105 = ssub.s32 %s103, %s104
      %p106 = scmp.eq.s32.totalorder %s105, 0
      %s108 = sadd.s32 %s107, 1
      %s109 = scalar_select %p106, %s107, %s108
      %p112 = pneg %p106
      %p113 = scmp.eq.s32.totalorder %s20, 1
      %p114 = por %p112, %p113
      %p115 = scmp.ne.s32.totalorder %s107, %s110
      %p116 = scmp.eq.s32.totalorder %s20, 0
      %p117 = por %p115, %p116
      %p118 = scmp.ne.s32.totalorder %s107, %s110
      %p119 = scmp.eq.s32.totalorder %s25, 1
      %p120 = por %p118, %p119
      %p121 = scmp.ne.s32.totalorder %s110, %s111
      %p122 = scmp.eq.s32.totalorder %s25, 0
      %p123 = por %p121, %p122
      %p124 = scmp.ne.s32.totalorder %s110, %s111
      %p125 = scmp.eq.s32.totalorder %s26, 1
      %p126 = por %p124, %p125
      %p128 = scmp.ne.s32.totalorder %s111, %s127
      %p129 = scmp.eq.s32.totalorder %s26, 0
      %p130 = por %p128, %p129
      %s131 = sadd.s32 %s27, %s28
      %s132 = sadd.s32 %s39, %s35
      %s133 = ssub.s32 %s131, %s132
      %p134 = scmp.eq.s32.totalorder %s133, 0
      %s136 = sadd.s32 %s135, 1
      %s137 = scalar_select %p134, %s135, %s136
      %p140 = pneg %p134
      %p141 = scmp.eq.s32.totalorder %s20, 1
      %p142 = por %p140, %p141
      %p143 = scmp.ne.s32.totalorder %s135, %s138
      %p144 = scmp.eq.s32.totalorder %s20, 0
      %p145 = por %p143, %p144
      %p146 = scmp.ne.s32.totalorder %s135, %s138
      %p147 = scmp.eq.s32.totalorder %s25, 1
      %p148 = por %p146, %p147
      %p149 = scmp.ne.s32.totalorder %s138, %s139
      %p150 = scmp.eq.s32.totalorder %s25, 0
      %p151 = por %p149, %p150
      %p152 = scmp.ne.s32.totalorder %s138, %s139
      %p153 = scmp.eq.s32.totalorder %s26, 1
      %p154 = por %p152, %p153
      %p156 = scmp.ne.s32.totalorder %s139, %s155
      %p157 = scmp.eq.s32.totalorder %s26, 0
      %p158 = por %p156, %p157
      %s159 = sadd.s32 %s27, %s28
      %s160 = sadd.s32 %s39, %s35
      %s161 = ssub.s32 %s159, %s160
      %p162 = scmp.eq.s32.totalorder %s161, 0
      %s164 = sadd.s32 %s163, 1
      %s165 = scalar_select %p162, %s163, %s164
      %p168 = pneg %p162
      %p169 = scmp.eq.s32.totalorder %s20, 1
      %p170 = por %p168, %p169
      %p171 = scmp.ne.s32.totalorder %s163, %s166
      %p172 = scmp.eq.s32.totalorder %s20, 0
      %p173 = por %p171, %p172
      %p174 = scmp.ne.s32.totalorder %s163, %s166
      %p175 = scmp.eq.s32.totalorder %s25, 1
      %p176 = por %p174, %p175
      %p177 = scmp.ne.s32.totalorder %s166, %s167
      %p178 = scmp.eq.s32.totalorder %s25, 0
      %p179 = por %p177, %p178
      %p180 = scmp.ne.s32.totalorder %s166, %s167
      %p181 = scmp.eq.s32.totalorder %s26, 1
      %p182 = por %p180, %p181
      %p184 = scmp.ne.s32.totalorder %s167, %s183
      %p185 = scmp.eq.s32.totalorder %s26, 0
      %p186 = por %p184, %p185
      %s187 = ssub.s32 %s27, %s39
      %p188 = scmp.eq.s32.totalorder %s187, 0
      %s190 = sadd.s32 %s189, 1
      %s191 = scalar_select %p188, %s189, %s190
      %p194 = pneg %p188
      %p195 = scmp.eq.s32.totalorder %s20, 1
      %p196 = por %p194, %p195
      %p197 = scmp.ne.s32.totalorder %s189, %s192
      %p198 = scmp.eq.s32.totalorder %s20, 0
      %p199 = por %p197, %p198
      %p200 = scmp.ne.s32.totalorder %s189, %s192
      %p201 = scmp.eq.s32.totalorder %s25, 1
      %p202 = por %p200, %p201
      %p203 = scmp.ne.s32.totalorder %s192, %s193
      %p204 = scmp.eq.s32.totalorder %s25, 0
      %p205 = por %p203, %p204
      %p206 = scmp.ne.s32.totalorder %s192, %s193
      %p207 = scmp.eq.s32.totalorder %s26, 1
      %p208 = por %p206, %p207
      %p210 = scmp.ne.s32.totalorder %s193, %s209
      %p211 = scmp.eq.s32.totalorder %s26, 0
      %p212 = por %p210, %p211
      %p213 = scmp.le.s32.totalorder 1, %s20
      %p214 = scmp.lt.s32.totalorder %s20, 3
      %p215 = pnand %p213, %p214
      %p216 = pneg %p215
      // Predicated region
      $region9: #{tpu_custom_call.1} parent=5 // pred_check
        _
      $region10: #{tpu_custom_call.1} parent=5 // pred_check_branch
        %218 = sbr.rel (%p215) target = $region12
      $region11: #{tpu_custom_call.1} parent=5 // pred_region
        %s219 = ssub.s32 %s20, 1
        // Predicated region
        $region13: #{tpu_custom_call.1} parent=11 // pred_check
          %p220 = pneg %p53
        $region14: #{tpu_custom_call.1} parent=11 // pred_check_branch
          %222 = sbr.rel (%p220) target = $region16
        $region15: #{tpu_custom_call.1} parent=11 // pred_region
          %s224 = ssub.s32 64, 64
          %225 = vsyncadd [#allocation5], %s224
          %s227 = sshll.u32 [#allocation4], 4
          %s228 = int_to_ptr.vmem [resolvable:$true] %s227
          %230 = dma.hbm_to_vmem [thread:$0]  %s0, 64, %s228, [#allocation5]
        $region16: #{tpu_custom_call.1} parent=11 // pred_fallthru
          _
        // Predicated region
        $region17: #{tpu_custom_call.1} parent=11 // pred_check
          %p231 = pneg %p74
        $region18: #{tpu_custom_call.1} parent=11 // pred_check_branch
          %233 = sbr.rel (%p231) target = $region20
        $region19: #{tpu_custom_call.1} parent=11 // pred_region
          %s235 = ssub.s32 2048, 2048
          %236 = vsyncadd [#allocation8], %s235
          %s237 = sshll.u32 [#allocation7], 4
          %s238 = int_to_ptr.vmem [resolvable:$true] %s237
          %243 = dma.hbm_to_vmem [thread:$0]  %s1, 2048, %s238, [#allocation8], 1024, 1024, 64
        $region20: #{tpu_custom_call.1} parent=11 // pred_fallthru
          _
        // Predicated region
        $region21: #{tpu_custom_call.1} parent=11 // pred_check
          %p244 = pneg %p95
        $region22: #{tpu_custom_call.1} parent=11 // pred_check_branch
          %246 = sbr.rel (%p244) target = $region24
        $region23: #{tpu_custom_call.1} parent=11 // pred_region
          %s248 = ssub.s32 256, 256
          %249 = vsyncadd [#allocation8], %s248
          %s251 = sshll.u32 [#allocation9], 4
          %s252 = int_to_ptr.vmem [resolvable:$true] %s251
          %254 = dma.hbm_to_vmem [thread:$0]  %s2, 256, %s252, [#allocation8]
        $region24: #{tpu_custom_call.1} parent=11 // pred_fallthru
          _
      $region12: #{tpu_custom_call.1} parent=5 // pred_fallthru
        _
      %p255 = scmp.lt.s32.totalorder %s20, 2
      // Predicated region
      $region25: #{tpu_custom_call.1} parent=5 // pred_check
        %p256 = pneg %p255
      $region26: #{tpu_custom_call.1} parent=5 // pred_check_branch
        %258 = sbr.rel (%p256) target = $region28
      $region27: #{tpu_custom_call.1} parent=5 // pred_region
        // Predicated region
        $region29: #{tpu_custom_call.1} parent=27 // pred_check
          %p259 = pneg %p117
        $region30: #{tpu_custom_call.1} parent=27 // pred_check_branch
          %261 = sbr.rel (%p259) target = $region32
        $region31: #{tpu_custom_call.1} parent=27 // pred_region
          %s262 = sand.u32 %s20, 1
          %s263 = scalar_lea.sflag [#allocation11], %s262
          %s264 = sand.u32 %s107, 1
          %s265 = smul.addr %s264, 8192
          %s266 = scalar_lea.vmem [#allocation10], %s265
          %s267 = sadd.s32 %s27, %s28
          %s268 = smul.u32 8, %s267
          %s270 = ssub.s32 131072, 131072
          %271 = vsyncadd %s263, %s270
          %s272 = smul.addr %s268, 64
          %s273 = scalar_lea.hbm %s3, %s272
          %s274 = sshll.u32 %s266, 4
          %s275 = int_to_ptr.vmem [resolvable:$true] %s274
          %280 = dma.hbm_to_vmem [thread:$0]  %s273, 131072, %s275, %s263, 1024, 512, 32
        $region32: #{tpu_custom_call.1} parent=27 // pred_fallthru
          _
        // Predicated region
        $region33: #{tpu_custom_call.1} parent=27 // pred_check
          %p281 = pneg %p145
        $region34: #{tpu_custom_call.1} parent=27 // pred_check_branch
          %283 = sbr.rel (%p281) target = $region36
        $region35: #{tpu_custom_call.1} parent=27 // pred_region
          %s284 = sand.u32 %s20, 1
          %s285 = scalar_lea.sflag [#allocation11], %s284
          %s286 = sand.u32 %s135, 1
          %s287 = smul.addr %s286, 8
          %s288 = scalar_lea.vmem [#allocation12], %s287
          %s289 = sadd.s32 %s27, %s28
          %s290 = smul.u32 8, %s289
          %s292 = ssub.s32 128, 128
          %293 = vsyncadd %s285, %s292
          %s294 = smul.addr %s290, 16
          %s295 = scalar_lea.hbm %s4, %s294
          %s297 = sshll.u32 %s288, 4
          %s298 = int_to_ptr.vmem [resolvable:$true] %s297
          %300 = dma.hbm_to_vmem [thread:$0]  %s295, 128, %s298, %s285
        $region36: #{tpu_custom_call.1} parent=27 // pred_fallthru
          _
        // Predicated region
        $region37: #{tpu_custom_call.1} parent=27 // pred_check
          %p301 = pneg %p173
        $region38: #{tpu_custom_call.1} parent=27 // pred_check_branch
          %303 = sbr.rel (%p301) target = $region40
        $region39: #{tpu_custom_call.1} parent=27 // pred_region
          %s304 = sadd.s32 %s27, %s28
          %s305 = smul.u32 128, %s304
          %p306 = scmp.lt.s32.totalorder %s305, 255
          %s307 = scalar_select %p306, %s305, 255
          %s308 = smul.addr %s307, 4
          %s309 = scalar_lea.vmem %s5, %s308
          %s310 = sadd.s32 %s27, %s28
          %s311 = smul.u32 128, %s310
        $region40: #{tpu_custom_call.1} parent=27 // pred_fallthru
          _
      $region28: #{tpu_custom_call.1} parent=5 // pred_fallthru
        _
      %p312 = scmp.le.s32.totalorder 1, %s20
      %p313 = scmp.lt.s32.totalorder %s20, 3
      %p314 = pnand %p312, %p313
      %p315 = pneg %p314
      // Predicated region
      $region41: #{tpu_custom_call.1} parent=5 // pred_check
        _
      $region42: #{tpu_custom_call.1} parent=5 // pred_check_branch
        %317 = sbr.rel (%p314) target = $region44
      $region43: #{tpu_custom_call.1} parent=5 // pred_region
        %s318 = ssub.s32 %s20, 1
        // Predicated region
        $region45: #{tpu_custom_call.1} parent=43 // pred_check
          %p319 = pneg %p53
        $region46: #{tpu_custom_call.1} parent=43 // pred_check_branch
          %321 = sbr.rel (%p319) target = $region48
        $region47: #{tpu_custom_call.1} parent=43 // pred_region
          %322 = dma.done [#allocation5], 64
        $region48: #{tpu_custom_call.1} parent=43 // pred_fallthru
          _
        // Predicated region
        $region49: #{tpu_custom_call.1} parent=43 // pred_check
          %p323 = pneg %p74
        $region50: #{tpu_custom_call.1} parent=43 // pred_check_branch
          %325 = sbr.rel (%p323) target = $region52
        $region51: #{tpu_custom_call.1} parent=43 // pred_region
          %326 = dma.done [#allocation8], 2048
        $region52: #{tpu_custom_call.1} parent=43 // pred_fallthru
          _
        // Predicated region
        $region53: #{tpu_custom_call.1} parent=43 // pred_check
          %p327 = pneg %p95
        $region54: #{tpu_custom_call.1} parent=43 // pred_check_branch
          %329 = sbr.rel (%p327) target = $region56
        $region55: #{tpu_custom_call.1} parent=43 // pred_region
          %330 = dma.done [#allocation8], 256
        $region56: #{tpu_custom_call.1} parent=43 // pred_fallthru
          _
        %s331 = sand.u32 %s25, 1
        %s332 = scalar_lea.sflag [#allocation11], %s331
        %s333 = sand.u32 %s110, 1
        %s334 = smul.addr %s333, 8192
        %s335 = scalar_lea.vmem [#allocation10], %s334
        // Predicated region
        $region57: #{tpu_custom_call.1} parent=43 // pred_check
          %p336 = pneg %p123
        $region58: #{tpu_custom_call.1} parent=43 // pred_check_branch
          %338 = sbr.rel (%p336) target = $region60
        $region59: #{tpu_custom_call.1} parent=43 // pred_region
          %339 = dma.done %s332, 131072
        $region60: #{tpu_custom_call.1} parent=43 // pred_fallthru
          _
        %s340 = sand.u32 %s25, 1
        %s341 = scalar_lea.sflag [#allocation11], %s340
        %s342 = sand.u32 %s138, 1
        %s343 = smul.addr %s342, 8
        %s344 = scalar_lea.vmem [#allocation12], %s343
        // Predicated region
        $region61: #{tpu_custom_call.1} parent=43 // pred_check
          %p345 = pneg %p151
        $region62: #{tpu_custom_call.1} parent=43 // pred_check_branch
          %347 = sbr.rel (%p345) target = $region64
        $region63: #{tpu_custom_call.1} parent=43 // pred_region
          %348 = dma.done %s341, 128
        $region64: #{tpu_custom_call.1} parent=43 // pred_fallthru
          _
        %p349 = pneg %p53
        %p350 = pneg %p50
        %p351 = pneg %p74
        %p352 = pneg %p71
        %p353 = pneg %p95
        %p354 = pneg %p92
        %s355 = sand.u32 %s25, 1
        %s356 = scalar_lea.sflag [#allocation11], %s355
        %s357 = sand.u32 %s110, 1
        %s358 = smul.addr %s357, 8192
        %s359 = scalar_lea.vmem [#allocation10], %s358
        %p360 = pneg %p123
        %p361 = pneg %p120
        %s362 = sand.u32 %s25, 1
        %s363 = scalar_lea.sflag [#allocation11], %s362
        %s364 = sand.u32 %s138, 1
        %s365 = smul.addr %s364, 8
        %s366 = scalar_lea.vmem [#allocation12], %s365
        %p367 = pneg %p151
        %p368 = pneg %p148
        %s369 = sadd.s32 %s29, %s30
        %s370 = smul.u32 128, %s369
        %p371 = scmp.lt.s32.totalorder %s370, 255
        %s372 = scalar_select %p371, %s370, 255
        %s373 = smul.addr %s372, 4
        %s374 = scalar_lea.vmem %s5, %s373
        %p375 = pneg %p179
        %p376 = pneg %p176
        %p377 = pneg %p205
        %p378 = pneg %p202
        %s379 = sand.u32 %s192, 1
        %s380 = scalar_lea.sflag [#allocation6], %s379
        %s381 = sand.u32 %s192, 1
        %s382 = smul.addr %s381, 8
        %s383 = scalar_lea.vmem [#allocation13], %s382
        %s384 = sadd.s32 %s29, %s30
        %s385 = smul.u32 8, %s384
        %s386 = sadd.s32 %s29, %s30
        %s387 = smul.u32 8, %s386
        %s388 = sadd.s32 %s29, %s30
        %s389 = smul.u32 128, %s388
        %p390 = scmp.lt.s32.totalorder %s389, 255
        %s391 = scalar_select %p390, %s389, 255
        %s392 = smul.addr %s391, 4
        %s393 = scalar_lea.vmem %s5, %s392
        %s394 = sadd.s32 %s29, %s30
        %s395 = smul.u32 128, %s394
        %p397 = scmp.eq.s32.totalorder %s30, 0
        // Predicated region
        $region65: #{tpu_custom_call.1} parent=43 // pred_check
          %p398 = pneg %p397
        $region66: #{tpu_custom_call.1} parent=43 // pred_check_branch
          %400 = sbr.rel (%p398) target = $region68
        $region67: #{tpu_custom_call.1} parent=43 // pred_region
          %v401 = vld [vmem:[#allocation4] sm:$0xf]
          %v402 = vld [vmem:[#allocation7] sm:$0xff]
          %v403 = vld [vmem:[#allocation7 + $0x8] sm:$0xff]
          %v404 = vld [vmem:[#allocation7 + $0x10] sm:$0xff]
          %v405 = vld [vmem:[#allocation7 + $0x18] sm:$0xff]
          %v406 = vld [vmem:[#allocation7 + $0x20] sm:$0xff]
          %v407 = vld [vmem:[#allocation7 + $0x28] sm:$0xff]
          %v408 = vld [vmem:[#allocation7 + $0x30] sm:$0xff]
          %v409 = vld [vmem:[#allocation7 + $0x38] sm:$0xff]
          %v410 = vld [vmem:[#allocation7 + $0x40] sm:$0x77]
          %v411 = vld [vmem:[#allocation7 + $0x48] sm:$0x77]
          %v412 = vld [vmem:[#allocation7 + $0x50] sm:$0x77]
          %v413 = vld [vmem:[#allocation7 + $0x58] sm:$0x77]
          %v414 = vld [vmem:[#allocation7 + $0x60] sm:$0x77]
          %v415 = vld [vmem:[#allocation7 + $0x68] sm:$0x77]
          %v416 = vld [vmem:[#allocation7 + $0x70] sm:$0x77]
          %v417 = vld [vmem:[#allocation7 + $0x78] sm:$0x77]
          %v418 = vld [vmem:[#allocation9] sm:$0xff]
          %v419 = vld [vmem:[#allocation9 + $0x8] sm:$0xff]
          %v422 = vlaneseq
          %v423 = vshrl.u32 %v422, 7
          %v424 = vsub.s32 0, %v423
          %v425 = vrot.slane %v418, %v424
          %v426 = vlaneseq
          %v427 = vshrl.u32 %v426, 7
          %v428 = vsub.s32 1, %v427
          %v429 = vrot.slane %v418, %v428
          %v430 = vlaneseq
          %v431 = vshrl.u32 %v430, 7
          %v432 = vsub.s32 2, %v431
          %v433 = vrot.slane %v418, %v432
          %v434 = vlaneseq
          %v435 = vshrl.u32 %v434, 7
          %v436 = vsub.s32 3, %v435
          %v437 = vrot.slane %v418, %v436
          %v438 = vlaneseq
          %v439 = vshrl.u32 %v438, 7
          %v440 = vsub.s32 4, %v439
          %v441 = vrot.slane %v418, %v440
          %v442 = vlaneseq
          %v443 = vshrl.u32 %v442, 7
          %v444 = vsub.s32 5, %v443
          %v445 = vrot.slane %v418, %v444
          %v446 = vlaneseq
          %v447 = vshrl.u32 %v446, 7
          %v448 = vsub.s32 6, %v447
          %v449 = vrot.slane %v418, %v448
          %v450 = vlaneseq
          %v451 = vshrl.u32 %v450, 7
          %v452 = vsub.s32 7, %v451
          %v453 = vrot.slane %v418, %v452
          %v454 = vlaneseq
          %v455 = vshrl.u32 %v454, 7
          %v456 = vsub.s32 0, %v455
          %v457 = vrot.slane %v419, %v456
          %v458 = vlaneseq
          %v459 = vshrl.u32 %v458, 7
          %v460 = vsub.s32 1, %v459
          %v461 = vrot.slane %v419, %v460
          %v462 = vlaneseq
          %v463 = vshrl.u32 %v462, 7
          %v464 = vsub.s32 2, %v463
          %v465 = vrot.slane %v419, %v464
          %v466 = vlaneseq
          %v467 = vshrl.u32 %v466, 7
          %v468 = vsub.s32 3, %v467
          %v469 = vrot.slane %v419, %v468
          %v470 = vlaneseq
          %v471 = vshrl.u32 %v470, 7
          %v472 = vsub.s32 4, %v471
          %v473 = vrot.slane %v419, %v472
          %v474 = vlaneseq
          %v475 = vshrl.u32 %v474, 7
          %v476 = vsub.s32 5, %v475
          %v477 = vrot.slane %v419, %v476
          %v478 = vlaneseq
          %v479 = vshrl.u32 %v478, 7
          %v480 = vsub.s32 6, %v479
          %v481 = vrot.slane %v419, %v480
          %v482 = vlaneseq
          %v483 = vshrl.u32 %v482, 7
          %v484 = vsub.s32 7, %v483
          %v485 = vrot.slane %v419, %v484
          %v518 = vunpack.c.l.b16 %v402
          %v519 = vunpack.c.h.b16 %v402
          %v520 = vunpack.c.l.b16 %v403
          %v521 = vunpack.c.h.b16 %v403
          %v522 = vunpack.c.l.b16 %v404
          %v523 = vunpack.c.h.b16 %v404
          %v524 = vunpack.c.l.b16 %v405
          %v525 = vunpack.c.h.b16 %v405
          %v526 = vunpack.c.l.b16 %v406
          %v527 = vunpack.c.h.b16 %v406
          %v528 = vunpack.c.l.b16 %v407
          %v529 = vunpack.c.h.b16 %v407
          %v530 = vunpack.c.l.b16 %v408
          %v531 = vunpack.c.h.b16 %v408
          %v532 = vunpack.c.l.b16 %v409
          %v533 = vunpack.c.h.b16 %v409
          %v534 = vunpack.c.l.b16 %v410
          %v535 = vunpack.c.h.b16 %v410
          %v536 = vunpack.c.l.b16 %v411
          %v537 = vunpack.c.h.b16 %v411
          %v538 = vunpack.c.l.b16 %v412
          %v539 = vunpack.c.h.b16 %v412
          %v540 = vunpack.c.l.b16 %v413
          %v541 = vunpack.c.h.b16 %v413
          %v542 = vunpack.c.l.b16 %v414
          %v543 = vunpack.c.h.b16 %v414
          %v544 = vunpack.c.l.b16 %v415
          %v545 = vunpack.c.h.b16 %v415
          %v546 = vunpack.c.l.b16 %v416
          %v547 = vunpack.c.h.b16 %v416
          %v548 = vunpack.c.l.b16 %v417
          %v549 = vunpack.c.h.b16 %v417
          %v550 = vpack.c.b16 %v534, %v518
          %v551 = vpack.c.b16 %v535, %v519
          %v552 = vpack.c.b16 %v536, %v520
          %v553 = vpack.c.b16 %v537, %v521
          %v554 = vpack.c.b16 %v538, %v522
          %v555 = vpack.c.b16 %v539, %v523
          %v556 = vpack.c.b16 %v540, %v524
          %v557 = vpack.c.b16 %v541, %v525
          %v558 = vpack.c.b16 %v542, %v526
          %v559 = vpack.c.b16 %v543, %v527
          %v560 = vpack.c.b16 %v544, %v528
          %v561 = vpack.c.b16 %v545, %v529
          %v562 = vpack.c.b16 %v546, %v530
          %v563 = vpack.c.b16 %v547, %v531
          %v564 = vpack.c.b16 %v548, %v532
          %v565 = vpack.c.b16 %v549, %v533
          %vm566 = vcmask 113664
          %v568 = vsel %vm566, %v401, 0
          %vm570 = vcmask 1046528
          %v572 = vsel %vm570, %v550, 0
          %v575 = vsel %vm570, %v551, 0
          %v578 = vsel %vm570, %v552, 0
          %v581 = vsel %vm570, %v553, 0
          %v584 = vsel %vm570, %v554, 0
          %v587 = vsel %vm570, %v555, 0
          %v590 = vsel %vm570, %v556, 0
          %v593 = vsel %vm570, %v557, 0
          %v596 = vsel %vm570, %v558, 0
          %v599 = vsel %vm570, %v559, 0
          %v602 = vsel %vm570, %v560, 0
          %v605 = vsel %vm570, %v561, 0
          %v608 = vsel %vm570, %v562, 0
          %v611 = vsel %vm570, %v563, 0
          %v614 = vsel %vm570, %v564, 0
          %v617 = vsel %vm570, %v565, 0
          %619 = vmatprep.subr.bf16.mxu0 %v575
          %620 = vmatpush1.bf16.msra.mxu0 %v572
          %621 = vmatprep.subr.bf16.mxu0 0
          %622 = vmatpush1.bf16.msra.mxu0 0
          %623 = vmatprep.subr.bf16.mxu0 0
          %624 = vmatpush1.bf16.msra.mxu0 0
          %625 = vmatprep.subr.bf16.mxu0 0
          %626 = vmatpush1.bf16.msra.mxu0 0
          %627 = vmatprep.subr.bf16.mxu0 0
          %628 = vmatpush1.bf16.msra.mxu0 0
          %629 = vmatprep.subr.bf16.mxu0 0
          %630 = vmatpush1.bf16.msra.mxu0 0
          %631 = vmatprep.subr.bf16.mxu0 0
          %632 = vmatpush1.bf16.msra.mxu0 0
          %633 = vmatprep.subr.bf16.mxu0 0
          %634 = vmatpush1.bf16.msra.mxu0 0
          %635 = vmatprep.subr.bf16.mxu0 0
          %636 = vmatpush1.bf16.msra.mxu0 0
          %637 = vmatprep.subr.bf16.mxu0 0
          %638 = vmatpush1.bf16.msra.mxu0 0
          %639 = vmatprep.subr.bf16.mxu0 0
          %640 = vmatpush1.bf16.msra.mxu0 0
          %641 = vmatprep.subr.bf16.mxu0 0
          %642 = vmatpush1.bf16.msra.mxu0 0
          %643 = vmatprep.subr.bf16.mxu0 0
          %644 = vmatpush1.bf16.msra.mxu0 0
          %645 = vmatprep.subr.bf16.mxu0 0
          %646 = vmatpush1.bf16.msra.mxu0 0
          %647 = vmatprep.subr.bf16.mxu0 0
          %648 = vmatpush1.bf16.msra.mxu0 0
          %649 = vmatprep.subr.bf16.mxu0 0
          %650 = vmatpush1.bf16.msra.mxu0 0
          %651 = vmatprep.mubr.bf16.mxu0 0
          %652 = vmatmul.mubr.bf16.gmra.mrb[0].mxu0 %v568
          %v653 = vpop.f32.mrb[0].mxu0
          %v654 = vadd.f32 %v425, %v653
          %v655 = vpop.f32.mrb[0].mxu0
          %v656 = vadd.f32 %v429, %v655
          %v657 = vpop.f32.mrb[0].mxu0
          %v658 = vpop.f32.mrb[0].mxu0
          %659 = vdwg.mxu0
          %660 = vmatprep.subr.bf16.mxu0 %v581
          %661 = vmatpush1.bf16.msra.mxu0 %v578
          %662 = vmatprep.subr.bf16.mxu0 0
          %663 = vmatpush1.bf16.msra.mxu0 0
          %664 = vmatprep.subr.bf16.mxu0 0
          %665 = vmatpush1.bf16.msra.mxu0 0
          %666 = vmatprep.subr.bf16.mxu0 0
          %667 = vmatpush1.bf16.msra.mxu0 0
          %668 = vmatprep.subr.bf16.mxu0 0
          %669 = vmatpush1.bf16.msra.mxu0 0
          %670 = vmatprep.subr.bf16.mxu0 0
          %671 = vmatpush1.bf16.msra.mxu0 0
          %672 = vmatprep.subr.bf16.mxu0 0
          %673 = vmatpush1.bf16.msra.mxu0 0
          %674 = vmatprep.subr.bf16.mxu0 0
          %675 = vmatpush1.bf16.msra.mxu0 0
          %676 = vmatprep.subr.bf16.mxu0 0
          %677 = vmatpush1.bf16.msra.mxu0 0
          %678 = vmatprep.subr.bf16.mxu0 0
          %679 = vmatpush1.bf16.msra.mxu0 0
          %680 = vmatprep.subr.bf16.mxu0 0
          %681 = vmatpush1.bf16.msra.mxu0 0
          %682 = vmatprep.subr.bf16.mxu0 0
          %683 = vmatpush1.bf16.msra.mxu0 0
          %684 = vmatprep.subr.bf16.mxu0 0
          %685 = vmatpush1.bf16.msra.mxu0 0
          %686 = vmatprep.subr.bf16.mxu0 0
          %687 = vmatpush1.bf16.msra.mxu0 0
          %688 = vmatprep.subr.bf16.mxu0 0
          %689 = vmatpush1.bf16.msra.mxu0 0
          %690 = vmatprep.subr.bf16.mxu0 0
          %691 = vmatpush1.bf16.msra.mxu0 0
          %692 = vmatprep.mubr.bf16.mxu0 0
          %693 = vmatmul.mubr.bf16.gmra.mrb[0].mxu0 %v568
          %v694 = vpop.f32.mrb[0].mxu0
          %v695 = vadd.f32 %v433, %v694
          %v696 = vpop.f32.mrb[0].mxu0
          %v697 = vadd.f32 %v437, %v696
          %v698 = vpop.f32.mrb[0].mxu0
          %v699 = vpop.f32.mrb[0].mxu0
          %700 = vdwg.mxu0
          %701 = vmatprep.subr.bf16.mxu0 %v587
          %702 = vmatpush1.bf16.msra.mxu0 %v584
          %703 = vmatprep.subr.bf16.mxu0 0
          %704 = vmatpush1.bf16.msra.mxu0 0
          %705 = vmatprep.subr.bf16.mxu0 0
          %706 = vmatpush1.bf16.msra.mxu0 0
          %707 = vmatprep.subr.bf16.mxu0 0
          %708 = vmatpush1.bf16.msra.mxu0 0
          %709 = vmatprep.subr.bf16.mxu0 0
          %710 = vmatpush1.bf16.msra.mxu0 0
          %711 = vmatprep.subr.bf16.mxu0 0
          %712 = vmatpush1.bf16.msra.mxu0 0
          %713 = vmatprep.subr.bf16.mxu0 0
          %714 = vmatpush1.bf16.msra.mxu0 0
          %715 = vmatprep.subr.bf16.mxu0 0
          %716 = vmatpush1.bf16.msra.mxu0 0
          %717 = vmatprep.subr.bf16.mxu0 0
          %718 = vmatpush1.bf16.msra.mxu0 0
          %719 = vmatprep.subr.bf16.mxu0 0
          %720 = vmatpush1.bf16.msra.mxu0 0
          %721 = vmatprep.subr.bf16.mxu0 0
          %722 = vmatpush1.bf16.msra.mxu0 0
          %723 = vmatprep.subr.bf16.mxu0 0
          %724 = vmatpush1.bf16.msra.mxu0 0
          %725 = vmatprep.subr.bf16.mxu0 0
          %726 = vmatpush1.bf16.msra.mxu0 0
          %727 = vmatprep.subr.bf16.mxu0 0
          %728 = vmatpush1.bf16.msra.mxu0 0
          %729 = vmatprep.subr.bf16.mxu0 0
          %730 = vmatpush1.bf16.msra.mxu0 0
          %731 = vmatprep.subr.bf16.mxu0 0
          %732 = vmatpush1.bf16.msra.mxu0 0
          %733 = vmatprep.mubr.bf16.mxu0 0
          %734 = vmatmul.mubr.bf16.gmra.mrb[0].mxu0 %v568
          %v735 = vpop.f32.mrb[0].mxu0
          %v736 = vadd.f32 %v441, %v735
          %v737 = vpop.f32.mrb[0].mxu0
          %v738 = vadd.f32 %v445, %v737
          %v739 = vpop.f32.mrb[0].mxu0
          %v740 = vpop.f32.mrb[0].mxu0
          %741 = vdwg.mxu0
          %742 = vmatprep.subr.bf16.mxu0 %v593
          %743 = vmatpush1.bf16.msra.mxu0 %v590
          %744 = vmatprep.subr.bf16.mxu0 0
          %745 = vmatpush1.bf16.msra.mxu0 0
          %746 = vmatprep.subr.bf16.mxu0 0
          %747 = vmatpush1.bf16.msra.mxu0 0
          %748 = vmatprep.subr.bf16.mxu0 0
          %749 = vmatpush1.bf16.msra.mxu0 0
          %750 = vmatprep.subr.bf16.mxu0 0
          %751 = vmatpush1.bf16.msra.mxu0 0
          %752 = vmatprep.subr.bf16.mxu0 0
          %753 = vmatpush1.bf16.msra.mxu0 0
          %754 = vmatprep.subr.bf16.mxu0 0
          %755 = vmatpush1.bf16.msra.mxu0 0
          %756 = vmatprep.subr.bf16.mxu0 0
          %757 = vmatpush1.bf16.msra.mxu0 0
          %758 = vmatprep.subr.bf16.mxu0 0
          %759 = vmatpush1.bf16.msra.mxu0 0
          %760 = vmatprep.subr.bf16.mxu0 0
          %761 = vmatpush1.bf16.msra.mxu0 0
          %762 = vmatprep.subr.bf16.mxu0 0
          %763 = vmatpush1.bf16.msra.mxu0 0
          %764 = vmatprep.subr.bf16.mxu0 0
          %765 = vmatpush1.bf16.msra.mxu0 0
          %766 = vmatprep.subr.bf16.mxu0 0
          %767 = vmatpush1.bf16.msra.mxu0 0
          %768 = vmatprep.subr.bf16.mxu0 0
          %769 = vmatpush1.bf16.msra.mxu0 0
          %770 = vmatprep.subr.bf16.mxu0 0
          %771 = vmatpush1.bf16.msra.mxu0 0
          %772 = vmatprep.subr.bf16.mxu0 0
          %773 = vmatpush1.bf16.msra.mxu0 0
          %774 = vmatprep.mubr.bf16.mxu0 0
          %775 = vmatmul.mubr.bf16.gmra.mrb[0].mxu0 %v568
          %v776 = vpop.f32.mrb[0].mxu0
          %v777 = vadd.f32 %v449, %v776
          %v778 = vpop.f32.mrb[0].mxu0
          %v779 = vadd.f32 %v453, %v778
          %v780 = vpop.f32.mrb[0].mxu0
          %v781 = vpop.f32.mrb[0].mxu0
          %782 = vdwg.mxu0
          %783 = vmatprep.subr.bf16.mxu0 %v599
          %784 = vmatpush1.bf16.msra.mxu0 %v596
          %785 = vmatprep.subr.bf16.mxu0 0
          %786 = vmatpush1.bf16.msra.mxu0 0
          %787 = vmatprep.subr.bf16.mxu0 0
          %788 = vmatpush1.bf16.msra.mxu0 0
          %789 = vmatprep.subr.bf16.mxu0 0
          %790 = vmatpush1.bf16.msra.mxu0 0
          %791 = vmatprep.subr.bf16.mxu0 0
          %792 = vmatpush1.bf16.msra.mxu0 0
          %793 = vmatprep.subr.bf16.mxu0 0
          %794 = vmatpush1.bf16.msra.mxu0 0
          %795 = vmatprep.subr.bf16.mxu0 0
          %796 = vmatpush1.bf16.msra.mxu0 0
          %797 = vmatprep.subr.bf16.mxu0 0
          %798 = vmatpush1.bf16.msra.mxu0 0
          %799 = vmatprep.subr.bf16.mxu0 0
          %800 = vmatpush1.bf16.msra.mxu0 0
          %801 = vmatprep.subr.bf16.mxu0 0
          %802 = vmatpush1.bf16.msra.mxu0 0
          %803 = vmatprep.subr.bf16.mxu0 0
          %804 = vmatpush1.bf16.msra.mxu0 0
          %805 = vmatprep.subr.bf16.mxu0 0
          %806 = vmatpush1.bf16.msra.mxu0 0
          %807 = vmatprep.subr.bf16.mxu0 0
          %808 = vmatpush1.bf16.msra.mxu0 0
          %809 = vmatprep.subr.bf16.mxu0 0
          %810 = vmatpush1.bf16.msra.mxu0 0
          %811 = vmatprep.subr.bf16.mxu0 0
          %812 = vmatpush1.bf16.msra.mxu0 0
          %813 = vmatprep.subr.bf16.mxu0 0
          %814 = vmatpush1.bf16.msra.mxu0 0
          %815 = vmatprep.mubr.bf16.mxu0 0
          %816 = vmatmul.mubr.bf16.gmra.mrb[0].mxu0 %v568
          %v817 = vpop.f32.mrb[0].mxu0
          %v818 = vadd.f32 %v457, %v817
          %v819 = vpop.f32.mrb[0].mxu0
          %v820 = vadd.f32 %v461, %v819
          %v821 = vpop.f32.mrb[0].mxu0
          %v822 = vpop.f32.mrb[0].mxu0
          %823 = vdwg.mxu0
          %824 = vmatprep.subr.bf16.mxu0 %v605
          %825 = vmatpush1.bf16.msra.mxu0 %v602
          %826 = vmatprep.subr.bf16.mxu0 0
          %827 = vmatpush1.bf16.msra.mxu0 0
          %828 = vmatprep.subr.bf16.mxu0 0
          %829 = vmatpush1.bf16.msra.mxu0 0
          %830 = vmatprep.subr.bf16.mxu0 0
          %831 = vmatpush1.bf16.msra.mxu0 0
          %832 = vmatprep.subr.bf16.mxu0 0
          %833 = vmatpush1.bf16.msra.mxu0 0
          %834 = vmatprep.subr.bf16.mxu0 0
          %835 = vmatpush1.bf16.msra.mxu0 0
          %836 = vmatprep.subr.bf16.mxu0 0
          %837 = vmatpush1.bf16.msra.mxu0 0
          %838 = vmatprep.subr.bf16.mxu0 0
          %839 = vmatpush1.bf16.msra.mxu0 0
          %840 = vmatprep.subr.bf16.mxu0 0
          %841 = vmatpush1.bf16.msra.mxu0 0
          %842 = vmatprep.subr.bf16.mxu0 0
          %843 = vmatpush1.bf16.msra.mxu0 0
          %844 = vmatprep.subr.bf16.mxu0 0
          %845 = vmatpush1.bf16.msra.mxu0 0
          %846 = vmatprep.subr.bf16.mxu0 0
          %847 = vmatpush1.bf16.msra.mxu0 0
          %848 = vmatprep.subr.bf16.mxu0 0
          %849 = vmatpush1.bf16.msra.mxu0 0
          %850 = vmatprep.subr.bf16.mxu0 0
          %851 = vmatpush1.bf16.msra.mxu0 0
          %852 = vmatprep.subr.bf16.mxu0 0
          %853 = vmatpush1.bf16.msra.mxu0 0
          %854 = vmatprep.subr.bf16.mxu0 0
          %855 = vmatpush1.bf16.msra.mxu0 0
          %856 = vmatprep.mubr.bf16.mxu0 0
          %857 = vmatmul.mubr.bf16.gmra.mrb[0].mxu0 %v568
          %v858 = vpop.f32.mrb[0].mxu0
          %v859 = vadd.f32 %v465, %v858
          %v860 = vpop.f32.mrb[0].mxu0
          %v861 = vadd.f32 %v469, %v860
          %v862 = vpop.f32.mrb[0].mxu0
          %v863 = vpop.f32.mrb[0].mxu0
          %864 = vdwg.mxu0
          %865 = vmatprep.subr.bf16.mxu0 %v611
          %866 = vmatpush1.bf16.msra.mxu0 %v608
          %867 = vmatprep.subr.bf16.mxu0 0
          %868 = vmatpush1.bf16.msra.mxu0 0
          %869 = vmatprep.subr.bf16.mxu0 0
          %870 = vmatpush1.bf16.msra.mxu0 0
          %871 = vmatprep.subr.bf16.mxu0 0
          %872 = vmatpush1.bf16.msra.mxu0 0
          %873 = vmatprep.subr.bf16.mxu0 0
          %874 = vmatpush1.bf16.msra.mxu0 0
          %875 = vmatprep.subr.bf16.mxu0 0
          %876 = vmatpush1.bf16.msra.mxu0 0
          %877 = vmatprep.subr.bf16.mxu0 0
          %878 = vmatpush1.bf16.msra.mxu0 0
          %879 = vmatprep.subr.bf16.mxu0 0
          %880 = vmatpush1.bf16.msra.mxu0 0
          %881 = vmatprep.subr.bf16.mxu0 0
          %882 = vmatpush1.bf16.msra.mxu0 0
          %883 = vmatprep.subr.bf16.mxu0 0
          %884 = vmatpush1.bf16.msra.mxu0 0
          %885 = vmatprep.subr.bf16.mxu0 0
          %886 = vmatpush1.bf16.msra.mxu0 0
          %887 = vmatprep.subr.bf16.mxu0 0
          %888 = vmatpush1.bf16.msra.mxu0 0
          %889 = vmatprep.subr.bf16.mxu0 0
          %890 = vmatpush1.bf16.msra.mxu0 0
          %891 = vmatprep.subr.bf16.mxu0 0
          %892 = vmatpush1.bf16.msra.mxu0 0
          %893 = vmatprep.subr.bf16.mxu0 0
          %894 = vmatpush1.bf16.msra.mxu0 0
          %895 = vmatprep.subr.bf16.mxu0 0
          %896 = vmatpush1.bf16.msra.mxu0 0
          %897 = vmatprep.mubr.bf16.mxu0 0
          %898 = vmatmul.mubr.bf16.gmra.mrb[0].mxu0 %v568
          %v899 = vpop.f32.mrb[0].mxu0
          %v900 = vadd.f32 %v473, %v899
          %v901 = vpop.f32.mrb[0].mxu0
          %v902 = vadd.f32 %v477, %v901
          %v903 = vpop.f32.mrb[0].mxu0
          %v904 = vpop.f32.mrb[0].mxu0
          %905 = vdwg.mxu0
          %906 = vmatprep.subr.bf16.mxu0 %v617
          %907 = vmatpush1.bf16.msra.mxu0 %v614
          %908 = vmatprep.subr.bf16.mxu0 0
          %909 = vmatpush1.bf16.msra.mxu0 0
          %910 = vmatprep.subr.bf16.mxu0 0
          %911 = vmatpush1.bf16.msra.mxu0 0
          %912 = vmatprep.subr.bf16.mxu0 0
          %913 = vmatpush1.bf16.msra.mxu0 0
          %914 = vmatprep.subr.bf16.mxu0 0
          %915 = vmatpush1.bf16.msra.mxu0 0
          %916 = vmatprep.subr.bf16.mxu0 0
          %917 = vmatpush1.bf16.msra.mxu0 0
          %918 = vmatprep.subr.bf16.mxu0 0
          %919 = vmatpush1.bf16.msra.mxu0 0
          %920 = vmatprep.subr.bf16.mxu0 0
          %921 = vmatpush1.bf16.msra.mxu0 0
          %922 = vmatprep.subr.bf16.mxu0 0
          %923 = vmatpush1.bf16.msra.mxu0 0
          %924 = vmatprep.subr.bf16.mxu0 0
          %925 = vmatpush1.bf16.msra.mxu0 0
          %926 = vmatprep.subr.bf16.mxu0 0
          %927 = vmatpush1.bf16.msra.mxu0 0
          %928 = vmatprep.subr.bf16.mxu0 0
          %929 = vmatpush1.bf16.msra.mxu0 0
          %930 = vmatprep.subr.bf16.mxu0 0
          %931 = vmatpush1.bf16.msra.mxu0 0
          %932 = vmatprep.subr.bf16.mxu0 0
          %933 = vmatpush1.bf16.msra.mxu0 0
          %934 = vmatprep.subr.bf16.mxu0 0
          %935 = vmatpush1.bf16.msra.mxu0 0
          %936 = vmatprep.subr.bf16.mxu0 0
          %937 = vmatpush1.bf16.msra.mxu0 0
          %938 = vmatprep.mubr.bf16.mxu0 0
          %939 = vmatmul.mubr.bf16.gmra.mrb[0].mxu0 %v568
          %v940 = vpop.f32.mrb[0].mxu0
          %v941 = vadd.f32 %v481, %v940
          %v942 = vpop.f32.mrb[0].mxu0
          %v943 = vadd.f32 %v485, %v942
          %v944 = vpop.f32.mrb[0].mxu0
          %v945 = vpop.f32.mrb[0].mxu0
          %946 = vdwg.mxu0
          %v947 = vmax.f32 %v654, 0.0
          %v948 = vmax.f32 %v656, 0.0
          %v949 = vmax.f32 %v695, 0.0
          %v950 = vmax.f32 %v697, 0.0
          %v951 = vmax.f32 %v736, 0.0
          %v952 = vmax.f32 %v738, 0.0
          %v953 = vmax.f32 %v777, 0.0
          %v954 = vmax.f32 %v779, 0.0
          %v955 = vmax.f32 %v818, 0.0
          %v956 = vmax.f32 %v820, 0.0
          %v957 = vmax.f32 %v859, 0.0
          %v958 = vmax.f32 %v861, 0.0
          %v959 = vmax.f32 %v900, 0.0
          %v960 = vmax.f32 %v902, 0.0
          %v961 = vmax.f32 %v941, 0.0
          %v962 = vmax.f32 %v943, 0.0
          %963 = vst [vmem:[#allocation2] sm:$0xff] %v947
          %964 = vst [vmem:[#allocation2 + $0x8] sm:$0xff] %v948
          %965 = vst [vmem:[#allocation2 + $0x10] sm:$0xff] %v949
          %966 = vst [vmem:[#allocation2 + $0x18] sm:$0xff] %v950
          %967 = vst [vmem:[#allocation2 + $0x20] sm:$0xff] %v951
          %968 = vst [vmem:[#allocation2 + $0x28] sm:$0xff] %v952
          %969 = vst [vmem:[#allocation2 + $0x30] sm:$0xff] %v953
          %970 = vst [vmem:[#allocation2 + $0x38] sm:$0xff] %v954
          %971 = vst [vmem:[#allocation2 + $0x40] sm:$0xff] %v955
          %972 = vst [vmem:[#allocation2 + $0x48] sm:$0xff] %v956
          %973 = vst [vmem:[#allocation2 + $0x50] sm:$0xff] %v957
          %974 = vst [vmem:[#allocation2 + $0x58] sm:$0xff] %v958
          %975 = vst [vmem:[#allocation2 + $0x60] sm:$0xff] %v959
          %976 = vst [vmem:[#allocation2 + $0x68] sm:$0xff] %v960
          %977 = vst [vmem:[#allocation2 + $0x70] sm:$0xff] %v961
          %978 = vst [vmem:[#allocation2 + $0x78] sm:$0xff] %v962
          %vm979 = vcmask 72704
          %980 = vst.msk [vmem:[#allocation3] sm:$0xff] %vm979, 0.0
        $region68: #{tpu_custom_call.1} parent=43 // pred_fallthru
          _
        %v981 = vld [vmem:[#allocation2] sm:$0xff]
        %v982 = vld [vmem:[#allocation2 + $0x8] sm:$0xff]
        %v983 = vld [vmem:[#allocation2 + $0x10] sm:$0xff]
        %v984 = vld [vmem:[#allocation2 + $0x18] sm:$0xff]
        %v985 = vld [vmem:[#allocation2 + $0x20] sm:$0xff]
        %v986 = vld [vmem:[#allocation2 + $0x28] sm:$0xff]
        %v987 = vld [vmem:[#allocation2 + $0x30] sm:$0xff]
        %v988 = vld [vmem:[#allocation2 + $0x38] sm:$0xff]
        %v989 = vld [vmem:[#allocation2 + $0x40] sm:$0xff]
        %v990 = vld [vmem:[#allocation2 + $0x48] sm:$0xff]
        %v991 = vld [vmem:[#allocation2 + $0x50] sm:$0xff]
        %v992 = vld [vmem:[#allocation2 + $0x58] sm:$0xff]
        %v993 = vld [vmem:[#allocation2 + $0x60] sm:$0xff]
        %v994 = vld [vmem:[#allocation2 + $0x68] sm:$0xff]
        %v995 = vld [vmem:[#allocation2 + $0x70] sm:$0xff]
        %v996 = vld [vmem:[#allocation2 + $0x78] sm:$0xff]
        %v997 = vpack.c.bf16 %v981, %v981
        %v998 = vpack.c.bf16 %v982, %v982
        %v999 = vpack.c.bf16 %v983, %v983
        %v1000 = vpack.c.bf16 %v984, %v984
        %v1001 = vpack.c.bf16 %v985, %v985
        %v1002 = vpack.c.bf16 %v986, %v986
        %v1003 = vpack.c.bf16 %v987, %v987
        %v1004 = vpack.c.bf16 %v988, %v988
        %v1005 = vpack.c.bf16 %v989, %v989
        %v1006 = vpack.c.bf16 %v990, %v990
        %v1007 = vpack.c.bf16 %v991, %v991
        %v1008 = vpack.c.bf16 %v992, %v992
        %v1009 = vpack.c.bf16 %v993, %v993
        %v1010 = vpack.c.bf16 %v994, %v994
        %v1011 = vpack.c.bf16 %v995, %v995
        %v1012 = vpack.c.bf16 %v996, %v996
        %v1013 = vld [vmem:[%s335] sm:$0xff]
        %v1014 = vld [vmem:[%s335 + $0x8] sm:$0xff]
        %v1015 = vld [vmem:[%s335 + $0x10] sm:$0xff]
        %v1016 = vld [vmem:[%s335 + $0x18] sm:$0xff]
        %v1017 = vld [vmem:[%s335 + $0x20] sm:$0xff]
        %v1018 = vld [vmem:[%s335 + $0x28] sm:$0xff]
        %v1019 = vld [vmem:[%s335 + $0x30] sm:$0xff]
        %v1020 = vld [vmem:[%s335 + $0x38] sm:$0xff]
        %v1021 = vld [vmem:[%s335 + $0x40] sm:$0xff]
        %v1022 = vld [vmem:[%s335 + $0x48] sm:$0xff]
        %v1023 = vld [vmem:[%s335 + $0x50] sm:$0xff]
        %v1024 = vld [vmem:[%s335 + $0x58] sm:$0xff]
        %v1025 = vld [vmem:[%s335 + $0x60] sm:$0xff]
        %v1026 = vld [vmem:[%s335 + $0x68] sm:$0xff]
        %v1027 = vld [vmem:[%s335 + $0x70] sm:$0xff]
        %v1028 = vld [vmem:[%s335 + $0x78] sm:$0xff]
        %v1029 = vld [vmem:[%s335 + $0x80] sm:$0xff]
        %v1030 = vld [vmem:[%s335 + $0x88] sm:$0xff]
        %v1031 = vld [vmem:[%s335 + $0x90] sm:$0xff]
        %v1032 = vld [vmem:[%s335 + $0x98] sm:$0xff]
        %v1033 = vld [vmem:[%s335 + $0xa0] sm:$0xff]
        %v1034 = vld [vmem:[%s335 + $0xa8] sm:$0xff]
        %v1035 = vld [vmem:[%s335 + $0xb0] sm:$0xff]
        %v1036 = vld [vmem:[%s335 + $0xb8] sm:$0xff]
        %v1037 = vld [vmem:[%s335 + $0xc0] sm:$0xff]
        %v1038 = vld [vmem:[%s335 + $0xc8] sm:$0xff]
        %v1039 = vld [vmem:[%s335 + $0xd0] sm:$0xff]
        %v1040 = vld [vmem:[%s335 + $0xd8] sm:$0xff]
        %v1041 = vld [vmem:[%s335 + $0xe0] sm:$0xff]
        %v1042 = vld [vmem:[%s335 + $0xe8] sm:$0xff]
        %v1043 = vld [vmem:[%s335 + $0xf0] sm:$0xff]
        %v1044 = vld [vmem:[%s335 + $0xf8] sm:$0xff]
        %v1045 = vld [vmem:[%s335 + $0x100] sm:$0xff]
        %v1046 = vld [vmem:[%s335 + $0x108] sm:$0xff]
        %v1047 = vld [vmem:[%s335 + $0x110] sm:$0xff]
        %v1048 = vld [vmem:[%s335 + $0x118] sm:$0xff]
        %v1049 = vld [vmem:[%s335 + $0x120] sm:$0xff]
        %v1050 = vld [vmem:[%s335 + $0x128] sm:$0xff]
        %v1051 = vld [vmem:[%s335 + $0x130] sm:$0xff]
        %v1052 = vld [vmem:[%s335 + $0x138] sm:$0xff]
        %v1053 = vld [vmem:[%s335 + $0x140] sm:$0xff]
        %v1054 = vld [vmem:[%s335 + $0x148] sm:$0xff]
        %v1055 = vld [vmem:[%s335 + $0x150] sm:$0xff]
        %v1056 = vld [vmem:[%s335 + $0x158] sm:$0xff]
        %v1057 = vld [vmem:[%s335 + $0x160] sm:$0xff]
        %v1058 = vld [vmem:[%s335 + $0x168] sm:$0xff]
        %v1059 = vld [vmem:[%s335 + $0x170] sm:$0xff]
        %v1060 = vld [vmem:[%s335 + $0x178] sm:$0xff]
        %v1061 = vld [vmem:[%s335 + $0x180] sm:$0xff]
        %v1062 = vld [vmem:[%s335 + $0x188] sm:$0xff]
        %v1063 = vld [vmem:[%s335 + $0x190] sm:$0xff]
        %v1064 = vld [vmem:[%s335 + $0x198] sm:$0xff]
        %v1065 = vld [vmem:[%s335 + $0x1a0] sm:$0xff]
        %v1066 = vld [vmem:[%s335 + $0x1a8] sm:$0xff]
        %v1067 = vld [vmem:[%s335 + $0x1b0] sm:$0xff]
        %v1068 = vld [vmem:[%s335 + $0x1b8] sm:$0xff]
        %v1069 = vld [vmem:[%s335 + $0x1c0] sm:$0xff]
        %v1070 = vld [vmem:[%s335 + $0x1c8] sm:$0xff]
        %v1071 = vld [vmem:[%s335 + $0x1d0] sm:$0xff]
        %v1072 = vld [vmem:[%s335 + $0x1d8] sm:$0xff]
        %v1073 = vld [vmem:[%s335 + $0x1e0] sm:$0xff]
        %v1074 = vld [vmem:[%s335 + $0x1e8] sm:$0xff]
        %v1075 = vld [vmem:[%s335 + $0x1f0] sm:$0xff]
        %v1076 = vld [vmem:[%s335 + $0x1f8] sm:$0xff]
        %v1077 = vld [vmem:[%s335 + $0x200] sm:$0xff]
        %v1078 = vld [vmem:[%s335 + $0x208] sm:$0xff]
        %v1079 = vld [vmem:[%s335 + $0x210] sm:$0xff]
        %v1080 = vld [vmem:[%s335 + $0x218] sm:$0xff]
        %v1081 = vld [vmem:[%s335 + $0x220] sm:$0xff]
        %v1082 = vld [vmem:[%s335 + $0x228] sm:$0xff]
        %v1083 = vld [vmem:[%s335 + $0x230] sm:$0xff]
        %v1084 = vld [vmem:[%s335 + $0x238] sm:$0xff]
        %v1085 = vld [vmem:[%s335 + $0x240] sm:$0xff]
        %v1086 = vld [vmem:[%s335 + $0x248] sm:$0xff]
        %v1087 = vld [vmem:[%s335 + $0x250] sm:$0xff]
        %v1088 = vld [vmem:[%s335 + $0x258] sm:$0xff]
        %v1089 = vld [vmem:[%s335 + $0x260] sm:$0xff]
        %v1090 = vld [vmem:[%s335 + $0x268] sm:$0xff]
        %v1091 = vld [vmem:[%s335 + $0x270] sm:$0xff]
        %v1092 = vld [vmem:[%s335 + $0x278] sm:$0xff]
        %v1093 = vld [vmem:[%s335 + $0x280] sm:$0xff]
        %v1094 = vld [vmem:[%s335 + $0x288] sm:$0xff]
        %v1095 = vld [vmem:[%s335 + $0x290] sm:$0xff]
        %v1096 = vld [vmem:[%s335 + $0x298] sm:$0xff]
        %v1097 = vld [vmem:[%s335 + $0x2a0] sm:$0xff]
        %v1098 = vld [vmem:[%s335 + $0x2a8] sm:$0xff]
        %v1099 = vld [vmem:[%s335 + $0x2b0] sm:$0xff]
        %v1100 = vld [vmem:[%s335 + $0x2b8] sm:$0xff]
        %v1101 = vld [vmem:[%s335 + $0x2c0] sm:$0xff]
        %v1102 = vld [vmem:[%s335 + $0x2c8] sm:$0xff]
        %v1103 = vld [vmem:[%s335 + $0x2d0] sm:$0xff]
        %v1104 = vld [vmem:[%s335 + $0x2d8] sm:$0xff]
        %v1105 = vld [vmem:[%s335 + $0x2e0] sm:$0xff]
        %v1106 = vld [vmem:[%s335 + $0x2e8] sm:$0xff]
        %v1107 = vld [vmem:[%s335 + $0x2f0] sm:$0xff]
        %v1108 = vld [vmem:[%s335 + $0x2f8] sm:$0xff]
        %v1109 = vld [vmem:[%s335 + $0x300] sm:$0xff]
        %v1110 = vld [vmem:[%s335 + $0x308] sm:$0xff]
        %v1111 = vld [vmem:[%s335 + $0x310] sm:$0xff]
        %v1112 = vld [vmem:[%s335 + $0x318] sm:$0xff]
        %v1113 = vld [vmem:[%s335 + $0x320] sm:$0xff]
        %v1114 = vld [vmem:[%s335 + $0x328] sm:$0xff]
        %v1115 = vld [vmem:[%s335 + $0x330] sm:$0xff]
        %v1116 = vld [vmem:[%s335 + $0x338] sm:$0xff]
        %v1117 = vld [vmem:[%s335 + $0x340] sm:$0xff]
        %v1118 = vld [vmem:[%s335 + $0x348] sm:$0xff]
        %v1119 = vld [vmem:[%s335 + $0x350] sm:$0xff]
        %v1120 = vld [vmem:[%s335 + $0x358] sm:$0xff]
        %v1121 = vld [vmem:[%s335 + $0x360] sm:$0xff]
        %v1122 = vld [vmem:[%s335 + $0x368] sm:$0xff]
        %v1123 = vld [vmem:[%s335 + $0x370] sm:$0xff]
        %v1124 = vld [vmem:[%s335 + $0x378] sm:$0xff]
        %v1125 = vld [vmem:[%s335 + $0x380] sm:$0xff]
        %v1126 = vld [vmem:[%s335 + $0x388] sm:$0xff]
        %v1127 = vld [vmem:[%s335 + $0x390] sm:$0xff]
        %v1128 = vld [vmem:[%s335 + $0x398] sm:$0xff]
        %v1129 = vld [vmem:[%s335 + $0x3a0] sm:$0xff]
        %v1130 = vld [vmem:[%s335 + $0x3a8] sm:$0xff]
        %v1131 = vld [vmem:[%s335 + $0x3b0] sm:$0xff]
        %v1132 = vld [vmem:[%s335 + $0x3b8] sm:$0xff]
        %v1133 = vld [vmem:[%s335 + $0x3c0] sm:$0xff]
        %v1134 = vld [vmem:[%s335 + $0x3c8] sm:$0xff]
        %v1135 = vld [vmem:[%s335 + $0x3d0] sm:$0xff]
        %v1136 = vld [vmem:[%s335 + $0x3d8] sm:$0xff]
        %v1137 = vld [vmem:[%s335 + $0x3e0] sm:$0xff]
        %v1138 = vld [vmem:[%s335 + $0x3e8] sm:$0xff]
        %v1139 = vld [vmem:[%s335 + $0x3f0] sm:$0xff]
        %v1140 = vld [vmem:[%s335 + $0x3f8] sm:$0xff]
        %v1141 = vld [vmem:[%s335 + $0x400] sm:$0xff]
        %v1142 = vld [vmem:[%s335 + $0x408] sm:$0xff]
        %v1143 = vld [vmem:[%s335 + $0x410] sm:$0xff]
        %v1144 = vld [vmem:[%s335 + $0x418] sm:$0xff]
        %v1145 = vld [vmem:[%s335 + $0x420] sm:$0xff]
        %v1146 = vld [vmem:[%s335 + $0x428] sm:$0xff]
        %v1147 = vld [vmem:[%s335 + $0x430] sm:$0xff]
        %v1148 = vld [vmem:[%s335 + $0x438] sm:$0xff]
        %v1149 = vld [vmem:[%s335 + $0x440] sm:$0xff]
        %v1150 = vld [vmem:[%s335 + $0x448] sm:$0xff]
        %v1151 = vld [vmem:[%s335 + $0x450] sm:$0xff]
        %v1152 = vld [vmem:[%s335 + $0x458] sm:$0xff]
        %v1153 = vld [vmem:[%s335 + $0x460] sm:$0xff]
        %v1154 = vld [vmem:[%s335 + $0x468] sm:$0xff]
        %v1155 = vld [vmem:[%s335 + $0x470] sm:$0xff]
        %v1156 = vld [vmem:[%s335 + $0x478] sm:$0xff]
        %v1157 = vld [vmem:[%s335 + $0x480] sm:$0xff]
        %v1158 = vld [vmem:[%s335 + $0x488] sm:$0xff]
        %v1159 = vld [vmem:[%s335 + $0x490] sm:$0xff]
        %v1160 = vld [vmem:[%s335 + $0x498] sm:$0xff]
        %v1161 = vld [vmem:[%s335 + $0x4a0] sm:$0xff]
        %v1162 = vld [vmem:[%s335 + $0x4a8] sm:$0xff]
        %v1163 = vld [vmem:[%s335 + $0x4b0] sm:$0xff]
        %v1164 = vld [vmem:[%s335 + $0x4b8] sm:$0xff]
        %v1165 = vld [vmem:[%s335 + $0x4c0] sm:$0xff]
        %v1166 = vld [vmem:[%s335 + $0x4c8] sm:$0xff]
        %v1167 = vld [vmem:[%s335 + $0x4d0] sm:$0xff]
        %v1168 = vld [vmem:[%s335 + $0x4d8] sm:$0xff]
        %v1169 = vld [vmem:[%s335 + $0x4e0] sm:$0xff]
        %v1170 = vld [vmem:[%s335 + $0x4e8] sm:$0xff]
        %v1171 = vld [vmem:[%s335 + $0x4f0] sm:$0xff]
        %v1172 = vld [vmem:[%s335 + $0x4f8] sm:$0xff]
        %v1173 = vld [vmem:[%s335 + $0x500] sm:$0xff]
        %v1174 = vld [vmem:[%s335 + $0x508] sm:$0xff]
        %v1175 = vld [vmem:[%s335 + $0x510] sm:$0xff]
        %v1176 = vld [vmem:[%s335 + $0x518] sm:$0xff]
        %v1177 = vld [vmem:[%s335 + $0x520] sm:$0xff]
        %v1178 = vld [vmem:[%s335 + $0x528] sm:$0xff]
        %v1179 = vld [vmem:[%s335 + $0x530] sm:$0xff]
        %v1180 = vld [vmem:[%s335 + $0x538] sm:$0xff]
        %v1181 = vld [vmem:[%s335 + $0x540] sm:$0xff]
        %v1182 = vld [vmem:[%s335 + $0x548] sm:$0xff]
        %v1183 = vld [vmem:[%s335 + $0x550] sm:$0xff]
        %v1184 = vld [vmem:[%s335 + $0x558] sm:$0xff]
        %v1185 = vld [vmem:[%s335 + $0x560] sm:$0xff]
        %v1186 = vld [vmem:[%s335 + $0x568] sm:$0xff]
        %v1187 = vld [vmem:[%s335 + $0x570] sm:$0xff]
        %v1188 = vld [vmem:[%s335 + $0x578] sm:$0xff]
        %v1189 = vld [vmem:[%s335 + $0x580] sm:$0xff]
        %v1190 = vld [vmem:[%s335 + $0x588] sm:$0xff]
        %v1191 = vld [vmem:[%s335 + $0x590] sm:$0xff]
        %v1192 = vld [vmem:[%s335 + $0x598] sm:$0xff]
        %v1193 = vld [vmem:[%s335 + $0x5a0] sm:$0xff]
        %v1194 = vld [vmem:[%s335 + $0x5a8] sm:$0xff]
        %v1195 = vld [vmem:[%s335 + $0x5b0] sm:$0xff]
        %v1196 = vld [vmem:[%s335 + $0x5b8] sm:$0xff]
        %v1197 = vld [vmem:[%s335 + $0x5c0] sm:$0xff]
        %v1198 = vld [vmem:[%s335 + $0x5c8] sm:$0xff]
        %v1199 = vld [vmem:[%s335 + $0x5d0] sm:$0xff]
        %v1200 = vld [vmem:[%s335 + $0x5d8] sm:$0xff]
        %v1201 = vld [vmem:[%s335 + $0x5e0] sm:$0xff]
        %v1202 = vld [vmem:[%s335 + $0x5e8] sm:$0xff]
        %v1203 = vld [vmem:[%s335 + $0x5f0] sm:$0xff]
        %v1204 = vld [vmem:[%s335 + $0x5f8] sm:$0xff]
        %v1205 = vld [vmem:[%s335 + $0x600] sm:$0xff]
        %v1206 = vld [vmem:[%s335 + $0x608] sm:$0xff]
        %v1207 = vld [vmem:[%s335 + $0x610] sm:$0xff]
        %v1208 = vld [vmem:[%s335 + $0x618] sm:$0xff]
        %v1209 = vld [vmem:[%s335 + $0x620] sm:$0xff]
        %v1210 = vld [vmem:[%s335 + $0x628] sm:$0xff]
        %v1211 = vld [vmem:[%s335 + $0x630] sm:$0xff]
        %v1212 = vld [vmem:[%s335 + $0x638] sm:$0xff]
        %v1213 = vld [vmem:[%s335 + $0x640] sm:$0xff]
        %v1214 = vld [vmem:[%s335 + $0x648] sm:$0xff]
        %v1215 = vld [vmem:[%s335 + $0x650] sm:$0xff]
        %v1216 = vld [vmem:[%s335 + $0x658] sm:$0xff]
        %v1217 = vld [vmem:[%s335 + $0x660] sm:$0xff]
        %v1218 = vld [vmem:[%s335 + $0x668] sm:$0xff]
        %v1219 = vld [vmem:[%s335 + $0x670] sm:$0xff]
        %v1220 = vld [vmem:[%s335 + $0x678] sm:$0xff]
        %v1221 = vld [vmem:[%s335 + $0x680] sm:$0xff]
        %v1222 = vld [vmem:[%s335 + $0x688] sm:$0xff]
        %v1223 = vld [vmem:[%s335 + $0x690] sm:$0xff]
        %v1224 = vld [vmem:[%s335 + $0x698] sm:$0xff]
        %v1225 = vld [vmem:[%s335 + $0x6a0] sm:$0xff]
        %v1226 = vld [vmem:[%s335 + $0x6a8] sm:$0xff]
        %v1227 = vld [vmem:[%s335 + $0x6b0] sm:$0xff]
        %v1228 = vld [vmem:[%s335 + $0x6b8] sm:$0xff]
        %v1229 = vld [vmem:[%s335 + $0x6c0] sm:$0xff]
        %v1230 = vld [vmem:[%s335 + $0x6c8] sm:$0xff]
        %v1231 = vld [vmem:[%s335 + $0x6d0] sm:$0xff]
        %v1232 = vld [vmem:[%s335 + $0x6d8] sm:$0xff]
        %v1233 = vld [vmem:[%s335 + $0x6e0] sm:$0xff]
        %v1234 = vld [vmem:[%s335 + $0x6e8] sm:$0xff]
        %v1235 = vld [vmem:[%s335 + $0x6f0] sm:$0xff]
        %v1236 = vld [vmem:[%s335 + $0x6f8] sm:$0xff]
        %v1237 = vld [vmem:[%s335 + $0x700] sm:$0xff]
        %v1238 = vld [vmem:[%s335 + $0x708] sm:$0xff]
        %v1239 = vld [vmem:[%s335 + $0x710] sm:$0xff]
        %v1240 = vld [vmem:[%s335 + $0x718] sm:$0xff]
        %v1241 = vld [vmem:[%s335 + $0x720] sm:$0xff]
        %v1242 = vld [vmem:[%s335 + $0x728] sm:$0xff]
        %v1243 = vld [vmem:[%s335 + $0x730] sm:$0xff]
        %v1244 = vld [vmem:[%s335 + $0x738] sm:$0xff]
        %v1245 = vld [vmem:[%s335 + $0x740] sm:$0xff]
        %v1246 = vld [vmem:[%s335 + $0x748] sm:$0xff]
        %v1247 = vld [vmem:[%s335 + $0x750] sm:$0xff]
        %v1248 = vld [vmem:[%s335 + $0x758] sm:$0xff]
        %v1249 = vld [vmem:[%s335 + $0x760] sm:$0xff]
        %v1250 = vld [vmem:[%s335 + $0x768] sm:$0xff]
        %v1251 = vld [vmem:[%s335 + $0x770] sm:$0xff]
        %v1252 = vld [vmem:[%s335 + $0x778] sm:$0xff]
        %v1253 = vld [vmem:[%s335 + $0x780] sm:$0xff]
        %v1254 = vld [vmem:[%s335 + $0x788] sm:$0xff]
        %v1255 = vld [vmem:[%s335 + $0x790] sm:$0xff]
        %v1256 = vld [vmem:[%s335 + $0x798] sm:$0xff]
        %v1257 = vld [vmem:[%s335 + $0x7a0] sm:$0xff]
        %v1258 = vld [vmem:[%s335 + $0x7a8] sm:$0xff]
        %v1259 = vld [vmem:[%s335 + $0x7b0] sm:$0xff]
        %v1260 = vld [vmem:[%s335 + $0x7b8] sm:$0xff]
        %v1261 = vld [vmem:[%s335 + $0x7c0] sm:$0xff]
        %v1262 = vld [vmem:[%s335 + $0x7c8] sm:$0xff]
        %v1263 = vld [vmem:[%s335 + $0x7d0] sm:$0xff]
        %v1264 = vld [vmem:[%s335 + $0x7d8] sm:$0xff]
        %v1265 = vld [vmem:[%s335 + $0x7e0] sm:$0xff]
        %v1266 = vld [vmem:[%s335 + $0x7e8] sm:$0xff]
        %v1267 = vld [vmem:[%s335 + $0x7f0] sm:$0xff]
        %v1268 = vld [vmem:[%s335 + $0x7f8] sm:$0xff]
        %v1269 = vld [vmem:[%s335 + $0x800] sm:$0xff]
        %v1270 = vld [vmem:[%s335 + $0x808] sm:$0xff]
        %v1271 = vld [vmem:[%s335 + $0x810] sm:$0xff]
        %v1272 = vld [vmem:[%s335 + $0x818] sm:$0xff]
        %v1273 = vld [vmem:[%s335 + $0x820] sm:$0xff]
        %v1274 = vld [vmem:[%s335 + $0x828] sm:$0xff]
        %v1275 = vld [vmem:[%s335 + $0x830] sm:$0xff]
        %v1276 = vld [vmem:[%s335 + $0x838] sm:$0xff]
        %v1277 = vld [vmem:[%s335 + $0x840] sm:$0xff]
        %v1278 = vld [vmem:[%s335 + $0x848] sm:$0xff]
        %v1279 = vld [vmem:[%s335 + $0x850] sm:$0xff]
        %v1280 = vld [vmem:[%s335 + $0x858] sm:$0xff]
        %v1281 = vld [vmem:[%s335 + $0x860] sm:$0xff]
        %v1282 = vld [vmem:[%s335 + $0x868] sm:$0xff]
        %v1283 = vld [vmem:[%s335 + $0x870] sm:$0xff]
        %v1284 = vld [vmem:[%s335 + $0x878] sm:$0xff]
        %v1285 = vld [vmem:[%s335 + $0x880] sm:$0xff]
        %v1286 = vld [vmem:[%s335 + $0x888] sm:$0xff]
        %v1287 = vld [vmem:[%s335 + $0x890] sm:$0xff]
        %v1288 = vld [vmem:[%s335 + $0x898] sm:$0xff]
        %v1289 = vld [vmem:[%s335 + $0x8a0] sm:$0xff]
        %v1290 = vld [vmem:[%s335 + $0x8a8] sm:$0xff]
        %v1291 = vld [vmem:[%s335 + $0x8b0] sm:$0xff]
        %v1292 = vld [vmem:[%s335 + $0x8b8] sm:$0xff]
        %v1293 = vld [vmem:[%s335 + $0x8c0] sm:$0xff]
        %v1294 = vld [vmem:[%s335 + $0x8c8] sm:$0xff]
        %v1295 = vld [vmem:[%s335 + $0x8d0] sm:$0xff]
        %v1296 = vld [vmem:[%s335 + $0x8d8] sm:$0xff]
        %v1297 = vld [vmem:[%s335 + $0x8e0] sm:$0xff]
        %v1298 = vld [vmem:[%s335 + $0x8e8] sm:$0xff]
        %v1299 = vld [vmem:[%s335 + $0x8f0] sm:$0xff]
        %v1300 = vld [vmem:[%s335 + $0x8f8] sm:$0xff]
        %v1301 = vld [vmem:[%s335 + $0x900] sm:$0xff]
        %v1302 = vld [vmem:[%s335 + $0x908] sm:$0xff]
        %v1303 = vld [vmem:[%s335 + $0x910] sm:$0xff]
        %v1304 = vld [vmem:[%s335 + $0x918] sm:$0xff]
        %v1305 = vld [vmem:[%s335 + $0x920] sm:$0xff]
        %v1306 = vld [vmem:[%s335 + $0x928] sm:$0xff]
        %v1307 = vld [vmem:[%s335 + $0x930] sm:$0xff]
        %v1308 = vld [vmem:[%s335 + $0x938] sm:$0xff]
        %v1309 = vld [vmem:[%s335 + $0x940] sm:$0xff]
        %v1310 = vld [vmem:[%s335 + $0x948] sm:$0xff]
        %v1311 = vld [vmem:[%s335 + $0x950] sm:$0xff]
        %v1312 = vld [vmem:[%s335 + $0x958] sm:$0xff]
        %v1313 = vld [vmem:[%s335 + $0x960] sm:$0xff]
        %v1314 = vld [vmem:[%s335 + $0x968] sm:$0xff]
        %v1315 = vld [vmem:[%s335 + $0x970] sm:$0xff]
        %v1316 = vld [vmem:[%s335 + $0x978] sm:$0xff]
        %v1317 = vld [vmem:[%s335 + $0x980] sm:$0xff]
        %v1318 = vld [vmem:[%s335 + $0x988] sm:$0xff]
        %v1319 = vld [vmem:[%s335 + $0x990] sm:$0xff]
        %v1320 = vld [vmem:[%s335 + $0x998] sm:$0xff]
        %v1321 = vld [vmem:[%s335 + $0x9a0] sm:$0xff]
        %v1322 = vld [vmem:[%s335 + $0x9a8] sm:$0xff]
        %v1323 = vld [vmem:[%s335 + $0x9b0] sm:$0xff]
        %v1324 = vld [vmem:[%s335 + $0x9b8] sm:$0xff]
        %v1325 = vld [vmem:[%s335 + $0x9c0] sm:$0xff]
        %v1326 = vld [vmem:[%s335 + $0x9c8] sm:$0xff]
        %v1327 = vld [vmem:[%s335 + $0x9d0] sm:$0xff]
        %v1328 = vld [vmem:[%s335 + $0x9d8] sm:$0xff]
        %v1329 = vld [vmem:[%s335 + $0x9e0] sm:$0xff]
        %v1330 = vld [vmem:[%s335 + $0x9e8] sm:$0xff]
        %v1331 = vld [vmem:[%s335 + $0x9f0] sm:$0xff]
        %v1332 = vld [vmem:[%s335 + $0x9f8] sm:$0xff]
        %v1333 = vld [vmem:[%s335 + $0xa00] sm:$0xff]
        %v1334 = vld [vmem:[%s335 + $0xa08] sm:$0xff]
        %v1335 = vld [vmem:[%s335 + $0xa10] sm:$0xff]
        %v1336 = vld [vmem:[%s335 + $0xa18] sm:$0xff]
        %v1337 = vld [vmem:[%s335 + $0xa20] sm:$0xff]
        %v1338 = vld [vmem:[%s335 + $0xa28] sm:$0xff]
        %v1339 = vld [vmem:[%s335 + $0xa30] sm:$0xff]
        %v1340 = vld [vmem:[%s335 + $0xa38] sm:$0xff]
        %v1341 = vld [vmem:[%s335 + $0xa40] sm:$0xff]
        %v1342 = vld [vmem:[%s335 + $0xa48] sm:$0xff]
        %v1343 = vld [vmem:[%s335 + $0xa50] sm:$0xff]
        %v1344 = vld [vmem:[%s335 + $0xa58] sm:$0xff]
        %v1345 = vld [vmem:[%s335 + $0xa60] sm:$0xff]
        %v1346 = vld [vmem:[%s335 + $0xa68] sm:$0xff]
        %v1347 = vld [vmem:[%s335 + $0xa70] sm:$0xff]
        %v1348 = vld [vmem:[%s335 + $0xa78] sm:$0xff]
        %v1349 = vld [vmem:[%s335 + $0xa80] sm:$0xff]
        %v1350 = vld [vmem:[%s335 + $0xa88] sm:$0xff]
        %v1351 = vld [vmem:[%s335 + $0xa90] sm:$0xff]
        %v1352 = vld [vmem:[%s335 + $0xa98] sm:$0xff]
        %v1353 = vld [vmem:[%s335 + $0xaa0] sm:$0xff]
        %v1354 = vld [vmem:[%s335 + $0xaa8] sm:$0xff]
        %v1355 = vld [vmem:[%s335 + $0xab0] sm:$0xff]
        %v1356 = vld [vmem:[%s335 + $0xab8] sm:$0xff]
        %v1357 = vld [vmem:[%s335 + $0xac0] sm:$0xff]
        %v1358 = vld [vmem:[%s335 + $0xac8] sm:$0xff]
        %v1359 = vld [vmem:[%s335 + $0xad0] sm:$0xff]
        %v1360 = vld [vmem:[%s335 + $0xad8] sm:$0xff]
        %v1361 = vld [vmem:[%s335 + $0xae0] sm:$0xff]
        %v1362 = vld [vmem:[%s335 + $0xae8] sm:$0xff]
        %v1363 = vld [vmem:[%s335 + $0xaf0] sm:$0xff]
        %v1364 = vld [vmem:[%s335 + $0xaf8] sm:$0xff]
        %v1365 = vld [vmem:[%s335 + $0xb00] sm:$0xff]
        %v1366 = vld [vmem:[%s335 + $0xb08] sm:$0xff]
        %v1367 = vld [vmem:[%s335 + $0xb10] sm:$0xff]
        %v1368 = vld [vmem:[%s335 + $0xb18] sm:$0xff]
        %v1369 = vld [vmem:[%s335 + $0xb20] sm:$0xff]
        %v1370 = vld [vmem:[%s335 + $0xb28] sm:$0xff]
        %v1371 = vld [vmem:[%s335 + $0xb30] sm:$0xff]
        %v1372 = vld [vmem:[%s335 + $0xb38] sm:$0xff]
        %v1373 = vld [vmem:[%s335 + $0xb40] sm:$0xff]
        %v1374 = vld [vmem:[%s335 + $0xb48] sm:$0xff]
        %v1375 = vld [vmem:[%s335 + $0xb50] sm:$0xff]
        %v1376 = vld [vmem:[%s335 + $0xb58] sm:$0xff]
        %v1377 = vld [vmem:[%s335 + $0xb60] sm:$0xff]
        %v1378 = vld [vmem:[%s335 + $0xb68] sm:$0xff]
        %v1379 = vld [vmem:[%s335 + $0xb70] sm:$0xff]
        %v1380 = vld [vmem:[%s335 + $0xb78] sm:$0xff]
        %v1381 = vld [vmem:[%s335 + $0xb80] sm:$0xff]
        %v1382 = vld [vmem:[%s335 + $0xb88] sm:$0xff]
        %v1383 = vld [vmem:[%s335 + $0xb90] sm:$0xff]
        %v1384 = vld [vmem:[%s335 + $0xb98] sm:$0xff]
        %v1385 = vld [vmem:[%s335 + $0xba0] sm:$0xff]
        %v1386 = vld [vmem:[%s335 + $0xba8] sm:$0xff]
        %v1387 = vld [vmem:[%s335 + $0xbb0] sm:$0xff]
        %v1388 = vld [vmem:[%s335 + $0xbb8] sm:$0xff]
        %v1389 = vld [vmem:[%s335 + $0xbc0] sm:$0xff]
        %v1390 = vld [vmem:[%s335 + $0xbc8] sm:$0xff]
        %v1391 = vld [vmem:[%s335 + $0xbd0] sm:$0xff]
        %v1392 = vld [vmem:[%s335 + $0xbd8] sm:$0xff]
        %v1393 = vld [vmem:[%s335 + $0xbe0] sm:$0xff]
        %v1394 = vld [vmem:[%s335 + $0xbe8] sm:$0xff]
        %v1395 = vld [vmem:[%s335 + $0xbf0] sm:$0xff]
        %v1396 = vld [vmem:[%s335 + $0xbf8] sm:$0xff]
        %v1397 = vld [vmem:[%s335 + $0xc00] sm:$0xff]
        %v1398 = vld [vmem:[%s335 + $0xc08] sm:$0xff]
        %v1399 = vld [vmem:[%s335 + $0xc10] sm:$0xff]
        %v1400 = vld [vmem:[%s335 + $0xc18] sm:$0xff]
        %v1401 = vld [vmem:[%s335 + $0xc20] sm:$0xff]
        %v1402 = vld [vmem:[%s335 + $0xc28] sm:$0xff]
        %v1403 = vld [vmem:[%s335 + $0xc30] sm:$0xff]
        %v1404 = vld [vmem:[%s335 + $0xc38] sm:$0xff]
        %v1405 = vld [vmem:[%s335 + $0xc40] sm:$0xff]
        %v1406 = vld [vmem:[%s335 + $0xc48] sm:$0xff]
        %v1407 = vld [vmem:[%s335 + $0xc50] sm:$0xff]
        %v1408 = vld [vmem:[%s335 + $0xc58] sm:$0xff]
        %v1409 = vld [vmem:[%s335 + $0xc60] sm:$0xff]
        %v1410 = vld [vmem:[%s335 + $0xc68] sm:$0xff]
        %v1411 = vld [vmem:[%s335 + $0xc70] sm:$0xff]
        %v1412 = vld [vmem:[%s335 + $0xc78] sm:$0xff]
        %v1413 = vld [vmem:[%s335 + $0xc80] sm:$0xff]
        %v1414 = vld [vmem:[%s335 + $0xc88] sm:$0xff]
        %v1415 = vld [vmem:[%s335 + $0xc90] sm:$0xff]
        %v1416 = vld [vmem:[%s335 + $0xc98] sm:$0xff]
        %v1417 = vld [vmem:[%s335 + $0xca0] sm:$0xff]
        %v1418 = vld [vmem:[%s335 + $0xca8] sm:$0xff]
        %v1419 = vld [vmem:[%s335 + $0xcb0] sm:$0xff]
        %v1420 = vld [vmem:[%s335 + $0xcb8] sm:$0xff]
        %v1421 = vld [vmem:[%s335 + $0xcc0] sm:$0xff]
        %v1422 = vld [vmem:[%s335 + $0xcc8] sm:$0xff]
        %v1423 = vld [vmem:[%s335 + $0xcd0] sm:$0xff]
        %v1424 = vld [vmem:[%s335 + $0xcd8] sm:$0xff]
        %v1425 = vld [vmem:[%s335 + $0xce0] sm:$0xff]
        %v1426 = vld [vmem:[%s335 + $0xce8] sm:$0xff]
        %v1427 = vld [vmem:[%s335 + $0xcf0] sm:$0xff]
        %v1428 = vld [vmem:[%s335 + $0xcf8] sm:$0xff]
        %v1429 = vld [vmem:[%s335 + $0xd00] sm:$0xff]
        %v1430 = vld [vmem:[%s335 + $0xd08] sm:$0xff]
        %v1431 = vld [vmem:[%s335 + $0xd10] sm:$0xff]
        %v1432 = vld [vmem:[%s335 + $0xd18] sm:$0xff]
        %v1433 = vld [vmem:[%s335 + $0xd20] sm:$0xff]
        %v1434 = vld [vmem:[%s335 + $0xd28] sm:$0xff]
        %v1435 = vld [vmem:[%s335 + $0xd30] sm:$0xff]
        %v1436 = vld [vmem:[%s335 + $0xd38] sm:$0xff]
        %v1437 = vld [vmem:[%s335 + $0xd40] sm:$0xff]
        %v1438 = vld [vmem:[%s335 + $0xd48] sm:$0xff]
        %v1439 = vld [vmem:[%s335 + $0xd50] sm:$0xff]
        %v1440 = vld [vmem:[%s335 + $0xd58] sm:$0xff]
        %v1441 = vld [vmem:[%s335 + $0xd60] sm:$0xff]
        %v1442 = vld [vmem:[%s335 + $0xd68] sm:$0xff]
        %v1443 = vld [vmem:[%s335 + $0xd70] sm:$0xff]
        %v1444 = vld [vmem:[%s335 + $0xd78] sm:$0xff]
        %v1445 = vld [vmem:[%s335 + $0xd80] sm:$0xff]
        %v1446 = vld [vmem:[%s335 + $0xd88] sm:$0xff]
        %v1447 = vld [vmem:[%s335 + $0xd90] sm:$0xff]
        %v1448 = vld [vmem:[%s335 + $0xd98] sm:$0xff]
        %v1449 = vld [vmem:[%s335 + $0xda0] sm:$0xff]
        %v1450 = vld [vmem:[%s335 + $0xda8] sm:$0xff]
        %v1451 = vld [vmem:[%s335 + $0xdb0] sm:$0xff]
        %v1452 = vld [vmem:[%s335 + $0xdb8] sm:$0xff]
        %v1453 = vld [vmem:[%s335 + $0xdc0] sm:$0xff]
        %v1454 = vld [vmem:[%s335 + $0xdc8] sm:$0xff]
        %v1455 = vld [vmem:[%s335 + $0xdd0] sm:$0xff]
        %v1456 = vld [vmem:[%s335 + $0xdd8] sm:$0xff]
        %v1457 = vld [vmem:[%s335 + $0xde0] sm:$0xff]
        %v1458 = vld [vmem:[%s335 + $0xde8] sm:$0xff]
        %v1459 = vld [vmem:[%s335 + $0xdf0] sm:$0xff]
        %v1460 = vld [vmem:[%s335 + $0xdf8] sm:$0xff]
        %v1461 = vld [vmem:[%s335 + $0xe00] sm:$0xff]
        %v1462 = vld [vmem:[%s335 + $0xe08] sm:$0xff]
        %v1463 = vld [vmem:[%s335 + $0xe10] sm:$0xff]
        %v1464 = vld [vmem:[%s335 + $0xe18] sm:$0xff]
        %v1465 = vld [vmem:[%s335 + $0xe20] sm:$0xff]
        %v1466 = vld [vmem:[%s335 + $0xe28] sm:$0xff]
        %v1467 = vld [vmem:[%s335 + $0xe30] sm:$0xff]
        %v1468 = vld [vmem:[%s335 + $0xe38] sm:$0xff]
        %v1469 = vld [vmem:[%s335 + $0xe40] sm:$0xff]
        %v1470 = vld [vmem:[%s335 + $0xe48] sm:$0xff]
        %v1471 = vld [vmem:[%s335 + $0xe50] sm:$0xff]
        %v1472 = vld [vmem:[%s335 + $0xe58] sm:$0xff]
        %v1473 = vld [vmem:[%s335 + $0xe60] sm:$0xff]
        %v1474 = vld [vmem:[%s335 + $0xe68] sm:$0xff]
        %v1475 = vld [vmem:[%s335 + $0xe70] sm:$0xff]
        %v1476 = vld [vmem:[%s335 + $0xe78] sm:$0xff]
        %v1477 = vld [vmem:[%s335 + $0xe80] sm:$0xff]
        %v1478 = vld [vmem:[%s335 + $0xe88] sm:$0xff]
        %v1479 = vld [vmem:[%s335 + $0xe90] sm:$0xff]
        %v1480 = vld [vmem:[%s335 + $0xe98] sm:$0xff]
        %v1481 = vld [vmem:[%s335 + $0xea0] sm:$0xff]
        %v1482 = vld [vmem:[%s335 + $0xea8] sm:$0xff]
        %v1483 = vld [vmem:[%s335 + $0xeb0] sm:$0xff]
        %v1484 = vld [vmem:[%s335 + $0xeb8] sm:$0xff]
        %v1485 = vld [vmem:[%s335 + $0xec0] sm:$0xff]
        %v1486 = vld [vmem:[%s335 + $0xec8] sm:$0xff]
        %v1487 = vld [vmem:[%s335 + $0xed0] sm:$0xff]
        %v1488 = vld [vmem:[%s335 + $0xed8] sm:$0xff]
        %v1489 = vld [vmem:[%s335 + $0xee0] sm:$0xff]
        %v1490 = vld [vmem:[%s335 + $0xee8] sm:$0xff]
        %v1491 = vld [vmem:[%s335 + $0xef0] sm:$0xff]
        %v1492 = vld [vmem:[%s335 + $0xef8] sm:$0xff]
        %v1493 = vld [vmem:[%s335 + $0xf00] sm:$0xff]
        %v1494 = vld [vmem:[%s335 + $0xf08] sm:$0xff]
        %v1495 = vld [vmem:[%s335 + $0xf10] sm:$0xff]
        %v1496 = vld [vmem:[%s335 + $0xf18] sm:$0xff]
        %v1497 = vld [vmem:[%s335 + $0xf20] sm:$0xff]
        %v1498 = vld [vmem:[%s335 + $0xf28] sm:$0xff]
        %v1499 = vld [vmem:[%s335 + $0xf30] sm:$0xff]
        %v1500 = vld [vmem:[%s335 + $0xf38] sm:$0xff]
        %v1501 = vld [vmem:[%s335 + $0xf40] sm:$0xff]
        %v1502 = vld [vmem:[%s335 + $0xf48] sm:$0xff]
        %v1503 = vld [vmem:[%s335 + $0xf50] sm:$0xff]
        %v1504 = vld [vmem:[%s335 + $0xf58] sm:$0xff]
        %v1505 = vld [vmem:[%s335 + $0xf60] sm:$0xff]
        %v1506 = vld [vmem:[%s335 + $0xf68] sm:$0xff]
        %v1507 = vld [vmem:[%s335 + $0xf70] sm:$0xff]
        %v1508 = vld [vmem:[%s335 + $0xf78] sm:$0xff]
        %v1509 = vld [vmem:[%s335 + $0xf80] sm:$0xff]
        %v1510 = vld [vmem:[%s335 + $0xf88] sm:$0xff]
        %v1511 = vld [vmem:[%s335 + $0xf90] sm:$0xff]
        %v1512 = vld [vmem:[%s335 + $0xf98] sm:$0xff]
        %v1513 = vld [vmem:[%s335 + $0xfa0] sm:$0xff]
        %v1514 = vld [vmem:[%s335 + $0xfa8] sm:$0xff]
        %v1515 = vld [vmem:[%s335 + $0xfb0] sm:$0xff]
        %v1516 = vld [vmem:[%s335 + $0xfb8] sm:$0xff]
        %v1517 = vld [vmem:[%s335 + $0xfc0] sm:$0xff]
        %v1518 = vld [vmem:[%s335 + $0xfc8] sm:$0xff]
        %v1519 = vld [vmem:[%s335 + $0xfd0] sm:$0xff]
        %v1520 = vld [vmem:[%s335 + $0xfd8] sm:$0xff]
        %v1521 = vld [vmem:[%s335 + $0xfe0] sm:$0xff]
        %v1522 = vld [vmem:[%s335 + $0xfe8] sm:$0xff]
        %v1523 = vld [vmem:[%s335 + $0xff0] sm:$0xff]
        %v1524 = vld [vmem:[%s335 + $0xff8] sm:$0xff]
        %v1525 = vld [vmem:[%s335 + $0x1000] sm:$0xff]
        %v1526 = vld [vmem:[%s335 + $0x1008] sm:$0xff]
        %v1527 = vld [vmem:[%s335 + $0x1010] sm:$0xff]
        %v1528 = vld [vmem:[%s335 + $0x1018] sm:$0xff]
        %v1529 = vld [vmem:[%s335 + $0x1020] sm:$0xff]
        %v1530 = vld [vmem:[%s335 + $0x1028] sm:$0xff]
        %v1531 = vld [vmem:[%s335 + $0x1030] sm:$0xff]
        %v1532 = vld [vmem:[%s335 + $0x1038] sm:$0xff]
        %v1533 = vld [vmem:[%s335 + $0x1040] sm:$0xff]
        %v1534 = vld [vmem:[%s335 + $0x1048] sm:$0xff]
        %v1535 = vld [vmem:[%s335 + $0x1050] sm:$0xff]
        %v1536 = vld [vmem:[%s335 + $0x1058] sm:$0xff]
        %v1537 = vld [vmem:[%s335 + $0x1060] sm:$0xff]
        %v1538 = vld [vmem:[%s335 + $0x1068] sm:$0xff]
        %v1539 = vld [vmem:[%s335 + $0x1070] sm:$0xff]
        %v1540 = vld [vmem:[%s335 + $0x1078] sm:$0xff]
        %v1541 = vld [vmem:[%s335 + $0x1080] sm:$0xff]
        %v1542 = vld [vmem:[%s335 + $0x1088] sm:$0xff]
        %v1543 = vld [vmem:[%s335 + $0x1090] sm:$0xff]
        %v1544 = vld [vmem:[%s335 + $0x1098] sm:$0xff]
        %v1545 = vld [vmem:[%s335 + $0x10a0] sm:$0xff]
        %v1546 = vld [vmem:[%s335 + $0x10a8] sm:$0xff]
        %v1547 = vld [vmem:[%s335 + $0x10b0] sm:$0xff]
        %v1548 = vld [vmem:[%s335 + $0x10b8] sm:$0xff]
        %v1549 = vld [vmem:[%s335 + $0x10c0] sm:$0xff]
        %v1550 = vld [vmem:[%s335 + $0x10c8] sm:$0xff]
        %v1551 = vld [vmem:[%s335 + $0x10d0] sm:$0xff]
        %v1552 = vld [vmem:[%s335 + $0x10d8] sm:$0xff]
        %v1553 = vld [vmem:[%s335 + $0x10e0] sm:$0xff]
        %v1554 = vld [vmem:[%s335 + $0x10e8] sm:$0xff]
        %v1555 = vld [vmem:[%s335 + $0x10f0] sm:$0xff]
        %v1556 = vld [vmem:[%s335 + $0x10f8] sm:$0xff]
        %v1557 = vld [vmem:[%s335 + $0x1100] sm:$0xff]
        %v1558 = vld [vmem:[%s335 + $0x1108] sm:$0xff]
        %v1559 = vld [vmem:[%s335 + $0x1110] sm:$0xff]
        %v1560 = vld [vmem:[%s335 + $0x1118] sm:$0xff]
        %v1561 = vld [vmem:[%s335 + $0x1120] sm:$0xff]
        %v1562 = vld [vmem:[%s335 + $0x1128] sm:$0xff]
        %v1563 = vld [vmem:[%s335 + $0x1130] sm:$0xff]
        %v1564 = vld [vmem:[%s335 + $0x1138] sm:$0xff]
        %v1565 = vld [vmem:[%s335 + $0x1140] sm:$0xff]
        %v1566 = vld [vmem:[%s335 + $0x1148] sm:$0xff]
        %v1567 = vld [vmem:[%s335 + $0x1150] sm:$0xff]
        %v1568 = vld [vmem:[%s335 + $0x1158] sm:$0xff]
        %v1569 = vld [vmem:[%s335 + $0x1160] sm:$0xff]
        %v1570 = vld [vmem:[%s335 + $0x1168] sm:$0xff]
        %v1571 = vld [vmem:[%s335 + $0x1170] sm:$0xff]
        %v1572 = vld [vmem:[%s335 + $0x1178] sm:$0xff]
        %v1573 = vld [vmem:[%s335 + $0x1180] sm:$0xff]
        %v1574 = vld [vmem:[%s335 + $0x1188] sm:$0xff]
        %v1575 = vld [vmem:[%s335 + $0x1190] sm:$0xff]
        %v1576 = vld [vmem:[%s335 + $0x1198] sm:$0xff]
        %v1577 = vld [vmem:[%s335 + $0x11a0] sm:$0xff]
        %v1578 = vld [vmem:[%s335 + $0x11a8] sm:$0xff]
        %v1579 = vld [vmem:[%s335 + $0x11b0] sm:$0xff]
        %v1580 = vld [vmem:[%s335 + $0x11b8] sm:$0xff]
        %v1581 = vld [vmem:[%s335 + $0x11c0] sm:$0xff]
        %v1582 = vld [vmem:[%s335 + $0x11c8] sm:$0xff]
        %v1583 = vld [vmem:[%s335 + $0x11d0] sm:$0xff]
        %v1584 = vld [vmem:[%s335 + $0x11d8] sm:$0xff]
        %v1585 = vld [vmem:[%s335 + $0x11e0] sm:$0xff]
        %v1586 = vld [vmem:[%s335 + $0x11e8] sm:$0xff]
        %v1587 = vld [vmem:[%s335 + $0x11f0] sm:$0xff]
        %v1588 = vld [vmem:[%s335 + $0x11f8] sm:$0xff]
        %v1589 = vld [vmem:[%s335 + $0x1200] sm:$0xff]
        %v1590 = vld [vmem:[%s335 + $0x1208] sm:$0xff]
        %v1591 = vld [vmem:[%s335 + $0x1210] sm:$0xff]
        %v1592 = vld [vmem:[%s335 + $0x1218] sm:$0xff]
        %v1593 = vld [vmem:[%s335 + $0x1220] sm:$0xff]
        %v1594 = vld [vmem:[%s335 + $0x1228] sm:$0xff]
        %v1595 = vld [vmem:[%s335 + $0x1230] sm:$0xff]
        %v1596 = vld [vmem:[%s335 + $0x1238] sm:$0xff]
        %v1597 = vld [vmem:[%s335 + $0x1240] sm:$0xff]
        %v1598 = vld [vmem:[%s335 + $0x1248] sm:$0xff]
        %v1599 = vld [vmem:[%s335 + $0x1250] sm:$0xff]
        %v1600 = vld [vmem:[%s335 + $0x1258] sm:$0xff]
        %v1601 = vld [vmem:[%s335 + $0x1260] sm:$0xff]
        %v1602 = vld [vmem:[%s335 + $0x1268] sm:$0xff]
        %v1603 = vld [vmem:[%s335 + $0x1270] sm:$0xff]
        %v1604 = vld [vmem:[%s335 + $0x1278] sm:$0xff]
        %v1605 = vld [vmem:[%s335 + $0x1280] sm:$0xff]
        %v1606 = vld [vmem:[%s335 + $0x1288] sm:$0xff]
        %v1607 = vld [vmem:[%s335 + $0x1290] sm:$0xff]
        %v1608 = vld [vmem:[%s335 + $0x1298] sm:$0xff]
        %v1609 = vld [vmem:[%s335 + $0x12a0] sm:$0xff]
        %v1610 = vld [vmem:[%s335 + $0x12a8] sm:$0xff]
        %v1611 = vld [vmem:[%s335 + $0x12b0] sm:$0xff]
        %v1612 = vld [vmem:[%s335 + $0x12b8] sm:$0xff]
        %v1613 = vld [vmem:[%s335 + $0x12c0] sm:$0xff]
        %v1614 = vld [vmem:[%s335 + $0x12c8] sm:$0xff]
        %v1615 = vld [vmem:[%s335 + $0x12d0] sm:$0xff]
        %v1616 = vld [vmem:[%s335 + $0x12d8] sm:$0xff]
        %v1617 = vld [vmem:[%s335 + $0x12e0] sm:$0xff]
        %v1618 = vld [vmem:[%s335 + $0x12e8] sm:$0xff]
        %v1619 = vld [vmem:[%s335 + $0x12f0] sm:$0xff]
        %v1620 = vld [vmem:[%s335 + $0x12f8] sm:$0xff]
        %v1621 = vld [vmem:[%s335 + $0x1300] sm:$0xff]
        %v1622 = vld [vmem:[%s335 + $0x1308] sm:$0xff]
        %v1623 = vld [vmem:[%s335 + $0x1310] sm:$0xff]
        %v1624 = vld [vmem:[%s335 + $0x1318] sm:$0xff]
        %v1625 = vld [vmem:[%s335 + $0x1320] sm:$0xff]
        %v1626 = vld [vmem:[%s335 + $0x1328] sm:$0xff]
        %v1627 = vld [vmem:[%s335 + $0x1330] sm:$0xff]
        %v1628 = vld [vmem:[%s335 + $0x1338] sm:$0xff]
        %v1629 = vld [vmem:[%s335 + $0x1340] sm:$0xff]
        %v1630 = vld [vmem:[%s335 + $0x1348] sm:$0xff]
        %v1631 = vld [vmem:[%s335 + $0x1350] sm:$0xff]
        %v1632 = vld [vmem:[%s335 + $0x1358] sm:$0xff]
        %v1633 = vld [vmem:[%s335 + $0x1360] sm:$0xff]
        %v1634 = vld [vmem:[%s335 + $0x1368] sm:$0xff]
        %v1635 = vld [vmem:[%s335 + $0x1370] sm:$0xff]
        %v1636 = vld [vmem:[%s335 + $0x1378] sm:$0xff]
        %v1637 = vld [vmem:[%s335 + $0x1380] sm:$0xff]
        %v1638 = vld [vmem:[%s335 + $0x1388] sm:$0xff]
        %v1639 = vld [vmem:[%s335 + $0x1390] sm:$0xff]
        %v1640 = vld [vmem:[%s335 + $0x1398] sm:$0xff]
        %v1641 = vld [vmem:[%s335 + $0x13a0] sm:$0xff]
        %v1642 = vld [vmem:[%s335 + $0x13a8] sm:$0xff]
        %v1643 = vld [vmem:[%s335 + $0x13b0] sm:$0xff]
        %v1644 = vld [vmem:[%s335 + $0x13b8] sm:$0xff]
        %v1645 = vld [vmem:[%s335 + $0x13c0] sm:$0xff]
        %v1646 = vld [vmem:[%s335 + $0x13c8] sm:$0xff]
        %v1647 = vld [vmem:[%s335 + $0x13d0] sm:$0xff]
        %v1648 = vld [vmem:[%s335 + $0x13d8] sm:$0xff]
        %v1649 = vld [vmem:[%s335 + $0x13e0] sm:$0xff]
        %v1650 = vld [vmem:[%s335 + $0x13e8] sm:$0xff]
        %v1651 = vld [vmem:[%s335 + $0x13f0] sm:$0xff]
        %v1652 = vld [vmem:[%s335 + $0x13f8] sm:$0xff]
        %v1653 = vld [vmem:[%s335 + $0x1400] sm:$0xff]
        %v1654 = vld [vmem:[%s335 + $0x1408] sm:$0xff]
        %v1655 = vld [vmem:[%s335 + $0x1410] sm:$0xff]
        %v1656 = vld [vmem:[%s335 + $0x1418] sm:$0xff]
        %v1657 = vld [vmem:[%s335 + $0x1420] sm:$0xff]
        %v1658 = vld [vmem:[%s335 + $0x1428] sm:$0xff]
        %v1659 = vld [vmem:[%s335 + $0x1430] sm:$0xff]
        %v1660 = vld [vmem:[%s335 + $0x1438] sm:$0xff]
        %v1661 = vld [vmem:[%s335 + $0x1440] sm:$0xff]
        %v1662 = vld [vmem:[%s335 + $0x1448] sm:$0xff]
        %v1663 = vld [vmem:[%s335 + $0x1450] sm:$0xff]
        %v1664 = vld [vmem:[%s335 + $0x1458] sm:$0xff]
        %v1665 = vld [vmem:[%s335 + $0x1460] sm:$0xff]
        %v1666 = vld [vmem:[%s335 + $0x1468] sm:$0xff]
        %v1667 = vld [vmem:[%s335 + $0x1470] sm:$0xff]
        %v1668 = vld [vmem:[%s335 + $0x1478] sm:$0xff]
        %v1669 = vld [vmem:[%s335 + $0x1480] sm:$0xff]
        %v1670 = vld [vmem:[%s335 + $0x1488] sm:$0xff]
        %v1671 = vld [vmem:[%s335 + $0x1490] sm:$0xff]
        %v1672 = vld [vmem:[%s335 + $0x1498] sm:$0xff]
        %v1673 = vld [vmem:[%s335 + $0x14a0] sm:$0xff]
        %v1674 = vld [vmem:[%s335 + $0x14a8] sm:$0xff]
        %v1675 = vld [vmem:[%s335 + $0x14b0] sm:$0xff]
        %v1676 = vld [vmem:[%s335 + $0x14b8] sm:$0xff]
        %v1677 = vld [vmem:[%s335 + $0x14c0] sm:$0xff]
        %v1678 = vld [vmem:[%s335 + $0x14c8] sm:$0xff]
        %v1679 = vld [vmem:[%s335 + $0x14d0] sm:$0xff]
        %v1680 = vld [vmem:[%s335 + $0x14d8] sm:$0xff]
        %v1681 = vld [vmem:[%s335 + $0x14e0] sm:$0xff]
        %v1682 = vld [vmem:[%s335 + $0x14e8] sm:$0xff]
        %v1683 = vld [vmem:[%s335 + $0x14f0] sm:$0xff]
        %v1684 = vld [vmem:[%s335 + $0x14f8] sm:$0xff]
        %v1685 = vld [vmem:[%s335 + $0x1500] sm:$0xff]
        %v1686 = vld [vmem:[%s335 + $0x1508] sm:$0xff]
        %v1687 = vld [vmem:[%s335 + $0x1510] sm:$0xff]
        %v1688 = vld [vmem:[%s335 + $0x1518] sm:$0xff]
        %v1689 = vld [vmem:[%s335 + $0x1520] sm:$0xff]
        %v1690 = vld [vmem:[%s335 + $0x1528] sm:$0xff]
        %v1691 = vld [vmem:[%s335 + $0x1530] sm:$0xff]
        %v1692 = vld [vmem:[%s335 + $0x1538] sm:$0xff]
        %v1693 = vld [vmem:[%s335 + $0x1540] sm:$0xff]
        %v1694 = vld [vmem:[%s335 + $0x1548] sm:$0xff]
        %v1695 = vld [vmem:[%s335 + $0x1550] sm:$0xff]
        %v1696 = vld [vmem:[%s335 + $0x1558] sm:$0xff]
        %v1697 = vld [vmem:[%s335 + $0x1560] sm:$0xff]
        %v1698 = vld [vmem:[%s335 + $0x1568] sm:$0xff]
        %v1699 = vld [vmem:[%s335 + $0x1570] sm:$0xff]
        %v1700 = vld [vmem:[%s335 + $0x1578] sm:$0xff]
        %v1701 = vld [vmem:[%s335 + $0x1580] sm:$0xff]
        %v1702 = vld [vmem:[%s335 + $0x1588] sm:$0xff]
        %v1703 = vld [vmem:[%s335 + $0x1590] sm:$0xff]
        %v1704 = vld [vmem:[%s335 + $0x1598] sm:$0xff]
        %v1705 = vld [vmem:[%s335 + $0x15a0] sm:$0xff]
        %v1706 = vld [vmem:[%s335 + $0x15a8] sm:$0xff]
        %v1707 = vld [vmem:[%s335 + $0x15b0] sm:$0xff]
        %v1708 = vld [vmem:[%s335 + $0x15b8] sm:$0xff]
        %v1709 = vld [vmem:[%s335 + $0x15c0] sm:$0xff]
        %v1710 = vld [vmem:[%s335 + $0x15c8] sm:$0xff]
        %v1711 = vld [vmem:[%s335 + $0x15d0] sm:$0xff]
        %v1712 = vld [vmem:[%s335 + $0x15d8] sm:$0xff]
        %v1713 = vld [vmem:[%s335 + $0x15e0] sm:$0xff]
        %v1714 = vld [vmem:[%s335 + $0x15e8] sm:$0xff]
        %v1715 = vld [vmem:[%s335 + $0x15f0] sm:$0xff]
        %v1716 = vld [vmem:[%s335 + $0x15f8] sm:$0xff]
        %v1717 = vld [vmem:[%s335 + $0x1600] sm:$0xff]
        %v1718 = vld [vmem:[%s335 + $0x1608] sm:$0xff]
        %v1719 = vld [vmem:[%s335 + $0x1610] sm:$0xff]
        %v1720 = vld [vmem:[%s335 + $0x1618] sm:$0xff]
        %v1721 = vld [vmem:[%s335 + $0x1620] sm:$0xff]
        %v1722 = vld [vmem:[%s335 + $0x1628] sm:$0xff]
        %v1723 = vld [vmem:[%s335 + $0x1630] sm:$0xff]
        %v1724 = vld [vmem:[%s335 + $0x1638] sm:$0xff]
        %v1725 = vld [vmem:[%s335 + $0x1640] sm:$0xff]
        %v1726 = vld [vmem:[%s335 + $0x1648] sm:$0xff]
        %v1727 = vld [vmem:[%s335 + $0x1650] sm:$0xff]
        %v1728 = vld [vmem:[%s335 + $0x1658] sm:$0xff]
        %v1729 = vld [vmem:[%s335 + $0x1660] sm:$0xff]
        %v1730 = vld [vmem:[%s335 + $0x1668] sm:$0xff]
        %v1731 = vld [vmem:[%s335 + $0x1670] sm:$0xff]
        %v1732 = vld [vmem:[%s335 + $0x1678] sm:$0xff]
        %v1733 = vld [vmem:[%s335 + $0x1680] sm:$0xff]
        %v1734 = vld [vmem:[%s335 + $0x1688] sm:$0xff]
        %v1735 = vld [vmem:[%s335 + $0x1690] sm:$0xff]
        %v1736 = vld [vmem:[%s335 + $0x1698] sm:$0xff]
        %v1737 = vld [vmem:[%s335 + $0x16a0] sm:$0xff]
        %v1738 = vld [vmem:[%s335 + $0x16a8] sm:$0xff]
        %v1739 = vld [vmem:[%s335 + $0x16b0] sm:$0xff]
        %v1740 = vld [vmem:[%s335 + $0x16b8] sm:$0xff]
        %v1741 = vld [vmem:[%s335 + $0x16c0] sm:$0xff]
        %v1742 = vld [vmem:[%s335 + $0x16c8] sm:$0xff]
        %v1743 = vld [vmem:[%s335 + $0x16d0] sm:$0xff]
        %v1744 = vld [vmem:[%s335 + $0x16d8] sm:$0xff]
        %v1745 = vld [vmem:[%s335 + $0x16e0] sm:$0xff]
        %v1746 = vld [vmem:[%s335 + $0x16e8] sm:$0xff]
        %v1747 = vld [vmem:[%s335 + $0x16f0] sm:$0xff]
        %v1748 = vld [vmem:[%s335 + $0x16f8] sm:$0xff]
        %v1749 = vld [vmem:[%s335 + $0x1700] sm:$0xff]
        %v1750 = vld [vmem:[%s335 + $0x1708] sm:$0xff]
        %v1751 = vld [vmem:[%s335 + $0x1710] sm:$0xff]
        %v1752 = vld [vmem:[%s335 + $0x1718] sm:$0xff]
        %v1753 = vld [vmem:[%s335 + $0x1720] sm:$0xff]
        %v1754 = vld [vmem:[%s335 + $0x1728] sm:$0xff]
        %v1755 = vld [vmem:[%s335 + $0x1730] sm:$0xff]
        %v1756 = vld [vmem:[%s335 + $0x1738] sm:$0xff]
        %v1757 = vld [vmem:[%s335 + $0x1740] sm:$0xff]
        %v1758 = vld [vmem:[%s335 + $0x1748] sm:$0xff]
        %v1759 = vld [vmem:[%s335 + $0x1750] sm:$0xff]
        %v1760 = vld [vmem:[%s335 + $0x1758] sm:$0xff]
        %v1761 = vld [vmem:[%s335 + $0x1760] sm:$0xff]
        %v1762 = vld [vmem:[%s335 + $0x1768] sm:$0xff]
        %v1763 = vld [vmem:[%s335 + $0x1770] sm:$0xff]
        %v1764 = vld [vmem:[%s335 + $0x1778] sm:$0xff]
        %v1765 = vld [vmem:[%s335 + $0x1780] sm:$0xff]
        %v1766 = vld [vmem:[%s335 + $0x1788] sm:$0xff]
        %v1767 = vld [vmem:[%s335 + $0x1790] sm:$0xff]
        %v1768 = vld [vmem:[%s335 + $0x1798] sm:$0xff]
        %v1769 = vld [vmem:[%s335 + $0x17a0] sm:$0xff]
        %v1770 = vld [vmem:[%s335 + $0x17a8] sm:$0xff]
        %v1771 = vld [vmem:[%s335 + $0x17b0] sm:$0xff]
        %v1772 = vld [vmem:[%s335 + $0x17b8] sm:$0xff]
        %v1773 = vld [vmem:[%s335 + $0x17c0] sm:$0xff]
        %v1774 = vld [vmem:[%s335 + $0x17c8] sm:$0xff]
        %v1775 = vld [vmem:[%s335 + $0x17d0] sm:$0xff]
        %v1776 = vld [vmem:[%s335 + $0x17d8] sm:$0xff]
        %v1777 = vld [vmem:[%s335 + $0x17e0] sm:$0xff]
        %v1778 = vld [vmem:[%s335 + $0x17e8] sm:$0xff]
        %v1779 = vld [vmem:[%s335 + $0x17f0] sm:$0xff]
        %v1780 = vld [vmem:[%s335 + $0x17f8] sm:$0xff]
        %v1781 = vld [vmem:[%s335 + $0x1800] sm:$0xff]
        %v1782 = vld [vmem:[%s335 + $0x1808] sm:$0xff]
        %v1783 = vld [vmem:[%s335 + $0x1810] sm:$0xff]
        %v1784 = vld [vmem:[%s335 + $0x1818] sm:$0xff]
        %v1785 = vld [vmem:[%s335 + $0x1820] sm:$0xff]
        %v1786 = vld [vmem:[%s335 + $0x1828] sm:$0xff]
        %v1787 = vld [vmem:[%s335 + $0x1830] sm:$0xff]
        %v1788 = vld [vmem:[%s335 + $0x1838] sm:$0xff]
        %v1789 = vld [vmem:[%s335 + $0x1840] sm:$0xff]
        %v1790 = vld [vmem:[%s335 + $0x1848] sm:$0xff]
        %v1791 = vld [vmem:[%s335 + $0x1850] sm:$0xff]
        %v1792 = vld [vmem:[%s335 + $0x1858] sm:$0xff]
        %v1793 = vld [vmem:[%s335 + $0x1860] sm:$0xff]
        %v1794 = vld [vmem:[%s335 + $0x1868] sm:$0xff]
        %v1795 = vld [vmem:[%s335 + $0x1870] sm:$0xff]
        %v1796 = vld [vmem:[%s335 + $0x1878] sm:$0xff]
        %v1797 = vld [vmem:[%s335 + $0x1880] sm:$0xff]
        %v1798 = vld [vmem:[%s335 + $0x1888] sm:$0xff]
        %v1799 = vld [vmem:[%s335 + $0x1890] sm:$0xff]
        %v1800 = vld [vmem:[%s335 + $0x1898] sm:$0xff]
        %v1801 = vld [vmem:[%s335 + $0x18a0] sm:$0xff]
        %v1802 = vld [vmem:[%s335 + $0x18a8] sm:$0xff]
        %v1803 = vld [vmem:[%s335 + $0x18b0] sm:$0xff]
        %v1804 = vld [vmem:[%s335 + $0x18b8] sm:$0xff]
        %v1805 = vld [vmem:[%s335 + $0x18c0] sm:$0xff]
        %v1806 = vld [vmem:[%s335 + $0x18c8] sm:$0xff]
        %v1807 = vld [vmem:[%s335 + $0x18d0] sm:$0xff]
        %v1808 = vld [vmem:[%s335 + $0x18d8] sm:$0xff]
        %v1809 = vld [vmem:[%s335 + $0x18e0] sm:$0xff]
        %v1810 = vld [vmem:[%s335 + $0x18e8] sm:$0xff]
        %v1811 = vld [vmem:[%s335 + $0x18f0] sm:$0xff]
        %v1812 = vld [vmem:[%s335 + $0x18f8] sm:$0xff]
        %v1813 = vld [vmem:[%s335 + $0x1900] sm:$0xff]
        %v1814 = vld [vmem:[%s335 + $0x1908] sm:$0xff]
        %v1815 = vld [vmem:[%s335 + $0x1910] sm:$0xff]
        %v1816 = vld [vmem:[%s335 + $0x1918] sm:$0xff]
        %v1817 = vld [vmem:[%s335 + $0x1920] sm:$0xff]
        %v1818 = vld [vmem:[%s335 + $0x1928] sm:$0xff]
        %v1819 = vld [vmem:[%s335 + $0x1930] sm:$0xff]
        %v1820 = vld [vmem:[%s335 + $0x1938] sm:$0xff]
        %v1821 = vld [vmem:[%s335 + $0x1940] sm:$0xff]
        %v1822 = vld [vmem:[%s335 + $0x1948] sm:$0xff]
        %v1823 = vld [vmem:[%s335 + $0x1950] sm:$0xff]
        %v1824 = vld [vmem:[%s335 + $0x1958] sm:$0xff]
        %v1825 = vld [vmem:[%s335 + $0x1960] sm:$0xff]
        %v1826 = vld [vmem:[%s335 + $0x1968] sm:$0xff]
        %v1827 = vld [vmem:[%s335 + $0x1970] sm:$0xff]
        %v1828 = vld [vmem:[%s335 + $0x1978] sm:$0xff]
        %v1829 = vld [vmem:[%s335 + $0x1980] sm:$0xff]
        %v1830 = vld [vmem:[%s335 + $0x1988] sm:$0xff]
        %v1831 = vld [vmem:[%s335 + $0x1990] sm:$0xff]
        %v1832 = vld [vmem:[%s335 + $0x1998] sm:$0xff]
        %v1833 = vld [vmem:[%s335 + $0x19a0] sm:$0xff]
        %v1834 = vld [vmem:[%s335 + $0x19a8] sm:$0xff]
        %v1835 = vld [vmem:[%s335 + $0x19b0] sm:$0xff]
        %v1836 = vld [vmem:[%s335 + $0x19b8] sm:$0xff]
        %v1837 = vld [vmem:[%s335 + $0x19c0] sm:$0xff]
        %v1838 = vld [vmem:[%s335 + $0x19c8] sm:$0xff]
        %v1839 = vld [vmem:[%s335 + $0x19d0] sm:$0xff]
        %v1840 = vld [vmem:[%s335 + $0x19d8] sm:$0xff]
        %v1841 = vld [vmem:[%s335 + $0x19e0] sm:$0xff]
        %v1842 = vld [vmem:[%s335 + $0x19e8] sm:$0xff]
        %v1843 = vld [vmem:[%s335 + $0x19f0] sm:$0xff]
        %v1844 = vld [vmem:[%s335 + $0x19f8] sm:$0xff]
        %v1845 = vld [vmem:[%s335 + $0x1a00] sm:$0xff]
        %v1846 = vld [vmem:[%s335 + $0x1a08] sm:$0xff]
        %v1847 = vld [vmem:[%s335 + $0x1a10] sm:$0xff]
        %v1848 = vld [vmem:[%s335 + $0x1a18] sm:$0xff]
        %v1849 = vld [vmem:[%s335 + $0x1a20] sm:$0xff]
        %v1850 = vld [vmem:[%s335 + $0x1a28] sm:$0xff]
        %v1851 = vld [vmem:[%s335 + $0x1a30] sm:$0xff]
        %v1852 = vld [vmem:[%s335 + $0x1a38] sm:$0xff]
        %v1853 = vld [vmem:[%s335 + $0x1a40] sm:$0xff]
        %v1854 = vld [vmem:[%s335 + $0x1a48] sm:$0xff]
        %v1855 = vld [vmem:[%s335 + $0x1a50] sm:$0xff]
        %v1856 = vld [vmem:[%s335 + $0x1a58] sm:$0xff]
        %v1857 = vld [vmem:[%s335 + $0x1a60] sm:$0xff]
        %v1858 = vld [vmem:[%s335 + $0x1a68] sm:$0xff]
        %v1859 = vld [vmem:[%s335 + $0x1a70] sm:$0xff]
        %v1860 = vld [vmem:[%s335 + $0x1a78] sm:$0xff]
        %v1861 = vld [vmem:[%s335 + $0x1a80] sm:$0xff]
        %v1862 = vld [vmem:[%s335 + $0x1a88] sm:$0xff]
        %v1863 = vld [vmem:[%s335 + $0x1a90] sm:$0xff]
        %v1864 = vld [vmem:[%s335 + $0x1a98] sm:$0xff]
        %v1865 = vld [vmem:[%s335 + $0x1aa0] sm:$0xff]
        %v1866 = vld [vmem:[%s335 + $0x1aa8] sm:$0xff]
        %v1867 = vld [vmem:[%s335 + $0x1ab0] sm:$0xff]
        %v1868 = vld [vmem:[%s335 + $0x1ab8] sm:$0xff]
        %v1869 = vld [vmem:[%s335 + $0x1ac0] sm:$0xff]
        %v1870 = vld [vmem:[%s335 + $0x1ac8] sm:$0xff]
        %v1871 = vld [vmem:[%s335 + $0x1ad0] sm:$0xff]
        %v1872 = vld [vmem:[%s335 + $0x1ad8] sm:$0xff]
        %v1873 = vld [vmem:[%s335 + $0x1ae0] sm:$0xff]
        %v1874 = vld [vmem:[%s335 + $0x1ae8] sm:$0xff]
        %v1875 = vld [vmem:[%s335 + $0x1af0] sm:$0xff]
        %v1876 = vld [vmem:[%s335 + $0x1af8] sm:$0xff]
        %v1877 = vld [vmem:[%s335 + $0x1b00] sm:$0xff]
        %v1878 = vld [vmem:[%s335 + $0x1b08] sm:$0xff]
        %v1879 = vld [vmem:[%s335 + $0x1b10] sm:$0xff]
        %v1880 = vld [vmem:[%s335 + $0x1b18] sm:$0xff]
        %v1881 = vld [vmem:[%s335 + $0x1b20] sm:$0xff]
        %v1882 = vld [vmem:[%s335 + $0x1b28] sm:$0xff]
        %v1883 = vld [vmem:[%s335 + $0x1b30] sm:$0xff]
        %v1884 = vld [vmem:[%s335 + $0x1b38] sm:$0xff]
        %v1885 = vld [vmem:[%s335 + $0x1b40] sm:$0xff]
        %v1886 = vld [vmem:[%s335 + $0x1b48] sm:$0xff]
        %v1887 = vld [vmem:[%s335 + $0x1b50] sm:$0xff]
        %v1888 = vld [vmem:[%s335 + $0x1b58] sm:$0xff]
        %v1889 = vld [vmem:[%s335 + $0x1b60] sm:$0xff]
        %v1890 = vld [vmem:[%s335 + $0x1b68] sm:$0xff]
        %v1891 = vld [vmem:[%s335 + $0x1b70] sm:$0xff]
        %v1892 = vld [vmem:[%s335 + $0x1b78] sm:$0xff]
        %v1893 = vld [vmem:[%s335 + $0x1b80] sm:$0xff]
        %v1894 = vld [vmem:[%s335 + $0x1b88] sm:$0xff]
        %v1895 = vld [vmem:[%s335 + $0x1b90] sm:$0xff]
        %v1896 = vld [vmem:[%s335 + $0x1b98] sm:$0xff]
        %v1897 = vld [vmem:[%s335 + $0x1ba0] sm:$0xff]
        %v1898 = vld [vmem:[%s335 + $0x1ba8] sm:$0xff]
        %v1899 = vld [vmem:[%s335 + $0x1bb0] sm:$0xff]
        %v1900 = vld [vmem:[%s335 + $0x1bb8] sm:$0xff]
        %v1901 = vld [vmem:[%s335 + $0x1bc0] sm:$0xff]
        %v1902 = vld [vmem:[%s335 + $0x1bc8] sm:$0xff]
        %v1903 = vld [vmem:[%s335 + $0x1bd0] sm:$0xff]
        %v1904 = vld [vmem:[%s335 + $0x1bd8] sm:$0xff]
        %v1905 = vld [vmem:[%s335 + $0x1be0] sm:$0xff]
        %v1906 = vld [vmem:[%s335 + $0x1be8] sm:$0xff]
        %v1907 = vld [vmem:[%s335 + $0x1bf0] sm:$0xff]
        %v1908 = vld [vmem:[%s335 + $0x1bf8] sm:$0xff]
        %v1909 = vld [vmem:[%s335 + $0x1c00] sm:$0xff]
        %v1910 = vld [vmem:[%s335 + $0x1c08] sm:$0xff]
        %v1911 = vld [vmem:[%s335 + $0x1c10] sm:$0xff]
        %v1912 = vld [vmem:[%s335 + $0x1c18] sm:$0xff]
        %v1913 = vld [vmem:[%s335 + $0x1c20] sm:$0xff]
        %v1914 = vld [vmem:[%s335 + $0x1c28] sm:$0xff]
        %v1915 = vld [vmem:[%s335 + $0x1c30] sm:$0xff]
        %v1916 = vld [vmem:[%s335 + $0x1c38] sm:$0xff]
        %v1917 = vld [vmem:[%s335 + $0x1c40] sm:$0xff]
        %v1918 = vld [vmem:[%s335 + $0x1c48] sm:$0xff]
        %v1919 = vld [vmem:[%s335 + $0x1c50] sm:$0xff]
        %v1920 = vld [vmem:[%s335 + $0x1c58] sm:$0xff]
        %v1921 = vld [vmem:[%s335 + $0x1c60] sm:$0xff]
        %v1922 = vld [vmem:[%s335 + $0x1c68] sm:$0xff]
        %v1923 = vld [vmem:[%s335 + $0x1c70] sm:$0xff]
        %v1924 = vld [vmem:[%s335 + $0x1c78] sm:$0xff]
        %v1925 = vld [vmem:[%s335 + $0x1c80] sm:$0xff]
        %v1926 = vld [vmem:[%s335 + $0x1c88] sm:$0xff]
        %v1927 = vld [vmem:[%s335 + $0x1c90] sm:$0xff]
        %v1928 = vld [vmem:[%s335 + $0x1c98] sm:$0xff]
        %v1929 = vld [vmem:[%s335 + $0x1ca0] sm:$0xff]
        %v1930 = vld [vmem:[%s335 + $0x1ca8] sm:$0xff]
        %v1931 = vld [vmem:[%s335 + $0x1cb0] sm:$0xff]
        %v1932 = vld [vmem:[%s335 + $0x1cb8] sm:$0xff]
        %v1933 = vld [vmem:[%s335 + $0x1cc0] sm:$0xff]
        %v1934 = vld [vmem:[%s335 + $0x1cc8] sm:$0xff]
        %v1935 = vld [vmem:[%s335 + $0x1cd0] sm:$0xff]
        %v1936 = vld [vmem:[%s335 + $0x1cd8] sm:$0xff]
        %v1937 = vld [vmem:[%s335 + $0x1ce0] sm:$0xff]
        %v1938 = vld [vmem:[%s335 + $0x1ce8] sm:$0xff]
        %v1939 = vld [vmem:[%s335 + $0x1cf0] sm:$0xff]
        %v1940 = vld [vmem:[%s335 + $0x1cf8] sm:$0xff]
        %v1941 = vld [vmem:[%s335 + $0x1d00] sm:$0xff]
        %v1942 = vld [vmem:[%s335 + $0x1d08] sm:$0xff]
        %v1943 = vld [vmem:[%s335 + $0x1d10] sm:$0xff]
        %v1944 = vld [vmem:[%s335 + $0x1d18] sm:$0xff]
        %v1945 = vld [vmem:[%s335 + $0x1d20] sm:$0xff]
        %v1946 = vld [vmem:[%s335 + $0x1d28] sm:$0xff]
        %v1947 = vld [vmem:[%s335 + $0x1d30] sm:$0xff]
        %v1948 = vld [vmem:[%s335 + $0x1d38] sm:$0xff]
        %v1949 = vld [vmem:[%s335 + $0x1d40] sm:$0xff]
        %v1950 = vld [vmem:[%s335 + $0x1d48] sm:$0xff]
        %v1951 = vld [vmem:[%s335 + $0x1d50] sm:$0xff]
        %v1952 = vld [vmem:[%s335 + $0x1d58] sm:$0xff]
        %v1953 = vld [vmem:[%s335 + $0x1d60] sm:$0xff]
        %v1954 = vld [vmem:[%s335 + $0x1d68] sm:$0xff]
        %v1955 = vld [vmem:[%s335 + $0x1d70] sm:$0xff]
        %v1956 = vld [vmem:[%s335 + $0x1d78] sm:$0xff]
        %v1957 = vld [vmem:[%s335 + $0x1d80] sm:$0xff]
        %v1958 = vld [vmem:[%s335 + $0x1d88] sm:$0xff]
        %v1959 = vld [vmem:[%s335 + $0x1d90] sm:$0xff]
        %v1960 = vld [vmem:[%s335 + $0x1d98] sm:$0xff]
        %v1961 = vld [vmem:[%s335 + $0x1da0] sm:$0xff]
        %v1962 = vld [vmem:[%s335 + $0x1da8] sm:$0xff]
        %v1963 = vld [vmem:[%s335 + $0x1db0] sm:$0xff]
        %v1964 = vld [vmem:[%s335 + $0x1db8] sm:$0xff]
        %v1965 = vld [vmem:[%s335 + $0x1dc0] sm:$0xff]
        %v1966 = vld [vmem:[%s335 + $0x1dc8] sm:$0xff]
        %v1967 = vld [vmem:[%s335 + $0x1dd0] sm:$0xff]
        %v1968 = vld [vmem:[%s335 + $0x1dd8] sm:$0xff]
        %v1969 = vld [vmem:[%s335 + $0x1de0] sm:$0xff]
        %v1970 = vld [vmem:[%s335 + $0x1de8] sm:$0xff]
        %v1971 = vld [vmem:[%s335 + $0x1df0] sm:$0xff]
        %v1972 = vld [vmem:[%s335 + $0x1df8] sm:$0xff]
        %v1973 = vld [vmem:[%s335 + $0x1e00] sm:$0xff]
        %v1974 = vld [vmem:[%s335 + $0x1e08] sm:$0xff]
        %v1975 = vld [vmem:[%s335 + $0x1e10] sm:$0xff]
        %v1976 = vld [vmem:[%s335 + $0x1e18] sm:$0xff]
        %v1977 = vld [vmem:[%s335 + $0x1e20] sm:$0xff]
        %v1978 = vld [vmem:[%s335 + $0x1e28] sm:$0xff]
        %v1979 = vld [vmem:[%s335 + $0x1e30] sm:$0xff]
        %v1980 = vld [vmem:[%s335 + $0x1e38] sm:$0xff]
        %v1981 = vld [vmem:[%s335 + $0x1e40] sm:$0xff]
        %v1982 = vld [vmem:[%s335 + $0x1e48] sm:$0xff]
        %v1983 = vld [vmem:[%s335 + $0x1e50] sm:$0xff]
        %v1984 = vld [vmem:[%s335 + $0x1e58] sm:$0xff]
        %v1985 = vld [vmem:[%s335 + $0x1e60] sm:$0xff]
        %v1986 = vld [vmem:[%s335 + $0x1e68] sm:$0xff]
        %v1987 = vld [vmem:[%s335 + $0x1e70] sm:$0xff]
        %v1988 = vld [vmem:[%s335 + $0x1e78] sm:$0xff]
        %v1989 = vld [vmem:[%s335 + $0x1e80] sm:$0xff]
        %v1990 = vld [vmem:[%s335 + $0x1e88] sm:$0xff]
        %v1991 = vld [vmem:[%s335 + $0x1e90] sm:$0xff]
        %v1992 = vld [vmem:[%s335 + $0x1e98] sm:$0xff]
        %v1993 = vld [vmem:[%s335 + $0x1ea0] sm:$0xff]
        %v1994 = vld [vmem:[%s335 + $0x1ea8] sm:$0xff]
        %v1995 = vld [vmem:[%s335 + $0x1eb0] sm:$0xff]
        %v1996 = vld [vmem:[%s335 + $0x1eb8] sm:$0xff]
        %v1997 = vld [vmem:[%s335 + $0x1ec0] sm:$0xff]
        %v1998 = vld [vmem:[%s335 + $0x1ec8] sm:$0xff]
        %v1999 = vld [vmem:[%s335 + $0x1ed0] sm:$0xff]
        %v2000 = vld [vmem:[%s335 + $0x1ed8] sm:$0xff]
        %v2001 = vld [vmem:[%s335 + $0x1ee0] sm:$0xff]
        %v2002 = vld [vmem:[%s335 + $0x1ee8] sm:$0xff]
        %v2003 = vld [vmem:[%s335 + $0x1ef0] sm:$0xff]
        %v2004 = vld [vmem:[%s335 + $0x1ef8] sm:$0xff]
        %v2005 = vld [vmem:[%s335 + $0x1f00] sm:$0xff]
        %v2006 = vld [vmem:[%s335 + $0x1f08] sm:$0xff]
        %v2007 = vld [vmem:[%s335 + $0x1f10] sm:$0xff]
        %v2008 = vld [vmem:[%s335 + $0x1f18] sm:$0xff]
        %v2009 = vld [vmem:[%s335 + $0x1f20] sm:$0xff]
        %v2010 = vld [vmem:[%s335 + $0x1f28] sm:$0xff]
        %v2011 = vld [vmem:[%s335 + $0x1f30] sm:$0xff]
        %v2012 = vld [vmem:[%s335 + $0x1f38] sm:$0xff]
        %v2013 = vld [vmem:[%s335 + $0x1f40] sm:$0xff]
        %v2014 = vld [vmem:[%s335 + $0x1f48] sm:$0xff]
        %v2015 = vld [vmem:[%s335 + $0x1f50] sm:$0xff]
        %v2016 = vld [vmem:[%s335 + $0x1f58] sm:$0xff]
        %v2017 = vld [vmem:[%s335 + $0x1f60] sm:$0xff]
        %v2018 = vld [vmem:[%s335 + $0x1f68] sm:$0xff]
        %v2019 = vld [vmem:[%s335 + $0x1f70] sm:$0xff]
        %v2020 = vld [vmem:[%s335 + $0x1f78] sm:$0xff]
        %v2021 = vld [vmem:[%s335 + $0x1f80] sm:$0xff]
        %v2022 = vld [vmem:[%s335 + $0x1f88] sm:$0xff]
        %v2023 = vld [vmem:[%s335 + $0x1f90] sm:$0xff]
        %v2024 = vld [vmem:[%s335 + $0x1f98] sm:$0xff]
        %v2025 = vld [vmem:[%s335 + $0x1fa0] sm:$0xff]
        %v2026 = vld [vmem:[%s335 + $0x1fa8] sm:$0xff]
        %v2027 = vld [vmem:[%s335 + $0x1fb0] sm:$0xff]
        %v2028 = vld [vmem:[%s335 + $0x1fb8] sm:$0xff]
        %v2029 = vld [vmem:[%s335 + $0x1fc0] sm:$0xff]
        %v2030 = vld [vmem:[%s335 + $0x1fc8] sm:$0xff]
        %v2031 = vld [vmem:[%s335 + $0x1fd0] sm:$0xff]
        %v2032 = vld [vmem:[%s335 + $0x1fd8] sm:$0xff]
        %v2033 = vld [vmem:[%s335 + $0x1fe0] sm:$0xff]
        %v2034 = vld [vmem:[%s335 + $0x1fe8] sm:$0xff]
        %v2035 = vld [vmem:[%s335 + $0x1ff0] sm:$0xff]
        %v2036 = vld [vmem:[%s335 + $0x1ff8] sm:$0xff]
        %v2037 = vld [vmem:[%s344] sm:$0xff]
        %v2039 = vlaneseq
        %v2040 = vshrl.u32 %v2039, 7
        %v2041 = vsub.s32 0, %v2040
        %v2042 = vrot.slane %v2037, %v2041
        %v2043 = vlaneseq
        %v2044 = vshrl.u32 %v2043, 7
        %v2045 = vsub.s32 1, %v2044
        %v2046 = vrot.slane %v2037, %v2045
        %v2047 = vlaneseq
        %v2048 = vshrl.u32 %v2047, 7
        %v2049 = vsub.s32 2, %v2048
        %v2050 = vrot.slane %v2037, %v2049
        %v2051 = vlaneseq
        %v2052 = vshrl.u32 %v2051, 7
        %v2053 = vsub.s32 3, %v2052
        %v2054 = vrot.slane %v2037, %v2053
        %v2055 = vlaneseq
        %v2056 = vshrl.u32 %v2055, 7
        %v2057 = vsub.s32 4, %v2056
        %v2058 = vrot.slane %v2037, %v2057
        %v2059 = vlaneseq
        %v2060 = vshrl.u32 %v2059, 7
        %v2061 = vsub.s32 5, %v2060
        %v2062 = vrot.slane %v2037, %v2061
        %v2063 = vlaneseq
        %v2064 = vshrl.u32 %v2063, 7
        %v2065 = vsub.s32 6, %v2064
        %v2066 = vrot.slane %v2037, %v2065
        %v2067 = vlaneseq
        %v2068 = vshrl.u32 %v2067, 7
        %v2069 = vsub.s32 7, %v2068
        %v2070 = vrot.slane %v2037, %v2069
        %v3103 = vunpack.c.l.b16 %v1013
        %v3104 = vunpack.c.h.b16 %v1013
        %v3105 = vunpack.c.l.b16 %v1014
        %v3106 = vunpack.c.h.b16 %v1014
        %v3107 = vunpack.c.l.b16 %v1015
        %v3108 = vunpack.c.h.b16 %v1015
        %v3109 = vunpack.c.l.b16 %v1016
        %v3110 = vunpack.c.h.b16 %v1016
        %v3111 = vunpack.c.l.b16 %v1017
        %v3112 = vunpack.c.h.b16 %v1017
        %v3113 = vunpack.c.l.b16 %v1018
        %v3114 = vunpack.c.h.b16 %v1018
        %v3115 = vunpack.c.l.b16 %v1019
        %v3116 = vunpack.c.h.b16 %v1019
        %v3117 = vunpack.c.l.b16 %v1020
        %v3118 = vunpack.c.h.b16 %v1020
        %v3119 = vunpack.c.l.b16 %v1021
        %v3120 = vunpack.c.h.b16 %v1021
        %v3121 = vunpack.c.l.b16 %v1022
        %v3122 = vunpack.c.h.b16 %v1022
        %v3123 = vunpack.c.l.b16 %v1023
        %v3124 = vunpack.c.h.b16 %v1023
        %v3125 = vunpack.c.l.b16 %v1024
        %v3126 = vunpack.c.h.b16 %v1024
        %v3127 = vunpack.c.l.b16 %v1025
        %v3128 = vunpack.c.h.b16 %v1025
        %v3129 = vunpack.c.l.b16 %v1026
        %v3130 = vunpack.c.h.b16 %v1026
        %v3131 = vunpack.c.l.b16 %v1027
        %v3132 = vunpack.c.h.b16 %v1027
        %v3133 = vunpack.c.l.b16 %v1028
        %v3134 = vunpack.c.h.b16 %v1028
        %v3135 = vunpack.c.l.b16 %v1029
        %v3136 = vunpack.c.h.b16 %v1029
        %v3137 = vunpack.c.l.b16 %v1030
        %v3138 = vunpack.c.h.b16 %v1030
        %v3139 = vunpack.c.l.b16 %v1031
        %v3140 = vunpack.c.h.b16 %v1031
        %v3141 = vunpack.c.l.b16 %v1032
        %v3142 = vunpack.c.h.b16 %v1032
        %v3143 = vunpack.c.l.b16 %v1033
        %v3144 = vunpack.c.h.b16 %v1033
        %v3145 = vunpack.c.l.b16 %v1034
        %v3146 = vunpack.c.h.b16 %v1034
        %v3147 = vunpack.c.l.b16 %v1035
        %v3148 = vunpack.c.h.b16 %v1035
        %v3149 = vunpack.c.l.b16 %v1036
        %v3150 = vunpack.c.h.b16 %v1036
        %v3151 = vunpack.c.l.b16 %v1037
        %v3152 = vunpack.c.h.b16 %v1037
        %v3153 = vunpack.c.l.b16 %v1038
        %v3154 = vunpack.c.h.b16 %v1038
        %v3155 = vunpack.c.l.b16 %v1039
        %v3156 = vunpack.c.h.b16 %v1039
        %v3157 = vunpack.c.l.b16 %v1040
        %v3158 = vunpack.c.h.b16 %v1040
        %v3159 = vunpack.c.l.b16 %v1041
        %v3160 = vunpack.c.h.b16 %v1041
        %v3161 = vunpack.c.l.b16 %v1042
        %v3162 = vunpack.c.h.b16 %v1042
        %v3163 = vunpack.c.l.b16 %v1043
        %v3164 = vunpack.c.h.b16 %v1043
        %v3165 = vunpack.c.l.b16 %v1044
        %v3166 = vunpack.c.h.b16 %v1044
        %v3167 = vunpack.c.l.b16 %v1045
        %v3168 = vunpack.c.h.b16 %v1045
        %v3169 = vunpack.c.l.b16 %v1046
        %v3170 = vunpack.c.h.b16 %v1046
        %v3171 = vunpack.c.l.b16 %v1047
        %v3172 = vunpack.c.h.b16 %v1047
        %v3173 = vunpack.c.l.b16 %v1048
        %v3174 = vunpack.c.h.b16 %v1048
        %v3175 = vunpack.c.l.b16 %v1049
        %v3176 = vunpack.c.h.b16 %v1049
        %v3177 = vunpack.c.l.b16 %v1050
        %v3178 = vunpack.c.h.b16 %v1050
        %v3179 = vunpack.c.l.b16 %v1051
        %v3180 = vunpack.c.h.b16 %v1051
        %v3181 = vunpack.c.l.b16 %v1052
        %v3182 = vunpack.c.h.b16 %v1052
        %v3183 = vunpack.c.l.b16 %v1053
        %v3184 = vunpack.c.h.b16 %v1053
        %v3185 = vunpack.c.l.b16 %v1054
        %v3186 = vunpack.c.h.b16 %v1054
        %v3187 = vunpack.c.l.b16 %v1055
        %v3188 = vunpack.c.h.b16 %v1055
        %v3189 = vunpack.c.l.b16 %v1056
        %v3190 = vunpack.c.h.b16 %v1056
        %v3191 = vunpack.c.l.b16 %v1057
        %v3192 = vunpack.c.h.b16 %v1057
        %v3193 = vunpack.c.l.b16 %v1058
        %v3194 = vunpack.c.h.b16 %v1058
        %v3195 = vunpack.c.l.b16 %v1059
        %v3196 = vunpack.c.h.b16 %v1059
        %v3197 = vunpack.c.l.b16 %v1060
        %v3198 = vunpack.c.h.b16 %v1060
        %v3199 = vunpack.c.l.b16 %v1061
        %v3200 = vunpack.c.h.b16 %v1061
        %v3201 = vunpack.c.l.b16 %v1062
        %v3202 = vunpack.c.h.b16 %v1062
        %v3203 = vunpack.c.l.b16 %v1063
        %v3204 = vunpack.c.h.b16 %v1063
        %v3205 = vunpack.c.l.b16 %v1064
        %v3206 = vunpack.c.h.b16 %v1064
        %v3207 = vunpack.c.l.b16 %v1065
        %v3208 = vunpack.c.h.b16 %v1065
        %v3209 = vunpack.c.l.b16 %v1066
        %v3210 = vunpack.c.h.b16 %v1066
        %v3211 = vunpack.c.l.b16 %v1067
        %v3212 = vunpack.c.h.b16 %v1067
        %v3213 = vunpack.c.l.b16 %v1068
        %v3214 = vunpack.c.h.b16 %v1068
        %v3215 = vunpack.c.l.b16 %v1069
        %v3216 = vunpack.c.h.b16 %v1069
        %v3217 = vunpack.c.l.b16 %v1070
        %v3218 = vunpack.c.h.b16 %v1070
        %v3219 = vunpack.c.l.b16 %v1071
        %v3220 = vunpack.c.h.b16 %v1071
        %v3221 = vunpack.c.l.b16 %v1072
        %v3222 = vunpack.c.h.b16 %v1072
        %v3223 = vunpack.c.l.b16 %v1073
        %v3224 = vunpack.c.h.b16 %v1073
        %v3225 = vunpack.c.l.b16 %v1074
        %v3226 = vunpack.c.h.b16 %v1074
        %v3227 = vunpack.c.l.b16 %v1075
        %v3228 = vunpack.c.h.b16 %v1075
        %v3229 = vunpack.c.l.b16 %v1076
        %v3230 = vunpack.c.h.b16 %v1076
        %v3231 = vunpack.c.l.b16 %v1077
        %v3232 = vunpack.c.h.b16 %v1077
        %v3233 = vunpack.c.l.b16 %v1078
        %v3234 = vunpack.c.h.b16 %v1078
        %v3235 = vunpack.c.l.b16 %v1079
        %v3236 = vunpack.c.h.b16 %v1079
        %v3237 = vunpack.c.l.b16 %v1080
        %v3238 = vunpack.c.h.b16 %v1080
        %v3239 = vunpack.c.l.b16 %v1081
        %v3240 = vunpack.c.h.b16 %v1081
        %v3241 = vunpack.c.l.b16 %v1082
        %v3242 = vunpack.c.h.b16 %v1082
        %v3243 = vunpack.c.l.b16 %v1083
        %v3244 = vunpack.c.h.b16 %v1083
        %v3245 = vunpack.c.l.b16 %v1084
        %v3246 = vunpack.c.h.b16 %v1084
        %v3247 = vunpack.c.l.b16 %v1085
        %v3248 = vunpack.c.h.b16 %v1085
        %v3249 = vunpack.c.l.b16 %v1086
        %v3250 = vunpack.c.h.b16 %v1086
        %v3251 = vunpack.c.l.b16 %v1087
        %v3252 = vunpack.c.h.b16 %v1087
        %v3253 = vunpack.c.l.b16 %v1088
        %v3254 = vunpack.c.h.b16 %v1088
        %v3255 = vunpack.c.l.b16 %v1089
        %v3256 = vunpack.c.h.b16 %v1089
        %v3257 = vunpack.c.l.b16 %v1090
        %v3258 = vunpack.c.h.b16 %v1090
        %v3259 = vunpack.c.l.b16 %v1091
        %v3260 = vunpack.c.h.b16 %v1091
        %v3261 = vunpack.c.l.b16 %v1092
        %v3262 = vunpack.c.h.b16 %v1092
        %v3263 = vunpack.c.l.b16 %v1093
        %v3264 = vunpack.c.h.b16 %v1093
        %v3265 = vunpack.c.l.b16 %v1094
        %v3266 = vunpack.c.h.b16 %v1094
        %v3267 = vunpack.c.l.b16 %v1095
        %v3268 = vunpack.c.h.b16 %v1095
        %v3269 = vunpack.c.l.b16 %v1096
        %v3270 = vunpack.c.h.b16 %v1096
        %v3271 = vunpack.c.l.b16 %v1097
        %v3272 = vunpack.c.h.b16 %v1097
        %v3273 = vunpack.c.l.b16 %v1098
        %v3274 = vunpack.c.h.b16 %v1098
        %v3275 = vunpack.c.l.b16 %v1099
        %v3276 = vunpack.c.h.b16 %v1099
        %v3277 = vunpack.c.l.b16 %v1100
        %v3278 = vunpack.c.h.b16 %v1100
        %v3279 = vunpack.c.l.b16 %v1101
        %v3280 = vunpack.c.h.b16 %v1101
        %v3281 = vunpack.c.l.b16 %v1102
        %v3282 = vunpack.c.h.b16 %v1102
        %v3283 = vunpack.c.l.b16 %v1103
        %v3284 = vunpack.c.h.b16 %v1103
        %v3285 = vunpack.c.l.b16 %v1104
        %v3286 = vunpack.c.h.b16 %v1104
        %v3287 = vunpack.c.l.b16 %v1105
        %v3288 = vunpack.c.h.b16 %v1105
        %v3289 = vunpack.c.l.b16 %v1106
        %v3290 = vunpack.c.h.b16 %v1106
        %v3291 = vunpack.c.l.b16 %v1107
        %v3292 = vunpack.c.h.b16 %v1107
        %v3293 = vunpack.c.l.b16 %v1108
        %v3294 = vunpack.c.h.b16 %v1108
        %v3295 = vunpack.c.l.b16 %v1109
        %v3296 = vunpack.c.h.b16 %v1109
        %v3297 = vunpack.c.l.b16 %v1110
        %v3298 = vunpack.c.h.b16 %v1110
        %v3299 = vunpack.c.l.b16 %v1111
        %v3300 = vunpack.c.h.b16 %v1111
        %v3301 = vunpack.c.l.b16 %v1112
        %v3302 = vunpack.c.h.b16 %v1112
        %v3303 = vunpack.c.l.b16 %v1113
        %v3304 = vunpack.c.h.b16 %v1113
        %v3305 = vunpack.c.l.b16 %v1114
        %v3306 = vunpack.c.h.b16 %v1114
        %v3307 = vunpack.c.l.b16 %v1115
        %v3308 = vunpack.c.h.b16 %v1115
        %v3309 = vunpack.c.l.b16 %v1116
        %v3310 = vunpack.c.h.b16 %v1116
        %v3311 = vunpack.c.l.b16 %v1117
        %v3312 = vunpack.c.h.b16 %v1117
        %v3313 = vunpack.c.l.b16 %v1118
        %v3314 = vunpack.c.h.b16 %v1118
        %v3315 = vunpack.c.l.b16 %v1119
        %v3316 = vunpack.c.h.b16 %v1119
        %v3317 = vunpack.c.l.b16 %v1120
        %v3318 = vunpack.c.h.b16 %v1120
        %v3319 = vunpack.c.l.b16 %v1121
        %v3320 = vunpack.c.h.b16 %v1121
        %v3321 = vunpack.c.l.b16 %v1122
        %v3322 = vunpack.c.h.b16 %v1122
        %v3323 = vunpack.c.l.b16 %v1123
        %v3324 = vunpack.c.h.b16 %v1123
        %v3325 = vunpack.c.l.b16 %v1124
        %v3326 = vunpack.c.h.b16 %v1124
        %v3327 = vunpack.c.l.b16 %v1125
        %v3328 = vunpack.c.h.b16 %v1125
        %v3329 = vunpack.c.l.b16 %v1126
        %v3330 = vunpack.c.h.b16 %v1126
        %v3331 = vunpack.c.l.b16 %v1127
        %v3332 = vunpack.c.h.b16 %v1127
        %v3333 = vunpack.c.l.b16 %v1128
        %v3334 = vunpack.c.h.b16 %v1128
        %v3335 = vunpack.c.l.b16 %v1129
        %v3336 = vunpack.c.h.b16 %v1129
        %v3337 = vunpack.c.l.b16 %v1130
        %v3338 = vunpack.c.h.b16 %v1130
        %v3339 = vunpack.c.l.b16 %v1131
        %v3340 = vunpack.c.h.b16 %v1131
        %v3341 = vunpack.c.l.b16 %v1132
        %v3342 = vunpack.c.h.b16 %v1132
        %v3343 = vunpack.c.l.b16 %v1133
        %v3344 = vunpack.c.h.b16 %v1133
        %v3345 = vunpack.c.l.b16 %v1134
        %v3346 = vunpack.c.h.b16 %v1134
        %v3347 = vunpack.c.l.b16 %v1135
        %v3348 = vunpack.c.h.b16 %v1135
        %v3349 = vunpack.c.l.b16 %v1136
        %v3350 = vunpack.c.h.b16 %v1136
        %v3351 = vunpack.c.l.b16 %v1137
        %v3352 = vunpack.c.h.b16 %v1137
        %v3353 = vunpack.c.l.b16 %v1138
        %v3354 = vunpack.c.h.b16 %v1138
        %v3355 = vunpack.c.l.b16 %v1139
        %v3356 = vunpack.c.h.b16 %v1139
        %v3357 = vunpack.c.l.b16 %v1140
        %v3358 = vunpack.c.h.b16 %v1140
        %v3359 = vunpack.c.l.b16 %v1141
        %v3360 = vunpack.c.h.b16 %v1141
        %v3361 = vunpack.c.l.b16 %v1142
        %v3362 = vunpack.c.h.b16 %v1142
        %v3363 = vunpack.c.l.b16 %v1143
        %v3364 = vunpack.c.h.b16 %v1143
        %v3365 = vunpack.c.l.b16 %v1144
        %v3366 = vunpack.c.h.b16 %v1144
        %v3367 = vunpack.c.l.b16 %v1145
        %v3368 = vunpack.c.h.b16 %v1145
        %v3369 = vunpack.c.l.b16 %v1146
        %v3370 = vunpack.c.h.b16 %v1146
        %v3371 = vunpack.c.l.b16 %v1147
        %v3372 = vunpack.c.h.b16 %v1147
        %v3373 = vunpack.c.l.b16 %v1148
        %v3374 = vunpack.c.h.b16 %v1148
        %v3375 = vunpack.c.l.b16 %v1149
        %v3376 = vunpack.c.h.b16 %v1149
        %v3377 = vunpack.c.l.b16 %v1150
        %v3378 = vunpack.c.h.b16 %v1150
        %v3379 = vunpack.c.l.b16 %v1151
        %v3380 = vunpack.c.h.b16 %v1151
        %v3381 = vunpack.c.l.b16 %v1152
        %v3382 = vunpack.c.h.b16 %v1152
        %v3383 = vunpack.c.l.b16 %v1153
        %v3384 = vunpack.c.h.b16 %v1153
        %v3385 = vunpack.c.l.b16 %v1154
        %v3386 = vunpack.c.h.b16 %v1154
        %v3387 = vunpack.c.l.b16 %v1155
        %v3388 = vunpack.c.h.b16 %v1155
        %v3389 = vunpack.c.l.b16 %v1156
        %v3390 = vunpack.c.h.b16 %v1156
        %v3391 = vunpack.c.l.b16 %v1157
        %v3392 = vunpack.c.h.b16 %v1157
        %v3393 = vunpack.c.l.b16 %v1158
        %v3394 = vunpack.c.h.b16 %v1158
        %v3395 = vunpack.c.l.b16 %v1159
        %v3396 = vunpack.c.h.b16 %v1159
        %v3397 = vunpack.c.l.b16 %v1160
        %v3398 = vunpack.c.h.b16 %v1160
        %v3399 = vunpack.c.l.b16 %v1161
        %v3400 = vunpack.c.h.b16 %v1161
        %v3401 = vunpack.c.l.b16 %v1162
        %v3402 = vunpack.c.h.b16 %v1162
        %v3403 = vunpack.c.l.b16 %v1163
        %v3404 = vunpack.c.h.b16 %v1163
        %v3405 = vunpack.c.l.b16 %v1164
        %v3406 = vunpack.c.h.b16 %v1164
        %v3407 = vunpack.c.l.b16 %v1165
        %v3408 = vunpack.c.h.b16 %v1165
        %v3409 = vunpack.c.l.b16 %v1166
        %v3410 = vunpack.c.h.b16 %v1166
        %v3411 = vunpack.c.l.b16 %v1167
        %v3412 = vunpack.c.h.b16 %v1167
        %v3413 = vunpack.c.l.b16 %v1168
        %v3414 = vunpack.c.h.b16 %v1168
        %v3415 = vunpack.c.l.b16 %v1169
        %v3416 = vunpack.c.h.b16 %v1169
        %v3417 = vunpack.c.l.b16 %v1170
        %v3418 = vunpack.c.h.b16 %v1170
        %v3419 = vunpack.c.l.b16 %v1171
        %v3420 = vunpack.c.h.b16 %v1171
        %v3421 = vunpack.c.l.b16 %v1172
        %v3422 = vunpack.c.h.b16 %v1172
        %v3423 = vunpack.c.l.b16 %v1173
        %v3424 = vunpack.c.h.b16 %v1173
        %v3425 = vunpack.c.l.b16 %v1174
        %v3426 = vunpack.c.h.b16 %v1174
        %v3427 = vunpack.c.l.b16 %v1175
        %v3428 = vunpack.c.h.b16 %v1175
        %v3429 = vunpack.c.l.b16 %v1176
        %v3430 = vunpack.c.h.b16 %v1176
        %v3431 = vunpack.c.l.b16 %v1177
        %v3432 = vunpack.c.h.b16 %v1177
        %v3433 = vunpack.c.l.b16 %v1178
        %v3434 = vunpack.c.h.b16 %v1178
        %v3435 = vunpack.c.l.b16 %v1179
        %v3436 = vunpack.c.h.b16 %v1179
        %v3437 = vunpack.c.l.b16 %v1180
        %v3438 = vunpack.c.h.b16 %v1180
        %v3439 = vunpack.c.l.b16 %v1181
        %v3440 = vunpack.c.h.b16 %v1181
        %v3441 = vunpack.c.l.b16 %v1182
        %v3442 = vunpack.c.h.b16 %v1182
        %v3443 = vunpack.c.l.b16 %v1183
        %v3444 = vunpack.c.h.b16 %v1183
        %v3445 = vunpack.c.l.b16 %v1184
        %v3446 = vunpack.c.h.b16 %v1184
        %v3447 = vunpack.c.l.b16 %v1185
        %v3448 = vunpack.c.h.b16 %v1185
        %v3449 = vunpack.c.l.b16 %v1186
        %v3450 = vunpack.c.h.b16 %v1186
        %v3451 = vunpack.c.l.b16 %v1187
        %v3452 = vunpack.c.h.b16 %v1187
        %v3453 = vunpack.c.l.b16 %v1188
        %v3454 = vunpack.c.h.b16 %v1188
        %v3455 = vunpack.c.l.b16 %v1189
        %v3456 = vunpack.c.h.b16 %v1189
        %v3457 = vunpack.c.l.b16 %v1190
        %v3458 = vunpack.c.h.b16 %v1190
        %v3459 = vunpack.c.l.b16 %v1191
        %v3460 = vunpack.c.h.b16 %v1191
        %v3461 = vunpack.c.l.b16 %v1192
        %v3462 = vunpack.c.h.b16 %v1192
        %v3463 = vunpack.c.l.b16 %v1193
        %v3464 = vunpack.c.h.b16 %v1193
        %v3465 = vunpack.c.l.b16 %v1194
        %v3466 = vunpack.c.h.b16 %v1194
        %v3467 = vunpack.c.l.b16 %v1195
        %v3468 = vunpack.c.h.b16 %v1195
        %v3469 = vunpack.c.l.b16 %v1196
        %v3470 = vunpack.c.h.b16 %v1196
        %v3471 = vunpack.c.l.b16 %v1197
        %v3472 = vunpack.c.h.b16 %v1197
        %v3473 = vunpack.c.l.b16 %v1198
        %v3474 = vunpack.c.h.b16 %v1198
        %v3475 = vunpack.c.l.b16 %v1199
        %v3476 = vunpack.c.h.b16 %v1199
        %v3477 = vunpack.c.l.b16 %v1200
        %v3478 = vunpack.c.h.b16 %v1200
        %v3479 = vunpack.c.l.b16 %v1201
        %v3480 = vunpack.c.h.b16 %v1201
        %v3481 = vunpack.c.l.b16 %v1202
        %v3482 = vunpack.c.h.b16 %v1202
        %v3483 = vunpack.c.l.b16 %v1203
        %v3484 = vunpack.c.h.b16 %v1203
        %v3485 = vunpack.c.l.b16 %v1204
        %v3486 = vunpack.c.h.b16 %v1204
        %v3487 = vunpack.c.l.b16 %v1205
        %v3488 = vunpack.c.h.b16 %v1205
        %v3489 = vunpack.c.l.b16 %v1206
        %v3490 = vunpack.c.h.b16 %v1206
        %v3491 = vunpack.c.l.b16 %v1207
        %v3492 = vunpack.c.h.b16 %v1207
        %v3493 = vunpack.c.l.b16 %v1208
        %v3494 = vunpack.c.h.b16 %v1208
        %v3495 = vunpack.c.l.b16 %v1209
        %v3496 = vunpack.c.h.b16 %v1209
        %v3497 = vunpack.c.l.b16 %v1210
        %v3498 = vunpack.c.h.b16 %v1210
        %v3499 = vunpack.c.l.b16 %v1211
        %v3500 = vunpack.c.h.b16 %v1211
        %v3501 = vunpack.c.l.b16 %v1212
        %v3502 = vunpack.c.h.b16 %v1212
        %v3503 = vunpack.c.l.b16 %v1213
        %v3504 = vunpack.c.h.b16 %v1213
        %v3505 = vunpack.c.l.b16 %v1214
        %v3506 = vunpack.c.h.b16 %v1214
        %v3507 = vunpack.c.l.b16 %v1215
        %v3508 = vunpack.c.h.b16 %v1215
        %v3509 = vunpack.c.l.b16 %v1216
        %v3510 = vunpack.c.h.b16 %v1216
        %v3511 = vunpack.c.l.b16 %v1217
        %v3512 = vunpack.c.h.b16 %v1217
        %v3513 = vunpack.c.l.b16 %v1218
        %v3514 = vunpack.c.h.b16 %v1218
        %v3515 = vunpack.c.l.b16 %v1219
        %v3516 = vunpack.c.h.b16 %v1219
        %v3517 = vunpack.c.l.b16 %v1220
        %v3518 = vunpack.c.h.b16 %v1220
        %v3519 = vunpack.c.l.b16 %v1221
        %v3520 = vunpack.c.h.b16 %v1221
        %v3521 = vunpack.c.l.b16 %v1222
        %v3522 = vunpack.c.h.b16 %v1222
        %v3523 = vunpack.c.l.b16 %v1223
        %v3524 = vunpack.c.h.b16 %v1223
        %v3525 = vunpack.c.l.b16 %v1224
        %v3526 = vunpack.c.h.b16 %v1224
        %v3527 = vunpack.c.l.b16 %v1225
        %v3528 = vunpack.c.h.b16 %v1225
        %v3529 = vunpack.c.l.b16 %v1226
        %v3530 = vunpack.c.h.b16 %v1226
        %v3531 = vunpack.c.l.b16 %v1227
        %v3532 = vunpack.c.h.b16 %v1227
        %v3533 = vunpack.c.l.b16 %v1228
        %v3534 = vunpack.c.h.b16 %v1228
        %v3535 = vunpack.c.l.b16 %v1229
        %v3536 = vunpack.c.h.b16 %v1229
        %v3537 = vunpack.c.l.b16 %v1230
        %v3538 = vunpack.c.h.b16 %v1230
        %v3539 = vunpack.c.l.b16 %v1231
        %v3540 = vunpack.c.h.b16 %v1231
        %v3541 = vunpack.c.l.b16 %v1232
        %v3542 = vunpack.c.h.b16 %v1232
        %v3543 = vunpack.c.l.b16 %v1233
        %v3544 = vunpack.c.h.b16 %v1233
        %v3545 = vunpack.c.l.b16 %v1234
        %v3546 = vunpack.c.h.b16 %v1234
        %v3547 = vunpack.c.l.b16 %v1235
        %v3548 = vunpack.c.h.b16 %v1235
        %v3549 = vunpack.c.l.b16 %v1236
        %v3550 = vunpack.c.h.b16 %v1236
        %v3551 = vunpack.c.l.b16 %v1237
        %v3552 = vunpack.c.h.b16 %v1237
        %v3553 = vunpack.c.l.b16 %v1238
        %v3554 = vunpack.c.h.b16 %v1238
        %v3555 = vunpack.c.l.b16 %v1239
        %v3556 = vunpack.c.h.b16 %v1239
        %v3557 = vunpack.c.l.b16 %v1240
        %v3558 = vunpack.c.h.b16 %v1240
        %v3559 = vunpack.c.l.b16 %v1241
        %v3560 = vunpack.c.h.b16 %v1241
        %v3561 = vunpack.c.l.b16 %v1242
        %v3562 = vunpack.c.h.b16 %v1242
        %v3563 = vunpack.c.l.b16 %v1243
        %v3564 = vunpack.c.h.b16 %v1243
        %v3565 = vunpack.c.l.b16 %v1244
        %v3566 = vunpack.c.h.b16 %v1244
        %v3567 = vunpack.c.l.b16 %v1245
        %v3568 = vunpack.c.h.b16 %v1245
        %v3569 = vunpack.c.l.b16 %v1246
        %v3570 = vunpack.c.h.b16 %v1246
        %v3571 = vunpack.c.l.b16 %v1247
        %v3572 = vunpack.c.h.b16 %v1247
        %v3573 = vunpack.c.l.b16 %v1248
        %v3574 = vunpack.c.h.b16 %v1248
        %v3575 = vunpack.c.l.b16 %v1249
        %v3576 = vunpack.c.h.b16 %v1249
        %v3577 = vunpack.c.l.b16 %v1250
        %v3578 = vunpack.c.h.b16 %v1250
        %v3579 = vunpack.c.l.b16 %v1251
        %v3580 = vunpack.c.h.b16 %v1251
        %v3581 = vunpack.c.l.b16 %v1252
        %v3582 = vunpack.c.h.b16 %v1252
        %v3583 = vunpack.c.l.b16 %v1253
        %v3584 = vunpack.c.h.b16 %v1253
        %v3585 = vunpack.c.l.b16 %v1254
        %v3586 = vunpack.c.h.b16 %v1254
        %v3587 = vunpack.c.l.b16 %v1255
        %v3588 = vunpack.c.h.b16 %v1255
        %v3589 = vunpack.c.l.b16 %v1256
        %v3590 = vunpack.c.h.b16 %v1256
        %v3591 = vunpack.c.l.b16 %v1257
        %v3592 = vunpack.c.h.b16 %v1257
        %v3593 = vunpack.c.l.b16 %v1258
        %v3594 = vunpack.c.h.b16 %v1258
        %v3595 = vunpack.c.l.b16 %v1259
        %v3596 = vunpack.c.h.b16 %v1259
        %v3597 = vunpack.c.l.b16 %v1260
        %v3598 = vunpack.c.h.b16 %v1260
        %v3599 = vunpack.c.l.b16 %v1261
        %v3600 = vunpack.c.h.b16 %v1261
        %v3601 = vunpack.c.l.b16 %v1262
        %v3602 = vunpack.c.h.b16 %v1262
        %v3603 = vunpack.c.l.b16 %v1263
        %v3604 = vunpack.c.h.b16 %v1263
        %v3605 = vunpack.c.l.b16 %v1264
        %v3606 = vunpack.c.h.b16 %v1264
        %v3607 = vunpack.c.l.b16 %v1265
        %v3608 = vunpack.c.h.b16 %v1265
        %v3609 = vunpack.c.l.b16 %v1266
        %v3610 = vunpack.c.h.b16 %v1266
        %v3611 = vunpack.c.l.b16 %v1267
        %v3612 = vunpack.c.h.b16 %v1267
        %v3613 = vunpack.c.l.b16 %v1268
        %v3614 = vunpack.c.h.b16 %v1268
        %v3615 = vunpack.c.l.b16 %v1269
        %v3616 = vunpack.c.h.b16 %v1269
        %v3617 = vunpack.c.l.b16 %v1270
        %v3618 = vunpack.c.h.b16 %v1270
        %v3619 = vunpack.c.l.b16 %v1271
        %v3620 = vunpack.c.h.b16 %v1271
        %v3621 = vunpack.c.l.b16 %v1272
        %v3622 = vunpack.c.h.b16 %v1272
        %v3623 = vunpack.c.l.b16 %v1273
        %v3624 = vunpack.c.h.b16 %v1273
        %v3625 = vunpack.c.l.b16 %v1274
        %v3626 = vunpack.c.h.b16 %v1274
        %v3627 = vunpack.c.l.b16 %v1275
        %v3628 = vunpack.c.h.b16 %v1275
        %v3629 = vunpack.c.l.b16 %v1276
        %v3630 = vunpack.c.h.b16 %v1276
        %v3631 = vunpack.c.l.b16 %v1277
        %v3632 = vunpack.c.h.b16 %v1277
        %v3633 = vunpack.c.l.b16 %v1278
        %v3634 = vunpack.c.h.b16 %v1278
        %v3635 = vunpack.c.l.b16 %v1279
        %v3636 = vunpack.c.h.b16 %v1279
        %v3637 = vunpack.c.l.b16 %v1280
        %v3638 = vunpack.c.h.b16 %v1280
        %v3639 = vunpack.c.l.b16 %v1281
        %v3640 = vunpack.c.h.b16 %v1281
        %v3641 = vunpack.c.l.b16 %v1282
        %v3642 = vunpack.c.h.b16 %v1282
        %v3643 = vunpack.c.l.b16 %v1283
        %v3644 = vunpack.c.h.b16 %v1283
        %v3645 = vunpack.c.l.b16 %v1284
        %v3646 = vunpack.c.h.b16 %v1284
        %v3647 = vunpack.c.l.b16 %v1285
        %v3648 = vunpack.c.h.b16 %v1285
        %v3649 = vunpack.c.l.b16 %v1286
        %v3650 = vunpack.c.h.b16 %v1286
        %v3651 = vunpack.c.l.b16 %v1287
        %v3652 = vunpack.c.h.b16 %v1287
        %v3653 = vunpack.c.l.b16 %v1288
        %v3654 = vunpack.c.h.b16 %v1288
        %v3655 = vunpack.c.l.b16 %v1289
        %v3656 = vunpack.c.h.b16 %v1289
        %v3657 = vunpack.c.l.b16 %v1290
        %v3658 = vunpack.c.h.b16 %v1290
        %v3659 = vunpack.c.l.b16 %v1291
        %v3660 = vunpack.c.h.b16 %v1291
        %v3661 = vunpack.c.l.b16 %v1292
        %v3662 = vunpack.c.h.b16 %v1292
        %v3663 = vunpack.c.l.b16 %v1293
        %v3664 = vunpack.c.h.b16 %v1293
        %v3665 = vunpack.c.l.b16 %v1294
        %v3666 = vunpack.c.h.b16 %v1294
        %v3667 = vunpack.c.l.b16 %v1295
        %v3668 = vunpack.c.h.b16 %v1295
        %v3669 = vunpack.c.l.b16 %v1296
        %v3670 = vunpack.c.h.b16 %v1296
        %v3671 = vunpack.c.l.b16 %v1297
        %v3672 = vunpack.c.h.b16 %v1297
        %v3673 = vunpack.c.l.b16 %v1298
        %v3674 = vunpack.c.h.b16 %v1298
        %v3675 = vunpack.c.l.b16 %v1299
        %v3676 = vunpack.c.h.b16 %v1299
        %v3677 = vunpack.c.l.b16 %v1300
        %v3678 = vunpack.c.h.b16 %v1300
        %v3679 = vunpack.c.l.b16 %v1301
        %v3680 = vunpack.c.h.b16 %v1301
        %v3681 = vunpack.c.l.b16 %v1302
        %v3682 = vunpack.c.h.b16 %v1302
        %v3683 = vunpack.c.l.b16 %v1303
        %v3684 = vunpack.c.h.b16 %v1303
        %v3685 = vunpack.c.l.b16 %v1304
        %v3686 = vunpack.c.h.b16 %v1304
        %v3687 = vunpack.c.l.b16 %v1305
        %v3688 = vunpack.c.h.b16 %v1305
        %v3689 = vunpack.c.l.b16 %v1306
        %v3690 = vunpack.c.h.b16 %v1306
        %v3691 = vunpack.c.l.b16 %v1307
        %v3692 = vunpack.c.h.b16 %v1307
        %v3693 = vunpack.c.l.b16 %v1308
        %v3694 = vunpack.c.h.b16 %v1308
        %v3695 = vunpack.c.l.b16 %v1309
        %v3696 = vunpack.c.h.b16 %v1309
        %v3697 = vunpack.c.l.b16 %v1310
        %v3698 = vunpack.c.h.b16 %v1310
        %v3699 = vunpack.c.l.b16 %v1311
        %v3700 = vunpack.c.h.b16 %v1311
        %v3701 = vunpack.c.l.b16 %v1312
        %v3702 = vunpack.c.h.b16 %v1312
        %v3703 = vunpack.c.l.b16 %v1313
        %v3704 = vunpack.c.h.b16 %v1313
        %v3705 = vunpack.c.l.b16 %v1314
        %v3706 = vunpack.c.h.b16 %v1314
        %v3707 = vunpack.c.l.b16 %v1315
        %v3708 = vunpack.c.h.b16 %v1315
        %v3709 = vunpack.c.l.b16 %v1316
        %v3710 = vunpack.c.h.b16 %v1316
        %v3711 = vunpack.c.l.b16 %v1317
        %v3712 = vunpack.c.h.b16 %v1317
        %v3713 = vunpack.c.l.b16 %v1318
        %v3714 = vunpack.c.h.b16 %v1318
        %v3715 = vunpack.c.l.b16 %v1319
        %v3716 = vunpack.c.h.b16 %v1319
        %v3717 = vunpack.c.l.b16 %v1320
        %v3718 = vunpack.c.h.b16 %v1320
        %v3719 = vunpack.c.l.b16 %v1321
        %v3720 = vunpack.c.h.b16 %v1321
        %v3721 = vunpack.c.l.b16 %v1322
        %v3722 = vunpack.c.h.b16 %v1322
        %v3723 = vunpack.c.l.b16 %v1323
        %v3724 = vunpack.c.h.b16 %v1323
        %v3725 = vunpack.c.l.b16 %v1324
        %v3726 = vunpack.c.h.b16 %v1324
        %v3727 = vunpack.c.l.b16 %v1325
        %v3728 = vunpack.c.h.b16 %v1325
        %v3729 = vunpack.c.l.b16 %v1326
        %v3730 = vunpack.c.h.b16 %v1326
        %v3731 = vunpack.c.l.b16 %v1327
        %v3732 = vunpack.c.h.b16 %v1327
        %v3733 = vunpack.c.l.b16 %v1328
        %v3734 = vunpack.c.h.b16 %v1328
        %v3735 = vunpack.c.l.b16 %v1329
        %v3736 = vunpack.c.h.b16 %v1329
        %v3737 = vunpack.c.l.b16 %v1330
        %v3738 = vunpack.c.h.b16 %v1330
        %v3739 = vunpack.c.l.b16 %v1331
        %v3740 = vunpack.c.h.b16 %v1331
        %v3741 = vunpack.c.l.b16 %v1332
        %v3742 = vunpack.c.h.b16 %v1332
        %v3743 = vunpack.c.l.b16 %v1333
        %v3744 = vunpack.c.h.b16 %v1333
        %v3745 = vunpack.c.l.b16 %v1334
        %v3746 = vunpack.c.h.b16 %v1334
        %v3747 = vunpack.c.l.b16 %v1335
        %v3748 = vunpack.c.h.b16 %v1335
        %v3749 = vunpack.c.l.b16 %v1336
        %v3750 = vunpack.c.h.b16 %v1336
        %v3751 = vunpack.c.l.b16 %v1337
        %v3752 = vunpack.c.h.b16 %v1337
        %v3753 = vunpack.c.l.b16 %v1338
        %v3754 = vunpack.c.h.b16 %v1338
        %v3755 = vunpack.c.l.b16 %v1339
        %v3756 = vunpack.c.h.b16 %v1339
        %v3757 = vunpack.c.l.b16 %v1340
        %v3758 = vunpack.c.h.b16 %v1340
        %v3759 = vunpack.c.l.b16 %v1341
        %v3760 = vunpack.c.h.b16 %v1341
        %v3761 = vunpack.c.l.b16 %v1342
        %v3762 = vunpack.c.h.b16 %v1342
        %v3763 = vunpack.c.l.b16 %v1343
        %v3764 = vunpack.c.h.b16 %v1343
        %v3765 = vunpack.c.l.b16 %v1344
        %v3766 = vunpack.c.h.b16 %v1344
        %v3767 = vunpack.c.l.b16 %v1345
        %v3768 = vunpack.c.h.b16 %v1345
        %v3769 = vunpack.c.l.b16 %v1346
        %v3770 = vunpack.c.h.b16 %v1346
        %v3771 = vunpack.c.l.b16 %v1347
        %v3772 = vunpack.c.h.b16 %v1347
        %v3773 = vunpack.c.l.b16 %v1348
        %v3774 = vunpack.c.h.b16 %v1348
        %v3775 = vunpack.c.l.b16 %v1349
        %v3776 = vunpack.c.h.b16 %v1349
        %v3777 = vunpack.c.l.b16 %v1350
        %v3778 = vunpack.c.h.b16 %v1350
        %v3779 = vunpack.c.l.b16 %v1351
        %v3780 = vunpack.c.h.b16 %v1351
        %v3781 = vunpack.c.l.b16 %v1352
        %v3782 = vunpack.c.h.b16 %v1352
        %v3783 = vunpack.c.l.b16 %v1353
        %v3784 = vunpack.c.h.b16 %v1353
        %v3785 = vunpack.c.l.b16 %v1354
        %v3786 = vunpack.c.h.b16 %v1354
        %v3787 = vunpack.c.l.b16 %v1355
        %v3788 = vunpack.c.h.b16 %v1355
        %v3789 = vunpack.c.l.b16 %v1356
        %v3790 = vunpack.c.h.b16 %v1356
        %v3791 = vunpack.c.l.b16 %v1357
        %v3792 = vunpack.c.h.b16 %v1357
        %v3793 = vunpack.c.l.b16 %v1358
        %v3794 = vunpack.c.h.b16 %v1358
        %v3795 = vunpack.c.l.b16 %v1359
        %v3796 = vunpack.c.h.b16 %v1359
        %v3797 = vunpack.c.l.b16 %v1360
        %v3798 = vunpack.c.h.b16 %v1360
        %v3799 = vunpack.c.l.b16 %v1361
        %v3800 = vunpack.c.h.b16 %v1361
        %v3801 = vunpack.c.l.b16 %v1362
        %v3802 = vunpack.c.h.b16 %v1362
        %v3803 = vunpack.c.l.b16 %v1363
        %v3804 = vunpack.c.h.b16 %v1363
        %v3805 = vunpack.c.l.b16 %v1364
        %v3806 = vunpack.c.h.b16 %v1364
        %v3807 = vunpack.c.l.b16 %v1365
        %v3808 = vunpack.c.h.b16 %v1365
        %v3809 = vunpack.c.l.b16 %v1366
        %v3810 = vunpack.c.h.b16 %v1366
        %v3811 = vunpack.c.l.b16 %v1367
        %v3812 = vunpack.c.h.b16 %v1367
        %v3813 = vunpack.c.l.b16 %v1368
        %v3814 = vunpack.c.h.b16 %v1368
        %v3815 = vunpack.c.l.b16 %v1369
        %v3816 = vunpack.c.h.b16 %v1369
        %v3817 = vunpack.c.l.b16 %v1370
        %v3818 = vunpack.c.h.b16 %v1370
        %v3819 = vunpack.c.l.b16 %v1371
        %v3820 = vunpack.c.h.b16 %v1371
        %v3821 = vunpack.c.l.b16 %v1372
        %v3822 = vunpack.c.h.b16 %v1372
        %v3823 = vunpack.c.l.b16 %v1373
        %v3824 = vunpack.c.h.b16 %v1373
        %v3825 = vunpack.c.l.b16 %v1374
        %v3826 = vunpack.c.h.b16 %v1374
        %v3827 = vunpack.c.l.b16 %v1375
        %v3828 = vunpack.c.h.b16 %v1375
        %v3829 = vunpack.c.l.b16 %v1376
        %v3830 = vunpack.c.h.b16 %v1376
        %v3831 = vunpack.c.l.b16 %v1377
        %v3832 = vunpack.c.h.b16 %v1377
        %v3833 = vunpack.c.l.b16 %v1378
        %v3834 = vunpack.c.h.b16 %v1378
        %v3835 = vunpack.c.l.b16 %v1379
        %v3836 = vunpack.c.h.b16 %v1379
        %v3837 = vunpack.c.l.b16 %v1380
        %v3838 = vunpack.c.h.b16 %v1380
        %v3839 = vunpack.c.l.b16 %v1381
        %v3840 = vunpack.c.h.b16 %v1381
        %v3841 = vunpack.c.l.b16 %v1382
        %v3842 = vunpack.c.h.b16 %v1382
        %v3843 = vunpack.c.l.b16 %v1383
        %v3844 = vunpack.c.h.b16 %v1383
        %v3845 = vunpack.c.l.b16 %v1384
        %v3846 = vunpack.c.h.b16 %v1384
        %v3847 = vunpack.c.l.b16 %v1385
        %v3848 = vunpack.c.h.b16 %v1385
        %v3849 = vunpack.c.l.b16 %v1386
        %v3850 = vunpack.c.h.b16 %v1386
        %v3851 = vunpack.c.l.b16 %v1387
        %v3852 = vunpack.c.h.b16 %v1387
        %v3853 = vunpack.c.l.b16 %v1388
        %v3854 = vunpack.c.h.b16 %v1388
        %v3855 = vunpack.c.l.b16 %v1389
        %v3856 = vunpack.c.h.b16 %v1389
        %v3857 = vunpack.c.l.b16 %v1390
        %v3858 = vunpack.c.h.b16 %v1390
        %v3859 = vunpack.c.l.b16 %v1391
        %v3860 = vunpack.c.h.b16 %v1391
        %v3861 = vunpack.c.l.b16 %v1392
        %v3862 = vunpack.c.h.b16 %v1392
        %v3863 = vunpack.c.l.b16 %v1393
        %v3864 = vunpack.c.h.b16 %v1393
        %v3865 = vunpack.c.l.b16 %v1394
        %v3866 = vunpack.c.h.b16 %v1394
        %v3867 = vunpack.c.l.b16 %v1395
        %v3868 = vunpack.c.h.b16 %v1395
        %v3869 = vunpack.c.l.b16 %v1396
        %v3870 = vunpack.c.h.b16 %v1396
        %v3871 = vunpack.c.l.b16 %v1397
        %v3872 = vunpack.c.h.b16 %v1397
        %v3873 = vunpack.c.l.b16 %v1398
        %v3874 = vunpack.c.h.b16 %v1398
        %v3875 = vunpack.c.l.b16 %v1399
        %v3876 = vunpack.c.h.b16 %v1399
        %v3877 = vunpack.c.l.b16 %v1400
        %v3878 = vunpack.c.h.b16 %v1400
        %v3879 = vunpack.c.l.b16 %v1401
        %v3880 = vunpack.c.h.b16 %v1401
        %v3881 = vunpack.c.l.b16 %v1402
        %v3882 = vunpack.c.h.b16 %v1402
        %v3883 = vunpack.c.l.b16 %v1403
        %v3884 = vunpack.c.h.b16 %v1403
        %v3885 = vunpack.c.l.b16 %v1404
        %v3886 = vunpack.c.h.b16 %v1404
        %v3887 = vunpack.c.l.b16 %v1405
        %v3888 = vunpack.c.h.b16 %v1405
        %v3889 = vunpack.c.l.b16 %v1406
        %v3890 = vunpack.c.h.b16 %v1406
        %v3891 = vunpack.c.l.b16 %v1407
        %v3892 = vunpack.c.h.b16 %v1407
        %v3893 = vunpack.c.l.b16 %v1408
        %v3894 = vunpack.c.h.b16 %v1408
        %v3895 = vunpack.c.l.b16 %v1409
        %v3896 = vunpack.c.h.b16 %v1409
        %v3897 = vunpack.c.l.b16 %v1410
        %v3898 = vunpack.c.h.b16 %v1410
        %v3899 = vunpack.c.l.b16 %v1411
        %v3900 = vunpack.c.h.b16 %v1411
        %v3901 = vunpack.c.l.b16 %v1412
        %v3902 = vunpack.c.h.b16 %v1412
        %v3903 = vunpack.c.l.b16 %v1413
        %v3904 = vunpack.c.h.b16 %v1413
        %v3905 = vunpack.c.l.b16 %v1414
        %v3906 = vunpack.c.h.b16 %v1414
        %v3907 = vunpack.c.l.b16 %v1415
        %v3908 = vunpack.c.h.b16 %v1415
        %v3909 = vunpack.c.l.b16 %v1416
        %v3910 = vunpack.c.h.b16 %v1416
        %v3911 = vunpack.c.l.b16 %v1417
        %v3912 = vunpack.c.h.b16 %v1417
        %v3913 = vunpack.c.l.b16 %v1418
        %v3914 = vunpack.c.h.b16 %v1418
        %v3915 = vunpack.c.l.b16 %v1419
        %v3916 = vunpack.c.h.b16 %v1419
        %v3917 = vunpack.c.l.b16 %v1420
        %v3918 = vunpack.c.h.b16 %v1420
        %v3919 = vunpack.c.l.b16 %v1421
        %v3920 = vunpack.c.h.b16 %v1421
        %v3921 = vunpack.c.l.b16 %v1422
        %v3922 = vunpack.c.h.b16 %v1422
        %v3923 = vunpack.c.l.b16 %v1423
        %v3924 = vunpack.c.h.b16 %v1423
        %v3925 = vunpack.c.l.b16 %v1424
        %v3926 = vunpack.c.h.b16 %v1424
        %v3927 = vunpack.c.l.b16 %v1425
        %v3928 = vunpack.c.h.b16 %v1425
        %v3929 = vunpack.c.l.b16 %v1426
        %v3930 = vunpack.c.h.b16 %v1426
        %v3931 = vunpack.c.l.b16 %v1427
        %v3932 = vunpack.c.h.b16 %v1427
        %v3933 = vunpack.c.l.b16 %v1428
        %v3934 = vunpack.c.h.b16 %v1428
        %v3935 = vunpack.c.l.b16 %v1429
        %v3936 = vunpack.c.h.b16 %v1429
        %v3937 = vunpack.c.l.b16 %v1430
        %v3938 = vunpack.c.h.b16 %v1430
        %v3939 = vunpack.c.l.b16 %v1431
        %v3940 = vunpack.c.h.b16 %v1431
        %v3941 = vunpack.c.l.b16 %v1432
        %v3942 = vunpack.c.h.b16 %v1432
        %v3943 = vunpack.c.l.b16 %v1433
        %v3944 = vunpack.c.h.b16 %v1433
        %v3945 = vunpack.c.l.b16 %v1434
        %v3946 = vunpack.c.h.b16 %v1434
        %v3947 = vunpack.c.l.b16 %v1435
        %v3948 = vunpack.c.h.b16 %v1435
        %v3949 = vunpack.c.l.b16 %v1436
        %v3950 = vunpack.c.h.b16 %v1436
        %v3951 = vunpack.c.l.b16 %v1437
        %v3952 = vunpack.c.h.b16 %v1437
        %v3953 = vunpack.c.l.b16 %v1438
        %v3954 = vunpack.c.h.b16 %v1438
        %v3955 = vunpack.c.l.b16 %v1439
        %v3956 = vunpack.c.h.b16 %v1439
        %v3957 = vunpack.c.l.b16 %v1440
        %v3958 = vunpack.c.h.b16 %v1440
        %v3959 = vunpack.c.l.b16 %v1441
        %v3960 = vunpack.c.h.b16 %v1441
        %v3961 = vunpack.c.l.b16 %v1442
        %v3962 = vunpack.c.h.b16 %v1442
        %v3963 = vunpack.c.l.b16 %v1443
        %v3964 = vunpack.c.h.b16 %v1443
        %v3965 = vunpack.c.l.b16 %v1444
        %v3966 = vunpack.c.h.b16 %v1444
        %v3967 = vunpack.c.l.b16 %v1445
        %v3968 = vunpack.c.h.b16 %v1445
        %v3969 = vunpack.c.l.b16 %v1446
        %v3970 = vunpack.c.h.b16 %v1446
        %v3971 = vunpack.c.l.b16 %v1447
        %v3972 = vunpack.c.h.b16 %v1447
        %v3973 = vunpack.c.l.b16 %v1448
        %v3974 = vunpack.c.h.b16 %v1448
        %v3975 = vunpack.c.l.b16 %v1449
        %v3976 = vunpack.c.h.b16 %v1449
        %v3977 = vunpack.c.l.b16 %v1450
        %v3978 = vunpack.c.h.b16 %v1450
        %v3979 = vunpack.c.l.b16 %v1451
        %v3980 = vunpack.c.h.b16 %v1451
        %v3981 = vunpack.c.l.b16 %v1452
        %v3982 = vunpack.c.h.b16 %v1452
        %v3983 = vunpack.c.l.b16 %v1453
        %v3984 = vunpack.c.h.b16 %v1453
        %v3985 = vunpack.c.l.b16 %v1454
        %v3986 = vunpack.c.h.b16 %v1454
        %v3987 = vunpack.c.l.b16 %v1455
        %v3988 = vunpack.c.h.b16 %v1455
        %v3989 = vunpack.c.l.b16 %v1456
        %v3990 = vunpack.c.h.b16 %v1456
        %v3991 = vunpack.c.l.b16 %v1457
        %v3992 = vunpack.c.h.b16 %v1457
        %v3993 = vunpack.c.l.b16 %v1458
        %v3994 = vunpack.c.h.b16 %v1458
        %v3995 = vunpack.c.l.b16 %v1459
        %v3996 = vunpack.c.h.b16 %v1459
        %v3997 = vunpack.c.l.b16 %v1460
        %v3998 = vunpack.c.h.b16 %v1460
        %v3999 = vunpack.c.l.b16 %v1461
        %v4000 = vunpack.c.h.b16 %v1461
        %v4001 = vunpack.c.l.b16 %v1462
        %v4002 = vunpack.c.h.b16 %v1462
        %v4003 = vunpack.c.l.b16 %v1463
        %v4004 = vunpack.c.h.b16 %v1463
        %v4005 = vunpack.c.l.b16 %v1464
        %v4006 = vunpack.c.h.b16 %v1464
        %v4007 = vunpack.c.l.b16 %v1465
        %v4008 = vunpack.c.h.b16 %v1465
        %v4009 = vunpack.c.l.b16 %v1466
        %v4010 = vunpack.c.h.b16 %v1466
        %v4011 = vunpack.c.l.b16 %v1467
        %v4012 = vunpack.c.h.b16 %v1467
        %v4013 = vunpack.c.l.b16 %v1468
        %v4014 = vunpack.c.h.b16 %v1468
        %v4015 = vunpack.c.l.b16 %v1469
        %v4016 = vunpack.c.h.b16 %v1469
        %v4017 = vunpack.c.l.b16 %v1470
        %v4018 = vunpack.c.h.b16 %v1470
        %v4019 = vunpack.c.l.b16 %v1471
        %v4020 = vunpack.c.h.b16 %v1471
        %v4021 = vunpack.c.l.b16 %v1472
        %v4022 = vunpack.c.h.b16 %v1472
        %v4023 = vunpack.c.l.b16 %v1473
        %v4024 = vunpack.c.h.b16 %v1473
        %v4025 = vunpack.c.l.b16 %v1474
        %v4026 = vunpack.c.h.b16 %v1474
        %v4027 = vunpack.c.l.b16 %v1475
        %v4028 = vunpack.c.h.b16 %v1475
        %v4029 = vunpack.c.l.b16 %v1476
        %v4030 = vunpack.c.h.b16 %v1476
        %v4031 = vunpack.c.l.b16 %v1477
        %v4032 = vunpack.c.h.b16 %v1477
        %v4033 = vunpack.c.l.b16 %v1478
        %v4034 = vunpack.c.h.b16 %v1478
        %v4035 = vunpack.c.l.b16 %v1479
        %v4036 = vunpack.c.h.b16 %v1479
        %v4037 = vunpack.c.l.b16 %v1480
        %v4038 = vunpack.c.h.b16 %v1480
        %v4039 = vunpack.c.l.b16 %v1481
        %v4040 = vunpack.c.h.b16 %v1481
        %v4041 = vunpack.c.l.b16 %v1482
        %v4042 = vunpack.c.h.b16 %v1482
        %v4043 = vunpack.c.l.b16 %v1483
        %v4044 = vunpack.c.h.b16 %v1483
        %v4045 = vunpack.c.l.b16 %v1484
        %v4046 = vunpack.c.h.b16 %v1484
        %v4047 = vunpack.c.l.b16 %v1485
        %v4048 = vunpack.c.h.b16 %v1485
        %v4049 = vunpack.c.l.b16 %v1486
        %v4050 = vunpack.c.h.b16 %v1486
        %v4051 = vunpack.c.l.b16 %v1487
        %v4052 = vunpack.c.h.b16 %v1487
        %v4053 = vunpack.c.l.b16 %v1488
        %v4054 = vunpack.c.h.b16 %v1488
        %v4055 = vunpack.c.l.b16 %v1489
        %v4056 = vunpack.c.h.b16 %v1489
        %v4057 = vunpack.c.l.b16 %v1490
        %v4058 = vunpack.c.h.b16 %v1490
        %v4059 = vunpack.c.l.b16 %v1491
        %v4060 = vunpack.c.h.b16 %v1491
        %v4061 = vunpack.c.l.b16 %v1492
        %v4062 = vunpack.c.h.b16 %v1492
        %v4063 = vunpack.c.l.b16 %v1493
        %v4064 = vunpack.c.h.b16 %v1493
        %v4065 = vunpack.c.l.b16 %v1494
        %v4066 = vunpack.c.h.b16 %v1494
        %v4067 = vunpack.c.l.b16 %v1495
        %v4068 = vunpack.c.h.b16 %v1495
        %v4069 = vunpack.c.l.b16 %v1496
        %v4070 = vunpack.c.h.b16 %v1496
        %v4071 = vunpack.c.l.b16 %v1497
        %v4072 = vunpack.c.h.b16 %v1497
        %v4073 = vunpack.c.l.b16 %v1498
        %v4074 = vunpack.c.h.b16 %v1498
        %v4075 = vunpack.c.l.b16 %v1499
        %v4076 = vunpack.c.h.b16 %v1499
        %v4077 = vunpack.c.l.b16 %v1500
        %v4078 = vunpack.c.h.b16 %v1500
        %v4079 = vunpack.c.l.b16 %v1501
        %v4080 = vunpack.c.h.b16 %v1501
        %v4081 = vunpack.c.l.b16 %v1502
        %v4082 = vunpack.c.h.b16 %v1502
        %v4083 = vunpack.c.l.b16 %v1503
        %v4084 = vunpack.c.h.b16 %v1503
        %v4085 = vunpack.c.l.b16 %v1504
        %v4086 = vunpack.c.h.b16 %v1504
        %v4087 = vunpack.c.l.b16 %v1505
        %v4088 = vunpack.c.h.b16 %v1505
        %v4089 = vunpack.c.l.b16 %v1506
        %v4090 = vunpack.c.h.b16 %v1506
        %v4091 = vunpack.c.l.b16 %v1507
        %v4092 = vunpack.c.h.b16 %v1507
        %v4093 = vunpack.c.l.b16 %v1508
        %v4094 = vunpack.c.h.b16 %v1508
        %v4095 = vunpack.c.l.b16 %v1509
        %v4096 = vunpack.c.h.b16 %v1509
        %v4097 = vunpack.c.l.b16 %v1510
        %v4098 = vunpack.c.h.b16 %v1510
        %v4099 = vunpack.c.l.b16 %v1511
        %v4100 = vunpack.c.h.b16 %v1511
        %v4101 = vunpack.c.l.b16 %v1512
        %v4102 = vunpack.c.h.b16 %v1512
        %v4103 = vunpack.c.l.b16 %v1513
        %v4104 = vunpack.c.h.b16 %v1513
        %v4105 = vunpack.c.l.b16 %v1514
        %v4106 = vunpack.c.h.b16 %v1514
        %v4107 = vunpack.c.l.b16 %v1515
        %v4108 = vunpack.c.h.b16 %v1515
        %v4109 = vunpack.c.l.b16 %v1516
        %v4110 = vunpack.c.h.b16 %v1516
        %v4111 = vunpack.c.l.b16 %v1517
        %v4112 = vunpack.c.h.b16 %v1517
        %v4113 = vunpack.c.l.b16 %v1518
        %v4114 = vunpack.c.h.b16 %v1518
        %v4115 = vunpack.c.l.b16 %v1519
        %v4116 = vunpack.c.h.b16 %v1519
        %v4117 = vunpack.c.l.b16 %v1520
        %v4118 = vunpack.c.h.b16 %v1520
        %v4119 = vunpack.c.l.b16 %v1521
        %v4120 = vunpack.c.h.b16 %v1521
        %v4121 = vunpack.c.l.b16 %v1522
        %v4122 = vunpack.c.h.b16 %v1522
        %v4123 = vunpack.c.l.b16 %v1523
        %v4124 = vunpack.c.h.b16 %v1523
        %v4125 = vunpack.c.l.b16 %v1524
        %v4126 = vunpack.c.h.b16 %v1524
        %v4127 = vunpack.c.l.b16 %v1525
        %v4128 = vunpack.c.h.b16 %v1525
        %v4129 = vunpack.c.l.b16 %v1526
        %v4130 = vunpack.c.h.b16 %v1526
        %v4131 = vunpack.c.l.b16 %v1527
        %v4132 = vunpack.c.h.b16 %v1527
        %v4133 = vunpack.c.l.b16 %v1528
        %v4134 = vunpack.c.h.b16 %v1528
        %v4135 = vunpack.c.l.b16 %v1529
        %v4136 = vunpack.c.h.b16 %v1529
        %v4137 = vunpack.c.l.b16 %v1530
        %v4138 = vunpack.c.h.b16 %v1530
        %v4139 = vunpack.c.l.b16 %v1531
        %v4140 = vunpack.c.h.b16 %v1531
        %v4141 = vunpack.c.l.b16 %v1532
        %v4142 = vunpack.c.h.b16 %v1532
        %v4143 = vunpack.c.l.b16 %v1533
        %v4144 = vunpack.c.h.b16 %v1533
        %v4145 = vunpack.c.l.b16 %v1534
        %v4146 = vunpack.c.h.b16 %v1534
        %v4147 = vunpack.c.l.b16 %v1535
        %v4148 = vunpack.c.h.b16 %v1535
        %v4149 = vunpack.c.l.b16 %v1536
        %v4150 = vunpack.c.h.b16 %v1536
        %v4151 = vunpack.c.l.b16 %v1537
        %v4152 = vunpack.c.h.b16 %v1537
        %v4153 = vunpack.c.l.b16 %v1538
        %v4154 = vunpack.c.h.b16 %v1538
        %v4155 = vunpack.c.l.b16 %v1539
        %v4156 = vunpack.c.h.b16 %v1539
        %v4157 = vunpack.c.l.b16 %v1540
        %v4158 = vunpack.c.h.b16 %v1540
        %v4159 = vunpack.c.l.b16 %v1541
        %v4160 = vunpack.c.h.b16 %v1541
        %v4161 = vunpack.c.l.b16 %v1542
        %v4162 = vunpack.c.h.b16 %v1542
        %v4163 = vunpack.c.l.b16 %v1543
        %v4164 = vunpack.c.h.b16 %v1543
        %v4165 = vunpack.c.l.b16 %v1544
        %v4166 = vunpack.c.h.b16 %v1544
        %v4167 = vunpack.c.l.b16 %v1545
        %v4168 = vunpack.c.h.b16 %v1545
        %v4169 = vunpack.c.l.b16 %v1546
        %v4170 = vunpack.c.h.b16 %v1546
        %v4171 = vunpack.c.l.b16 %v1547
        %v4172 = vunpack.c.h.b16 %v1547
        %v4173 = vunpack.c.l.b16 %v1548
        %v4174 = vunpack.c.h.b16 %v1548
        %v4175 = vunpack.c.l.b16 %v1549
        %v4176 = vunpack.c.h.b16 %v1549
        %v4177 = vunpack.c.l.b16 %v1550
        %v4178 = vunpack.c.h.b16 %v1550
        %v4179 = vunpack.c.l.b16 %v1551
        %v4180 = vunpack.c.h.b16 %v1551
        %v4181 = vunpack.c.l.b16 %v1552
        %v4182 = vunpack.c.h.b16 %v1552
        %v4183 = vunpack.c.l.b16 %v1553
        %v4184 = vunpack.c.h.b16 %v1553
        %v4185 = vunpack.c.l.b16 %v1554
        %v4186 = vunpack.c.h.b16 %v1554
        %v4187 = vunpack.c.l.b16 %v1555
        %v4188 = vunpack.c.h.b16 %v1555
        %v4189 = vunpack.c.l.b16 %v1556
        %v4190 = vunpack.c.h.b16 %v1556
        %v4191 = vunpack.c.l.b16 %v1557
        %v4192 = vunpack.c.h.b16 %v1557
        %v4193 = vunpack.c.l.b16 %v1558
        %v4194 = vunpack.c.h.b16 %v1558
        %v4195 = vunpack.c.l.b16 %v1559
        %v4196 = vunpack.c.h.b16 %v1559
        %v4197 = vunpack.c.l.b16 %v1560
        %v4198 = vunpack.c.h.b16 %v1560
        %v4199 = vunpack.c.l.b16 %v1561
        %v4200 = vunpack.c.h.b16 %v1561
        %v4201 = vunpack.c.l.b16 %v1562
        %v4202 = vunpack.c.h.b16 %v1562
        %v4203 = vunpack.c.l.b16 %v1563
        %v4204 = vunpack.c.h.b16 %v1563
        %v4205 = vunpack.c.l.b16 %v1564
        %v4206 = vunpack.c.h.b16 %v1564
        %v4207 = vunpack.c.l.b16 %v1565
        %v4208 = vunpack.c.h.b16 %v1565
        %v4209 = vunpack.c.l.b16 %v1566
        %v4210 = vunpack.c.h.b16 %v1566
        %v4211 = vunpack.c.l.b16 %v1567
        %v4212 = vunpack.c.h.b16 %v1567
        %v4213 = vunpack.c.l.b16 %v1568
        %v4214 = vunpack.c.h.b16 %v1568
        %v4215 = vunpack.c.l.b16 %v1569
        %v4216 = vunpack.c.h.b16 %v1569
        %v4217 = vunpack.c.l.b16 %v1570
        %v4218 = vunpack.c.h.b16 %v1570
        %v4219 = vunpack.c.l.b16 %v1571
        %v4220 = vunpack.c.h.b16 %v1571
        %v4221 = vunpack.c.l.b16 %v1572
        %v4222 = vunpack.c.h.b16 %v1572
        %v4223 = vunpack.c.l.b16 %v1573
        %v4224 = vunpack.c.h.b16 %v1573
        %v4225 = vunpack.c.l.b16 %v1574
        %v4226 = vunpack.c.h.b16 %v1574
        %v4227 = vunpack.c.l.b16 %v1575
        %v4228 = vunpack.c.h.b16 %v1575
        %v4229 = vunpack.c.l.b16 %v1576
        %v4230 = vunpack.c.h.b16 %v1576
        %v4231 = vunpack.c.l.b16 %v1577
        %v4232 = vunpack.c.h.b16 %v1577
        %v4233 = vunpack.c.l.b16 %v1578
        %v4234 = vunpack.c.h.b16 %v1578
        %v4235 = vunpack.c.l.b16 %v1579
        %v4236 = vunpack.c.h.b16 %v1579
        %v4237 = vunpack.c.l.b16 %v1580
        %v4238 = vunpack.c.h.b16 %v1580
        %v4239 = vunpack.c.l.b16 %v1581
        %v4240 = vunpack.c.h.b16 %v1581
        %v4241 = vunpack.c.l.b16 %v1582
        %v4242 = vunpack.c.h.b16 %v1582
        %v4243 = vunpack.c.l.b16 %v1583
        %v4244 = vunpack.c.h.b16 %v1583
        %v4245 = vunpack.c.l.b16 %v1584
        %v4246 = vunpack.c.h.b16 %v1584
        %v4247 = vunpack.c.l.b16 %v1585
        %v4248 = vunpack.c.h.b16 %v1585
        %v4249 = vunpack.c.l.b16 %v1586
        %v4250 = vunpack.c.h.b16 %v1586
        %v4251 = vunpack.c.l.b16 %v1587
        %v4252 = vunpack.c.h.b16 %v1587
        %v4253 = vunpack.c.l.b16 %v1588
        %v4254 = vunpack.c.h.b16 %v1588
        %v4255 = vunpack.c.l.b16 %v1589
        %v4256 = vunpack.c.h.b16 %v1589
        %v4257 = vunpack.c.l.b16 %v1590
        %v4258 = vunpack.c.h.b16 %v1590
        %v4259 = vunpack.c.l.b16 %v1591
        %v4260 = vunpack.c.h.b16 %v1591
        %v4261 = vunpack.c.l.b16 %v1592
        %v4262 = vunpack.c.h.b16 %v1592
        %v4263 = vunpack.c.l.b16 %v1593
        %v4264 = vunpack.c.h.b16 %v1593
        %v4265 = vunpack.c.l.b16 %v1594
        %v4266 = vunpack.c.h.b16 %v1594
        %v4267 = vunpack.c.l.b16 %v1595
        %v4268 = vunpack.c.h.b16 %v1595
        %v4269 = vunpack.c.l.b16 %v1596
        %v4270 = vunpack.c.h.b16 %v1596
        %v4271 = vunpack.c.l.b16 %v1597
        %v4272 = vunpack.c.h.b16 %v1597
        %v4273 = vunpack.c.l.b16 %v1598
        %v4274 = vunpack.c.h.b16 %v1598
        %v4275 = vunpack.c.l.b16 %v1599
        %v4276 = vunpack.c.h.b16 %v1599
        %v4277 = vunpack.c.l.b16 %v1600
        %v4278 = vunpack.c.h.b16 %v1600
        %v4279 = vunpack.c.l.b16 %v1601
        %v4280 = vunpack.c.h.b16 %v1601
        %v4281 = vunpack.c.l.b16 %v1602
        %v4282 = vunpack.c.h.b16 %v1602
        %v4283 = vunpack.c.l.b16 %v1603
        %v4284 = vunpack.c.h.b16 %v1603
        %v4285 = vunpack.c.l.b16 %v1604
        %v4286 = vunpack.c.h.b16 %v1604
        %v4287 = vunpack.c.l.b16 %v1605
        %v4288 = vunpack.c.h.b16 %v1605
        %v4289 = vunpack.c.l.b16 %v1606
        %v4290 = vunpack.c.h.b16 %v1606
        %v4291 = vunpack.c.l.b16 %v1607
        %v4292 = vunpack.c.h.b16 %v1607
        %v4293 = vunpack.c.l.b16 %v1608
        %v4294 = vunpack.c.h.b16 %v1608
        %v4295 = vunpack.c.l.b16 %v1609
        %v4296 = vunpack.c.h.b16 %v1609
        %v4297 = vunpack.c.l.b16 %v1610
        %v4298 = vunpack.c.h.b16 %v1610
        %v4299 = vunpack.c.l.b16 %v1611
        %v4300 = vunpack.c.h.b16 %v1611
        %v4301 = vunpack.c.l.b16 %v1612
        %v4302 = vunpack.c.h.b16 %v1612
        %v4303 = vunpack.c.l.b16 %v1613
        %v4304 = vunpack.c.h.b16 %v1613
        %v4305 = vunpack.c.l.b16 %v1614
        %v4306 = vunpack.c.h.b16 %v1614
        %v4307 = vunpack.c.l.b16 %v1615
        %v4308 = vunpack.c.h.b16 %v1615
        %v4309 = vunpack.c.l.b16 %v1616
        %v4310 = vunpack.c.h.b16 %v1616
        %v4311 = vunpack.c.l.b16 %v1617
        %v4312 = vunpack.c.h.b16 %v1617
        %v4313 = vunpack.c.l.b16 %v1618
        %v4314 = vunpack.c.h.b16 %v1618
        %v4315 = vunpack.c.l.b16 %v1619
        %v4316 = vunpack.c.h.b16 %v1619
        %v4317 = vunpack.c.l.b16 %v1620
        %v4318 = vunpack.c.h.b16 %v1620
        %v4319 = vunpack.c.l.b16 %v1621
        %v4320 = vunpack.c.h.b16 %v1621
        %v4321 = vunpack.c.l.b16 %v1622
        %v4322 = vunpack.c.h.b16 %v1622
        %v4323 = vunpack.c.l.b16 %v1623
        %v4324 = vunpack.c.h.b16 %v1623
        %v4325 = vunpack.c.l.b16 %v1624
        %v4326 = vunpack.c.h.b16 %v1624
        %v4327 = vunpack.c.l.b16 %v1625
        %v4328 = vunpack.c.h.b16 %v1625
        %v4329 = vunpack.c.l.b16 %v1626
        %v4330 = vunpack.c.h.b16 %v1626
        %v4331 = vunpack.c.l.b16 %v1627
        %v4332 = vunpack.c.h.b16 %v1627
        %v4333 = vunpack.c.l.b16 %v1628
        %v4334 = vunpack.c.h.b16 %v1628
        %v4335 = vunpack.c.l.b16 %v1629
        %v4336 = vunpack.c.h.b16 %v1629
        %v4337 = vunpack.c.l.b16 %v1630
        %v4338 = vunpack.c.h.b16 %v1630
        %v4339 = vunpack.c.l.b16 %v1631
        %v4340 = vunpack.c.h.b16 %v1631
        %v4341 = vunpack.c.l.b16 %v1632
        %v4342 = vunpack.c.h.b16 %v1632
        %v4343 = vunpack.c.l.b16 %v1633
        %v4344 = vunpack.c.h.b16 %v1633
        %v4345 = vunpack.c.l.b16 %v1634
        %v4346 = vunpack.c.h.b16 %v1634
        %v4347 = vunpack.c.l.b16 %v1635
        %v4348 = vunpack.c.h.b16 %v1635
        %v4349 = vunpack.c.l.b16 %v1636
        %v4350 = vunpack.c.h.b16 %v1636
        %v4351 = vunpack.c.l.b16 %v1637
        %v4352 = vunpack.c.h.b16 %v1637
        %v4353 = vunpack.c.l.b16 %v1638
        %v4354 = vunpack.c.h.b16 %v1638
        %v4355 = vunpack.c.l.b16 %v1639
        %v4356 = vunpack.c.h.b16 %v1639
        %v4357 = vunpack.c.l.b16 %v1640
        %v4358 = vunpack.c.h.b16 %v1640
        %v4359 = vunpack.c.l.b16 %v1641
        %v4360 = vunpack.c.h.b16 %v1641
        %v4361 = vunpack.c.l.b16 %v1642
        %v4362 = vunpack.c.h.b16 %v1642
        %v4363 = vunpack.c.l.b16 %v1643
        %v4364 = vunpack.c.h.b16 %v1643
        %v4365 = vunpack.c.l.b16 %v1644
        %v4366 = vunpack.c.h.b16 %v1644
        %v4367 = vunpack.c.l.b16 %v1645
        %v4368 = vunpack.c.h.b16 %v1645
        %v4369 = vunpack.c.l.b16 %v1646
        %v4370 = vunpack.c.h.b16 %v1646
        %v4371 = vunpack.c.l.b16 %v1647
        %v4372 = vunpack.c.h.b16 %v1647
        %v4373 = vunpack.c.l.b16 %v1648
        %v4374 = vunpack.c.h.b16 %v1648
        %v4375 = vunpack.c.l.b16 %v1649
        %v4376 = vunpack.c.h.b16 %v1649
        %v4377 = vunpack.c.l.b16 %v1650
        %v4378 = vunpack.c.h.b16 %v1650
        %v4379 = vunpack.c.l.b16 %v1651
        %v4380 = vunpack.c.h.b16 %v1651
        %v4381 = vunpack.c.l.b16 %v1652
        %v4382 = vunpack.c.h.b16 %v1652
        %v4383 = vunpack.c.l.b16 %v1653
        %v4384 = vunpack.c.h.b16 %v1653
        %v4385 = vunpack.c.l.b16 %v1654
        %v4386 = vunpack.c.h.b16 %v1654
        %v4387 = vunpack.c.l.b16 %v1655
        %v4388 = vunpack.c.h.b16 %v1655
        %v4389 = vunpack.c.l.b16 %v1656
        %v4390 = vunpack.c.h.b16 %v1656
        %v4391 = vunpack.c.l.b16 %v1657
        %v4392 = vunpack.c.h.b16 %v1657
        %v4393 = vunpack.c.l.b16 %v1658
        %v4394 = vunpack.c.h.b16 %v1658
        %v4395 = vunpack.c.l.b16 %v1659
        %v4396 = vunpack.c.h.b16 %v1659
        %v4397 = vunpack.c.l.b16 %v1660
        %v4398 = vunpack.c.h.b16 %v1660
        %v4399 = vunpack.c.l.b16 %v1661
        %v4400 = vunpack.c.h.b16 %v1661
        %v4401 = vunpack.c.l.b16 %v1662
        %v4402 = vunpack.c.h.b16 %v1662
        %v4403 = vunpack.c.l.b16 %v1663
        %v4404 = vunpack.c.h.b16 %v1663
        %v4405 = vunpack.c.l.b16 %v1664
        %v4406 = vunpack.c.h.b16 %v1664
        %v4407 = vunpack.c.l.b16 %v1665
        %v4408 = vunpack.c.h.b16 %v1665
        %v4409 = vunpack.c.l.b16 %v1666
        %v4410 = vunpack.c.h.b16 %v1666
        %v4411 = vunpack.c.l.b16 %v1667
        %v4412 = vunpack.c.h.b16 %v1667
        %v4413 = vunpack.c.l.b16 %v1668
        %v4414 = vunpack.c.h.b16 %v1668
        %v4415 = vunpack.c.l.b16 %v1669
        %v4416 = vunpack.c.h.b16 %v1669
        %v4417 = vunpack.c.l.b16 %v1670
        %v4418 = vunpack.c.h.b16 %v1670
        %v4419 = vunpack.c.l.b16 %v1671
        %v4420 = vunpack.c.h.b16 %v1671
        %v4421 = vunpack.c.l.b16 %v1672
        %v4422 = vunpack.c.h.b16 %v1672
        %v4423 = vunpack.c.l.b16 %v1673
        %v4424 = vunpack.c.h.b16 %v1673
        %v4425 = vunpack.c.l.b16 %v1674
        %v4426 = vunpack.c.h.b16 %v1674
        %v4427 = vunpack.c.l.b16 %v1675
        %v4428 = vunpack.c.h.b16 %v1675
        %v4429 = vunpack.c.l.b16 %v1676
        %v4430 = vunpack.c.h.b16 %v1676
        %v4431 = vunpack.c.l.b16 %v1677
        %v4432 = vunpack.c.h.b16 %v1677
        %v4433 = vunpack.c.l.b16 %v1678
        %v4434 = vunpack.c.h.b16 %v1678
        %v4435 = vunpack.c.l.b16 %v1679
        %v4436 = vunpack.c.h.b16 %v1679
        %v4437 = vunpack.c.l.b16 %v1680
        %v4438 = vunpack.c.h.b16 %v1680
        %v4439 = vunpack.c.l.b16 %v1681
        %v4440 = vunpack.c.h.b16 %v1681
        %v4441 = vunpack.c.l.b16 %v1682
        %v4442 = vunpack.c.h.b16 %v1682
        %v4443 = vunpack.c.l.b16 %v1683
        %v4444 = vunpack.c.h.b16 %v1683
        %v4445 = vunpack.c.l.b16 %v1684
        %v4446 = vunpack.c.h.b16 %v1684
        %v4447 = vunpack.c.l.b16 %v1685
        %v4448 = vunpack.c.h.b16 %v1685
        %v4449 = vunpack.c.l.b16 %v1686
        %v4450 = vunpack.c.h.b16 %v1686
        %v4451 = vunpack.c.l.b16 %v1687
        %v4452 = vunpack.c.h.b16 %v1687
        %v4453 = vunpack.c.l.b16 %v1688
        %v4454 = vunpack.c.h.b16 %v1688
        %v4455 = vunpack.c.l.b16 %v1689
        %v4456 = vunpack.c.h.b16 %v1689
        %v4457 = vunpack.c.l.b16 %v1690
        %v4458 = vunpack.c.h.b16 %v1690
        %v4459 = vunpack.c.l.b16 %v1691
        %v4460 = vunpack.c.h.b16 %v1691
        %v4461 = vunpack.c.l.b16 %v1692
        %v4462 = vunpack.c.h.b16 %v1692
        %v4463 = vunpack.c.l.b16 %v1693
        %v4464 = vunpack.c.h.b16 %v1693
        %v4465 = vunpack.c.l.b16 %v1694
        %v4466 = vunpack.c.h.b16 %v1694
        %v4467 = vunpack.c.l.b16 %v1695
        %v4468 = vunpack.c.h.b16 %v1695
        %v4469 = vunpack.c.l.b16 %v1696
        %v4470 = vunpack.c.h.b16 %v1696
        %v4471 = vunpack.c.l.b16 %v1697
        %v4472 = vunpack.c.h.b16 %v1697
        %v4473 = vunpack.c.l.b16 %v1698
        %v4474 = vunpack.c.h.b16 %v1698
        %v4475 = vunpack.c.l.b16 %v1699
        %v4476 = vunpack.c.h.b16 %v1699
        %v4477 = vunpack.c.l.b16 %v1700
        %v4478 = vunpack.c.h.b16 %v1700
        %v4479 = vunpack.c.l.b16 %v1701
        %v4480 = vunpack.c.h.b16 %v1701
        %v4481 = vunpack.c.l.b16 %v1702
        %v4482 = vunpack.c.h.b16 %v1702
        %v4483 = vunpack.c.l.b16 %v1703
        %v4484 = vunpack.c.h.b16 %v1703
        %v4485 = vunpack.c.l.b16 %v1704
        %v4486 = vunpack.c.h.b16 %v1704
        %v4487 = vunpack.c.l.b16 %v1705
        %v4488 = vunpack.c.h.b16 %v1705
        %v4489 = vunpack.c.l.b16 %v1706
        %v4490 = vunpack.c.h.b16 %v1706
        %v4491 = vunpack.c.l.b16 %v1707
        %v4492 = vunpack.c.h.b16 %v1707
        %v4493 = vunpack.c.l.b16 %v1708
        %v4494 = vunpack.c.h.b16 %v1708
        %v4495 = vunpack.c.l.b16 %v1709
        %v4496 = vunpack.c.h.b16 %v1709
        %v4497 = vunpack.c.l.b16 %v1710
        %v4498 = vunpack.c.h.b16 %v1710
        %v4499 = vunpack.c.l.b16 %v1711
        %v4500 = vunpack.c.h.b16 %v1711
        %v4501 = vunpack.c.l.b16 %v1712
        %v4502 = vunpack.c.h.b16 %v1712
        %v4503 = vunpack.c.l.b16 %v1713
        %v4504 = vunpack.c.h.b16 %v1713
        %v4505 = vunpack.c.l.b16 %v1714
        %v4506 = vunpack.c.h.b16 %v1714
        %v4507 = vunpack.c.l.b16 %v1715
        %v4508 = vunpack.c.h.b16 %v1715
        %v4509 = vunpack.c.l.b16 %v1716
        %v4510 = vunpack.c.h.b16 %v1716
        %v4511 = vunpack.c.l.b16 %v1717
        %v4512 = vunpack.c.h.b16 %v1717
        %v4513 = vunpack.c.l.b16 %v1718
        %v4514 = vunpack.c.h.b16 %v1718
        %v4515 = vunpack.c.l.b16 %v1719
        %v4516 = vunpack.c.h.b16 %v1719
        %v4517 = vunpack.c.l.b16 %v1720
        %v4518 = vunpack.c.h.b16 %v1720
        %v4519 = vunpack.c.l.b16 %v1721
        %v4520 = vunpack.c.h.b16 %v1721
        %v4521 = vunpack.c.l.b16 %v1722
        %v4522 = vunpack.c.h.b16 %v1722
        %v4523 = vunpack.c.l.b16 %v1723
        %v4524 = vunpack.c.h.b16 %v1723
        %v4525 = vunpack.c.l.b16 %v1724
        %v4526 = vunpack.c.h.b16 %v1724
        %v4527 = vunpack.c.l.b16 %v1725
        %v4528 = vunpack.c.h.b16 %v1725
        %v4529 = vunpack.c.l.b16 %v1726
        %v4530 = vunpack.c.h.b16 %v1726
        %v4531 = vunpack.c.l.b16 %v1727
        %v4532 = vunpack.c.h.b16 %v1727
        %v4533 = vunpack.c.l.b16 %v1728
        %v4534 = vunpack.c.h.b16 %v1728
        %v4535 = vunpack.c.l.b16 %v1729
        %v4536 = vunpack.c.h.b16 %v1729
        %v4537 = vunpack.c.l.b16 %v1730
        %v4538 = vunpack.c.h.b16 %v1730
        %v4539 = vunpack.c.l.b16 %v1731
        %v4540 = vunpack.c.h.b16 %v1731
        %v4541 = vunpack.c.l.b16 %v1732
        %v4542 = vunpack.c.h.b16 %v1732
        %v4543 = vunpack.c.l.b16 %v1733
        %v4544 = vunpack.c.h.b16 %v1733
        %v4545 = vunpack.c.l.b16 %v1734
        %v4546 = vunpack.c.h.b16 %v1734
        %v4547 = vunpack.c.l.b16 %v1735
        %v4548 = vunpack.c.h.b16 %v1735
        %v4549 = vunpack.c.l.b16 %v1736
        %v4550 = vunpack.c.h.b16 %v1736
        %v4551 = vunpack.c.l.b16 %v1737
        %v4552 = vunpack.c.h.b16 %v1737
        %v4553 = vunpack.c.l.b16 %v1738
        %v4554 = vunpack.c.h.b16 %v1738
        %v4555 = vunpack.c.l.b16 %v1739
        %v4556 = vunpack.c.h.b16 %v1739
        %v4557 = vunpack.c.l.b16 %v1740
        %v4558 = vunpack.c.h.b16 %v1740
        %v4559 = vunpack.c.l.b16 %v1741
        %v4560 = vunpack.c.h.b16 %v1741
        %v4561 = vunpack.c.l.b16 %v1742
        %v4562 = vunpack.c.h.b16 %v1742
        %v4563 = vunpack.c.l.b16 %v1743
        %v4564 = vunpack.c.h.b16 %v1743
        %v4565 = vunpack.c.l.b16 %v1744
        %v4566 = vunpack.c.h.b16 %v1744
        %v4567 = vunpack.c.l.b16 %v1745
        %v4568 = vunpack.c.h.b16 %v1745
        %v4569 = vunpack.c.l.b16 %v1746
        %v4570 = vunpack.c.h.b16 %v1746
        %v4571 = vunpack.c.l.b16 %v1747
        %v4572 = vunpack.c.h.b16 %v1747
        %v4573 = vunpack.c.l.b16 %v1748
        %v4574 = vunpack.c.h.b16 %v1748
        %v4575 = vunpack.c.l.b16 %v1749
        %v4576 = vunpack.c.h.b16 %v1749
        %v4577 = vunpack.c.l.b16 %v1750
        %v4578 = vunpack.c.h.b16 %v1750
        %v4579 = vunpack.c.l.b16 %v1751
        %v4580 = vunpack.c.h.b16 %v1751
        %v4581 = vunpack.c.l.b16 %v1752
        %v4582 = vunpack.c.h.b16 %v1752
        %v4583 = vunpack.c.l.b16 %v1753
        %v4584 = vunpack.c.h.b16 %v1753
        %v4585 = vunpack.c.l.b16 %v1754
        %v4586 = vunpack.c.h.b16 %v1754
        %v4587 = vunpack.c.l.b16 %v1755
        %v4588 = vunpack.c.h.b16 %v1755
        %v4589 = vunpack.c.l.b16 %v1756
        %v4590 = vunpack.c.h.b16 %v1756
        %v4591 = vunpack.c.l.b16 %v1757
        %v4592 = vunpack.c.h.b16 %v1757
        %v4593 = vunpack.c.l.b16 %v1758
        %v4594 = vunpack.c.h.b16 %v1758
        %v4595 = vunpack.c.l.b16 %v1759
        %v4596 = vunpack.c.h.b16 %v1759
        %v4597 = vunpack.c.l.b16 %v1760
        %v4598 = vunpack.c.h.b16 %v1760
        %v4599 = vunpack.c.l.b16 %v1761
        %v4600 = vunpack.c.h.b16 %v1761
        %v4601 = vunpack.c.l.b16 %v1762
        %v4602 = vunpack.c.h.b16 %v1762
        %v4603 = vunpack.c.l.b16 %v1763
        %v4604 = vunpack.c.h.b16 %v1763
        %v4605 = vunpack.c.l.b16 %v1764
        %v4606 = vunpack.c.h.b16 %v1764
        %v4607 = vunpack.c.l.b16 %v1765
        %v4608 = vunpack.c.h.b16 %v1765
        %v4609 = vunpack.c.l.b16 %v1766
        %v4610 = vunpack.c.h.b16 %v1766
        %v4611 = vunpack.c.l.b16 %v1767
        %v4612 = vunpack.c.h.b16 %v1767
        %v4613 = vunpack.c.l.b16 %v1768
        %v4614 = vunpack.c.h.b16 %v1768
        %v4615 = vunpack.c.l.b16 %v1769
        %v4616 = vunpack.c.h.b16 %v1769
        %v4617 = vunpack.c.l.b16 %v1770
        %v4618 = vunpack.c.h.b16 %v1770
        %v4619 = vunpack.c.l.b16 %v1771
        %v4620 = vunpack.c.h.b16 %v1771
        %v4621 = vunpack.c.l.b16 %v1772
        %v4622 = vunpack.c.h.b16 %v1772
        %v4623 = vunpack.c.l.b16 %v1773
        %v4624 = vunpack.c.h.b16 %v1773
        %v4625 = vunpack.c.l.b16 %v1774
        %v4626 = vunpack.c.h.b16 %v1774
        %v4627 = vunpack.c.l.b16 %v1775
        %v4628 = vunpack.c.h.b16 %v1775
        %v4629 = vunpack.c.l.b16 %v1776
        %v4630 = vunpack.c.h.b16 %v1776
        %v4631 = vunpack.c.l.b16 %v1777
        %v4632 = vunpack.c.h.b16 %v1777
        %v4633 = vunpack.c.l.b16 %v1778
        %v4634 = vunpack.c.h.b16 %v1778
        %v4635 = vunpack.c.l.b16 %v1779
        %v4636 = vunpack.c.h.b16 %v1779
        %v4637 = vunpack.c.l.b16 %v1780
        %v4638 = vunpack.c.h.b16 %v1780
        %v4639 = vunpack.c.l.b16 %v1781
        %v4640 = vunpack.c.h.b16 %v1781
        %v4641 = vunpack.c.l.b16 %v1782
        %v4642 = vunpack.c.h.b16 %v1782
        %v4643 = vunpack.c.l.b16 %v1783
        %v4644 = vunpack.c.h.b16 %v1783
        %v4645 = vunpack.c.l.b16 %v1784
        %v4646 = vunpack.c.h.b16 %v1784
        %v4647 = vunpack.c.l.b16 %v1785
        %v4648 = vunpack.c.h.b16 %v1785
        %v4649 = vunpack.c.l.b16 %v1786
        %v4650 = vunpack.c.h.b16 %v1786
        %v4651 = vunpack.c.l.b16 %v1787
        %v4652 = vunpack.c.h.b16 %v1787
        %v4653 = vunpack.c.l.b16 %v1788
        %v4654 = vunpack.c.h.b16 %v1788
        %v4655 = vunpack.c.l.b16 %v1789
        %v4656 = vunpack.c.h.b16 %v1789
        %v4657 = vunpack.c.l.b16 %v1790
        %v4658 = vunpack.c.h.b16 %v1790
        %v4659 = vunpack.c.l.b16 %v1791
        %v4660 = vunpack.c.h.b16 %v1791
        %v4661 = vunpack.c.l.b16 %v1792
        %v4662 = vunpack.c.h.b16 %v1792
        %v4663 = vunpack.c.l.b16 %v1793
        %v4664 = vunpack.c.h.b16 %v1793
        %v4665 = vunpack.c.l.b16 %v1794
        %v4666 = vunpack.c.h.b16 %v1794
        %v4667 = vunpack.c.l.b16 %v1795
        %v4668 = vunpack.c.h.b16 %v1795
        %v4669 = vunpack.c.l.b16 %v1796
        %v4670 = vunpack.c.h.b16 %v1796
        %v4671 = vunpack.c.l.b16 %v1797
        %v4672 = vunpack.c.h.b16 %v1797
        %v4673 = vunpack.c.l.b16 %v1798
        %v4674 = vunpack.c.h.b16 %v1798
        %v4675 = vunpack.c.l.b16 %v1799
        %v4676 = vunpack.c.h.b16 %v1799
        %v4677 = vunpack.c.l.b16 %v1800
        %v4678 = vunpack.c.h.b16 %v1800
        %v4679 = vunpack.c.l.b16 %v1801
        %v4680 = vunpack.c.h.b16 %v1801
        %v4681 = vunpack.c.l.b16 %v1802
        %v4682 = vunpack.c.h.b16 %v1802
        %v4683 = vunpack.c.l.b16 %v1803
        %v4684 = vunpack.c.h.b16 %v1803
        %v4685 = vunpack.c.l.b16 %v1804
        %v4686 = vunpack.c.h.b16 %v1804
        %v4687 = vunpack.c.l.b16 %v1805
        %v4688 = vunpack.c.h.b16 %v1805
        %v4689 = vunpack.c.l.b16 %v1806
        %v4690 = vunpack.c.h.b16 %v1806
        %v4691 = vunpack.c.l.b16 %v1807
        %v4692 = vunpack.c.h.b16 %v1807
        %v4693 = vunpack.c.l.b16 %v1808
        %v4694 = vunpack.c.h.b16 %v1808
        %v4695 = vunpack.c.l.b16 %v1809
        %v4696 = vunpack.c.h.b16 %v1809
        %v4697 = vunpack.c.l.b16 %v1810
        %v4698 = vunpack.c.h.b16 %v1810
        %v4699 = vunpack.c.l.b16 %v1811
        %v4700 = vunpack.c.h.b16 %v1811
        %v4701 = vunpack.c.l.b16 %v1812
        %v4702 = vunpack.c.h.b16 %v1812
        %v4703 = vunpack.c.l.b16 %v1813
        %v4704 = vunpack.c.h.b16 %v1813
        %v4705 = vunpack.c.l.b16 %v1814
        %v4706 = vunpack.c.h.b16 %v1814
        %v4707 = vunpack.c.l.b16 %v1815
        %v4708 = vunpack.c.h.b16 %v1815
        %v4709 = vunpack.c.l.b16 %v1816
        %v4710 = vunpack.c.h.b16 %v1816
        %v4711 = vunpack.c.l.b16 %v1817
        %v4712 = vunpack.c.h.b16 %v1817
        %v4713 = vunpack.c.l.b16 %v1818
        %v4714 = vunpack.c.h.b16 %v1818
        %v4715 = vunpack.c.l.b16 %v1819
        %v4716 = vunpack.c.h.b16 %v1819
        %v4717 = vunpack.c.l.b16 %v1820
        %v4718 = vunpack.c.h.b16 %v1820
        %v4719 = vunpack.c.l.b16 %v1821
        %v4720 = vunpack.c.h.b16 %v1821
        %v4721 = vunpack.c.l.b16 %v1822
        %v4722 = vunpack.c.h.b16 %v1822
        %v4723 = vunpack.c.l.b16 %v1823
        %v4724 = vunpack.c.h.b16 %v1823
        %v4725 = vunpack.c.l.b16 %v1824
        %v4726 = vunpack.c.h.b16 %v1824
        %v4727 = vunpack.c.l.b16 %v1825
        %v4728 = vunpack.c.h.b16 %v1825
        %v4729 = vunpack.c.l.b16 %v1826
        %v4730 = vunpack.c.h.b16 %v1826
        %v4731 = vunpack.c.l.b16 %v1827
        %v4732 = vunpack.c.h.b16 %v1827
        %v4733 = vunpack.c.l.b16 %v1828
        %v4734 = vunpack.c.h.b16 %v1828
        %v4735 = vunpack.c.l.b16 %v1829
        %v4736 = vunpack.c.h.b16 %v1829
        %v4737 = vunpack.c.l.b16 %v1830
        %v4738 = vunpack.c.h.b16 %v1830
        %v4739 = vunpack.c.l.b16 %v1831
        %v4740 = vunpack.c.h.b16 %v1831
        %v4741 = vunpack.c.l.b16 %v1832
        %v4742 = vunpack.c.h.b16 %v1832
        %v4743 = vunpack.c.l.b16 %v1833
        %v4744 = vunpack.c.h.b16 %v1833
        %v4745 = vunpack.c.l.b16 %v1834
        %v4746 = vunpack.c.h.b16 %v1834
        %v4747 = vunpack.c.l.b16 %v1835
        %v4748 = vunpack.c.h.b16 %v1835
        %v4749 = vunpack.c.l.b16 %v1836
        %v4750 = vunpack.c.h.b16 %v1836
        %v4751 = vunpack.c.l.b16 %v1837
        %v4752 = vunpack.c.h.b16 %v1837
        %v4753 = vunpack.c.l.b16 %v1838
        %v4754 = vunpack.c.h.b16 %v1838
        %v4755 = vunpack.c.l.b16 %v1839
        %v4756 = vunpack.c.h.b16 %v1839
        %v4757 = vunpack.c.l.b16 %v1840
        %v4758 = vunpack.c.h.b16 %v1840
        %v4759 = vunpack.c.l.b16 %v1841
        %v4760 = vunpack.c.h.b16 %v1841
        %v4761 = vunpack.c.l.b16 %v1842
        %v4762 = vunpack.c.h.b16 %v1842
        %v4763 = vunpack.c.l.b16 %v1843
        %v4764 = vunpack.c.h.b16 %v1843
        %v4765 = vunpack.c.l.b16 %v1844
        %v4766 = vunpack.c.h.b16 %v1844
        %v4767 = vunpack.c.l.b16 %v1845
        %v4768 = vunpack.c.h.b16 %v1845
        %v4769 = vunpack.c.l.b16 %v1846
        %v4770 = vunpack.c.h.b16 %v1846
        %v4771 = vunpack.c.l.b16 %v1847
        %v4772 = vunpack.c.h.b16 %v1847
        %v4773 = vunpack.c.l.b16 %v1848
        %v4774 = vunpack.c.h.b16 %v1848
        %v4775 = vunpack.c.l.b16 %v1849
        %v4776 = vunpack.c.h.b16 %v1849
        %v4777 = vunpack.c.l.b16 %v1850
        %v4778 = vunpack.c.h.b16 %v1850
        %v4779 = vunpack.c.l.b16 %v1851
        %v4780 = vunpack.c.h.b16 %v1851
        %v4781 = vunpack.c.l.b16 %v1852
        %v4782 = vunpack.c.h.b16 %v1852
        %v4783 = vunpack.c.l.b16 %v1853
        %v4784 = vunpack.c.h.b16 %v1853
        %v4785 = vunpack.c.l.b16 %v1854
        %v4786 = vunpack.c.h.b16 %v1854
        %v4787 = vunpack.c.l.b16 %v1855
        %v4788 = vunpack.c.h.b16 %v1855
        %v4789 = vunpack.c.l.b16 %v1856
        %v4790 = vunpack.c.h.b16 %v1856
        %v4791 = vunpack.c.l.b16 %v1857
        %v4792 = vunpack.c.h.b16 %v1857
        %v4793 = vunpack.c.l.b16 %v1858
        %v4794 = vunpack.c.h.b16 %v1858
        %v4795 = vunpack.c.l.b16 %v1859
        %v4796 = vunpack.c.h.b16 %v1859
        %v4797 = vunpack.c.l.b16 %v1860
        %v4798 = vunpack.c.h.b16 %v1860
        %v4799 = vunpack.c.l.b16 %v1861
        %v4800 = vunpack.c.h.b16 %v1861
        %v4801 = vunpack.c.l.b16 %v1862
        %v4802 = vunpack.c.h.b16 %v1862
        %v4803 = vunpack.c.l.b16 %v1863
        %v4804 = vunpack.c.h.b16 %v1863
        %v4805 = vunpack.c.l.b16 %v1864
        %v4806 = vunpack.c.h.b16 %v1864
        %v4807 = vunpack.c.l.b16 %v1865
        %v4808 = vunpack.c.h.b16 %v1865
        %v4809 = vunpack.c.l.b16 %v1866
        %v4810 = vunpack.c.h.b16 %v1866
        %v4811 = vunpack.c.l.b16 %v1867
        %v4812 = vunpack.c.h.b16 %v1867
        %v4813 = vunpack.c.l.b16 %v1868
        %v4814 = vunpack.c.h.b16 %v1868
        %v4815 = vunpack.c.l.b16 %v1869
        %v4816 = vunpack.c.h.b16 %v1869
        %v4817 = vunpack.c.l.b16 %v1870
        %v4818 = vunpack.c.h.b16 %v1870
        %v4819 = vunpack.c.l.b16 %v1871
        %v4820 = vunpack.c.h.b16 %v1871
        %v4821 = vunpack.c.l.b16 %v1872
        %v4822 = vunpack.c.h.b16 %v1872
        %v4823 = vunpack.c.l.b16 %v1873
        %v4824 = vunpack.c.h.b16 %v1873
        %v4825 = vunpack.c.l.b16 %v1874
        %v4826 = vunpack.c.h.b16 %v1874
        %v4827 = vunpack.c.l.b16 %v1875
        %v4828 = vunpack.c.h.b16 %v1875
        %v4829 = vunpack.c.l.b16 %v1876
        %v4830 = vunpack.c.h.b16 %v1876
        %v4831 = vunpack.c.l.b16 %v1877
        %v4832 = vunpack.c.h.b16 %v1877
        %v4833 = vunpack.c.l.b16 %v1878
        %v4834 = vunpack.c.h.b16 %v1878
        %v4835 = vunpack.c.l.b16 %v1879
        %v4836 = vunpack.c.h.b16 %v1879
        %v4837 = vunpack.c.l.b16 %v1880
        %v4838 = vunpack.c.h.b16 %v1880
        %v4839 = vunpack.c.l.b16 %v1881
        %v4840 = vunpack.c.h.b16 %v1881
        %v4841 = vunpack.c.l.b16 %v1882
        %v4842 = vunpack.c.h.b16 %v1882
        %v4843 = vunpack.c.l.b16 %v1883
        %v4844 = vunpack.c.h.b16 %v1883
        %v4845 = vunpack.c.l.b16 %v1884
        %v4846 = vunpack.c.h.b16 %v1884
        %v4847 = vunpack.c.l.b16 %v1885
        %v4848 = vunpack.c.h.b16 %v1885
        %v4849 = vunpack.c.l.b16 %v1886
        %v4850 = vunpack.c.h.b16 %v1886
        %v4851 = vunpack.c.l.b16 %v1887
        %v4852 = vunpack.c.h.b16 %v1887
        %v4853 = vunpack.c.l.b16 %v1888
        %v4854 = vunpack.c.h.b16 %v1888
        %v4855 = vunpack.c.l.b16 %v1889
        %v4856 = vunpack.c.h.b16 %v1889
        %v4857 = vunpack.c.l.b16 %v1890
        %v4858 = vunpack.c.h.b16 %v1890
        %v4859 = vunpack.c.l.b16 %v1891
        %v4860 = vunpack.c.h.b16 %v1891
        %v4861 = vunpack.c.l.b16 %v1892
        %v4862 = vunpack.c.h.b16 %v1892
        %v4863 = vunpack.c.l.b16 %v1893
        %v4864 = vunpack.c.h.b16 %v1893
        %v4865 = vunpack.c.l.b16 %v1894
        %v4866 = vunpack.c.h.b16 %v1894
        %v4867 = vunpack.c.l.b16 %v1895
        %v4868 = vunpack.c.h.b16 %v1895
        %v4869 = vunpack.c.l.b16 %v1896
        %v4870 = vunpack.c.h.b16 %v1896
        %v4871 = vunpack.c.l.b16 %v1897
        %v4872 = vunpack.c.h.b16 %v1897
        %v4873 = vunpack.c.l.b16 %v1898
        %v4874 = vunpack.c.h.b16 %v1898
        %v4875 = vunpack.c.l.b16 %v1899
        %v4876 = vunpack.c.h.b16 %v1899
        %v4877 = vunpack.c.l.b16 %v1900
        %v4878 = vunpack.c.h.b16 %v1900
        %v4879 = vunpack.c.l.b16 %v1901
        %v4880 = vunpack.c.h.b16 %v1901
        %v4881 = vunpack.c.l.b16 %v1902
        %v4882 = vunpack.c.h.b16 %v1902
        %v4883 = vunpack.c.l.b16 %v1903
        %v4884 = vunpack.c.h.b16 %v1903
        %v4885 = vunpack.c.l.b16 %v1904
        %v4886 = vunpack.c.h.b16 %v1904
        %v4887 = vunpack.c.l.b16 %v1905
        %v4888 = vunpack.c.h.b16 %v1905
        %v4889 = vunpack.c.l.b16 %v1906
        %v4890 = vunpack.c.h.b16 %v1906
        %v4891 = vunpack.c.l.b16 %v1907
        %v4892 = vunpack.c.h.b16 %v1907
        %v4893 = vunpack.c.l.b16 %v1908
        %v4894 = vunpack.c.h.b16 %v1908
        %v4895 = vunpack.c.l.b16 %v1909
        %v4896 = vunpack.c.h.b16 %v1909
        %v4897 = vunpack.c.l.b16 %v1910
        %v4898 = vunpack.c.h.b16 %v1910
        %v4899 = vunpack.c.l.b16 %v1911
        %v4900 = vunpack.c.h.b16 %v1911
        %v4901 = vunpack.c.l.b16 %v1912
        %v4902 = vunpack.c.h.b16 %v1912
        %v4903 = vunpack.c.l.b16 %v1913
        %v4904 = vunpack.c.h.b16 %v1913
        %v4905 = vunpack.c.l.b16 %v1914
        %v4906 = vunpack.c.h.b16 %v1914
        %v4907 = vunpack.c.l.b16 %v1915
        %v4908 = vunpack.c.h.b16 %v1915
        %v4909 = vunpack.c.l.b16 %v1916
        %v4910 = vunpack.c.h.b16 %v1916
        %v4911 = vunpack.c.l.b16 %v1917
        %v4912 = vunpack.c.h.b16 %v1917
        %v4913 = vunpack.c.l.b16 %v1918
        %v4914 = vunpack.c.h.b16 %v1918
        %v4915 = vunpack.c.l.b16 %v1919
        %v4916 = vunpack.c.h.b16 %v1919
        %v4917 = vunpack.c.l.b16 %v1920
        %v4918 = vunpack.c.h.b16 %v1920
        %v4919 = vunpack.c.l.b16 %v1921
        %v4920 = vunpack.c.h.b16 %v1921
        %v4921 = vunpack.c.l.b16 %v1922
        %v4922 = vunpack.c.h.b16 %v1922
        %v4923 = vunpack.c.l.b16 %v1923
        %v4924 = vunpack.c.h.b16 %v1923
        %v4925 = vunpack.c.l.b16 %v1924
        %v4926 = vunpack.c.h.b16 %v1924
        %v4927 = vunpack.c.l.b16 %v1925
        %v4928 = vunpack.c.h.b16 %v1925
        %v4929 = vunpack.c.l.b16 %v1926
        %v4930 = vunpack.c.h.b16 %v1926
        %v4931 = vunpack.c.l.b16 %v1927
        %v4932 = vunpack.c.h.b16 %v1927
        %v4933 = vunpack.c.l.b16 %v1928
        %v4934 = vunpack.c.h.b16 %v1928
        %v4935 = vunpack.c.l.b16 %v1929
        %v4936 = vunpack.c.h.b16 %v1929
        %v4937 = vunpack.c.l.b16 %v1930
        %v4938 = vunpack.c.h.b16 %v1930
        %v4939 = vunpack.c.l.b16 %v1931
        %v4940 = vunpack.c.h.b16 %v1931
        %v4941 = vunpack.c.l.b16 %v1932
        %v4942 = vunpack.c.h.b16 %v1932
        %v4943 = vunpack.c.l.b16 %v1933
        %v4944 = vunpack.c.h.b16 %v1933
        %v4945 = vunpack.c.l.b16 %v1934
        %v4946 = vunpack.c.h.b16 %v1934
        %v4947 = vunpack.c.l.b16 %v1935
        %v4948 = vunpack.c.h.b16 %v1935
        %v4949 = vunpack.c.l.b16 %v1936
        %v4950 = vunpack.c.h.b16 %v1936
        %v4951 = vunpack.c.l.b16 %v1937
        %v4952 = vunpack.c.h.b16 %v1937
        %v4953 = vunpack.c.l.b16 %v1938
        %v4954 = vunpack.c.h.b16 %v1938
        %v4955 = vunpack.c.l.b16 %v1939
        %v4956 = vunpack.c.h.b16 %v1939
        %v4957 = vunpack.c.l.b16 %v1940
        %v4958 = vunpack.c.h.b16 %v1940
        %v4959 = vunpack.c.l.b16 %v1941
        %v4960 = vunpack.c.h.b16 %v1941
        %v4961 = vunpack.c.l.b16 %v1942
        %v4962 = vunpack.c.h.b16 %v1942
        %v4963 = vunpack.c.l.b16 %v1943
        %v4964 = vunpack.c.h.b16 %v1943
        %v4965 = vunpack.c.l.b16 %v1944
        %v4966 = vunpack.c.h.b16 %v1944
        %v4967 = vunpack.c.l.b16 %v1945
        %v4968 = vunpack.c.h.b16 %v1945
        %v4969 = vunpack.c.l.b16 %v1946
        %v4970 = vunpack.c.h.b16 %v1946
        %v4971 = vunpack.c.l.b16 %v1947
        %v4972 = vunpack.c.h.b16 %v1947
        %v4973 = vunpack.c.l.b16 %v1948
        %v4974 = vunpack.c.h.b16 %v1948
        %v4975 = vunpack.c.l.b16 %v1949
        %v4976 = vunpack.c.h.b16 %v1949
        %v4977 = vunpack.c.l.b16 %v1950
        %v4978 = vunpack.c.h.b16 %v1950
        %v4979 = vunpack.c.l.b16 %v1951
        %v4980 = vunpack.c.h.b16 %v1951
        %v4981 = vunpack.c.l.b16 %v1952
        %v4982 = vunpack.c.h.b16 %v1952
        %v4983 = vunpack.c.l.b16 %v1953
        %v4984 = vunpack.c.h.b16 %v1953
        %v4985 = vunpack.c.l.b16 %v1954
        %v4986 = vunpack.c.h.b16 %v1954
        %v4987 = vunpack.c.l.b16 %v1955
        %v4988 = vunpack.c.h.b16 %v1955
        %v4989 = vunpack.c.l.b16 %v1956
        %v4990 = vunpack.c.h.b16 %v1956
        %v4991 = vunpack.c.l.b16 %v1957
        %v4992 = vunpack.c.h.b16 %v1957
        %v4993 = vunpack.c.l.b16 %v1958
        %v4994 = vunpack.c.h.b16 %v1958
        %v4995 = vunpack.c.l.b16 %v1959
        %v4996 = vunpack.c.h.b16 %v1959
        %v4997 = vunpack.c.l.b16 %v1960
        %v4998 = vunpack.c.h.b16 %v1960
        %v4999 = vunpack.c.l.b16 %v1961
        %v5000 = vunpack.c.h.b16 %v1961
        %v5001 = vunpack.c.l.b16 %v1962
        %v5002 = vunpack.c.h.b16 %v1962
        %v5003 = vunpack.c.l.b16 %v1963
        %v5004 = vunpack.c.h.b16 %v1963
        %v5005 = vunpack.c.l.b16 %v1964
        %v5006 = vunpack.c.h.b16 %v1964
        %v5007 = vunpack.c.l.b16 %v1965
        %v5008 = vunpack.c.h.b16 %v1965
        %v5009 = vunpack.c.l.b16 %v1966
        %v5010 = vunpack.c.h.b16 %v1966
        %v5011 = vunpack.c.l.b16 %v1967
        %v5012 = vunpack.c.h.b16 %v1967
        %v5013 = vunpack.c.l.b16 %v1968
        %v5014 = vunpack.c.h.b16 %v1968
        %v5015 = vunpack.c.l.b16 %v1969
        %v5016 = vunpack.c.h.b16 %v1969
        %v5017 = vunpack.c.l.b16 %v1970
        %v5018 = vunpack.c.h.b16 %v1970
        %v5019 = vunpack.c.l.b16 %v1971
        %v5020 = vunpack.c.h.b16 %v1971
        %v5021 = vunpack.c.l.b16 %v1972
        %v5022 = vunpack.c.h.b16 %v1972
        %v5023 = vunpack.c.l.b16 %v1973
        %v5024 = vunpack.c.h.b16 %v1973
        %v5025 = vunpack.c.l.b16 %v1974
        %v5026 = vunpack.c.h.b16 %v1974
        %v5027 = vunpack.c.l.b16 %v1975
        %v5028 = vunpack.c.h.b16 %v1975
        %v5029 = vunpack.c.l.b16 %v1976
        %v5030 = vunpack.c.h.b16 %v1976
        %v5031 = vunpack.c.l.b16 %v1977
        %v5032 = vunpack.c.h.b16 %v1977
        %v5033 = vunpack.c.l.b16 %v1978
        %v5034 = vunpack.c.h.b16 %v1978
        %v5035 = vunpack.c.l.b16 %v1979
        %v5036 = vunpack.c.h.b16 %v1979
        %v5037 = vunpack.c.l.b16 %v1980
        %v5038 = vunpack.c.h.b16 %v1980
        %v5039 = vunpack.c.l.b16 %v1981
        %v5040 = vunpack.c.h.b16 %v1981
        %v5041 = vunpack.c.l.b16 %v1982
        %v5042 = vunpack.c.h.b16 %v1982
        %v5043 = vunpack.c.l.b16 %v1983
        %v5044 = vunpack.c.h.b16 %v1983
        %v5045 = vunpack.c.l.b16 %v1984
        %v5046 = vunpack.c.h.b16 %v1984
        %v5047 = vunpack.c.l.b16 %v1985
        %v5048 = vunpack.c.h.b16 %v1985
        %v5049 = vunpack.c.l.b16 %v1986
        %v5050 = vunpack.c.h.b16 %v1986
        %v5051 = vunpack.c.l.b16 %v1987
        %v5052 = vunpack.c.h.b16 %v1987
        %v5053 = vunpack.c.l.b16 %v1988
        %v5054 = vunpack.c.h.b16 %v1988
        %v5055 = vunpack.c.l.b16 %v1989
        %v5056 = vunpack.c.h.b16 %v1989
        %v5057 = vunpack.c.l.b16 %v1990
        %v5058 = vunpack.c.h.b16 %v1990
        %v5059 = vunpack.c.l.b16 %v1991
        %v5060 = vunpack.c.h.b16 %v1991
        %v5061 = vunpack.c.l.b16 %v1992
        %v5062 = vunpack.c.h.b16 %v1992
        %v5063 = vunpack.c.l.b16 %v1993
        %v5064 = vunpack.c.h.b16 %v1993
        %v5065 = vunpack.c.l.b16 %v1994
        %v5066 = vunpack.c.h.b16 %v1994
        %v5067 = vunpack.c.l.b16 %v1995
        %v5068 = vunpack.c.h.b16 %v1995
        %v5069 = vunpack.c.l.b16 %v1996
        %v5070 = vunpack.c.h.b16 %v1996
        %v5071 = vunpack.c.l.b16 %v1997
        %v5072 = vunpack.c.h.b16 %v1997
        %v5073 = vunpack.c.l.b16 %v1998
        %v5074 = vunpack.c.h.b16 %v1998
        %v5075 = vunpack.c.l.b16 %v1999
        %v5076 = vunpack.c.h.b16 %v1999
        %v5077 = vunpack.c.l.b16 %v2000
        %v5078 = vunpack.c.h.b16 %v2000
        %v5079 = vunpack.c.l.b16 %v2001
        %v5080 = vunpack.c.h.b16 %v2001
        %v5081 = vunpack.c.l.b16 %v2002
        %v5082 = vunpack.c.h.b16 %v2002
        %v5083 = vunpack.c.l.b16 %v2003
        %v5084 = vunpack.c.h.b16 %v2003
        %v5085 = vunpack.c.l.b16 %v2004
        %v5086 = vunpack.c.h.b16 %v2004
        %v5087 = vunpack.c.l.b16 %v2005
        %v5088 = vunpack.c.h.b16 %v2005
        %v5089 = vunpack.c.l.b16 %v2006
        %v5090 = vunpack.c.h.b16 %v2006
        %v5091 = vunpack.c.l.b16 %v2007
        %v5092 = vunpack.c.h.b16 %v2007
        %v5093 = vunpack.c.l.b16 %v2008
        %v5094 = vunpack.c.h.b16 %v2008
        %v5095 = vunpack.c.l.b16 %v2009
        %v5096 = vunpack.c.h.b16 %v2009
        %v5097 = vunpack.c.l.b16 %v2010
        %v5098 = vunpack.c.h.b16 %v2010
        %v5099 = vunpack.c.l.b16 %v2011
        %v5100 = vunpack.c.h.b16 %v2011
        %v5101 = vunpack.c.l.b16 %v2012
        %v5102 = vunpack.c.h.b16 %v2012
        %v5103 = vunpack.c.l.b16 %v2013
        %v5104 = vunpack.c.h.b16 %v2013
        %v5105 = vunpack.c.l.b16 %v2014
        %v5106 = vunpack.c.h.b16 %v2014
        %v5107 = vunpack.c.l.b16 %v2015
        %v5108 = vunpack.c.h.b16 %v2015
        %v5109 = vunpack.c.l.b16 %v2016
        %v5110 = vunpack.c.h.b16 %v2016
        %v5111 = vunpack.c.l.b16 %v2017
        %v5112 = vunpack.c.h.b16 %v2017
        %v5113 = vunpack.c.l.b16 %v2018
        %v5114 = vunpack.c.h.b16 %v2018
        %v5115 = vunpack.c.l.b16 %v2019
        %v5116 = vunpack.c.h.b16 %v2019
        %v5117 = vunpack.c.l.b16 %v2020
        %v5118 = vunpack.c.h.b16 %v2020
        %v5119 = vunpack.c.l.b16 %v2021
        %v5120 = vunpack.c.h.b16 %v2021
        %v5121 = vunpack.c.l.b16 %v2022
        %v5122 = vunpack.c.h.b16 %v2022
        %v5123 = vunpack.c.l.b16 %v2023
        %v5124 = vunpack.c.h.b16 %v2023
        %v5125 = vunpack.c.l.b16 %v2024
        %v5126 = vunpack.c.h.b16 %v2024
        %v5127 = vunpack.c.l.b16 %v2025
        %v5128 = vunpack.c.h.b16 %v2025
        %v5129 = vunpack.c.l.b16 %v2026
        %v5130 = vunpack.c.h.b16 %v2026
        %v5131 = vunpack.c.l.b16 %v2027
        %v5132 = vunpack.c.h.b16 %v2027
        %v5133 = vunpack.c.l.b16 %v2028
        %v5134 = vunpack.c.h.b16 %v2028
        %v5135 = vunpack.c.l.b16 %v2029
        %v5136 = vunpack.c.h.b16 %v2029
        %v5137 = vunpack.c.l.b16 %v2030
        %v5138 = vunpack.c.h.b16 %v2030
        %v5139 = vunpack.c.l.b16 %v2031
        %v5140 = vunpack.c.h.b16 %v2031
        %v5141 = vunpack.c.l.b16 %v2032
        %v5142 = vunpack.c.h.b16 %v2032
        %v5143 = vunpack.c.l.b16 %v2033
        %v5144 = vunpack.c.h.b16 %v2033
        %v5145 = vunpack.c.l.b16 %v2034
        %v5146 = vunpack.c.h.b16 %v2034
        %v5147 = vunpack.c.l.b16 %v2035
        %v5148 = vunpack.c.h.b16 %v2035
        %v5149 = vunpack.c.l.b16 %v2036
        %v5150 = vunpack.c.h.b16 %v2036
        %v5151 = vpack.c.b16 %v3111, %v3103
        %v5152 = vpack.c.b16 %v3112, %v3104
        %v5153 = vpack.c.b16 %v3113, %v3105
        %v5154 = vpack.c.b16 %v3114, %v3106
        %v5155 = vpack.c.b16 %v3115, %v3107
        %v5156 = vpack.c.b16 %v3116, %v3108
        %v5157 = vpack.c.b16 %v3117, %v3109
        %v5158 = vpack.c.b16 %v3118, %v3110
        %v5159 = vpack.c.b16 %v3127, %v3119
        %v5160 = vpack.c.b16 %v3128, %v3120
        %v5161 = vpack.c.b16 %v3129, %v3121
        %v5162 = vpack.c.b16 %v3130, %v3122
        %v5163 = vpack.c.b16 %v3131, %v3123
        %v5164 = vpack.c.b16 %v3132, %v3124
        %v5165 = vpack.c.b16 %v3133, %v3125
        %v5166 = vpack.c.b16 %v3134, %v3126
        %v5167 = vpack.c.b16 %v3143, %v3135
        %v5168 = vpack.c.b16 %v3144, %v3136
        %v5169 = vpack.c.b16 %v3145, %v3137
        %v5170 = vpack.c.b16 %v3146, %v3138
        %v5171 = vpack.c.b16 %v3147, %v3139
        %v5172 = vpack.c.b16 %v3148, %v3140
        %v5173 = vpack.c.b16 %v3149, %v3141
        %v5174 = vpack.c.b16 %v3150, %v3142
        %v5175 = vpack.c.b16 %v3159, %v3151
        %v5176 = vpack.c.b16 %v3160, %v3152
        %v5177 = vpack.c.b16 %v3161, %v3153
        %v5178 = vpack.c.b16 %v3162, %v3154
        %v5179 = vpack.c.b16 %v3163, %v3155
        %v5180 = vpack.c.b16 %v3164, %v3156
        %v5181 = vpack.c.b16 %v3165, %v3157
        %v5182 = vpack.c.b16 %v3166, %v3158
        %v5183 = vpack.c.b16 %v3175, %v3167
        %v5184 = vpack.c.b16 %v3176, %v3168
        %v5185 = vpack.c.b16 %v3177, %v3169
        %v5186 = vpack.c.b16 %v3178, %v3170
        %v5187 = vpack.c.b16 %v3179, %v3171
        %v5188 = vpack.c.b16 %v3180, %v3172
        %v5189 = vpack.c.b16 %v3181, %v3173
        %v5190 = vpack.c.b16 %v3182, %v3174
        %v5191 = vpack.c.b16 %v3191, %v3183
        %v5192 = vpack.c.b16 %v3192, %v3184
        %v5193 = vpack.c.b16 %v3193, %v3185
        %v5194 = vpack.c.b16 %v3194, %v3186
        %v5195 = vpack.c.b16 %v3195, %v3187
        %v5196 = vpack.c.b16 %v3196, %v3188
        %v5197 = vpack.c.b16 %v3197, %v3189
        %v5198 = vpack.c.b16 %v3198, %v3190
        %v5199 = vpack.c.b16 %v3207, %v3199
        %v5200 = vpack.c.b16 %v3208, %v3200
        %v5201 = vpack.c.b16 %v3209, %v3201
        %v5202 = vpack.c.b16 %v3210, %v3202
        %v5203 = vpack.c.b16 %v3211, %v3203
        %v5204 = vpack.c.b16 %v3212, %v3204
        %v5205 = vpack.c.b16 %v3213, %v3205
        %v5206 = vpack.c.b16 %v3214, %v3206
        %v5207 = vpack.c.b16 %v3223, %v3215
        %v5208 = vpack.c.b16 %v3224, %v3216
        %v5209 = vpack.c.b16 %v3225, %v3217
        %v5210 = vpack.c.b16 %v3226, %v3218
        %v5211 = vpack.c.b16 %v3227, %v3219
        %v5212 = vpack.c.b16 %v3228, %v3220
        %v5213 = vpack.c.b16 %v3229, %v3221
        %v5214 = vpack.c.b16 %v3230, %v3222
        %v5215 = vpack.c.b16 %v3239, %v3231
        %v5216 = vpack.c.b16 %v3240, %v3232
        %v5217 = vpack.c.b16 %v3241, %v3233
        %v5218 = vpack.c.b16 %v3242, %v3234
        %v5219 = vpack.c.b16 %v3243, %v3235
        %v5220 = vpack.c.b16 %v3244, %v3236
        %v5221 = vpack.c.b16 %v3245, %v3237
        %v5222 = vpack.c.b16 %v3246, %v3238
        %v5223 = vpack.c.b16 %v3255, %v3247
        %v5224 = vpack.c.b16 %v3256, %v3248
        %v5225 = vpack.c.b16 %v3257, %v3249
        %v5226 = vpack.c.b16 %v3258, %v3250
        %v5227 = vpack.c.b16 %v3259, %v3251
        %v5228 = vpack.c.b16 %v3260, %v3252
        %v5229 = vpack.c.b16 %v3261, %v3253
        %v5230 = vpack.c.b16 %v3262, %v3254
        %v5231 = vpack.c.b16 %v3271, %v3263
        %v5232 = vpack.c.b16 %v3272, %v3264
        %v5233 = vpack.c.b16 %v3273, %v3265
        %v5234 = vpack.c.b16 %v3274, %v3266
        %v5235 = vpack.c.b16 %v3275, %v3267
        %v5236 = vpack.c.b16 %v3276, %v3268
        %v5237 = vpack.c.b16 %v3277, %v3269
        %v5238 = vpack.c.b16 %v3278, %v3270
        %v5239 = vpack.c.b16 %v3287, %v3279
        %v5240 = vpack.c.b16 %v3288, %v3280
        %v5241 = vpack.c.b16 %v3289, %v3281
        %v5242 = vpack.c.b16 %v3290, %v3282
        %v5243 = vpack.c.b16 %v3291, %v3283
        %v5244 = vpack.c.b16 %v3292, %v3284
        %v5245 = vpack.c.b16 %v3293, %v3285
        %v5246 = vpack.c.b16 %v3294, %v3286
        %v5247 = vpack.c.b16 %v3303, %v3295
        %v5248 = vpack.c.b16 %v3304, %v3296
        %v5249 = vpack.c.b16 %v3305, %v3297
        %v5250 = vpack.c.b16 %v3306, %v3298
        %v5251 = vpack.c.b16 %v3307, %v3299
        %v5252 = vpack.c.b16 %v3308, %v3300
        %v5253 = vpack.c.b16 %v3309, %v3301
        %v5254 = vpack.c.b16 %v3310, %v3302
        %v5255 = vpack.c.b16 %v3319, %v3311
        %v5256 = vpack.c.b16 %v3320, %v3312
        %v5257 = vpack.c.b16 %v3321, %v3313
        %v5258 = vpack.c.b16 %v3322, %v3314
        %v5259 = vpack.c.b16 %v3323, %v3315
        %v5260 = vpack.c.b16 %v3324, %v3316
        %v5261 = vpack.c.b16 %v3325, %v3317
        %v5262 = vpack.c.b16 %v3326, %v3318
        %v5263 = vpack.c.b16 %v3335, %v3327
        %v5264 = vpack.c.b16 %v3336, %v3328
        %v5265 = vpack.c.b16 %v3337, %v3329
        %v5266 = vpack.c.b16 %v3338, %v3330
        %v5267 = vpack.c.b16 %v3339, %v3331
        %v5268 = vpack.c.b16 %v3340, %v3332
        %v5269 = vpack.c.b16 %v3341, %v3333
        %v5270 = vpack.c.b16 %v3342, %v3334
        %v5271 = vpack.c.b16 %v3351, %v3343
        %v5272 = vpack.c.b16 %v3352, %v3344
        %v5273 = vpack.c.b16 %v3353, %v3345
        %v5274 = vpack.c.b16 %v3354, %v3346
        %v5275 = vpack.c.b16 %v3355, %v3347
        %v5276 = vpack.c.b16 %v3356, %v3348
        %v5277 = vpack.c.b16 %v3357, %v3349
        %v5278 = vpack.c.b16 %v3358, %v3350
        %v5279 = vpack.c.b16 %v3367, %v3359
        %v5280 = vpack.c.b16 %v3368, %v3360
        %v5281 = vpack.c.b16 %v3369, %v3361
        %v5282 = vpack.c.b16 %v3370, %v3362
        %v5283 = vpack.c.b16 %v3371, %v3363
        %v5284 = vpack.c.b16 %v3372, %v3364
        %v5285 = vpack.c.b16 %v3373, %v3365
        %v5286 = vpack.c.b16 %v3374, %v3366
        %v5287 = vpack.c.b16 %v3383, %v3375
        %v5288 = vpack.c.b16 %v3384, %v3376
        %v5289 = vpack.c.b16 %v3385, %v3377
        %v5290 = vpack.c.b16 %v3386, %v3378
        %v5291 = vpack.c.b16 %v3387, %v3379
        %v5292 = vpack.c.b16 %v3388, %v3380
        %v5293 = vpack.c.b16 %v3389, %v3381
        %v5294 = vpack.c.b16 %v3390, %v3382
        %v5295 = vpack.c.b16 %v3399, %v3391
        %v5296 = vpack.c.b16 %v3400, %v3392
        %v5297 = vpack.c.b16 %v3401, %v3393
        %v5298 = vpack.c.b16 %v3402, %v3394
        %v5299 = vpack.c.b16 %v3403, %v3395
        %v5300 = vpack.c.b16 %v3404, %v3396
        %v5301 = vpack.c.b16 %v3405, %v3397
        %v5302 = vpack.c.b16 %v3406, %v3398
        %v5303 = vpack.c.b16 %v3415, %v3407
        %v5304 = vpack.c.b16 %v3416, %v3408
        %v5305 = vpack.c.b16 %v3417, %v3409
        %v5306 = vpack.c.b16 %v3418, %v3410
        %v5307 = vpack.c.b16 %v3419, %v3411
        %v5308 = vpack.c.b16 %v3420, %v3412
        %v5309 = vpack.c.b16 %v3421, %v3413
        %v5310 = vpack.c.b16 %v3422, %v3414
        %v5311 = vpack.c.b16 %v3431, %v3423
        %v5312 = vpack.c.b16 %v3432, %v3424
        %v5313 = vpack.c.b16 %v3433, %v3425
        %v5314 = vpack.c.b16 %v3434, %v3426
        %v5315 = vpack.c.b16 %v3435, %v3427
        %v5316 = vpack.c.b16 %v3436, %v3428
        %v5317 = vpack.c.b16 %v3437, %v3429
        %v5318 = vpack.c.b16 %v3438, %v3430
        %v5319 = vpack.c.b16 %v3447, %v3439
        %v5320 = vpack.c.b16 %v3448, %v3440
        %v5321 = vpack.c.b16 %v3449, %v3441
        %v5322 = vpack.c.b16 %v3450, %v3442
        %v5323 = vpack.c.b16 %v3451, %v3443
        %v5324 = vpack.c.b16 %v3452, %v3444
        %v5325 = vpack.c.b16 %v3453, %v3445
        %v5326 = vpack.c.b16 %v3454, %v3446
        %v5327 = vpack.c.b16 %v3463, %v3455
        %v5328 = vpack.c.b16 %v3464, %v3456
        %v5329 = vpack.c.b16 %v3465, %v3457
        %v5330 = vpack.c.b16 %v3466, %v3458
        %v5331 = vpack.c.b16 %v3467, %v3459
        %v5332 = vpack.c.b16 %v3468, %v3460
        %v5333 = vpack.c.b16 %v3469, %v3461
        %v5334 = vpack.c.b16 %v3470, %v3462
        %v5335 = vpack.c.b16 %v3479, %v3471
        %v5336 = vpack.c.b16 %v3480, %v3472
        %v5337 = vpack.c.b16 %v3481, %v3473
        %v5338 = vpack.c.b16 %v3482, %v3474
        %v5339 = vpack.c.b16 %v3483, %v3475
        %v5340 = vpack.c.b16 %v3484, %v3476
        %v5341 = vpack.c.b16 %v3485, %v3477
        %v5342 = vpack.c.b16 %v3486, %v3478
        %v5343 = vpack.c.b16 %v3495, %v3487
        %v5344 = vpack.c.b16 %v3496, %v3488
        %v5345 = vpack.c.b16 %v3497, %v3489
        %v5346 = vpack.c.b16 %v3498, %v3490
        %v5347 = vpack.c.b16 %v3499, %v3491
        %v5348 = vpack.c.b16 %v3500, %v3492
        %v5349 = vpack.c.b16 %v3501, %v3493
        %v5350 = vpack.c.b16 %v3502, %v3494
        %v5351 = vpack.c.b16 %v3511, %v3503
        %v5352 = vpack.c.b16 %v3512, %v3504
        %v5353 = vpack.c.b16 %v3513, %v3505
        %v5354 = vpack.c.b16 %v3514, %v3506
        %v5355 = vpack.c.b16 %v3515, %v3507
        %v5356 = vpack.c.b16 %v3516, %v3508
        %v5357 = vpack.c.b16 %v3517, %v3509
        %v5358 = vpack.c.b16 %v3518, %v3510
        %v5359 = vpack.c.b16 %v3527, %v3519
        %v5360 = vpack.c.b16 %v3528, %v3520
        %v5361 = vpack.c.b16 %v3529, %v3521
        %v5362 = vpack.c.b16 %v3530, %v3522
        %v5363 = vpack.c.b16 %v3531, %v3523
        %v5364 = vpack.c.b16 %v3532, %v3524
        %v5365 = vpack.c.b16 %v3533, %v3525
        %v5366 = vpack.c.b16 %v3534, %v3526
        %v5367 = vpack.c.b16 %v3543, %v3535
        %v5368 = vpack.c.b16 %v3544, %v3536
        %v5369 = vpack.c.b16 %v3545, %v3537
        %v5370 = vpack.c.b16 %v3546, %v3538
        %v5371 = vpack.c.b16 %v3547, %v3539
        %v5372 = vpack.c.b16 %v3548, %v3540
        %v5373 = vpack.c.b16 %v3549, %v3541
        %v5374 = vpack.c.b16 %v3550, %v3542
        %v5375 = vpack.c.b16 %v3559, %v3551
        %v5376 = vpack.c.b16 %v3560, %v3552
        %v5377 = vpack.c.b16 %v3561, %v3553
        %v5378 = vpack.c.b16 %v3562, %v3554
        %v5379 = vpack.c.b16 %v3563, %v3555
        %v5380 = vpack.c.b16 %v3564, %v3556
        %v5381 = vpack.c.b16 %v3565, %v3557
        %v5382 = vpack.c.b16 %v3566, %v3558
        %v5383 = vpack.c.b16 %v3575, %v3567
        %v5384 = vpack.c.b16 %v3576, %v3568
        %v5385 = vpack.c.b16 %v3577, %v3569
        %v5386 = vpack.c.b16 %v3578, %v3570
        %v5387 = vpack.c.b16 %v3579, %v3571
        %v5388 = vpack.c.b16 %v3580, %v3572
        %v5389 = vpack.c.b16 %v3581, %v3573
        %v5390 = vpack.c.b16 %v3582, %v3574
        %v5391 = vpack.c.b16 %v3591, %v3583
        %v5392 = vpack.c.b16 %v3592, %v3584
        %v5393 = vpack.c.b16 %v3593, %v3585
        %v5394 = vpack.c.b16 %v3594, %v3586
        %v5395 = vpack.c.b16 %v3595, %v3587
        %v5396 = vpack.c.b16 %v3596, %v3588
        %v5397 = vpack.c.b16 %v3597, %v3589
        %v5398 = vpack.c.b16 %v3598, %v3590
        %v5399 = vpack.c.b16 %v3607, %v3599
        %v5400 = vpack.c.b16 %v3608, %v3600
        %v5401 = vpack.c.b16 %v3609, %v3601
        %v5402 = vpack.c.b16 %v3610, %v3602
        %v5403 = vpack.c.b16 %v3611, %v3603
        %v5404 = vpack.c.b16 %v3612, %v3604
        %v5405 = vpack.c.b16 %v3613, %v3605
        %v5406 = vpack.c.b16 %v3614, %v3606
        %v5407 = vpack.c.b16 %v3623, %v3615
        %v5408 = vpack.c.b16 %v3624, %v3616
        %v5409 = vpack.c.b16 %v3625, %v3617
        %v5410 = vpack.c.b16 %v3626, %v3618
        %v5411 = vpack.c.b16 %v3627, %v3619
        %v5412 = vpack.c.b16 %v3628, %v3620
        %v5413 = vpack.c.b16 %v3629, %v3621
        %v5414 = vpack.c.b16 %v3630, %v3622
        %v5415 = vpack.c.b16 %v3639, %v3631
        %v5416 = vpack.c.b16 %v3640, %v3632
        %v5417 = vpack.c.b16 %v3641, %v3633
        %v5418 = vpack.c.b16 %v3642, %v3634
        %v5419 = vpack.c.b16 %v3643, %v3635
        %v5420 = vpack.c.b16 %v3644, %v3636
        %v5421 = vpack.c.b16 %v3645, %v3637
        %v5422 = vpack.c.b16 %v3646, %v3638
        %v5423 = vpack.c.b16 %v3655, %v3647
        %v5424 = vpack.c.b16 %v3656, %v3648
        %v5425 = vpack.c.b16 %v3657, %v3649
        %v5426 = vpack.c.b16 %v3658, %v3650
        %v5427 = vpack.c.b16 %v3659, %v3651
        %v5428 = vpack.c.b16 %v3660, %v3652
        %v5429 = vpack.c.b16 %v3661, %v3653
        %v5430 = vpack.c.b16 %v3662, %v3654
        %v5431 = vpack.c.b16 %v3671, %v3663
        %v5432 = vpack.c.b16 %v3672, %v3664
        %v5433 = vpack.c.b16 %v3673, %v3665
        %v5434 = vpack.c.b16 %v3674, %v3666
        %v5435 = vpack.c.b16 %v3675, %v3667
        %v5436 = vpack.c.b16 %v3676, %v3668
        %v5437 = vpack.c.b16 %v3677, %v3669
        %v5438 = vpack.c.b16 %v3678, %v3670
        %v5439 = vpack.c.b16 %v3687, %v3679
        %v5440 = vpack.c.b16 %v3688, %v3680
        %v5441 = vpack.c.b16 %v3689, %v3681
        %v5442 = vpack.c.b16 %v3690, %v3682
        %v5443 = vpack.c.b16 %v3691, %v3683
        %v5444 = vpack.c.b16 %v3692, %v3684
        %v5445 = vpack.c.b16 %v3693, %v3685
        %v5446 = vpack.c.b16 %v3694, %v3686
        %v5447 = vpack.c.b16 %v3703, %v3695
        %v5448 = vpack.c.b16 %v3704, %v3696
        %v5449 = vpack.c.b16 %v3705, %v3697
        %v5450 = vpack.c.b16 %v3706, %v3698
        %v5451 = vpack.c.b16 %v3707, %v3699
        %v5452 = vpack.c.b16 %v3708, %v3700
        %v5453 = vpack.c.b16 %v3709, %v3701
        %v5454 = vpack.c.b16 %v3710, %v3702
        %v5455 = vpack.c.b16 %v3719, %v3711
        %v5456 = vpack.c.b16 %v3720, %v3712
        %v5457 = vpack.c.b16 %v3721, %v3713
        %v5458 = vpack.c.b16 %v3722, %v3714
        %v5459 = vpack.c.b16 %v3723, %v3715
        %v5460 = vpack.c.b16 %v3724, %v3716
        %v5461 = vpack.c.b16 %v3725, %v3717
        %v5462 = vpack.c.b16 %v3726, %v3718
        %v5463 = vpack.c.b16 %v3735, %v3727
        %v5464 = vpack.c.b16 %v3736, %v3728
        %v5465 = vpack.c.b16 %v3737, %v3729
        %v5466 = vpack.c.b16 %v3738, %v3730
        %v5467 = vpack.c.b16 %v3739, %v3731
        %v5468 = vpack.c.b16 %v3740, %v3732
        %v5469 = vpack.c.b16 %v3741, %v3733
        %v5470 = vpack.c.b16 %v3742, %v3734
        %v5471 = vpack.c.b16 %v3751, %v3743
        %v5472 = vpack.c.b16 %v3752, %v3744
        %v5473 = vpack.c.b16 %v3753, %v3745
        %v5474 = vpack.c.b16 %v3754, %v3746
        %v5475 = vpack.c.b16 %v3755, %v3747
        %v5476 = vpack.c.b16 %v3756, %v3748
        %v5477 = vpack.c.b16 %v3757, %v3749
        %v5478 = vpack.c.b16 %v3758, %v3750
        %v5479 = vpack.c.b16 %v3767, %v3759
        %v5480 = vpack.c.b16 %v3768, %v3760
        %v5481 = vpack.c.b16 %v3769, %v3761
        %v5482 = vpack.c.b16 %v3770, %v3762
        %v5483 = vpack.c.b16 %v3771, %v3763
        %v5484 = vpack.c.b16 %v3772, %v3764
        %v5485 = vpack.c.b16 %v3773, %v3765
        %v5486 = vpack.c.b16 %v3774, %v3766
        %v5487 = vpack.c.b16 %v3783, %v3775
        %v5488 = vpack.c.b16 %v3784, %v3776
        %v5489 = vpack.c.b16 %v3785, %v3777
        %v5490 = vpack.c.b16 %v3786, %v3778
        %v5491 = vpack.c.b16 %v3787, %v3779
        %v5492 = vpack.c.b16 %v3788, %v3780
        %v5493 = vpack.c.b16 %v3789, %v3781
        %v5494 = vpack.c.b16 %v3790, %v3782
        %v5495 = vpack.c.b16 %v3799, %v3791
        %v5496 = vpack.c.b16 %v3800, %v3792
        %v5497 = vpack.c.b16 %v3801, %v3793
        %v5498 = vpack.c.b16 %v3802, %v3794
        %v5499 = vpack.c.b16 %v3803, %v3795
        %v5500 = vpack.c.b16 %v3804, %v3796
        %v5501 = vpack.c.b16 %v3805, %v3797
        %v5502 = vpack.c.b16 %v3806, %v3798
        %v5503 = vpack.c.b16 %v3815, %v3807
        %v5504 = vpack.c.b16 %v3816, %v3808
        %v5505 = vpack.c.b16 %v3817, %v3809
        %v5506 = vpack.c.b16 %v3818, %v3810
        %v5507 = vpack.c.b16 %v3819, %v3811
        %v5508 = vpack.c.b16 %v3820, %v3812
        %v5509 = vpack.c.b16 %v3821, %v3813
        %v5510 = vpack.c.b16 %v3822, %v3814
        %v5511 = vpack.c.b16 %v3831, %v3823
        %v5512 = vpack.c.b16 %v3832, %v3824
        %v5513 = vpack.c.b16 %v3833, %v3825
        %v5514 = vpack.c.b16 %v3834, %v3826
        %v5515 = vpack.c.b16 %v3835, %v3827
        %v5516 = vpack.c.b16 %v3836, %v3828
        %v5517 = vpack.c.b16 %v3837, %v3829
        %v5518 = vpack.c.b16 %v3838, %v3830
        %v5519 = vpack.c.b16 %v3847, %v3839
        %v5520 = vpack.c.b16 %v3848, %v3840
        %v5521 = vpack.c.b16 %v3849, %v3841
        %v5522 = vpack.c.b16 %v3850, %v3842
        %v5523 = vpack.c.b16 %v3851, %v3843
        %v5524 = vpack.c.b16 %v3852, %v3844
        %v5525 = vpack.c.b16 %v3853, %v3845
        %v5526 = vpack.c.b16 %v3854, %v3846
        %v5527 = vpack.c.b16 %v3863, %v3855
        %v5528 = vpack.c.b16 %v3864, %v3856
        %v5529 = vpack.c.b16 %v3865, %v3857
        %v5530 = vpack.c.b16 %v3866, %v3858
        %v5531 = vpack.c.b16 %v3867, %v3859
        %v5532 = vpack.c.b16 %v3868, %v3860
        %v5533 = vpack.c.b16 %v3869, %v3861
        %v5534 = vpack.c.b16 %v3870, %v3862
        %v5535 = vpack.c.b16 %v3879, %v3871
        %v5536 = vpack.c.b16 %v3880, %v3872
        %v5537 = vpack.c.b16 %v3881, %v3873
        %v5538 = vpack.c.b16 %v3882, %v3874
        %v5539 = vpack.c.b16 %v3883, %v3875
        %v5540 = vpack.c.b16 %v3884, %v3876
        %v5541 = vpack.c.b16 %v3885, %v3877
        %v5542 = vpack.c.b16 %v3886, %v3878
        %v5543 = vpack.c.b16 %v3895, %v3887
        %v5544 = vpack.c.b16 %v3896, %v3888
        %v5545 = vpack.c.b16 %v3897, %v3889
        %v5546 = vpack.c.b16 %v3898, %v3890
        %v5547 = vpack.c.b16 %v3899, %v3891
        %v5548 = vpack.c.b16 %v3900, %v3892
        %v5549 = vpack.c.b16 %v3901, %v3893
        %v5550 = vpack.c.b16 %v3902, %v3894
        %v5551 = vpack.c.b16 %v3911, %v3903
        %v5552 = vpack.c.b16 %v3912, %v3904
        %v5553 = vpack.c.b16 %v3913, %v3905
        %v5554 = vpack.c.b16 %v3914, %v3906
        %v5555 = vpack.c.b16 %v3915, %v3907
        %v5556 = vpack.c.b16 %v3916, %v3908
        %v5557 = vpack.c.b16 %v3917, %v3909
        %v5558 = vpack.c.b16 %v3918, %v3910
        %v5559 = vpack.c.b16 %v3927, %v3919
        %v5560 = vpack.c.b16 %v3928, %v3920
        %v5561 = vpack.c.b16 %v3929, %v3921
        %v5562 = vpack.c.b16 %v3930, %v3922
        %v5563 = vpack.c.b16 %v3931, %v3923
        %v5564 = vpack.c.b16 %v3932, %v3924
        %v5565 = vpack.c.b16 %v3933, %v3925
        %v5566 = vpack.c.b16 %v3934, %v3926
        %v5567 = vpack.c.b16 %v3943, %v3935
        %v5568 = vpack.c.b16 %v3944, %v3936
        %v5569 = vpack.c.b16 %v3945, %v3937
        %v5570 = vpack.c.b16 %v3946, %v3938
        %v5571 = vpack.c.b16 %v3947, %v3939
        %v5572 = vpack.c.b16 %v3948, %v3940
        %v5573 = vpack.c.b16 %v3949, %v3941
        %v5574 = vpack.c.b16 %v3950, %v3942
        %v5575 = vpack.c.b16 %v3959, %v3951
        %v5576 = vpack.c.b16 %v3960, %v3952
        %v5577 = vpack.c.b16 %v3961, %v3953
        %v5578 = vpack.c.b16 %v3962, %v3954
        %v5579 = vpack.c.b16 %v3963, %v3955
        %v5580 = vpack.c.b16 %v3964, %v3956
        %v5581 = vpack.c.b16 %v3965, %v3957
        %v5582 = vpack.c.b16 %v3966, %v3958
        %v5583 = vpack.c.b16 %v3975, %v3967
        %v5584 = vpack.c.b16 %v3976, %v3968
        %v5585 = vpack.c.b16 %v3977, %v3969
        %v5586 = vpack.c.b16 %v3978, %v3970
        %v5587 = vpack.c.b16 %v3979, %v3971
        %v5588 = vpack.c.b16 %v3980, %v3972
        %v5589 = vpack.c.b16 %v3981, %v3973
        %v5590 = vpack.c.b16 %v3982, %v3974
        %v5591 = vpack.c.b16 %v3991, %v3983
        %v5592 = vpack.c.b16 %v3992, %v3984
        %v5593 = vpack.c.b16 %v3993, %v3985
        %v5594 = vpack.c.b16 %v3994, %v3986
        %v5595 = vpack.c.b16 %v3995, %v3987
        %v5596 = vpack.c.b16 %v3996, %v3988
        %v5597 = vpack.c.b16 %v3997, %v3989
        %v5598 = vpack.c.b16 %v3998, %v3990
        %v5599 = vpack.c.b16 %v4007, %v3999
        %v5600 = vpack.c.b16 %v4008, %v4000
        %v5601 = vpack.c.b16 %v4009, %v4001
        %v5602 = vpack.c.b16 %v4010, %v4002
        %v5603 = vpack.c.b16 %v4011, %v4003
        %v5604 = vpack.c.b16 %v4012, %v4004
        %v5605 = vpack.c.b16 %v4013, %v4005
        %v5606 = vpack.c.b16 %v4014, %v4006
        %v5607 = vpack.c.b16 %v4023, %v4015
        %v5608 = vpack.c.b16 %v4024, %v4016
        %v5609 = vpack.c.b16 %v4025, %v4017
        %v5610 = vpack.c.b16 %v4026, %v4018
        %v5611 = vpack.c.b16 %v4027, %v4019
        %v5612 = vpack.c.b16 %v4028, %v4020
        %v5613 = vpack.c.b16 %v4029, %v4021
        %v5614 = vpack.c.b16 %v4030, %v4022
        %v5615 = vpack.c.b16 %v4039, %v4031
        %v5616 = vpack.c.b16 %v4040, %v4032
        %v5617 = vpack.c.b16 %v4041, %v4033
        %v5618 = vpack.c.b16 %v4042, %v4034
        %v5619 = vpack.c.b16 %v4043, %v4035
        %v5620 = vpack.c.b16 %v4044, %v4036
        %v5621 = vpack.c.b16 %v4045, %v4037
        %v5622 = vpack.c.b16 %v4046, %v4038
        %v5623 = vpack.c.b16 %v4055, %v4047
        %v5624 = vpack.c.b16 %v4056, %v4048
        %v5625 = vpack.c.b16 %v4057, %v4049
        %v5626 = vpack.c.b16 %v4058, %v4050
        %v5627 = vpack.c.b16 %v4059, %v4051
        %v5628 = vpack.c.b16 %v4060, %v4052
        %v5629 = vpack.c.b16 %v4061, %v4053
        %v5630 = vpack.c.b16 %v4062, %v4054
        %v5631 = vpack.c.b16 %v4071, %v4063
        %v5632 = vpack.c.b16 %v4072, %v4064
        %v5633 = vpack.c.b16 %v4073, %v4065
        %v5634 = vpack.c.b16 %v4074, %v4066
        %v5635 = vpack.c.b16 %v4075, %v4067
        %v5636 = vpack.c.b16 %v4076, %v4068
        %v5637 = vpack.c.b16 %v4077, %v4069
        %v5638 = vpack.c.b16 %v4078, %v4070
        %v5639 = vpack.c.b16 %v4087, %v4079
        %v5640 = vpack.c.b16 %v4088, %v4080
        %v5641 = vpack.c.b16 %v4089, %v4081
        %v5642 = vpack.c.b16 %v4090, %v4082
        %v5643 = vpack.c.b16 %v4091, %v4083
        %v5644 = vpack.c.b16 %v4092, %v4084
        %v5645 = vpack.c.b16 %v4093, %v4085
        %v5646 = vpack.c.b16 %v4094, %v4086
        %v5647 = vpack.c.b16 %v4103, %v4095
        %v5648 = vpack.c.b16 %v4104, %v4096
        %v5649 = vpack.c.b16 %v4105, %v4097
        %v5650 = vpack.c.b16 %v4106, %v4098
        %v5651 = vpack.c.b16 %v4107, %v4099
        %v5652 = vpack.c.b16 %v4108, %v4100
        %v5653 = vpack.c.b16 %v4109, %v4101
        %v5654 = vpack.c.b16 %v4110, %v4102
        %v5655 = vpack.c.b16 %v4119, %v4111
        %v5656 = vpack.c.b16 %v4120, %v4112
        %v5657 = vpack.c.b16 %v4121, %v4113
        %v5658 = vpack.c.b16 %v4122, %v4114
        %v5659 = vpack.c.b16 %v4123, %v4115
        %v5660 = vpack.c.b16 %v4124, %v4116
        %v5661 = vpack.c.b16 %v4125, %v4117
        %v5662 = vpack.c.b16 %v4126, %v4118
        %v5663 = vpack.c.b16 %v4135, %v4127
        %v5664 = vpack.c.b16 %v4136, %v4128
        %v5665 = vpack.c.b16 %v4137, %v4129
        %v5666 = vpack.c.b16 %v4138, %v4130
        %v5667 = vpack.c.b16 %v4139, %v4131
        %v5668 = vpack.c.b16 %v4140, %v4132
        %v5669 = vpack.c.b16 %v4141, %v4133
        %v5670 = vpack.c.b16 %v4142, %v4134
        %v5671 = vpack.c.b16 %v4151, %v4143
        %v5672 = vpack.c.b16 %v4152, %v4144
        %v5673 = vpack.c.b16 %v4153, %v4145
        %v5674 = vpack.c.b16 %v4154, %v4146
        %v5675 = vpack.c.b16 %v4155, %v4147
        %v5676 = vpack.c.b16 %v4156, %v4148
        %v5677 = vpack.c.b16 %v4157, %v4149
        %v5678 = vpack.c.b16 %v4158, %v4150
        %v5679 = vpack.c.b16 %v4167, %v4159
        %v5680 = vpack.c.b16 %v4168, %v4160
        %v5681 = vpack.c.b16 %v4169, %v4161
        %v5682 = vpack.c.b16 %v4170, %v4162
        %v5683 = vpack.c.b16 %v4171, %v4163
        %v5684 = vpack.c.b16 %v4172, %v4164
        %v5685 = vpack.c.b16 %v4173, %v4165
        %v5686 = vpack.c.b16 %v4174, %v4166
        %v5687 = vpack.c.b16 %v4183, %v4175
        %v5688 = vpack.c.b16 %v4184, %v4176
        %v5689 = vpack.c.b16 %v4185, %v4177
        %v5690 = vpack.c.b16 %v4186, %v4178
        %v5691 = vpack.c.b16 %v4187, %v4179
        %v5692 = vpack.c.b16 %v4188, %v4180
        %v5693 = vpack.c.b16 %v4189, %v4181
        %v5694 = vpack.c.b16 %v4190, %v4182
        %v5695 = vpack.c.b16 %v4199, %v4191
        %v5696 = vpack.c.b16 %v4200, %v4192
        %v5697 = vpack.c.b16 %v4201, %v4193
        %v5698 = vpack.c.b16 %v4202, %v4194
        %v5699 = vpack.c.b16 %v4203, %v4195
        %v5700 = vpack.c.b16 %v4204, %v4196
        %v5701 = vpack.c.b16 %v4205, %v4197
        %v5702 = vpack.c.b16 %v4206, %v4198
        %v5703 = vpack.c.b16 %v4215, %v4207
        %v5704 = vpack.c.b16 %v4216, %v4208
        %v5705 = vpack.c.b16 %v4217, %v4209
        %v5706 = vpack.c.b16 %v4218, %v4210
        %v5707 = vpack.c.b16 %v4219, %v4211
        %v5708 = vpack.c.b16 %v4220, %v4212
        %v5709 = vpack.c.b16 %v4221, %v4213
        %v5710 = vpack.c.b16 %v4222, %v4214
        %v5711 = vpack.c.b16 %v4231, %v4223
        %v5712 = vpack.c.b16 %v4232, %v4224
        %v5713 = vpack.c.b16 %v4233, %v4225
        %v5714 = vpack.c.b16 %v4234, %v4226
        %v5715 = vpack.c.b16 %v4235, %v4227
        %v5716 = vpack.c.b16 %v4236, %v4228
        %v5717 = vpack.c.b16 %v4237, %v4229
        %v5718 = vpack.c.b16 %v4238, %v4230
        %v5719 = vpack.c.b16 %v4247, %v4239
        %v5720 = vpack.c.b16 %v4248, %v4240
        %v5721 = vpack.c.b16 %v4249, %v4241
        %v5722 = vpack.c.b16 %v4250, %v4242
        %v5723 = vpack.c.b16 %v4251, %v4243
        %v5724 = vpack.c.b16 %v4252, %v4244
        %v5725 = vpack.c.b16 %v4253, %v4245
        %v5726 = vpack.c.b16 %v4254, %v4246
        %v5727 = vpack.c.b16 %v4263, %v4255
        %v5728 = vpack.c.b16 %v4264, %v4256
        %v5729 = vpack.c.b16 %v4265, %v4257
        %v5730 = vpack.c.b16 %v4266, %v4258
        %v5731 = vpack.c.b16 %v4267, %v4259
        %v5732 = vpack.c.b16 %v4268, %v4260
        %v5733 = vpack.c.b16 %v4269, %v4261
        %v5734 = vpack.c.b16 %v4270, %v4262
        %v5735 = vpack.c.b16 %v4279, %v4271
        %v5736 = vpack.c.b16 %v4280, %v4272
        %v5737 = vpack.c.b16 %v4281, %v4273
        %v5738 = vpack.c.b16 %v4282, %v4274
        %v5739 = vpack.c.b16 %v4283, %v4275
        %v5740 = vpack.c.b16 %v4284, %v4276
        %v5741 = vpack.c.b16 %v4285, %v4277
        %v5742 = vpack.c.b16 %v4286, %v4278
        %v5743 = vpack.c.b16 %v4295, %v4287
        %v5744 = vpack.c.b16 %v4296, %v4288
        %v5745 = vpack.c.b16 %v4297, %v4289
        %v5746 = vpack.c.b16 %v4298, %v4290
        %v5747 = vpack.c.b16 %v4299, %v4291
        %v5748 = vpack.c.b16 %v4300, %v4292
        %v5749 = vpack.c.b16 %v4301, %v4293
        %v5750 = vpack.c.b16 %v4302, %v4294
        %v5751 = vpack.c.b16 %v4311, %v4303
        %v5752 = vpack.c.b16 %v4312, %v4304
        %v5753 = vpack.c.b16 %v4313, %v4305
        %v5754 = vpack.c.b16 %v4314, %v4306
        %v5755 = vpack.c.b16 %v4315, %v4307
        %v5756 = vpack.c.b16 %v4316, %v4308
        %v5757 = vpack.c.b16 %v4317, %v4309
        %v5758 = vpack.c.b16 %v4318, %v4310
        %v5759 = vpack.c.b16 %v4327, %v4319
        %v5760 = vpack.c.b16 %v4328, %v4320
        %v5761 = vpack.c.b16 %v4329, %v4321
        %v5762 = vpack.c.b16 %v4330, %v4322
        %v5763 = vpack.c.b16 %v4331, %v4323
        %v5764 = vpack.c.b16 %v4332, %v4324
        %v5765 = vpack.c.b16 %v4333, %v4325
        %v5766 = vpack.c.b16 %v4334, %v4326
        %v5767 = vpack.c.b16 %v4343, %v4335
        %v5768 = vpack.c.b16 %v4344, %v4336
        %v5769 = vpack.c.b16 %v4345, %v4337
        %v5770 = vpack.c.b16 %v4346, %v4338
        %v5771 = vpack.c.b16 %v4347, %v4339
        %v5772 = vpack.c.b16 %v4348, %v4340
        %v5773 = vpack.c.b16 %v4349, %v4341
        %v5774 = vpack.c.b16 %v4350, %v4342
        %v5775 = vpack.c.b16 %v4359, %v4351
        %v5776 = vpack.c.b16 %v4360, %v4352
        %v5777 = vpack.c.b16 %v4361, %v4353
        %v5778 = vpack.c.b16 %v4362, %v4354
        %v5779 = vpack.c.b16 %v4363, %v4355
        %v5780 = vpack.c.b16 %v4364, %v4356
        %v5781 = vpack.c.b16 %v4365, %v4357
        %v5782 = vpack.c.b16 %v4366, %v4358
        %v5783 = vpack.c.b16 %v4375, %v4367
        %v5784 = vpack.c.b16 %v4376, %v4368
        %v5785 = vpack.c.b16 %v4377, %v4369
        %v5786 = vpack.c.b16 %v4378, %v4370
        %v5787 = vpack.c.b16 %v4379, %v4371
        %v5788 = vpack.c.b16 %v4380, %v4372
        %v5789 = vpack.c.b16 %v4381, %v4373
        %v5790 = vpack.c.b16 %v4382, %v4374
        %v5791 = vpack.c.b16 %v4391, %v4383
        %v5792 = vpack.c.b16 %v4392, %v4384
        %v5793 = vpack.c.b16 %v4393, %v4385
        %v5794 = vpack.c.b16 %v4394, %v4386
        %v5795 = vpack.c.b16 %v4395, %v4387
        %v5796 = vpack.c.b16 %v4396, %v4388
        %v5797 = vpack.c.b16 %v4397, %v4389
        %v5798 = vpack.c.b16 %v4398, %v4390
        %v5799 = vpack.c.b16 %v4407, %v4399
        %v5800 = vpack.c.b16 %v4408, %v4400
        %v5801 = vpack.c.b16 %v4409, %v4401
        %v5802 = vpack.c.b16 %v4410, %v4402
        %v5803 = vpack.c.b16 %v4411, %v4403
        %v5804 = vpack.c.b16 %v4412, %v4404
        %v5805 = vpack.c.b16 %v4413, %v4405
        %v5806 = vpack.c.b16 %v4414, %v4406
        %v5807 = vpack.c.b16 %v4423, %v4415
        %v5808 = vpack.c.b16 %v4424, %v4416
        %v5809 = vpack.c.b16 %v4425, %v4417
        %v5810 = vpack.c.b16 %v4426, %v4418
        %v5811 = vpack.c.b16 %v4427, %v4419
        %v5812 = vpack.c.b16 %v4428, %v4420
        %v5813 = vpack.c.b16 %v4429, %v4421
        %v5814 = vpack.c.b16 %v4430, %v4422
        %v5815 = vpack.c.b16 %v4439, %v4431
        %v5816 = vpack.c.b16 %v4440, %v4432
        %v5817 = vpack.c.b16 %v4441, %v4433
        %v5818 = vpack.c.b16 %v4442, %v4434
        %v5819 = vpack.c.b16 %v4443, %v4435
        %v5820 = vpack.c.b16 %v4444, %v4436
        %v5821 = vpack.c.b16 %v4445, %v4437
        %v5822 = vpack.c.b16 %v4446, %v4438
        %v5823 = vpack.c.b16 %v4455, %v4447
        %v5824 = vpack.c.b16 %v4456, %v4448
        %v5825 = vpack.c.b16 %v4457, %v4449
        %v5826 = vpack.c.b16 %v4458, %v4450
        %v5827 = vpack.c.b16 %v4459, %v4451
        %v5828 = vpack.c.b16 %v4460, %v4452
        %v5829 = vpack.c.b16 %v4461, %v4453
        %v5830 = vpack.c.b16 %v4462, %v4454
        %v5831 = vpack.c.b16 %v4471, %v4463
        %v5832 = vpack.c.b16 %v4472, %v4464
        %v5833 = vpack.c.b16 %v4473, %v4465
        %v5834 = vpack.c.b16 %v4474, %v4466
        %v5835 = vpack.c.b16 %v4475, %v4467
        %v5836 = vpack.c.b16 %v4476, %v4468
        %v5837 = vpack.c.b16 %v4477, %v4469
        %v5838 = vpack.c.b16 %v4478, %v4470
        %v5839 = vpack.c.b16 %v4487, %v4479
        %v5840 = vpack.c.b16 %v4488, %v4480
        %v5841 = vpack.c.b16 %v4489, %v4481
        %v5842 = vpack.c.b16 %v4490, %v4482
        %v5843 = vpack.c.b16 %v4491, %v4483
        %v5844 = vpack.c.b16 %v4492, %v4484
        %v5845 = vpack.c.b16 %v4493, %v4485
        %v5846 = vpack.c.b16 %v4494, %v4486
        %v5847 = vpack.c.b16 %v4503, %v4495
        %v5848 = vpack.c.b16 %v4504, %v4496
        %v5849 = vpack.c.b16 %v4505, %v4497
        %v5850 = vpack.c.b16 %v4506, %v4498
        %v5851 = vpack.c.b16 %v4507, %v4499
        %v5852 = vpack.c.b16 %v4508, %v4500
        %v5853 = vpack.c.b16 %v4509, %v4501
        %v5854 = vpack.c.b16 %v4510, %v4502
        %v5855 = vpack.c.b16 %v4519, %v4511
        %v5856 = vpack.c.b16 %v4520, %v4512
        %v5857 = vpack.c.b16 %v4521, %v4513
        %v5858 = vpack.c.b16 %v4522, %v4514
        %v5859 = vpack.c.b16 %v4523, %v4515
        %v5860 = vpack.c.b16 %v4524, %v4516
        %v5861 = vpack.c.b16 %v4525, %v4517
        %v5862 = vpack.c.b16 %v4526, %v4518
        %v5863 = vpack.c.b16 %v4535, %v4527
        %v5864 = vpack.c.b16 %v4536, %v4528
        %v5865 = vpack.c.b16 %v4537, %v4529
        %v5866 = vpack.c.b16 %v4538, %v4530
        %v5867 = vpack.c.b16 %v4539, %v4531
        %v5868 = vpack.c.b16 %v4540, %v4532
        %v5869 = vpack.c.b16 %v4541, %v4533
        %v5870 = vpack.c.b16 %v4542, %v4534
        %v5871 = vpack.c.b16 %v4551, %v4543
        %v5872 = vpack.c.b16 %v4552, %v4544
        %v5873 = vpack.c.b16 %v4553, %v4545
        %v5874 = vpack.c.b16 %v4554, %v4546
        %v5875 = vpack.c.b16 %v4555, %v4547
        %v5876 = vpack.c.b16 %v4556, %v4548
        %v5877 = vpack.c.b16 %v4557, %v4549
        %v5878 = vpack.c.b16 %v4558, %v4550
        %v5879 = vpack.c.b16 %v4567, %v4559
        %v5880 = vpack.c.b16 %v4568, %v4560
        %v5881 = vpack.c.b16 %v4569, %v4561
        %v5882 = vpack.c.b16 %v4570, %v4562
        %v5883 = vpack.c.b16 %v4571, %v4563
        %v5884 = vpack.c.b16 %v4572, %v4564
        %v5885 = vpack.c.b16 %v4573, %v4565
        %v5886 = vpack.c.b16 %v4574, %v4566
        %v5887 = vpack.c.b16 %v4583, %v4575
        %v5888 = vpack.c.b16 %v4584, %v4576
        %v5889 = vpack.c.b16 %v4585, %v4577
        %v5890 = vpack.c.b16 %v4586, %v4578
        %v5891 = vpack.c.b16 %v4587, %v4579
        %v5892 = vpack.c.b16 %v4588, %v4580
        %v5893 = vpack.c.b16 %v4589, %v4581
        %v5894 = vpack.c.b16 %v4590, %v4582
        %v5895 = vpack.c.b16 %v4599, %v4591
        %v5896 = vpack.c.b16 %v4600, %v4592
        %v5897 = vpack.c.b16 %v4601, %v4593
        %v5898 = vpack.c.b16 %v4602, %v4594
        %v5899 = vpack.c.b16 %v4603, %v4595
        %v5900 = vpack.c.b16 %v4604, %v4596
        %v5901 = vpack.c.b16 %v4605, %v4597
        %v5902 = vpack.c.b16 %v4606, %v4598
        %v5903 = vpack.c.b16 %v4615, %v4607
        %v5904 = vpack.c.b16 %v4616, %v4608
        %v5905 = vpack.c.b16 %v4617, %v4609
        %v5906 = vpack.c.b16 %v4618, %v4610
        %v5907 = vpack.c.b16 %v4619, %v4611
        %v5908 = vpack.c.b16 %v4620, %v4612
        %v5909 = vpack.c.b16 %v4621, %v4613
        %v5910 = vpack.c.b16 %v4622, %v4614
        %v5911 = vpack.c.b16 %v4631, %v4623
        %v5912 = vpack.c.b16 %v4632, %v4624
        %v5913 = vpack.c.b16 %v4633, %v4625
        %v5914 = vpack.c.b16 %v4634, %v4626
        %v5915 = vpack.c.b16 %v4635, %v4627
        %v5916 = vpack.c.b16 %v4636, %v4628
        %v5917 = vpack.c.b16 %v4637, %v4629
        %v5918 = vpack.c.b16 %v4638, %v4630
        %v5919 = vpack.c.b16 %v4647, %v4639
        %v5920 = vpack.c.b16 %v4648, %v4640
        %v5921 = vpack.c.b16 %v4649, %v4641
        %v5922 = vpack.c.b16 %v4650, %v4642
        %v5923 = vpack.c.b16 %v4651, %v4643
        %v5924 = vpack.c.b16 %v4652, %v4644
        %v5925 = vpack.c.b16 %v4653, %v4645
        %v5926 = vpack.c.b16 %v4654, %v4646
        %v5927 = vpack.c.b16 %v4663, %v4655
        %v5928 = vpack.c.b16 %v4664, %v4656
        %v5929 = vpack.c.b16 %v4665, %v4657
        %v5930 = vpack.c.b16 %v4666, %v4658
        %v5931 = vpack.c.b16 %v4667, %v4659
        %v5932 = vpack.c.b16 %v4668, %v4660
        %v5933 = vpack.c.b16 %v4669, %v4661
        %v5934 = vpack.c.b16 %v4670, %v4662
        %v5935 = vpack.c.b16 %v4679, %v4671
        %v5936 = vpack.c.b16 %v4680, %v4672
        %v5937 = vpack.c.b16 %v4681, %v4673
        %v5938 = vpack.c.b16 %v4682, %v4674
        %v5939 = vpack.c.b16 %v4683, %v4675
        %v5940 = vpack.c.b16 %v4684, %v4676
        %v5941 = vpack.c.b16 %v4685, %v4677
        %v5942 = vpack.c.b16 %v4686, %v4678
        %v5943 = vpack.c.b16 %v4695, %v4687
        %v5944 = vpack.c.b16 %v4696, %v4688
        %v5945 = vpack.c.b16 %v4697, %v4689
        %v5946 = vpack.c.b16 %v4698, %v4690
        %v5947 = vpack.c.b16 %v4699, %v4691
        %v5948 = vpack.c.b16 %v4700, %v4692
        %v5949 = vpack.c.b16 %v4701, %v4693
        %v5950 = vpack.c.b16 %v4702, %v4694
        %v5951 = vpack.c.b16 %v4711, %v4703
        %v5952 = vpack.c.b16 %v4712, %v4704
        %v5953 = vpack.c.b16 %v4713, %v4705
        %v5954 = vpack.c.b16 %v4714, %v4706
        %v5955 = vpack.c.b16 %v4715, %v4707
        %v5956 = vpack.c.b16 %v4716, %v4708
        %v5957 = vpack.c.b16 %v4717, %v4709
        %v5958 = vpack.c.b16 %v4718, %v4710
        %v5959 = vpack.c.b16 %v4727, %v4719
        %v5960 = vpack.c.b16 %v4728, %v4720
        %v5961 = vpack.c.b16 %v4729, %v4721
        %v5962 = vpack.c.b16 %v4730, %v4722
        %v5963 = vpack.c.b16 %v4731, %v4723
        %v5964 = vpack.c.b16 %v4732, %v4724
        %v5965 = vpack.c.b16 %v4733, %v4725
        %v5966 = vpack.c.b16 %v4734, %v4726
        %v5967 = vpack.c.b16 %v4743, %v4735
        %v5968 = vpack.c.b16 %v4744, %v4736
        %v5969 = vpack.c.b16 %v4745, %v4737
        %v5970 = vpack.c.b16 %v4746, %v4738
        %v5971 = vpack.c.b16 %v4747, %v4739
        %v5972 = vpack.c.b16 %v4748, %v4740
        %v5973 = vpack.c.b16 %v4749, %v4741
        %v5974 = vpack.c.b16 %v4750, %v4742
        %v5975 = vpack.c.b16 %v4759, %v4751
        %v5976 = vpack.c.b16 %v4760, %v4752
        %v5977 = vpack.c.b16 %v4761, %v4753
        %v5978 = vpack.c.b16 %v4762, %v4754
        %v5979 = vpack.c.b16 %v4763, %v4755
        %v5980 = vpack.c.b16 %v4764, %v4756
        %v5981 = vpack.c.b16 %v4765, %v4757
        %v5982 = vpack.c.b16 %v4766, %v4758
        %v5983 = vpack.c.b16 %v4775, %v4767
        %v5984 = vpack.c.b16 %v4776, %v4768
        %v5985 = vpack.c.b16 %v4777, %v4769
        %v5986 = vpack.c.b16 %v4778, %v4770
        %v5987 = vpack.c.b16 %v4779, %v4771
        %v5988 = vpack.c.b16 %v4780, %v4772
        %v5989 = vpack.c.b16 %v4781, %v4773
        %v5990 = vpack.c.b16 %v4782, %v4774
        %v5991 = vpack.c.b16 %v4791, %v4783
        %v5992 = vpack.c.b16 %v4792, %v4784
        %v5993 = vpack.c.b16 %v4793, %v4785
        %v5994 = vpack.c.b16 %v4794, %v4786
        %v5995 = vpack.c.b16 %v4795, %v4787
        %v5996 = vpack.c.b16 %v4796, %v4788
        %v5997 = vpack.c.b16 %v4797, %v4789
        %v5998 = vpack.c.b16 %v4798, %v4790
        %v5999 = vpack.c.b16 %v4807, %v4799
        %v6000 = vpack.c.b16 %v4808, %v4800
        %v6001 = vpack.c.b16 %v4809, %v4801
        %v6002 = vpack.c.b16 %v4810, %v4802
        %v6003 = vpack.c.b16 %v4811, %v4803
        %v6004 = vpack.c.b16 %v4812, %v4804
        %v6005 = vpack.c.b16 %v4813, %v4805
        %v6006 = vpack.c.b16 %v4814, %v4806
        %v6007 = vpack.c.b16 %v4823, %v4815
        %v6008 = vpack.c.b16 %v4824, %v4816
        %v6009 = vpack.c.b16 %v4825, %v4817
        %v6010 = vpack.c.b16 %v4826, %v4818
        %v6011 = vpack.c.b16 %v4827, %v4819
        %v6012 = vpack.c.b16 %v4828, %v4820
        %v6013 = vpack.c.b16 %v4829, %v4821
        %v6014 = vpack.c.b16 %v4830, %v4822
        %v6015 = vpack.c.b16 %v4839, %v4831
        %v6016 = vpack.c.b16 %v4840, %v4832
        %v6017 = vpack.c.b16 %v4841, %v4833
        %v6018 = vpack.c.b16 %v4842, %v4834
        %v6019 = vpack.c.b16 %v4843, %v4835
        %v6020 = vpack.c.b16 %v4844, %v4836
        %v6021 = vpack.c.b16 %v4845, %v4837
        %v6022 = vpack.c.b16 %v4846, %v4838
        %v6023 = vpack.c.b16 %v4855, %v4847
        %v6024 = vpack.c.b16 %v4856, %v4848
        %v6025 = vpack.c.b16 %v4857, %v4849
        %v6026 = vpack.c.b16 %v4858, %v4850
        %v6027 = vpack.c.b16 %v4859, %v4851
        %v6028 = vpack.c.b16 %v4860, %v4852
        %v6029 = vpack.c.b16 %v4861, %v4853
        %v6030 = vpack.c.b16 %v4862, %v4854
        %v6031 = vpack.c.b16 %v4871, %v4863
        %v6032 = vpack.c.b16 %v4872, %v4864
        %v6033 = vpack.c.b16 %v4873, %v4865
        %v6034 = vpack.c.b16 %v4874, %v4866
        %v6035 = vpack.c.b16 %v4875, %v4867
        %v6036 = vpack.c.b16 %v4876, %v4868
        %v6037 = vpack.c.b16 %v4877, %v4869
        %v6038 = vpack.c.b16 %v4878, %v4870
        %v6039 = vpack.c.b16 %v4887, %v4879
        %v6040 = vpack.c.b16 %v4888, %v4880
        %v6041 = vpack.c.b16 %v4889, %v4881
        %v6042 = vpack.c.b16 %v4890, %v4882
        %v6043 = vpack.c.b16 %v4891, %v4883
        %v6044 = vpack.c.b16 %v4892, %v4884
        %v6045 = vpack.c.b16 %v4893, %v4885
        %v6046 = vpack.c.b16 %v4894, %v4886
        %v6047 = vpack.c.b16 %v4903, %v4895
        %v6048 = vpack.c.b16 %v4904, %v4896
        %v6049 = vpack.c.b16 %v4905, %v4897
        %v6050 = vpack.c.b16 %v4906, %v4898
        %v6051 = vpack.c.b16 %v4907, %v4899
        %v6052 = vpack.c.b16 %v4908, %v4900
        %v6053 = vpack.c.b16 %v4909, %v4901
        %v6054 = vpack.c.b16 %v4910, %v4902
        %v6055 = vpack.c.b16 %v4919, %v4911
        %v6056 = vpack.c.b16 %v4920, %v4912
        %v6057 = vpack.c.b16 %v4921, %v4913
        %v6058 = vpack.c.b16 %v4922, %v4914
        %v6059 = vpack.c.b16 %v4923, %v4915
        %v6060 = vpack.c.b16 %v4924, %v4916
        %v6061 = vpack.c.b16 %v4925, %v4917
        %v6062 = vpack.c.b16 %v4926, %v4918
        %v6063 = vpack.c.b16 %v4935, %v4927
        %v6064 = vpack.c.b16 %v4936, %v4928
        %v6065 = vpack.c.b16 %v4937, %v4929
        %v6066 = vpack.c.b16 %v4938, %v4930
        %v6067 = vpack.c.b16 %v4939, %v4931
        %v6068 = vpack.c.b16 %v4940, %v4932
        %v6069 = vpack.c.b16 %v4941, %v4933
        %v6070 = vpack.c.b16 %v4942, %v4934
        %v6071 = vpack.c.b16 %v4951, %v4943
        %v6072 = vpack.c.b16 %v4952, %v4944
        %v6073 = vpack.c.b16 %v4953, %v4945
        %v6074 = vpack.c.b16 %v4954, %v4946
        %v6075 = vpack.c.b16 %v4955, %v4947
        %v6076 = vpack.c.b16 %v4956, %v4948
        %v6077 = vpack.c.b16 %v4957, %v4949
        %v6078 = vpack.c.b16 %v4958, %v4950
        %v6079 = vpack.c.b16 %v4967, %v4959
        %v6080 = vpack.c.b16 %v4968, %v4960
        %v6081 = vpack.c.b16 %v4969, %v4961
        %v6082 = vpack.c.b16 %v4970, %v4962
        %v6083 = vpack.c.b16 %v4971, %v4963
        %v6084 = vpack.c.b16 %v4972, %v4964
        %v6085 = vpack.c.b16 %v4973, %v4965
        %v6086 = vpack.c.b16 %v4974, %v4966
        %v6087 = vpack.c.b16 %v4983, %v4975
        %v6088 = vpack.c.b16 %v4984, %v4976
        %v6089 = vpack.c.b16 %v4985, %v4977
        %v6090 = vpack.c.b16 %v4986, %v4978
        %v6091 = vpack.c.b16 %v4987, %v4979
        %v6092 = vpack.c.b16 %v4988, %v4980
        %v6093 = vpack.c.b16 %v4989, %v4981
        %v6094 = vpack.c.b16 %v4990, %v4982
        %v6095 = vpack.c.b16 %v4999, %v4991
        %v6096 = vpack.c.b16 %v5000, %v4992
        %v6097 = vpack.c.b16 %v5001, %v4993
        %v6098 = vpack.c.b16 %v5002, %v4994
        %v6099 = vpack.c.b16 %v5003, %v4995
        %v6100 = vpack.c.b16 %v5004, %v4996
        %v6101 = vpack.c.b16 %v5005, %v4997
        %v6102 = vpack.c.b16 %v5006, %v4998
        %v6103 = vpack.c.b16 %v5015, %v5007
        %v6104 = vpack.c.b16 %v5016, %v5008
        %v6105 = vpack.c.b16 %v5017, %v5009
        %v6106 = vpack.c.b16 %v5018, %v5010
        %v6107 = vpack.c.b16 %v5019, %v5011
        %v6108 = vpack.c.b16 %v5020, %v5012
        %v6109 = vpack.c.b16 %v5021, %v5013
        %v6110 = vpack.c.b16 %v5022, %v5014
        %v6111 = vpack.c.b16 %v5031, %v5023
        %v6112 = vpack.c.b16 %v5032, %v5024
        %v6113 = vpack.c.b16 %v5033, %v5025
        %v6114 = vpack.c.b16 %v5034, %v5026
        %v6115 = vpack.c.b16 %v5035, %v5027
        %v6116 = vpack.c.b16 %v5036, %v5028
        %v6117 = vpack.c.b16 %v5037, %v5029
        %v6118 = vpack.c.b16 %v5038, %v5030
        %v6119 = vpack.c.b16 %v5047, %v5039
        %v6120 = vpack.c.b16 %v5048, %v5040
        %v6121 = vpack.c.b16 %v5049, %v5041
        %v6122 = vpack.c.b16 %v5050, %v5042
        %v6123 = vpack.c.b16 %v5051, %v5043
        %v6124 = vpack.c.b16 %v5052, %v5044
        %v6125 = vpack.c.b16 %v5053, %v5045
        %v6126 = vpack.c.b16 %v5054, %v5046
        %v6127 = vpack.c.b16 %v5063, %v5055
        %v6128 = vpack.c.b16 %v5064, %v5056
        %v6129 = vpack.c.b16 %v5065, %v5057
        %v6130 = vpack.c.b16 %v5066, %v5058
        %v6131 = vpack.c.b16 %v5067, %v5059
        %v6132 = vpack.c.b16 %v5068, %v5060
        %v6133 = vpack.c.b16 %v5069, %v5061
        %v6134 = vpack.c.b16 %v5070, %v5062
        %v6135 = vpack.c.b16 %v5079, %v5071
        %v6136 = vpack.c.b16 %v5080, %v5072
        %v6137 = vpack.c.b16 %v5081, %v5073
        %v6138 = vpack.c.b16 %v5082, %v5074
        %v6139 = vpack.c.b16 %v5083, %v5075
        %v6140 = vpack.c.b16 %v5084, %v5076
        %v6141 = vpack.c.b16 %v5085, %v5077
        %v6142 = vpack.c.b16 %v5086, %v5078
        %v6143 = vpack.c.b16 %v5095, %v5087
        %v6144 = vpack.c.b16 %v5096, %v5088
        %v6145 = vpack.c.b16 %v5097, %v5089
        %v6146 = vpack.c.b16 %v5098, %v5090
        %v6147 = vpack.c.b16 %v5099, %v5091
        %v6148 = vpack.c.b16 %v5100, %v5092
        %v6149 = vpack.c.b16 %v5101, %v5093
        %v6150 = vpack.c.b16 %v5102, %v5094
        %v6151 = vpack.c.b16 %v5111, %v5103
        %v6152 = vpack.c.b16 %v5112, %v5104
        %v6153 = vpack.c.b16 %v5113, %v5105
        %v6154 = vpack.c.b16 %v5114, %v5106
        %v6155 = vpack.c.b16 %v5115, %v5107
        %v6156 = vpack.c.b16 %v5116, %v5108
        %v6157 = vpack.c.b16 %v5117, %v5109
        %v6158 = vpack.c.b16 %v5118, %v5110
        %v6159 = vpack.c.b16 %v5127, %v5119
        %v6160 = vpack.c.b16 %v5128, %v5120
        %v6161 = vpack.c.b16 %v5129, %v5121
        %v6162 = vpack.c.b16 %v5130, %v5122
        %v6163 = vpack.c.b16 %v5131, %v5123
        %v6164 = vpack.c.b16 %v5132, %v5124
        %v6165 = vpack.c.b16 %v5133, %v5125
        %v6166 = vpack.c.b16 %v5134, %v5126
        %v6167 = vpack.c.b16 %v5143, %v5135
        %v6168 = vpack.c.b16 %v5144, %v5136
        %v6169 = vpack.c.b16 %v5145, %v5137
        %v6170 = vpack.c.b16 %v5146, %v5138
        %v6171 = vpack.c.b16 %v5147, %v5139
        %v6172 = vpack.c.b16 %v5148, %v5140
        %v6173 = vpack.c.b16 %v5149, %v5141
        %v6174 = vpack.c.b16 %v5150, %v5142
        %7199 = vmatprep.subr.bf16.mxu0 %v5152
        %7200 = vmatpush1.bf16.msra.mxu0 %v5151
        %7201 = vmatprep.subr.bf16.mxu0 %v5160
        %7202 = vmatpush1.bf16.msra.mxu0 %v5159
        %7203 = vmatprep.subr.bf16.mxu0 %v5168
        %7204 = vmatpush1.bf16.msra.mxu0 %v5167
        %7205 = vmatprep.subr.bf16.mxu0 %v5176
        %7206 = vmatpush1.bf16.msra.mxu0 %v5175
        %7207 = vmatprep.subr.bf16.mxu0 %v5184
        %7208 = vmatpush1.bf16.msra.mxu0 %v5183
        %7209 = vmatprep.subr.bf16.mxu0 %v5192
        %7210 = vmatpush1.bf16.msra.mxu0 %v5191
        %7211 = vmatprep.subr.bf16.mxu0 %v5200
        %7212 = vmatpush1.bf16.msra.mxu0 %v5199
        %7213 = vmatprep.subr.bf16.mxu0 %v5208
        %7214 = vmatpush1.bf16.msra.mxu0 %v5207
        %7215 = vmatprep.subr.bf16.mxu0 %v5216
        %7216 = vmatpush1.bf16.msra.mxu0 %v5215
        %7217 = vmatprep.subr.bf16.mxu0 %v5224
        %7218 = vmatpush1.bf16.msra.mxu0 %v5223
        %7219 = vmatprep.subr.bf16.mxu0 %v5232
        %7220 = vmatpush1.bf16.msra.mxu0 %v5231
        %7221 = vmatprep.subr.bf16.mxu0 %v5240
        %7222 = vmatpush1.bf16.msra.mxu0 %v5239
        %7223 = vmatprep.subr.bf16.mxu0 %v5248
        %7224 = vmatpush1.bf16.msra.mxu0 %v5247
        %7225 = vmatprep.subr.bf16.mxu0 %v5256
        %7226 = vmatpush1.bf16.msra.mxu0 %v5255
        %7227 = vmatprep.subr.bf16.mxu0 %v5264
        %7228 = vmatpush1.bf16.msra.mxu0 %v5263
        %7229 = vmatprep.subr.bf16.mxu0 %v5272
        %7230 = vmatpush1.bf16.msra.mxu0 %v5271
        %7231 = vmatprep.mubr.bf16.mxu0 %v998
        %7232 = vmatmul.mubr.bf16.gmra.mrb[0].mxu0 %v997
        %v7233 = vpop.f32.mrb[0].mxu0
        %v7234 = vadd.f32 %v2042, %v7233
        %v7235 = vpop.f32.mrb[0].mxu0
        %v7236 = vadd.f32 %v2046, %v7235
        %v7237 = vpop.f32.mrb[0].mxu0
        %v7238 = vpop.f32.mrb[0].mxu0
        %7239 = vdwg.mxu0
        %7240 = vmatprep.subr.bf16.mxu0 %v5280
        %7241 = vmatpush1.bf16.msra.mxu0 %v5279
        %7242 = vmatprep.subr.bf16.mxu0 %v5288
        %7243 = vmatpush1.bf16.msra.mxu0 %v5287
        %7244 = vmatprep.subr.bf16.mxu0 %v5296
        %7245 = vmatpush1.bf16.msra.mxu0 %v5295
        %7246 = vmatprep.subr.bf16.mxu0 %v5304
        %7247 = vmatpush1.bf16.msra.mxu0 %v5303
        %7248 = vmatprep.subr.bf16.mxu0 %v5312
        %7249 = vmatpush1.bf16.msra.mxu0 %v5311
        %7250 = vmatprep.subr.bf16.mxu0 %v5320
        %7251 = vmatpush1.bf16.msra.mxu0 %v5319
        %7252 = vmatprep.subr.bf16.mxu0 %v5328
        %7253 = vmatpush1.bf16.msra.mxu0 %v5327
        %7254 = vmatprep.subr.bf16.mxu0 %v5336
        %7255 = vmatpush1.bf16.msra.mxu0 %v5335
        %7256 = vmatprep.subr.bf16.mxu0 %v5344
        %7257 = vmatpush1.bf16.msra.mxu0 %v5343
        %7258 = vmatprep.subr.bf16.mxu0 %v5352
        %7259 = vmatpush1.bf16.msra.mxu0 %v5351
        %7260 = vmatprep.subr.bf16.mxu0 %v5360
        %7261 = vmatpush1.bf16.msra.mxu0 %v5359
        %7262 = vmatprep.subr.bf16.mxu0 %v5368
        %7263 = vmatpush1.bf16.msra.mxu0 %v5367
        %7264 = vmatprep.subr.bf16.mxu0 %v5376
        %7265 = vmatpush1.bf16.msra.mxu0 %v5375
        %7266 = vmatprep.subr.bf16.mxu0 %v5384
        %7267 = vmatpush1.bf16.msra.mxu0 %v5383
        %7268 = vmatprep.subr.bf16.mxu0 %v5392
        %7269 = vmatpush1.bf16.msra.mxu0 %v5391
        %7270 = vmatprep.subr.bf16.mxu0 %v5400
        %7271 = vmatpush1.bf16.msra.mxu0 %v5399
        %7272 = vmatprep.mubr.bf16.mxu0 %v1000
        %7273 = vmatmul.mubr.bf16.gmra.mrb[0].mxu0 %v999
        %v7274 = vpop.f32.mrb[0].mxu0
        %v7275 = vadd.f32 %v7234, %v7274
        %v7276 = vpop.f32.mrb[0].mxu0
        %v7277 = vadd.f32 %v7236, %v7276
        %v7278 = vpop.f32.mrb[0].mxu0
        %v7279 = vpop.f32.mrb[0].mxu0
        %7280 = vdwg.mxu0
        %7281 = vmatprep.subr.bf16.mxu0 %v5408
        %7282 = vmatpush1.bf16.msra.mxu0 %v5407
        %7283 = vmatprep.subr.bf16.mxu0 %v5416
        %7284 = vmatpush1.bf16.msra.mxu0 %v5415
        %7285 = vmatprep.subr.bf16.mxu0 %v5424
        %7286 = vmatpush1.bf16.msra.mxu0 %v5423
        %7287 = vmatprep.subr.bf16.mxu0 %v5432
        %7288 = vmatpush1.bf16.msra.mxu0 %v5431
        %7289 = vmatprep.subr.bf16.mxu0 %v5440
        %7290 = vmatpush1.bf16.msra.mxu0 %v5439
        %7291 = vmatprep.subr.bf16.mxu0 %v5448
        %7292 = vmatpush1.bf16.msra.mxu0 %v5447
        %7293 = vmatprep.subr.bf16.mxu0 %v5456
        %7294 = vmatpush1.bf16.msra.mxu0 %v5455
        %7295 = vmatprep.subr.bf16.mxu0 %v5464
        %7296 = vmatpush1.bf16.msra.mxu0 %v5463
        %7297 = vmatprep.subr.bf16.mxu0 %v5472
        %7298 = vmatpush1.bf16.msra.mxu0 %v5471
        %7299 = vmatprep.subr.bf16.mxu0 %v5480
        %7300 = vmatpush1.bf16.msra.mxu0 %v5479
        %7301 = vmatprep.subr.bf16.mxu0 %v5488
        %7302 = vmatpush1.bf16.msra.mxu0 %v5487
        %7303 = vmatprep.subr.bf16.mxu0 %v5496
        %7304 = vmatpush1.bf16.msra.mxu0 %v5495
        %7305 = vmatprep.subr.bf16.mxu0 %v5504
        %7306 = vmatpush1.bf16.msra.mxu0 %v5503
        %7307 = vmatprep.subr.bf16.mxu0 %v5512
        %7308 = vmatpush1.bf16.msra.mxu0 %v5511
        %7309 = vmatprep.subr.bf16.mxu0 %v5520
        %7310 = vmatpush1.bf16.msra.mxu0 %v5519
        %7311 = vmatprep.subr.bf16.mxu0 %v5528
        %7312 = vmatpush1.bf16.msra.mxu0 %v5527
        %7313 = vmatprep.mubr.bf16.mxu0 %v1002
        %7314 = vmatmul.mubr.bf16.gmra.mrb[0].mxu0 %v1001
        %v7315 = vpop.f32.mrb[0].mxu0
        %v7316 = vadd.f32 %v7275, %v7315
        %v7317 = vpop.f32.mrb[0].mxu0
        %v7318 = vadd.f32 %v7277, %v7317
        %v7319 = vpop.f32.mrb[0].mxu0
        %v7320 = vpop.f32.mrb[0].mxu0
        %7321 = vdwg.mxu0
        %7322 = vmatprep.subr.bf16.mxu0 %v5536
        %7323 = vmatpush1.bf16.msra.mxu0 %v5535
        %7324 = vmatprep.subr.bf16.mxu0 %v5544
        %7325 = vmatpush1.bf16.msra.mxu0 %v5543
        %7326 = vmatprep.subr.bf16.mxu0 %v5552
        %7327 = vmatpush1.bf16.msra.mxu0 %v5551
        %7328 = vmatprep.subr.bf16.mxu0 %v5560
        %7329 = vmatpush1.bf16.msra.mxu0 %v5559
        %7330 = vmatprep.subr.bf16.mxu0 %v5568
        %7331 = vmatpush1.bf16.msra.mxu0 %v5567
        %7332 = vmatprep.subr.bf16.mxu0 %v5576
        %7333 = vmatpush1.bf16.msra.mxu0 %v5575
        %7334 = vmatprep.subr.bf16.mxu0 %v5584
        %7335 = vmatpush1.bf16.msra.mxu0 %v5583
        %7336 = vmatprep.subr.bf16.mxu0 %v5592
        %7337 = vmatpush1.bf16.msra.mxu0 %v5591
        %7338 = vmatprep.subr.bf16.mxu0 %v5600
        %7339 = vmatpush1.bf16.msra.mxu0 %v5599
        %7340 = vmatprep.subr.bf16.mxu0 %v5608
        %7341 = vmatpush1.bf16.msra.mxu0 %v5607
        %7342 = vmatprep.subr.bf16.mxu0 %v5616
        %7343 = vmatpush1.bf16.msra.mxu0 %v5615
        %7344 = vmatprep.subr.bf16.mxu0 %v5624
        %7345 = vmatpush1.bf16.msra.mxu0 %v5623
        %7346 = vmatprep.subr.bf16.mxu0 %v5632
        %7347 = vmatpush1.bf16.msra.mxu0 %v5631
        %7348 = vmatprep.subr.bf16.mxu0 %v5640
        %7349 = vmatpush1.bf16.msra.mxu0 %v5639
        %7350 = vmatprep.subr.bf16.mxu0 %v5648
        %7351 = vmatpush1.bf16.msra.mxu0 %v5647
        %7352 = vmatprep.subr.bf16.mxu0 %v5656
        %7353 = vmatpush1.bf16.msra.mxu0 %v5655
        %7354 = vmatprep.mubr.bf16.mxu0 %v1004
        %7355 = vmatmul.mubr.bf16.gmra.mrb[0].mxu0 %v1003
        %v7356 = vpop.f32.mrb[0].mxu0
        %v7357 = vadd.f32 %v7316, %v7356
        %v7358 = vpop.f32.mrb[0].mxu0
        %v7359 = vadd.f32 %v7318, %v7358
        %v7360 = vpop.f32.mrb[0].mxu0
        %v7361 = vpop.f32.mrb[0].mxu0
        %7362 = vdwg.mxu0
        %7363 = vmatprep.subr.bf16.mxu0 %v5664
        %7364 = vmatpush1.bf16.msra.mxu0 %v5663
        %7365 = vmatprep.subr.bf16.mxu0 %v5672
        %7366 = vmatpush1.bf16.msra.mxu0 %v5671
        %7367 = vmatprep.subr.bf16.mxu0 %v5680
        %7368 = vmatpush1.bf16.msra.mxu0 %v5679
        %7369 = vmatprep.subr.bf16.mxu0 %v5688
        %7370 = vmatpush1.bf16.msra.mxu0 %v5687
        %7371 = vmatprep.subr.bf16.mxu0 %v5696
        %7372 = vmatpush1.bf16.msra.mxu0 %v5695
        %7373 = vmatprep.subr.bf16.mxu0 %v5704
        %7374 = vmatpush1.bf16.msra.mxu0 %v5703
        %7375 = vmatprep.subr.bf16.mxu0 %v5712
        %7376 = vmatpush1.bf16.msra.mxu0 %v5711
        %7377 = vmatprep.subr.bf16.mxu0 %v5720
        %7378 = vmatpush1.bf16.msra.mxu0 %v5719
        %7379 = vmatprep.subr.bf16.mxu0 %v5728
        %7380 = vmatpush1.bf16.msra.mxu0 %v5727
        %7381 = vmatprep.subr.bf16.mxu0 %v5736
        %7382 = vmatpush1.bf16.msra.mxu0 %v5735
        %7383 = vmatprep.subr.bf16.mxu0 %v5744
        %7384 = vmatpush1.bf16.msra.mxu0 %v5743
        %7385 = vmatprep.subr.bf16.mxu0 %v5752
        %7386 = vmatpush1.bf16.msra.mxu0 %v5751
        %7387 = vmatprep.subr.bf16.mxu0 %v5760
        %7388 = vmatpush1.bf16.msra.mxu0 %v5759
        %7389 = vmatprep.subr.bf16.mxu0 %v5768
        %7390 = vmatpush1.bf16.msra.mxu0 %v5767
        %7391 = vmatprep.subr.bf16.mxu0 %v5776
        %7392 = vmatpush1.bf16.msra.mxu0 %v5775
        %7393 = vmatprep.subr.bf16.mxu0 %v5784
        %7394 = vmatpush1.bf16.msra.mxu0 %v5783
        %7395 = vmatprep.mubr.bf16.mxu0 %v1006
        %7396 = vmatmul.mubr.bf16.gmra.mrb[0].mxu0 %v1005
        %v7397 = vpop.f32.mrb[0].mxu0
        %v7398 = vadd.f32 %v7357, %v7397
        %v7399 = vpop.f32.mrb[0].mxu0
        %v7400 = vadd.f32 %v7359, %v7399
        %v7401 = vpop.f32.mrb[0].mxu0
        %v7402 = vpop.f32.mrb[0].mxu0
        %7403 = vdwg.mxu0
        %7404 = vmatprep.subr.bf16.mxu0 %v5792
        %7405 = vmatpush1.bf16.msra.mxu0 %v5791
        %7406 = vmatprep.subr.bf16.mxu0 %v5800
        %7407 = vmatpush1.bf16.msra.mxu0 %v5799
        %7408 = vmatprep.subr.bf16.mxu0 %v5808
        %7409 = vmatpush1.bf16.msra.mxu0 %v5807
        %7410 = vmatprep.subr.bf16.mxu0 %v5816
        %7411 = vmatpush1.bf16.msra.mxu0 %v5815
        %7412 = vmatprep.subr.bf16.mxu0 %v5824
        %7413 = vmatpush1.bf16.msra.mxu0 %v5823
        %7414 = vmatprep.subr.bf16.mxu0 %v5832
        %7415 = vmatpush1.bf16.msra.mxu0 %v5831
        %7416 = vmatprep.subr.bf16.mxu0 %v5840
        %7417 = vmatpush1.bf16.msra.mxu0 %v5839
        %7418 = vmatprep.subr.bf16.mxu0 %v5848
        %7419 = vmatpush1.bf16.msra.mxu0 %v5847
        %7420 = vmatprep.subr.bf16.mxu0 %v5856
        %7421 = vmatpush1.bf16.msra.mxu0 %v5855
        %7422 = vmatprep.subr.bf16.mxu0 %v5864
        %7423 = vmatpush1.bf16.msra.mxu0 %v5863
        %7424 = vmatprep.subr.bf16.mxu0 %v5872
        %7425 = vmatpush1.bf16.msra.mxu0 %v5871
        %7426 = vmatprep.subr.bf16.mxu0 %v5880
        %7427 = vmatpush1.bf16.msra.mxu0 %v5879
        %7428 = vmatprep.subr.bf16.mxu0 %v5888
        %7429 = vmatpush1.bf16.msra.mxu0 %v5887
        %7430 = vmatprep.subr.bf16.mxu0 %v5896
        %7431 = vmatpush1.bf16.msra.mxu0 %v5895
        %7432 = vmatprep.subr.bf16.mxu0 %v5904
        %7433 = vmatpush1.bf16.msra.mxu0 %v5903
        %7434 = vmatprep.subr.bf16.mxu0 %v5912
        %7435 = vmatpush1.bf16.msra.mxu0 %v5911
        %7436 = vmatprep.mubr.bf16.mxu0 %v1008
        %7437 = vmatmul.mubr.bf16.gmra.mrb[0].mxu0 %v1007
        %v7438 = vpop.f32.mrb[0].mxu0
        %v7439 = vadd.f32 %v7398, %v7438
        %v7440 = vpop.f32.mrb[0].mxu0
        %v7441 = vadd.f32 %v7400, %v7440
        %v7442 = vpop.f32.mrb[0].mxu0
        %v7443 = vpop.f32.mrb[0].mxu0
        %7444 = vdwg.mxu0
        %7445 = vmatprep.subr.bf16.mxu0 %v5920
        %7446 = vmatpush1.bf16.msra.mxu0 %v5919
        %7447 = vmatprep.subr.bf16.mxu0 %v5928
        %7448 = vmatpush1.bf16.msra.mxu0 %v5927
        %7449 = vmatprep.subr.bf16.mxu0 %v5936
        %7450 = vmatpush1.bf16.msra.mxu0 %v5935
        %7451 = vmatprep.subr.bf16.mxu0 %v5944
        %7452 = vmatpush1.bf16.msra.mxu0 %v5943
        %7453 = vmatprep.subr.bf16.mxu0 %v5952
        %7454 = vmatpush1.bf16.msra.mxu0 %v5951
        %7455 = vmatprep.subr.bf16.mxu0 %v5960
        %7456 = vmatpush1.bf16.msra.mxu0 %v5959
        %7457 = vmatprep.subr.bf16.mxu0 %v5968
        %7458 = vmatpush1.bf16.msra.mxu0 %v5967
        %7459 = vmatprep.subr.bf16.mxu0 %v5976
        %7460 = vmatpush1.bf16.msra.mxu0 %v5975
        %7461 = vmatprep.subr.bf16.mxu0 %v5984
        %7462 = vmatpush1.bf16.msra.mxu0 %v5983
        %7463 = vmatprep.subr.bf16.mxu0 %v5992
        %7464 = vmatpush1.bf16.msra.mxu0 %v5991
        %7465 = vmatprep.subr.bf16.mxu0 %v6000
        %7466 = vmatpush1.bf16.msra.mxu0 %v5999
        %7467 = vmatprep.subr.bf16.mxu0 %v6008
        %7468 = vmatpush1.bf16.msra.mxu0 %v6007
        %7469 = vmatprep.subr.bf16.mxu0 %v6016
        %7470 = vmatpush1.bf16.msra.mxu0 %v6015
        %7471 = vmatprep.subr.bf16.mxu0 %v6024
        %7472 = vmatpush1.bf16.msra.mxu0 %v6023
        %7473 = vmatprep.subr.bf16.mxu0 %v6032
        %7474 = vmatpush1.bf16.msra.mxu0 %v6031
        %7475 = vmatprep.subr.bf16.mxu0 %v6040
        %7476 = vmatpush1.bf16.msra.mxu0 %v6039
        %7477 = vmatprep.mubr.bf16.mxu0 %v1010
        %7478 = vmatmul.mubr.bf16.gmra.mrb[0].mxu0 %v1009
        %v7479 = vpop.f32.mrb[0].mxu0
        %v7480 = vadd.f32 %v7439, %v7479
        %v7481 = vpop.f32.mrb[0].mxu0
        %v7482 = vadd.f32 %v7441, %v7481
        %v7483 = vpop.f32.mrb[0].mxu0
        %v7484 = vpop.f32.mrb[0].mxu0
        %7485 = vdwg.mxu0
        %7486 = vmatprep.subr.bf16.mxu0 %v6048
        %7487 = vmatpush1.bf16.msra.mxu0 %v6047
        %7488 = vmatprep.subr.bf16.mxu0 %v6056
        %7489 = vmatpush1.bf16.msra.mxu0 %v6055
        %7490 = vmatprep.subr.bf16.mxu0 %v6064
        %7491 = vmatpush1.bf16.msra.mxu0 %v6063
        %7492 = vmatprep.subr.bf16.mxu0 %v6072
        %7493 = vmatpush1.bf16.msra.mxu0 %v6071
        %7494 = vmatprep.subr.bf16.mxu0 %v6080
        %7495 = vmatpush1.bf16.msra.mxu0 %v6079
        %7496 = vmatprep.subr.bf16.mxu0 %v6088
        %7497 = vmatpush1.bf16.msra.mxu0 %v6087
        %7498 = vmatprep.subr.bf16.mxu0 %v6096
        %7499 = vmatpush1.bf16.msra.mxu0 %v6095
        %7500 = vmatprep.subr.bf16.mxu0 %v6104
        %7501 = vmatpush1.bf16.msra.mxu0 %v6103
        %7502 = vmatprep.subr.bf16.mxu0 %v6112
        %7503 = vmatpush1.bf16.msra.mxu0 %v6111
        %7504 = vmatprep.subr.bf16.mxu0 %v6120
        %7505 = vmatpush1.bf16.msra.mxu0 %v6119
        %7506 = vmatprep.subr.bf16.mxu0 %v6128
        %7507 = vmatpush1.bf16.msra.mxu0 %v6127
        %7508 = vmatprep.subr.bf16.mxu0 %v6136
        %7509 = vmatpush1.bf16.msra.mxu0 %v6135
        %7510 = vmatprep.subr.bf16.mxu0 %v6144
        %7511 = vmatpush1.bf16.msra.mxu0 %v6143
        %7512 = vmatprep.subr.bf16.mxu0 %v6152
        %7513 = vmatpush1.bf16.msra.mxu0 %v6151
        %7514 = vmatprep.subr.bf16.mxu0 %v6160
        %7515 = vmatpush1.bf16.msra.mxu0 %v6159
        %7516 = vmatprep.subr.bf16.mxu0 %v6168
        %7517 = vmatpush1.bf16.msra.mxu0 %v6167
        %7518 = vmatprep.mubr.bf16.mxu0 %v1012
        %7519 = vmatmul.mubr.bf16.gmra.mrb[0].mxu0 %v1011
        %v7520 = vpop.f32.mrb[0].mxu0
        %v7521 = vadd.f32 %v7480, %v7520
        %v7522 = vpop.f32.mrb[0].mxu0
        %v7523 = vadd.f32 %v7482, %v7522
        %v7524 = vpop.f32.mrb[0].mxu0
        %v7525 = vpop.f32.mrb[0].mxu0
        %7526 = vdwg.mxu0
        %7527 = vmatprep.subr.bf16.mxu0 %v5154
        %7528 = vmatpush1.bf16.msra.mxu0 %v5153
        %7529 = vmatprep.subr.bf16.mxu0 %v5162
        %7530 = vmatpush1.bf16.msra.mxu0 %v5161
        %7531 = vmatprep.subr.bf16.mxu0 %v5170
        %7532 = vmatpush1.bf16.msra.mxu0 %v5169
        %7533 = vmatprep.subr.bf16.mxu0 %v5178
        %7534 = vmatpush1.bf16.msra.mxu0 %v5177
        %7535 = vmatprep.subr.bf16.mxu0 %v5186
        %7536 = vmatpush1.bf16.msra.mxu0 %v5185
        %7537 = vmatprep.subr.bf16.mxu0 %v5194
        %7538 = vmatpush1.bf16.msra.mxu0 %v5193
        %7539 = vmatprep.subr.bf16.mxu0 %v5202
        %7540 = vmatpush1.bf16.msra.mxu0 %v5201
        %7541 = vmatprep.subr.bf16.mxu0 %v5210
        %7542 = vmatpush1.bf16.msra.mxu0 %v5209
        %7543 = vmatprep.subr.bf16.mxu0 %v5218
        %7544 = vmatpush1.bf16.msra.mxu0 %v5217
        %7545 = vmatprep.subr.bf16.mxu0 %v5226
        %7546 = vmatpush1.bf16.msra.mxu0 %v5225
        %7547 = vmatprep.subr.bf16.mxu0 %v5234
        %7548 = vmatpush1.bf16.msra.mxu0 %v5233
        %7549 = vmatprep.subr.bf16.mxu0 %v5242
        %7550 = vmatpush1.bf16.msra.mxu0 %v5241
        %7551 = vmatprep.subr.bf16.mxu0 %v5250
        %7552 = vmatpush1.bf16.msra.mxu0 %v5249
        %7553 = vmatprep.subr.bf16.mxu0 %v5258
        %7554 = vmatpush1.bf16.msra.mxu0 %v5257
        %7555 = vmatprep.subr.bf16.mxu0 %v5266
        %7556 = vmatpush1.bf16.msra.mxu0 %v5265
        %7557 = vmatprep.subr.bf16.mxu0 %v5274
        %7558 = vmatpush1.bf16.msra.mxu0 %v5273
        %7559 = vmatprep.mubr.bf16.mxu0 %v998
        %7560 = vmatmul.mubr.bf16.gmra.mrb[0].mxu0 %v997
        %v7561 = vpop.f32.mrb[0].mxu0
        %v7562 = vadd.f32 %v2050, %v7561
        %v7563 = vpop.f32.mrb[0].mxu0
        %v7564 = vadd.f32 %v2054, %v7563
        %v7565 = vpop.f32.mrb[0].mxu0
        %v7566 = vpop.f32.mrb[0].mxu0
        %7567 = vdwg.mxu0
        %7568 = vmatprep.subr.bf16.mxu0 %v5282
        %7569 = vmatpush1.bf16.msra.mxu0 %v5281
        %7570 = vmatprep.subr.bf16.mxu0 %v5290
        %7571 = vmatpush1.bf16.msra.mxu0 %v5289
        %7572 = vmatprep.subr.bf16.mxu0 %v5298
        %7573 = vmatpush1.bf16.msra.mxu0 %v5297
        %7574 = vmatprep.subr.bf16.mxu0 %v5306
        %7575 = vmatpush1.bf16.msra.mxu0 %v5305
        %7576 = vmatprep.subr.bf16.mxu0 %v5314
        %7577 = vmatpush1.bf16.msra.mxu0 %v5313
        %7578 = vmatprep.subr.bf16.mxu0 %v5322
        %7579 = vmatpush1.bf16.msra.mxu0 %v5321
        %7580 = vmatprep.subr.bf16.mxu0 %v5330
        %7581 = vmatpush1.bf16.msra.mxu0 %v5329
        %7582 = vmatprep.subr.bf16.mxu0 %v5338
        %7583 = vmatpush1.bf16.msra.mxu0 %v5337
        %7584 = vmatprep.subr.bf16.mxu0 %v5346
        %7585 = vmatpush1.bf16.msra.mxu0 %v5345
        %7586 = vmatprep.subr.bf16.mxu0 %v5354
        %7587 = vmatpush1.bf16.msra.mxu0 %v5353
        %7588 = vmatprep.subr.bf16.mxu0 %v5362
        %7589 = vmatpush1.bf16.msra.mxu0 %v5361
        %7590 = vmatprep.subr.bf16.mxu0 %v5370
        %7591 = vmatpush1.bf16.msra.mxu0 %v5369
        %7592 = vmatprep.subr.bf16.mxu0 %v5378
        %7593 = vmatpush1.bf16.msra.mxu0 %v5377
        %7594 = vmatprep.subr.bf16.mxu0 %v5386
        %7595 = vmatpush1.bf16.msra.mxu0 %v5385
        %7596 = vmatprep.subr.bf16.mxu0 %v5394
        %7597 = vmatpush1.bf16.msra.mxu0 %v5393
        %7598 = vmatprep.subr.bf16.mxu0 %v5402
        %7599 = vmatpush1.bf16.msra.mxu0 %v5401
        %7600 = vmatprep.mubr.bf16.mxu0 %v1000
        %7601 = vmatmul.mubr.bf16.gmra.mrb[0].mxu0 %v999
        %v7602 = vpop.f32.mrb[0].mxu0
        %v7603 = vadd.f32 %v7562, %v7602
        %v7604 = vpop.f32.mrb[0].mxu0
        %v7605 = vadd.f32 %v7564, %v7604
        %v7606 = vpop.f32.mrb[0].mxu0
        %v7607 = vpop.f32.mrb[0].mxu0
        %7608 = vdwg.mxu0
        %7609 = vmatprep.subr.bf16.mxu0 %v5410
        %7610 = vmatpush1.bf16.msra.mxu0 %v5409
        %7611 = vmatprep.subr.bf16.mxu0 %v5418
        %7612 = vmatpush1.bf16.msra.mxu0 %v5417
        %7613 = vmatprep.subr.bf16.mxu0 %v5426
        %7614 = vmatpush1.bf16.msra.mxu0 %v5425
        %7615 = vmatprep.subr.bf16.mxu0 %v5434
        %7616 = vmatpush1.bf16.msra.mxu0 %v5433
        %7617 = vmatprep.subr.bf16.mxu0 %v5442
        %7618 = vmatpush1.bf16.msra.mxu0 %v5441
        %7619 = vmatprep.subr.bf16.mxu0 %v5450
        %7620 = vmatpush1.bf16.msra.mxu0 %v5449
        %7621 = vmatprep.subr.bf16.mxu0 %v5458
        %7622 = vmatpush1.bf16.msra.mxu0 %v5457
        %7623 = vmatprep.subr.bf16.mxu0 %v5466
        %7624 = vmatpush1.bf16.msra.mxu0 %v5465
        %7625 = vmatprep.subr.bf16.mxu0 %v5474
        %7626 = vmatpush1.bf16.msra.mxu0 %v5473
        %7627 = vmatprep.subr.bf16.mxu0 %v5482
        %7628 = vmatpush1.bf16.msra.mxu0 %v5481
        %7629 = vmatprep.subr.bf16.mxu0 %v5490
        %7630 = vmatpush1.bf16.msra.mxu0 %v5489
        %7631 = vmatprep.subr.bf16.mxu0 %v5498
        %7632 = vmatpush1.bf16.msra.mxu0 %v5497
        %7633 = vmatprep.subr.bf16.mxu0 %v5506
        %7634 = vmatpush1.bf16.msra.mxu0 %v5505
        %7635 = vmatprep.subr.bf16.mxu0 %v5514
        %7636 = vmatpush1.bf16.msra.mxu0 %v5513
        %7637 = vmatprep.subr.bf16.mxu0 %v5522
        %7638 = vmatpush1.bf16.msra.mxu0 %v5521
        %7639 = vmatprep.subr.bf16.mxu0 %v5530
        %7640 = vmatpush1.bf16.msra.mxu0 %v5529
        %7641 = vmatprep.mubr.bf16.mxu0 %v1002
        %7642 = vmatmul.mubr.bf16.gmra.mrb[0].mxu0 %v1001
        %v7643 = vpop.f32.mrb[0].mxu0
        %v7644 = vadd.f32 %v7603, %v7643
        %v7645 = vpop.f32.mrb[0].mxu0
        %v7646 = vadd.f32 %v7605, %v7645
        %v7647 = vpop.f32.mrb[0].mxu0
        %v7648 = vpop.f32.mrb[0].mxu0
        %7649 = vdwg.mxu0
        %7650 = vmatprep.subr.bf16.mxu0 %v5538
        %7651 = vmatpush1.bf16.msra.mxu0 %v5537
        %7652 = vmatprep.subr.bf16.mxu0 %v5546
        %7653 = vmatpush1.bf16.msra.mxu0 %v5545
        %7654 = vmatprep.subr.bf16.mxu0 %v5554
        %7655 = vmatpush1.bf16.msra.mxu0 %v5553
        %7656 = vmatprep.subr.bf16.mxu0 %v5562
        %7657 = vmatpush1.bf16.msra.mxu0 %v5561
        %7658 = vmatprep.subr.bf16.mxu0 %v5570
        %7659 = vmatpush1.bf16.msra.mxu0 %v5569
        %7660 = vmatprep.subr.bf16.mxu0 %v5578
        %7661 = vmatpush1.bf16.msra.mxu0 %v5577
        %7662 = vmatprep.subr.bf16.mxu0 %v5586
        %7663 = vmatpush1.bf16.msra.mxu0 %v5585
        %7664 = vmatprep.subr.bf16.mxu0 %v5594
        %7665 = vmatpush1.bf16.msra.mxu0 %v5593
        %7666 = vmatprep.subr.bf16.mxu0 %v5602
        %7667 = vmatpush1.bf16.msra.mxu0 %v5601
        %7668 = vmatprep.subr.bf16.mxu0 %v5610
        %7669 = vmatpush1.bf16.msra.mxu0 %v5609
        %7670 = vmatprep.subr.bf16.mxu0 %v5618
        %7671 = vmatpush1.bf16.msra.mxu0 %v5617
        %7672 = vmatprep.subr.bf16.mxu0 %v5626
        %7673 = vmatpush1.bf16.msra.mxu0 %v5625
        %7674 = vmatprep.subr.bf16.mxu0 %v5634
        %7675 = vmatpush1.bf16.msra.mxu0 %v5633
        %7676 = vmatprep.subr.bf16.mxu0 %v5642
        %7677 = vmatpush1.bf16.msra.mxu0 %v5641
        %7678 = vmatprep.subr.bf16.mxu0 %v5650
        %7679 = vmatpush1.bf16.msra.mxu0 %v5649
        %7680 = vmatprep.subr.bf16.mxu0 %v5658
        %7681 = vmatpush1.bf16.msra.mxu0 %v5657
        %7682 = vmatprep.mubr.bf16.mxu0 %v1004
        %7683 = vmatmul.mubr.bf16.gmra.mrb[0].mxu0 %v1003
        %v7684 = vpop.f32.mrb[0].mxu0
        %v7685 = vadd.f32 %v7644, %v7684
        %v7686 = vpop.f32.mrb[0].mxu0
        %v7687 = vadd.f32 %v7646, %v7686
        %v7688 = vpop.f32.mrb[0].mxu0
        %v7689 = vpop.f32.mrb[0].mxu0
        %7690 = vdwg.mxu0
        %7691 = vmatprep.subr.bf16.mxu0 %v5666
        %7692 = vmatpush1.bf16.msra.mxu0 %v5665
        %7693 = vmatprep.subr.bf16.mxu0 %v5674
        %7694 = vmatpush1.bf16.msra.mxu0 %v5673
        %7695 = vmatprep.subr.bf16.mxu0 %v5682
        %7696 = vmatpush1.bf16.msra.mxu0 %v5681
        %7697 = vmatprep.subr.bf16.mxu0 %v5690
        %7698 = vmatpush1.bf16.msra.mxu0 %v5689
        %7699 = vmatprep.subr.bf16.mxu0 %v5698
        %7700 = vmatpush1.bf16.msra.mxu0 %v5697
        %7701 = vmatprep.subr.bf16.mxu0 %v5706
        %7702 = vmatpush1.bf16.msra.mxu0 %v5705
        %7703 = vmatprep.subr.bf16.mxu0 %v5714
        %7704 = vmatpush1.bf16.msra.mxu0 %v5713
        %7705 = vmatprep.subr.bf16.mxu0 %v5722
        %7706 = vmatpush1.bf16.msra.mxu0 %v5721
        %7707 = vmatprep.subr.bf16.mxu0 %v5730
        %7708 = vmatpush1.bf16.msra.mxu0 %v5729
        %7709 = vmatprep.subr.bf16.mxu0 %v5738
        %7710 = vmatpush1.bf16.msra.mxu0 %v5737
        %7711 = vmatprep.subr.bf16.mxu0 %v5746
        %7712 = vmatpush1.bf16.msra.mxu0 %v5745
        %7713 = vmatprep.subr.bf16.mxu0 %v5754
        %7714 = vmatpush1.bf16.msra.mxu0 %v5753
        %7715 = vmatprep.subr.bf16.mxu0 %v5762
        %7716 = vmatpush1.bf16.msra.mxu0 %v5761
        %7717 = vmatprep.subr.bf16.mxu0 %v5770
        %7718 = vmatpush1.bf16.msra.mxu0 %v5769
        %7719 = vmatprep.subr.bf16.mxu0 %v5778
        %7720 = vmatpush1.bf16.msra.mxu0 %v5777
        %7721 = vmatprep.subr.bf16.mxu0 %v5786
        %7722 = vmatpush1.bf16.msra.mxu0 %v5785
        %7723 = vmatprep.mubr.bf16.mxu0 %v1006
        %7724 = vmatmul.mubr.bf16.gmra.mrb[0].mxu0 %v1005
        %v7725 = vpop.f32.mrb[0].mxu0
        %v7726 = vadd.f32 %v7685, %v7725
        %v7727 = vpop.f32.mrb[0].mxu0
        %v7728 = vadd.f32 %v7687, %v7727
        %v7729 = vpop.f32.mrb[0].mxu0
        %v7730 = vpop.f32.mrb[0].mxu0
        %7731 = vdwg.mxu0
        %7732 = vmatprep.subr.bf16.mxu0 %v5794
        %7733 = vmatpush1.bf16.msra.mxu0 %v5793
        %7734 = vmatprep.subr.bf16.mxu0 %v5802
        %7735 = vmatpush1.bf16.msra.mxu0 %v5801
        %7736 = vmatprep.subr.bf16.mxu0 %v5810
        %7737 = vmatpush1.bf16.msra.mxu0 %v5809
        %7738 = vmatprep.subr.bf16.mxu0 %v5818
        %7739 = vmatpush1.bf16.msra.mxu0 %v5817
        %7740 = vmatprep.subr.bf16.mxu0 %v5826
        %7741 = vmatpush1.bf16.msra.mxu0 %v5825
        %7742 = vmatprep.subr.bf16.mxu0 %v5834
        %7743 = vmatpush1.bf16.msra.mxu0 %v5833
        %7744 = vmatprep.subr.bf16.mxu0 %v5842
        %7745 = vmatpush1.bf16.msra.mxu0 %v5841
        %7746 = vmatprep.subr.bf16.mxu0 %v5850
        %7747 = vmatpush1.bf16.msra.mxu0 %v5849
        %7748 = vmatprep.subr.bf16.mxu0 %v5858
        %7749 = vmatpush1.bf16.msra.mxu0 %v5857
        %7750 = vmatprep.subr.bf16.mxu0 %v5866
        %7751 = vmatpush1.bf16.msra.mxu0 %v5865
        %7752 = vmatprep.subr.bf16.mxu0 %v5874
        %7753 = vmatpush1.bf16.msra.mxu0 %v5873
        %7754 = vmatprep.subr.bf16.mxu0 %v5882
        %7755 = vmatpush1.bf16.msra.mxu0 %v5881
        %7756 = vmatprep.subr.bf16.mxu0 %v5890
        %7757 = vmatpush1.bf16.msra.mxu0 %v5889
        %7758 = vmatprep.subr.bf16.mxu0 %v5898
        %7759 = vmatpush1.bf16.msra.mxu0 %v5897
        %7760 = vmatprep.subr.bf16.mxu0 %v5906
        %7761 = vmatpush1.bf16.msra.mxu0 %v5905
        %7762 = vmatprep.subr.bf16.mxu0 %v5914
        %7763 = vmatpush1.bf16.msra.mxu0 %v5913
        %7764 = vmatprep.mubr.bf16.mxu0 %v1008
        %7765 = vmatmul.mubr.bf16.gmra.mrb[0].mxu0 %v1007
        %v7766 = vpop.f32.mrb[0].mxu0
        %v7767 = vadd.f32 %v7726, %v7766
        %v7768 = vpop.f32.mrb[0].mxu0
        %v7769 = vadd.f32 %v7728, %v7768
        %v7770 = vpop.f32.mrb[0].mxu0
        %v7771 = vpop.f32.mrb[0].mxu0
        %7772 = vdwg.mxu0
        %7773 = vmatprep.subr.bf16.mxu0 %v5922
        %7774 = vmatpush1.bf16.msra.mxu0 %v5921
        %7775 = vmatprep.subr.bf16.mxu0 %v5930
        %7776 = vmatpush1.bf16.msra.mxu0 %v5929
        %7777 = vmatprep.subr.bf16.mxu0 %v5938
        %7778 = vmatpush1.bf16.msra.mxu0 %v5937
        %7779 = vmatprep.subr.bf16.mxu0 %v5946
        %7780 = vmatpush1.bf16.msra.mxu0 %v5945
        %7781 = vmatprep.subr.bf16.mxu0 %v5954
        %7782 = vmatpush1.bf16.msra.mxu0 %v5953
        %7783 = vmatprep.subr.bf16.mxu0 %v5962
        %7784 = vmatpush1.bf16.msra.mxu0 %v5961
        %7785 = vmatprep.subr.bf16.mxu0 %v5970
        %7786 = vmatpush1.bf16.msra.mxu0 %v5969
        %7787 = vmatprep.subr.bf16.mxu0 %v5978
        %7788 = vmatpush1.bf16.msra.mxu0 %v5977
        %7789 = vmatprep.subr.bf16.mxu0 %v5986
        %7790 = vmatpush1.bf16.msra.mxu0 %v5985
        %7791 = vmatprep.subr.bf16.mxu0 %v5994
        %7792 = vmatpush1.bf16.msra.mxu0 %v5993
        %7793 = vmatprep.subr.bf16.mxu0 %v6002
        %7794 = vmatpush1.bf16.msra.mxu0 %v6001
        %7795 = vmatprep.subr.bf16.mxu0 %v6010
        %7796 = vmatpush1.bf16.msra.mxu0 %v6009
        %7797 = vmatprep.subr.bf16.mxu0 %v6018
        %7798 = vmatpush1.bf16.msra.mxu0 %v6017
        %7799 = vmatprep.subr.bf16.mxu0 %v6026
        %7800 = vmatpush1.bf16.msra.mxu0 %v6025
        %7801 = vmatprep.subr.bf16.mxu0 %v6034
        %7802 = vmatpush1.bf16.msra.mxu0 %v6033
        %7803 = vmatprep.subr.bf16.mxu0 %v6042
        %7804 = vmatpush1.bf16.msra.mxu0 %v6041
        %7805 = vmatprep.mubr.bf16.mxu0 %v1010
        %7806 = vmatmul.mubr.bf16.gmra.mrb[0].mxu0 %v1009
        %v7807 = vpop.f32.mrb[0].mxu0
        %v7808 = vadd.f32 %v7767, %v7807
        %v7809 = vpop.f32.mrb[0].mxu0
        %v7810 = vadd.f32 %v7769, %v7809
        %v7811 = vpop.f32.mrb[0].mxu0
        %v7812 = vpop.f32.mrb[0].mxu0
        %7813 = vdwg.mxu0
        %7814 = vmatprep.subr.bf16.mxu0 %v6050
        %7815 = vmatpush1.bf16.msra.mxu0 %v6049
        %7816 = vmatprep.subr.bf16.mxu0 %v6058
        %7817 = vmatpush1.bf16.msra.mxu0 %v6057
        %7818 = vmatprep.subr.bf16.mxu0 %v6066
        %7819 = vmatpush1.bf16.msra.mxu0 %v6065
        %7820 = vmatprep.subr.bf16.mxu0 %v6074
        %7821 = vmatpush1.bf16.msra.mxu0 %v6073
        %7822 = vmatprep.subr.bf16.mxu0 %v6082
        %7823 = vmatpush1.bf16.msra.mxu0 %v6081
        %7824 = vmatprep.subr.bf16.mxu0 %v6090
        %7825 = vmatpush1.bf16.msra.mxu0 %v6089
        %7826 = vmatprep.subr.bf16.mxu0 %v6098
        %7827 = vmatpush1.bf16.msra.mxu0 %v6097
        %7828 = vmatprep.subr.bf16.mxu0 %v6106
        %7829 = vmatpush1.bf16.msra.mxu0 %v6105
        %7830 = vmatprep.subr.bf16.mxu0 %v6114
        %7831 = vmatpush1.bf16.msra.mxu0 %v6113
        %7832 = vmatprep.subr.bf16.mxu0 %v6122
        %7833 = vmatpush1.bf16.msra.mxu0 %v6121
        %7834 = vmatprep.subr.bf16.mxu0 %v6130
        %7835 = vmatpush1.bf16.msra.mxu0 %v6129
        %7836 = vmatprep.subr.bf16.mxu0 %v6138
        %7837 = vmatpush1.bf16.msra.mxu0 %v6137
        %7838 = vmatprep.subr.bf16.mxu0 %v6146
        %7839 = vmatpush1.bf16.msra.mxu0 %v6145
        %7840 = vmatprep.subr.bf16.mxu0 %v6154
        %7841 = vmatpush1.bf16.msra.mxu0 %v6153
        %7842 = vmatprep.subr.bf16.mxu0 %v6162
        %7843 = vmatpush1.bf16.msra.mxu0 %v6161
        %7844 = vmatprep.subr.bf16.mxu0 %v6170
        %7845 = vmatpush1.bf16.msra.mxu0 %v6169
        %7846 = vmatprep.mubr.bf16.mxu0 %v1012
        %7847 = vmatmul.mubr.bf16.gmra.mrb[0].mxu0 %v1011
        %v7848 = vpop.f32.mrb[0].mxu0
        %v7849 = vadd.f32 %v7808, %v7848
        %v7850 = vpop.f32.mrb[0].mxu0
        %v7851 = vadd.f32 %v7810, %v7850
        %v7852 = vpop.f32.mrb[0].mxu0
        %v7853 = vpop.f32.mrb[0].mxu0
        %7854 = vdwg.mxu0
        %7855 = vmatprep.subr.bf16.mxu0 %v5156
        %7856 = vmatpush1.bf16.msra.mxu0 %v5155
        %7857 = vmatprep.subr.bf16.mxu0 %v5164
        %7858 = vmatpush1.bf16.msra.mxu0 %v5163
        %7859 = vmatprep.subr.bf16.mxu0 %v5172
        %7860 = vmatpush1.bf16.msra.mxu0 %v5171
        %7861 = vmatprep.subr.bf16.mxu0 %v5180
        %7862 = vmatpush1.bf16.msra.mxu0 %v5179
        %7863 = vmatprep.subr.bf16.mxu0 %v5188
        %7864 = vmatpush1.bf16.msra.mxu0 %v5187
        %7865 = vmatprep.subr.bf16.mxu0 %v5196
        %7866 = vmatpush1.bf16.msra.mxu0 %v5195
        %7867 = vmatprep.subr.bf16.mxu0 %v5204
        %7868 = vmatpush1.bf16.msra.mxu0 %v5203
        %7869 = vmatprep.subr.bf16.mxu0 %v5212
        %7870 = vmatpush1.bf16.msra.mxu0 %v5211
        %7871 = vmatprep.subr.bf16.mxu0 %v5220
        %7872 = vmatpush1.bf16.msra.mxu0 %v5219
        %7873 = vmatprep.subr.bf16.mxu0 %v5228
        %7874 = vmatpush1.bf16.msra.mxu0 %v5227
        %7875 = vmatprep.subr.bf16.mxu0 %v5236
        %7876 = vmatpush1.bf16.msra.mxu0 %v5235
        %7877 = vmatprep.subr.bf16.mxu0 %v5244
        %7878 = vmatpush1.bf16.msra.mxu0 %v5243
        %7879 = vmatprep.subr.bf16.mxu0 %v5252
        %7880 = vmatpush1.bf16.msra.mxu0 %v5251
        %7881 = vmatprep.subr.bf16.mxu0 %v5260
        %7882 = vmatpush1.bf16.msra.mxu0 %v5259
        %7883 = vmatprep.subr.bf16.mxu0 %v5268
        %7884 = vmatpush1.bf16.msra.mxu0 %v5267
        %7885 = vmatprep.subr.bf16.mxu0 %v5276
        %7886 = vmatpush1.bf16.msra.mxu0 %v5275
        %7887 = vmatprep.mubr.bf16.mxu0 %v998
        %7888 = vmatmul.mubr.bf16.gmra.mrb[0].mxu0 %v997
        %v7889 = vpop.f32.mrb[0].mxu0
        %v7890 = vadd.f32 %v2058, %v7889
        %v7891 = vpop.f32.mrb[0].mxu0
        %v7892 = vadd.f32 %v2062, %v7891
        %v7893 = vpop.f32.mrb[0].mxu0
        %v7894 = vpop.f32.mrb[0].mxu0
        %7895 = vdwg.mxu0
        %7896 = vmatprep.subr.bf16.mxu0 %v5284
        %7897 = vmatpush1.bf16.msra.mxu0 %v5283
        %7898 = vmatprep.subr.bf16.mxu0 %v5292
        %7899 = vmatpush1.bf16.msra.mxu0 %v5291
        %7900 = vmatprep.subr.bf16.mxu0 %v5300
        %7901 = vmatpush1.bf16.msra.mxu0 %v5299
        %7902 = vmatprep.subr.bf16.mxu0 %v5308
        %7903 = vmatpush1.bf16.msra.mxu0 %v5307
        %7904 = vmatprep.subr.bf16.mxu0 %v5316
        %7905 = vmatpush1.bf16.msra.mxu0 %v5315
        %7906 = vmatprep.subr.bf16.mxu0 %v5324
        %7907 = vmatpush1.bf16.msra.mxu0 %v5323
        %7908 = vmatprep.subr.bf16.mxu0 %v5332
        %7909 = vmatpush1.bf16.msra.mxu0 %v5331
        %7910 = vmatprep.subr.bf16.mxu0 %v5340
        %7911 = vmatpush1.bf16.msra.mxu0 %v5339
        %7912 = vmatprep.subr.bf16.mxu0 %v5348
        %7913 = vmatpush1.bf16.msra.mxu0 %v5347
        %7914 = vmatprep.subr.bf16.mxu0 %v5356
        %7915 = vmatpush1.bf16.msra.mxu0 %v5355
        %7916 = vmatprep.subr.bf16.mxu0 %v5364
        %7917 = vmatpush1.bf16.msra.mxu0 %v5363
        %7918 = vmatprep.subr.bf16.mxu0 %v5372
        %7919 = vmatpush1.bf16.msra.mxu0 %v5371
        %7920 = vmatprep.subr.bf16.mxu0 %v5380
        %7921 = vmatpush1.bf16.msra.mxu0 %v5379
        %7922 = vmatprep.subr.bf16.mxu0 %v5388
        %7923 = vmatpush1.bf16.msra.mxu0 %v5387
        %7924 = vmatprep.subr.bf16.mxu0 %v5396
        %7925 = vmatpush1.bf16.msra.mxu0 %v5395
        %7926 = vmatprep.subr.bf16.mxu0 %v5404
        %7927 = vmatpush1.bf16.msra.mxu0 %v5403
        %7928 = vmatprep.mubr.bf16.mxu0 %v1000
        %7929 = vmatmul.mubr.bf16.gmra.mrb[0].mxu0 %v999
        %v7930 = vpop.f32.mrb[0].mxu0
        %v7931 = vadd.f32 %v7890, %v7930
        %v7932 = vpop.f32.mrb[0].mxu0
        %v7933 = vadd.f32 %v7892, %v7932
        %v7934 = vpop.f32.mrb[0].mxu0
        %v7935 = vpop.f32.mrb[0].mxu0
        %7936 = vdwg.mxu0
        %7937 = vmatprep.subr.bf16.mxu0 %v5412
        %7938 = vmatpush1.bf16.msra.mxu0 %v5411
        %7939 = vmatprep.subr.bf16.mxu0 %v5420
        %7940 = vmatpush1.bf16.msra.mxu0 %v5419
        %7941 = vmatprep.subr.bf16.mxu0 %v5428
        %7942 = vmatpush1.bf16.msra.mxu0 %v5427
        %7943 = vmatprep.subr.bf16.mxu0 %v5436
        %7944 = vmatpush1.bf16.msra.mxu0 %v5435
        %7945 = vmatprep.subr.bf16.mxu0 %v5444
        %7946 = vmatpush1.bf16.msra.mxu0 %v5443
        %7947 = vmatprep.subr.bf16.mxu0 %v5452
        %7948 = vmatpush1.bf16.msra.mxu0 %v5451
        %7949 = vmatprep.subr.bf16.mxu0 %v5460
        %7950 = vmatpush1.bf16.msra.mxu0 %v5459
        %7951 = vmatprep.subr.bf16.mxu0 %v5468
        %7952 = vmatpush1.bf16.msra.mxu0 %v5467
        %7953 = vmatprep.subr.bf16.mxu0 %v5476
        %7954 = vmatpush1.bf16.msra.mxu0 %v5475
        %7955 = vmatprep.subr.bf16.mxu0 %v5484
        %7956 = vmatpush1.bf16.msra.mxu0 %v5483
        %7957 = vmatprep.subr.bf16.mxu0 %v5492
        %7958 = vmatpush1.bf16.msra.mxu0 %v5491
        %7959 = vmatprep.subr.bf16.mxu0 %v5500
        %7960 = vmatpush1.bf16.msra.mxu0 %v5499
        %7961 = vmatprep.subr.bf16.mxu0 %v5508
        %7962 = vmatpush1.bf16.msra.mxu0 %v5507
        %7963 = vmatprep.subr.bf16.mxu0 %v5516
        %7964 = vmatpush1.bf16.msra.mxu0 %v5515
        %7965 = vmatprep.subr.bf16.mxu0 %v5524
        %7966 = vmatpush1.bf16.msra.mxu0 %v5523
        %7967 = vmatprep.subr.bf16.mxu0 %v5532
        %7968 = vmatpush1.bf16.msra.mxu0 %v5531
        %7969 = vmatprep.mubr.bf16.mxu0 %v1002
        %7970 = vmatmul.mubr.bf16.gmra.mrb[0].mxu0 %v1001
        %v7971 = vpop.f32.mrb[0].mxu0
        %v7972 = vadd.f32 %v7931, %v7971
        %v7973 = vpop.f32.mrb[0].mxu0
        %v7974 = vadd.f32 %v7933, %v7973
        %v7975 = vpop.f32.mrb[0].mxu0
        %v7976 = vpop.f32.mrb[0].mxu0
        %7977 = vdwg.mxu0
        %7978 = vmatprep.subr.bf16.mxu0 %v5540
        %7979 = vmatpush1.bf16.msra.mxu0 %v5539
        %7980 = vmatprep.subr.bf16.mxu0 %v5548
        %7981 = vmatpush1.bf16.msra.mxu0 %v5547
        %7982 = vmatprep.subr.bf16.mxu0 %v5556
        %7983 = vmatpush1.bf16.msra.mxu0 %v5555
        %7984 = vmatprep.subr.bf16.mxu0 %v5564
        %7985 = vmatpush1.bf16.msra.mxu0 %v5563
        %7986 = vmatprep.subr.bf16.mxu0 %v5572
        %7987 = vmatpush1.bf16.msra.mxu0 %v5571
        %7988 = vmatprep.subr.bf16.mxu0 %v5580
        %7989 = vmatpush1.bf16.msra.mxu0 %v5579
        %7990 = vmatprep.subr.bf16.mxu0 %v5588
        %7991 = vmatpush1.bf16.msra.mxu0 %v5587
        %7992 = vmatprep.subr.bf16.mxu0 %v5596
        %7993 = vmatpush1.bf16.msra.mxu0 %v5595
        %7994 = vmatprep.subr.bf16.mxu0 %v5604
        %7995 = vmatpush1.bf16.msra.mxu0 %v5603
        %7996 = vmatprep.subr.bf16.mxu0 %v5612
        %7997 = vmatpush1.bf16.msra.mxu0 %v5611
        %7998 = vmatprep.subr.bf16.mxu0 %v5620
        %7999 = vmatpush1.bf16.msra.mxu0 %v5619
        %8000 = vmatprep.subr.bf16.mxu0 %v5628
        %8001 = vmatpush1.bf16.msra.mxu0 %v5627
        %8002 = vmatprep.subr.bf16.mxu0 %v5636
        %8003 = vmatpush1.bf16.msra.mxu0 %v5635
        %8004 = vmatprep.subr.bf16.mxu0 %v5644
        %8005 = vmatpush1.bf16.msra.mxu0 %v5643
        %8006 = vmatprep.subr.bf16.mxu0 %v5652
        %8007 = vmatpush1.bf16.msra.mxu0 %v5651
        %8008 = vmatprep.subr.bf16.mxu0 %v5660
        %8009 = vmatpush1.bf16.msra.mxu0 %v5659
        %8010 = vmatprep.mubr.bf16.mxu0 %v1004
        %8011 = vmatmul.mubr.bf16.gmra.mrb[0].mxu0 %v1003
        %v8012 = vpop.f32.mrb[0].mxu0
        %v8013 = vadd.f32 %v7972, %v8012
        %v8014 = vpop.f32.mrb[0].mxu0
        %v8015 = vadd.f32 %v7974, %v8014
        %v8016 = vpop.f32.mrb[0].mxu0
        %v8017 = vpop.f32.mrb[0].mxu0
        %8018 = vdwg.mxu0
        %8019 = vmatprep.subr.bf16.mxu0 %v5668
        %8020 = vmatpush1.bf16.msra.mxu0 %v5667
        %8021 = vmatprep.subr.bf16.mxu0 %v5676
        %8022 = vmatpush1.bf16.msra.mxu0 %v5675
        %8023 = vmatprep.subr.bf16.mxu0 %v5684
        %8024 = vmatpush1.bf16.msra.mxu0 %v5683
        %8025 = vmatprep.subr.bf16.mxu0 %v5692
        %8026 = vmatpush1.bf16.msra.mxu0 %v5691
        %8027 = vmatprep.subr.bf16.mxu0 %v5700
        %8028 = vmatpush1.bf16.msra.mxu0 %v5699
        %8029 = vmatprep.subr.bf16.mxu0 %v5708
        %8030 = vmatpush1.bf16.msra.mxu0 %v5707
        %8031 = vmatprep.subr.bf16.mxu0 %v5716
        %8032 = vmatpush1.bf16.msra.mxu0 %v5715
        %8033 = vmatprep.subr.bf16.mxu0 %v5724
        %8034 = vmatpush1.bf16.msra.mxu0 %v5723
        %8035 = vmatprep.subr.bf16.mxu0 %v5732
        %8036 = vmatpush1.bf16.msra.mxu0 %v5731
        %8037 = vmatprep.subr.bf16.mxu0 %v5740
        %8038 = vmatpush1.bf16.msra.mxu0 %v5739
        %8039 = vmatprep.subr.bf16.mxu0 %v5748
        %8040 = vmatpush1.bf16.msra.mxu0 %v5747
        %8041 = vmatprep.subr.bf16.mxu0 %v5756
        %8042 = vmatpush1.bf16.msra.mxu0 %v5755
        %8043 = vmatprep.subr.bf16.mxu0 %v5764
        %8044 = vmatpush1.bf16.msra.mxu0 %v5763
        %8045 = vmatprep.subr.bf16.mxu0 %v5772
        %8046 = vmatpush1.bf16.msra.mxu0 %v5771
        %8047 = vmatprep.subr.bf16.mxu0 %v5780
        %8048 = vmatpush1.bf16.msra.mxu0 %v5779
        %8049 = vmatprep.subr.bf16.mxu0 %v5788
        %8050 = vmatpush1.bf16.msra.mxu0 %v5787
        %8051 = vmatprep.mubr.bf16.mxu0 %v1006
        %8052 = vmatmul.mubr.bf16.gmra.mrb[0].mxu0 %v1005
        %v8053 = vpop.f32.mrb[0].mxu0
        %v8054 = vadd.f32 %v8013, %v8053
        %v8055 = vpop.f32.mrb[0].mxu0
        %v8056 = vadd.f32 %v8015, %v8055
        %v8057 = vpop.f32.mrb[0].mxu0
        %v8058 = vpop.f32.mrb[0].mxu0
        %8059 = vdwg.mxu0
        %8060 = vmatprep.subr.bf16.mxu0 %v5796
        %8061 = vmatpush1.bf16.msra.mxu0 %v5795
        %8062 = vmatprep.subr.bf16.mxu0 %v5804
        %8063 = vmatpush1.bf16.msra.mxu0 %v5803
        %8064 = vmatprep.subr.bf16.mxu0 %v5812
        %8065 = vmatpush1.bf16.msra.mxu0 %v5811
        %8066 = vmatprep.subr.bf16.mxu0 %v5820
        %8067 = vmatpush1.bf16.msra.mxu0 %v5819
        %8068 = vmatprep.subr.bf16.mxu0 %v5828
        %8069 = vmatpush1.bf16.msra.mxu0 %v5827
        %8070 = vmatprep.subr.bf16.mxu0 %v5836
        %8071 = vmatpush1.bf16.msra.mxu0 %v5835
        %8072 = vmatprep.subr.bf16.mxu0 %v5844
        %8073 = vmatpush1.bf16.msra.mxu0 %v5843
        %8074 = vmatprep.subr.bf16.mxu0 %v5852
        %8075 = vmatpush1.bf16.msra.mxu0 %v5851
        %8076 = vmatprep.subr.bf16.mxu0 %v5860
        %8077 = vmatpush1.bf16.msra.mxu0 %v5859
        %8078 = vmatprep.subr.bf16.mxu0 %v5868
        %8079 = vmatpush1.bf16.msra.mxu0 %v5867
        %8080 = vmatprep.subr.bf16.mxu0 %v5876
        %8081 = vmatpush1.bf16.msra.mxu0 %v5875
        %8082 = vmatprep.subr.bf16.mxu0 %v5884
        %8083 = vmatpush1.bf16.msra.mxu0 %v5883
        %8084 = vmatprep.subr.bf16.mxu0 %v5892
        %8085 = vmatpush1.bf16.msra.mxu0 %v5891
        %8086 = vmatprep.subr.bf16.mxu0 %v5900
        %8087 = vmatpush1.bf16.msra.mxu0 %v5899
        %8088 = vmatprep.subr.bf16.mxu0 %v5908
        %8089 = vmatpush1.bf16.msra.mxu0 %v5907
        %8090 = vmatprep.subr.bf16.mxu0 %v5916
        %8091 = vmatpush1.bf16.msra.mxu0 %v5915
        %8092 = vmatprep.mubr.bf16.mxu0 %v1008
        %8093 = vmatmul.mubr.bf16.gmra.mrb[0].mxu0 %v1007
        %v8094 = vpop.f32.mrb[0].mxu0
        %v8095 = vadd.f32 %v8054, %v8094
        %v8096 = vpop.f32.mrb[0].mxu0
        %v8097 = vadd.f32 %v8056, %v8096
        %v8098 = vpop.f32.mrb[0].mxu0
        %v8099 = vpop.f32.mrb[0].mxu0
        %8100 = vdwg.mxu0
        %8101 = vmatprep.subr.bf16.mxu0 %v5924
        %8102 = vmatpush1.bf16.msra.mxu0 %v5923
        %8103 = vmatprep.subr.bf16.mxu0 %v5932
        %8104 = vmatpush1.bf16.msra.mxu0 %v5931
        %8105 = vmatprep.subr.bf16.mxu0 %v5940
        %8106 = vmatpush1.bf16.msra.mxu0 %v5939
        %8107 = vmatprep.subr.bf16.mxu0 %v5948
        %8108 = vmatpush1.bf16.msra.mxu0 %v5947
        %8109 = vmatprep.subr.bf16.mxu0 %v5956
        %8110 = vmatpush1.bf16.msra.mxu0 %v5955
        %8111 = vmatprep.subr.bf16.mxu0 %v5964
        %8112 = vmatpush1.bf16.msra.mxu0 %v5963
        %8113 = vmatprep.subr.bf16.mxu0 %v5972
        %8114 = vmatpush1.bf16.msra.mxu0 %v5971
        %8115 = vmatprep.subr.bf16.mxu0 %v5980
        %8116 = vmatpush1.bf16.msra.mxu0 %v5979
        %8117 = vmatprep.subr.bf16.mxu0 %v5988
        %8118 = vmatpush1.bf16.msra.mxu0 %v5987
        %8119 = vmatprep.subr.bf16.mxu0 %v5996
        %8120 = vmatpush1.bf16.msra.mxu0 %v5995
        %8121 = vmatprep.subr.bf16.mxu0 %v6004
        %8122 = vmatpush1.bf16.msra.mxu0 %v6003
        %8123 = vmatprep.subr.bf16.mxu0 %v6012
        %8124 = vmatpush1.bf16.msra.mxu0 %v6011
        %8125 = vmatprep.subr.bf16.mxu0 %v6020
        %8126 = vmatpush1.bf16.msra.mxu0 %v6019
        %8127 = vmatprep.subr.bf16.mxu0 %v6028
        %8128 = vmatpush1.bf16.msra.mxu0 %v6027
        %8129 = vmatprep.subr.bf16.mxu0 %v6036
        %8130 = vmatpush1.bf16.msra.mxu0 %v6035
        %8131 = vmatprep.subr.bf16.mxu0 %v6044
        %8132 = vmatpush1.bf16.msra.mxu0 %v6043
        %8133 = vmatprep.mubr.bf16.mxu0 %v1010
        %8134 = vmatmul.mubr.bf16.gmra.mrb[0].mxu0 %v1009
        %v8135 = vpop.f32.mrb[0].mxu0
        %v8136 = vadd.f32 %v8095, %v8135
        %v8137 = vpop.f32.mrb[0].mxu0
        %v8138 = vadd.f32 %v8097, %v8137
        %v8139 = vpop.f32.mrb[0].mxu0
        %v8140 = vpop.f32.mrb[0].mxu0
        %8141 = vdwg.mxu0
        %8142 = vmatprep.subr.bf16.mxu0 %v6052
        %8143 = vmatpush1.bf16.msra.mxu0 %v6051
        %8144 = vmatprep.subr.bf16.mxu0 %v6060
        %8145 = vmatpush1.bf16.msra.mxu0 %v6059
        %8146 = vmatprep.subr.bf16.mxu0 %v6068
        %8147 = vmatpush1.bf16.msra.mxu0 %v6067
        %8148 = vmatprep.subr.bf16.mxu0 %v6076
        %8149 = vmatpush1.bf16.msra.mxu0 %v6075
        %8150 = vmatprep.subr.bf16.mxu0 %v6084
        %8151 = vmatpush1.bf16.msra.mxu0 %v6083
        %8152 = vmatprep.subr.bf16.mxu0 %v6092
        %8153 = vmatpush1.bf16.msra.mxu0 %v6091
        %8154 = vmatprep.subr.bf16.mxu0 %v6100
        %8155 = vmatpush1.bf16.msra.mxu0 %v6099
        %8156 = vmatprep.subr.bf16.mxu0 %v6108
        %8157 = vmatpush1.bf16.msra.mxu0 %v6107
        %8158 = vmatprep.subr.bf16.mxu0 %v6116
        %8159 = vmatpush1.bf16.msra.mxu0 %v6115
        %8160 = vmatprep.subr.bf16.mxu0 %v6124
        %8161 = vmatpush1.bf16.msra.mxu0 %v6123
        %8162 = vmatprep.subr.bf16.mxu0 %v6132
        %8163 = vmatpush1.bf16.msra.mxu0 %v6131
        %8164 = vmatprep.subr.bf16.mxu0 %v6140
        %8165 = vmatpush1.bf16.msra.mxu0 %v6139
        %8166 = vmatprep.subr.bf16.mxu0 %v6148
        %8167 = vmatpush1.bf16.msra.mxu0 %v6147
        %8168 = vmatprep.subr.bf16.mxu0 %v6156
        %8169 = vmatpush1.bf16.msra.mxu0 %v6155
        %8170 = vmatprep.subr.bf16.mxu0 %v6164
        %8171 = vmatpush1.bf16.msra.mxu0 %v6163
        %8172 = vmatprep.subr.bf16.mxu0 %v6172
        %8173 = vmatpush1.bf16.msra.mxu0 %v6171
        %8174 = vmatprep.mubr.bf16.mxu0 %v1012
        %8175 = vmatmul.mubr.bf16.gmra.mrb[0].mxu0 %v1011
        %v8176 = vpop.f32.mrb[0].mxu0
        %v8177 = vadd.f32 %v8136, %v8176
        %v8178 = vpop.f32.mrb[0].mxu0
        %v8179 = vadd.f32 %v8138, %v8178
        %v8180 = vpop.f32.mrb[0].mxu0
        %v8181 = vpop.f32.mrb[0].mxu0
        %8182 = vdwg.mxu0
        %8183 = vmatprep.subr.bf16.mxu0 %v5158
        %8184 = vmatpush1.bf16.msra.mxu0 %v5157
        %8185 = vmatprep.subr.bf16.mxu0 %v5166
        %8186 = vmatpush1.bf16.msra.mxu0 %v5165
        %8187 = vmatprep.subr.bf16.mxu0 %v5174
        %8188 = vmatpush1.bf16.msra.mxu0 %v5173
        %8189 = vmatprep.subr.bf16.mxu0 %v5182
        %8190 = vmatpush1.bf16.msra.mxu0 %v5181
        %8191 = vmatprep.subr.bf16.mxu0 %v5190
        %8192 = vmatpush1.bf16.msra.mxu0 %v5189
        %8193 = vmatprep.subr.bf16.mxu0 %v5198
        %8194 = vmatpush1.bf16.msra.mxu0 %v5197
        %8195 = vmatprep.subr.bf16.mxu0 %v5206
        %8196 = vmatpush1.bf16.msra.mxu0 %v5205
        %8197 = vmatprep.subr.bf16.mxu0 %v5214
        %8198 = vmatpush1.bf16.msra.mxu0 %v5213
        %8199 = vmatprep.subr.bf16.mxu0 %v5222
        %8200 = vmatpush1.bf16.msra.mxu0 %v5221
        %8201 = vmatprep.subr.bf16.mxu0 %v5230
        %8202 = vmatpush1.bf16.msra.mxu0 %v5229
        %8203 = vmatprep.subr.bf16.mxu0 %v5238
        %8204 = vmatpush1.bf16.msra.mxu0 %v5237
        %8205 = vmatprep.subr.bf16.mxu0 %v5246
        %8206 = vmatpush1.bf16.msra.mxu0 %v5245
        %8207 = vmatprep.subr.bf16.mxu0 %v5254
        %8208 = vmatpush1.bf16.msra.mxu0 %v5253
        %8209 = vmatprep.subr.bf16.mxu0 %v5262
        %8210 = vmatpush1.bf16.msra.mxu0 %v5261
        %8211 = vmatprep.subr.bf16.mxu0 %v5270
        %8212 = vmatpush1.bf16.msra.mxu0 %v5269
        %8213 = vmatprep.subr.bf16.mxu0 %v5278
        %8214 = vmatpush1.bf16.msra.mxu0 %v5277
        %8215 = vmatprep.mubr.bf16.mxu0 %v998
        %8216 = vmatmul.mubr.bf16.gmra.mrb[0].mxu0 %v997
        %v8217 = vpop.f32.mrb[0].mxu0
        %v8218 = vadd.f32 %v2066, %v8217
        %v8219 = vpop.f32.mrb[0].mxu0
        %v8220 = vadd.f32 %v2070, %v8219
        %v8221 = vpop.f32.mrb[0].mxu0
        %v8222 = vpop.f32.mrb[0].mxu0
        %8223 = vdwg.mxu0
        %8224 = vmatprep.subr.bf16.mxu0 %v5286
        %8225 = vmatpush1.bf16.msra.mxu0 %v5285
        %8226 = vmatprep.subr.bf16.mxu0 %v5294
        %8227 = vmatpush1.bf16.msra.mxu0 %v5293
        %8228 = vmatprep.subr.bf16.mxu0 %v5302
        %8229 = vmatpush1.bf16.msra.mxu0 %v5301
        %8230 = vmatprep.subr.bf16.mxu0 %v5310
        %8231 = vmatpush1.bf16.msra.mxu0 %v5309
        %8232 = vmatprep.subr.bf16.mxu0 %v5318
        %8233 = vmatpush1.bf16.msra.mxu0 %v5317
        %8234 = vmatprep.subr.bf16.mxu0 %v5326
        %8235 = vmatpush1.bf16.msra.mxu0 %v5325
        %8236 = vmatprep.subr.bf16.mxu0 %v5334
        %8237 = vmatpush1.bf16.msra.mxu0 %v5333
        %8238 = vmatprep.subr.bf16.mxu0 %v5342
        %8239 = vmatpush1.bf16.msra.mxu0 %v5341
        %8240 = vmatprep.subr.bf16.mxu0 %v5350
        %8241 = vmatpush1.bf16.msra.mxu0 %v5349
        %8242 = vmatprep.subr.bf16.mxu0 %v5358
        %8243 = vmatpush1.bf16.msra.mxu0 %v5357
        %8244 = vmatprep.subr.bf16.mxu0 %v5366
        %8245 = vmatpush1.bf16.msra.mxu0 %v5365
        %8246 = vmatprep.subr.bf16.mxu0 %v5374
        %8247 = vmatpush1.bf16.msra.mxu0 %v5373
        %8248 = vmatprep.subr.bf16.mxu0 %v5382
        %8249 = vmatpush1.bf16.msra.mxu0 %v5381
        %8250 = vmatprep.subr.bf16.mxu0 %v5390
        %8251 = vmatpush1.bf16.msra.mxu0 %v5389
        %8252 = vmatprep.subr.bf16.mxu0 %v5398
        %8253 = vmatpush1.bf16.msra.mxu0 %v5397
        %8254 = vmatprep.subr.bf16.mxu0 %v5406
        %8255 = vmatpush1.bf16.msra.mxu0 %v5405
        %8256 = vmatprep.mubr.bf16.mxu0 %v1000
        %8257 = vmatmul.mubr.bf16.gmra.mrb[0].mxu0 %v999
        %v8258 = vpop.f32.mrb[0].mxu0
        %v8259 = vadd.f32 %v8218, %v8258
        %v8260 = vpop.f32.mrb[0].mxu0
        %v8261 = vadd.f32 %v8220, %v8260
        %v8262 = vpop.f32.mrb[0].mxu0
        %v8263 = vpop.f32.mrb[0].mxu0
        %8264 = vdwg.mxu0
        %8265 = vmatprep.subr.bf16.mxu0 %v5414
        %8266 = vmatpush1.bf16.msra.mxu0 %v5413
        %8267 = vmatprep.subr.bf16.mxu0 %v5422
        %8268 = vmatpush1.bf16.msra.mxu0 %v5421
        %8269 = vmatprep.subr.bf16.mxu0 %v5430
        %8270 = vmatpush1.bf16.msra.mxu0 %v5429
        %8271 = vmatprep.subr.bf16.mxu0 %v5438
        %8272 = vmatpush1.bf16.msra.mxu0 %v5437
        %8273 = vmatprep.subr.bf16.mxu0 %v5446
        %8274 = vmatpush1.bf16.msra.mxu0 %v5445
        %8275 = vmatprep.subr.bf16.mxu0 %v5454
        %8276 = vmatpush1.bf16.msra.mxu0 %v5453
        %8277 = vmatprep.subr.bf16.mxu0 %v5462
        %8278 = vmatpush1.bf16.msra.mxu0 %v5461
        %8279 = vmatprep.subr.bf16.mxu0 %v5470
        %8280 = vmatpush1.bf16.msra.mxu0 %v5469
        %8281 = vmatprep.subr.bf16.mxu0 %v5478
        %8282 = vmatpush1.bf16.msra.mxu0 %v5477
        %8283 = vmatprep.subr.bf16.mxu0 %v5486
        %8284 = vmatpush1.bf16.msra.mxu0 %v5485
        %8285 = vmatprep.subr.bf16.mxu0 %v5494
        %8286 = vmatpush1.bf16.msra.mxu0 %v5493
        %8287 = vmatprep.subr.bf16.mxu0 %v5502
        %8288 = vmatpush1.bf16.msra.mxu0 %v5501
        %8289 = vmatprep.subr.bf16.mxu0 %v5510
        %8290 = vmatpush1.bf16.msra.mxu0 %v5509
        %8291 = vmatprep.subr.bf16.mxu0 %v5518
        %8292 = vmatpush1.bf16.msra.mxu0 %v5517
        %8293 = vmatprep.subr.bf16.mxu0 %v5526
        %8294 = vmatpush1.bf16.msra.mxu0 %v5525
        %8295 = vmatprep.subr.bf16.mxu0 %v5534
        %8296 = vmatpush1.bf16.msra.mxu0 %v5533
        %8297 = vmatprep.mubr.bf16.mxu0 %v1002
        %8298 = vmatmul.mubr.bf16.gmra.mrb[0].mxu0 %v1001
        %v8299 = vpop.f32.mrb[0].mxu0
        %v8300 = vadd.f32 %v8259, %v8299
        %v8301 = vpop.f32.mrb[0].mxu0
        %v8302 = vadd.f32 %v8261, %v8301
        %v8303 = vpop.f32.mrb[0].mxu0
        %v8304 = vpop.f32.mrb[0].mxu0
        %8305 = vdwg.mxu0
        %8306 = vmatprep.subr.bf16.mxu0 %v5542
        %8307 = vmatpush1.bf16.msra.mxu0 %v5541
        %8308 = vmatprep.subr.bf16.mxu0 %v5550
        %8309 = vmatpush1.bf16.msra.mxu0 %v5549
        %8310 = vmatprep.subr.bf16.mxu0 %v5558
        %8311 = vmatpush1.bf16.msra.mxu0 %v5557
        %8312 = vmatprep.subr.bf16.mxu0 %v5566
        %8313 = vmatpush1.bf16.msra.mxu0 %v5565
        %8314 = vmatprep.subr.bf16.mxu0 %v5574
        %8315 = vmatpush1.bf16.msra.mxu0 %v5573
        %8316 = vmatprep.subr.bf16.mxu0 %v5582
        %8317 = vmatpush1.bf16.msra.mxu0 %v5581
        %8318 = vmatprep.subr.bf16.mxu0 %v5590
        %8319 = vmatpush1.bf16.msra.mxu0 %v5589
        %8320 = vmatprep.subr.bf16.mxu0 %v5598
        %8321 = vmatpush1.bf16.msra.mxu0 %v5597
        %8322 = vmatprep.subr.bf16.mxu0 %v5606
        %8323 = vmatpush1.bf16.msra.mxu0 %v5605
        %8324 = vmatprep.subr.bf16.mxu0 %v5614
        %8325 = vmatpush1.bf16.msra.mxu0 %v5613
        %8326 = vmatprep.subr.bf16.mxu0 %v5622
        %8327 = vmatpush1.bf16.msra.mxu0 %v5621
        %8328 = vmatprep.subr.bf16.mxu0 %v5630
        %8329 = vmatpush1.bf16.msra.mxu0 %v5629
        %8330 = vmatprep.subr.bf16.mxu0 %v5638
        %8331 = vmatpush1.bf16.msra.mxu0 %v5637
        %8332 = vmatprep.subr.bf16.mxu0 %v5646
        %8333 = vmatpush1.bf16.msra.mxu0 %v5645
        %8334 = vmatprep.subr.bf16.mxu0 %v5654
        %8335 = vmatpush1.bf16.msra.mxu0 %v5653
        %8336 = vmatprep.subr.bf16.mxu0 %v5662
        %8337 = vmatpush1.bf16.msra.mxu0 %v5661
        %8338 = vmatprep.mubr.bf16.mxu0 %v1004
        %8339 = vmatmul.mubr.bf16.gmra.mrb[0].mxu0 %v1003
        %v8340 = vpop.f32.mrb[0].mxu0
        %v8341 = vadd.f32 %v8300, %v8340
        %v8342 = vpop.f32.mrb[0].mxu0
        %v8343 = vadd.f32 %v8302, %v8342
        %v8344 = vpop.f32.mrb[0].mxu0
        %v8345 = vpop.f32.mrb[0].mxu0
        %8346 = vdwg.mxu0
        %8347 = vmatprep.subr.bf16.mxu0 %v5670
        %8348 = vmatpush1.bf16.msra.mxu0 %v5669
        %8349 = vmatprep.subr.bf16.mxu0 %v5678
        %8350 = vmatpush1.bf16.msra.mxu0 %v5677
        %8351 = vmatprep.subr.bf16.mxu0 %v5686
        %8352 = vmatpush1.bf16.msra.mxu0 %v5685
        %8353 = vmatprep.subr.bf16.mxu0 %v5694
        %8354 = vmatpush1.bf16.msra.mxu0 %v5693
        %8355 = vmatprep.subr.bf16.mxu0 %v5702
        %8356 = vmatpush1.bf16.msra.mxu0 %v5701
        %8357 = vmatprep.subr.bf16.mxu0 %v5710
        %8358 = vmatpush1.bf16.msra.mxu0 %v5709
        %8359 = vmatprep.subr.bf16.mxu0 %v5718
        %8360 = vmatpush1.bf16.msra.mxu0 %v5717
        %8361 = vmatprep.subr.bf16.mxu0 %v5726
        %8362 = vmatpush1.bf16.msra.mxu0 %v5725
        %8363 = vmatprep.subr.bf16.mxu0 %v5734
        %8364 = vmatpush1.bf16.msra.mxu0 %v5733
        %8365 = vmatprep.subr.bf16.mxu0 %v5742
        %8366 = vmatpush1.bf16.msra.mxu0 %v5741
        %8367 = vmatprep.subr.bf16.mxu0 %v5750
        %8368 = vmatpush1.bf16.msra.mxu0 %v5749
        %8369 = vmatprep.subr.bf16.mxu0 %v5758
        %8370 = vmatpush1.bf16.msra.mxu0 %v5757
        %8371 = vmatprep.subr.bf16.mxu0 %v5766
        %8372 = vmatpush1.bf16.msra.mxu0 %v5765
        %8373 = vmatprep.subr.bf16.mxu0 %v5774
        %8374 = vmatpush1.bf16.msra.mxu0 %v5773
        %8375 = vmatprep.subr.bf16.mxu0 %v5782
        %8376 = vmatpush1.bf16.msra.mxu0 %v5781
        %8377 = vmatprep.subr.bf16.mxu0 %v5790
        %8378 = vmatpush1.bf16.msra.mxu0 %v5789
        %8379 = vmatprep.mubr.bf16.mxu0 %v1006
        %8380 = vmatmul.mubr.bf16.gmra.mrb[0].mxu0 %v1005
        %v8381 = vpop.f32.mrb[0].mxu0
        %v8382 = vadd.f32 %v8341, %v8381
        %v8383 = vpop.f32.mrb[0].mxu0
        %v8384 = vadd.f32 %v8343, %v8383
        %v8385 = vpop.f32.mrb[0].mxu0
        %v8386 = vpop.f32.mrb[0].mxu0
        %8387 = vdwg.mxu0
        %8388 = vmatprep.subr.bf16.mxu0 %v5798
        %8389 = vmatpush1.bf16.msra.mxu0 %v5797
        %8390 = vmatprep.subr.bf16.mxu0 %v5806
        %8391 = vmatpush1.bf16.msra.mxu0 %v5805
        %8392 = vmatprep.subr.bf16.mxu0 %v5814
        %8393 = vmatpush1.bf16.msra.mxu0 %v5813
        %8394 = vmatprep.subr.bf16.mxu0 %v5822
        %8395 = vmatpush1.bf16.msra.mxu0 %v5821
        %8396 = vmatprep.subr.bf16.mxu0 %v5830
        %8397 = vmatpush1.bf16.msra.mxu0 %v5829
        %8398 = vmatprep.subr.bf16.mxu0 %v5838
        %8399 = vmatpush1.bf16.msra.mxu0 %v5837
        %8400 = vmatprep.subr.bf16.mxu0 %v5846
        %8401 = vmatpush1.bf16.msra.mxu0 %v5845
        %8402 = vmatprep.subr.bf16.mxu0 %v5854
        %8403 = vmatpush1.bf16.msra.mxu0 %v5853
        %8404 = vmatprep.subr.bf16.mxu0 %v5862
        %8405 = vmatpush1.bf16.msra.mxu0 %v5861
        %8406 = vmatprep.subr.bf16.mxu0 %v5870
        %8407 = vmatpush1.bf16.msra.mxu0 %v5869
        %8408 = vmatprep.subr.bf16.mxu0 %v5878
        %8409 = vmatpush1.bf16.msra.mxu0 %v5877
        %8410 = vmatprep.subr.bf16.mxu0 %v5886
        %8411 = vmatpush1.bf16.msra.mxu0 %v5885
        %8412 = vmatprep.subr.bf16.mxu0 %v5894
        %8413 = vmatpush1.bf16.msra.mxu0 %v5893
        %8414 = vmatprep.subr.bf16.mxu0 %v5902
        %8415 = vmatpush1.bf16.msra.mxu0 %v5901
        %8416 = vmatprep.subr.bf16.mxu0 %v5910
        %8417 = vmatpush1.bf16.msra.mxu0 %v5909
        %8418 = vmatprep.subr.bf16.mxu0 %v5918
        %8419 = vmatpush1.bf16.msra.mxu0 %v5917
        %8420 = vmatprep.mubr.bf16.mxu0 %v1008
        %8421 = vmatmul.mubr.bf16.gmra.mrb[0].mxu0 %v1007
        %v8422 = vpop.f32.mrb[0].mxu0
        %v8423 = vadd.f32 %v8382, %v8422
        %v8424 = vpop.f32.mrb[0].mxu0
        %v8425 = vadd.f32 %v8384, %v8424
        %v8426 = vpop.f32.mrb[0].mxu0
        %v8427 = vpop.f32.mrb[0].mxu0
        %8428 = vdwg.mxu0
        %8429 = vmatprep.subr.bf16.mxu0 %v5926
        %8430 = vmatpush1.bf16.msra.mxu0 %v5925
        %8431 = vmatprep.subr.bf16.mxu0 %v5934
        %8432 = vmatpush1.bf16.msra.mxu0 %v5933
        %8433 = vmatprep.subr.bf16.mxu0 %v5942
        %8434 = vmatpush1.bf16.msra.mxu0 %v5941
        %8435 = vmatprep.subr.bf16.mxu0 %v5950
        %8436 = vmatpush1.bf16.msra.mxu0 %v5949
        %8437 = vmatprep.subr.bf16.mxu0 %v5958
        %8438 = vmatpush1.bf16.msra.mxu0 %v5957
        %8439 = vmatprep.subr.bf16.mxu0 %v5966
        %8440 = vmatpush1.bf16.msra.mxu0 %v5965
        %8441 = vmatprep.subr.bf16.mxu0 %v5974
        %8442 = vmatpush1.bf16.msra.mxu0 %v5973
        %8443 = vmatprep.subr.bf16.mxu0 %v5982
        %8444 = vmatpush1.bf16.msra.mxu0 %v5981
        %8445 = vmatprep.subr.bf16.mxu0 %v5990
        %8446 = vmatpush1.bf16.msra.mxu0 %v5989
        %8447 = vmatprep.subr.bf16.mxu0 %v5998
        %8448 = vmatpush1.bf16.msra.mxu0 %v5997
        %8449 = vmatprep.subr.bf16.mxu0 %v6006
        %8450 = vmatpush1.bf16.msra.mxu0 %v6005
        %8451 = vmatprep.subr.bf16.mxu0 %v6014
        %8452 = vmatpush1.bf16.msra.mxu0 %v6013
        %8453 = vmatprep.subr.bf16.mxu0 %v6022
        %8454 = vmatpush1.bf16.msra.mxu0 %v6021
        %8455 = vmatprep.subr.bf16.mxu0 %v6030
        %8456 = vmatpush1.bf16.msra.mxu0 %v6029
        %8457 = vmatprep.subr.bf16.mxu0 %v6038
        %8458 = vmatpush1.bf16.msra.mxu0 %v6037
        %8459 = vmatprep.subr.bf16.mxu0 %v6046
        %8460 = vmatpush1.bf16.msra.mxu0 %v6045
        %8461 = vmatprep.mubr.bf16.mxu0 %v1010
        %8462 = vmatmul.mubr.bf16.gmra.mrb[0].mxu0 %v1009
        %v8463 = vpop.f32.mrb[0].mxu0
        %v8464 = vadd.f32 %v8423, %v8463
        %v8465 = vpop.f32.mrb[0].mxu0
        %v8466 = vadd.f32 %v8425, %v8465
        %v8467 = vpop.f32.mrb[0].mxu0
        %v8468 = vpop.f32.mrb[0].mxu0
        %8469 = vdwg.mxu0
        %8470 = vmatprep.subr.bf16.mxu0 %v6054
        %8471 = vmatpush1.bf16.msra.mxu0 %v6053
        %8472 = vmatprep.subr.bf16.mxu0 %v6062
        %8473 = vmatpush1.bf16.msra.mxu0 %v6061
        %8474 = vmatprep.subr.bf16.mxu0 %v6070
        %8475 = vmatpush1.bf16.msra.mxu0 %v6069
        %8476 = vmatprep.subr.bf16.mxu0 %v6078
        %8477 = vmatpush1.bf16.msra.mxu0 %v6077
        %8478 = vmatprep.subr.bf16.mxu0 %v6086
        %8479 = vmatpush1.bf16.msra.mxu0 %v6085
        %8480 = vmatprep.subr.bf16.mxu0 %v6094
        %8481 = vmatpush1.bf16.msra.mxu0 %v6093
        %8482 = vmatprep.subr.bf16.mxu0 %v6102
        %8483 = vmatpush1.bf16.msra.mxu0 %v6101
        %8484 = vmatprep.subr.bf16.mxu0 %v6110
        %8485 = vmatpush1.bf16.msra.mxu0 %v6109
        %8486 = vmatprep.subr.bf16.mxu0 %v6118
        %8487 = vmatpush1.bf16.msra.mxu0 %v6117
        %8488 = vmatprep.subr.bf16.mxu0 %v6126
        %8489 = vmatpush1.bf16.msra.mxu0 %v6125
        %8490 = vmatprep.subr.bf16.mxu0 %v6134
        %8491 = vmatpush1.bf16.msra.mxu0 %v6133
        %8492 = vmatprep.subr.bf16.mxu0 %v6142
        %8493 = vmatpush1.bf16.msra.mxu0 %v6141
        %8494 = vmatprep.subr.bf16.mxu0 %v6150
        %8495 = vmatpush1.bf16.msra.mxu0 %v6149
        %8496 = vmatprep.subr.bf16.mxu0 %v6158
        %8497 = vmatpush1.bf16.msra.mxu0 %v6157
        %8498 = vmatprep.subr.bf16.mxu0 %v6166
        %8499 = vmatpush1.bf16.msra.mxu0 %v6165
        %8500 = vmatprep.subr.bf16.mxu0 %v6174
        %8501 = vmatpush1.bf16.msra.mxu0 %v6173
        %8502 = vmatprep.mubr.bf16.mxu0 %v1012
        %8503 = vmatmul.mubr.bf16.gmra.mrb[0].mxu0 %v1011
        %v8504 = vpop.f32.mrb[0].mxu0
        %v8505 = vadd.f32 %v8464, %v8504
        %v8506 = vpop.f32.mrb[0].mxu0
        %v8507 = vadd.f32 %v8466, %v8506
        %v8508 = vpop.f32.mrb[0].mxu0
        %v8509 = vpop.f32.mrb[0].mxu0
        %8510 = vdwg.mxu0
        %v8511 = vmax.f32 %v7521, 0.0
        %v8512 = vmax.f32 %v7523, 0.0
        %v8513 = vmax.f32 %v7849, 0.0
        %v8514 = vmax.f32 %v7851, 0.0
        %v8515 = vmax.f32 %v8177, 0.0
        %v8516 = vmax.f32 %v8179, 0.0
        %v8517 = vmax.f32 %v8505, 0.0
        %v8518 = vmax.f32 %v8507, 0.0
        %v8519 = vld [vmem:[#allocation3] sm:$0xff]
        %v8520 = vpack.c.bf16 %v8511, %v8511
        %v8521 = vpack.c.bf16 %v8512, %v8512
        %v8522 = vpack.c.bf16 %v8513, %v8513
        %v8523 = vpack.c.bf16 %v8514, %v8514
        %v8524 = vpack.c.bf16 %v8515, %v8515
        %v8525 = vpack.c.bf16 %v8516, %v8516
        %v8526 = vpack.c.bf16 %v8517, %v8517
        %v8527 = vpack.c.bf16 %v8518, %v8518
        %v8528 = vld [vmem:[%s393] sm:$0xf]
        %v8529 = vld [vmem:[%s393 + $0x4] sm:$0xf]
        %v8530 = vld [vmem:[%s393 + $0x8] sm:$0xf]
        %v8531 = vld [vmem:[%s393 + $0xc] sm:$0xf]
        %v8532 = vld [vmem:[%s393 + $0x10] sm:$0xf]
        %v8533 = vld [vmem:[%s393 + $0x14] sm:$0xf]
        %v8534 = vld [vmem:[%s393 + $0x18] sm:$0xf]
        %v8535 = vld [vmem:[%s393 + $0x1c] sm:$0xf]
        %v8536 = vld [vmem:[%s393 + $0x20] sm:$0xf]
        %v8537 = vld [vmem:[%s393 + $0x24] sm:$0xf]
        %v8538 = vld [vmem:[%s393 + $0x28] sm:$0xf]
        %v8539 = vld [vmem:[%s393 + $0x2c] sm:$0xf]
        %v8540 = vld [vmem:[%s393 + $0x30] sm:$0xf]
        %v8541 = vld [vmem:[%s393 + $0x34] sm:$0xf]
        %v8542 = vld [vmem:[%s393 + $0x38] sm:$0xf]
        %v8543 = vld [vmem:[%s393 + $0x3c] sm:$0xf]
        %v8544 = vld [vmem:[%s393 + $0x40] sm:$0xf]
        %v8545 = vld [vmem:[%s393 + $0x44] sm:$0xf]
        %v8546 = vld [vmem:[%s393 + $0x48] sm:$0xf]
        %v8547 = vld [vmem:[%s393 + $0x4c] sm:$0xf]
        %v8548 = vld [vmem:[%s393 + $0x50] sm:$0xf]
        %v8549 = vld [vmem:[%s393 + $0x54] sm:$0xf]
        %v8550 = vld [vmem:[%s393 + $0x58] sm:$0xf]
        %v8551 = vld [vmem:[%s393 + $0x5c] sm:$0xf]
        %v8552 = vld [vmem:[%s393 + $0x60] sm:$0xf]
        %v8553 = vld [vmem:[%s393 + $0x64] sm:$0xf]
        %v8554 = vld [vmem:[%s393 + $0x68] sm:$0xf]
        %v8555 = vld [vmem:[%s393 + $0x6c] sm:$0xf]
        %v8556 = vld [vmem:[%s393 + $0x70] sm:$0xf]
        %v8557 = vld [vmem:[%s393 + $0x74] sm:$0xf]
        %v8558 = vld [vmem:[%s393 + $0x78] sm:$0xf]
        %v8559 = vld [vmem:[%s393 + $0x7c] sm:$0xf]
        %v8560 = vld [vmem:[%s393 + $0x80] sm:$0xf]
        %v8561 = vld [vmem:[%s393 + $0x84] sm:$0xf]
        %v8562 = vld [vmem:[%s393 + $0x88] sm:$0xf]
        %v8563 = vld [vmem:[%s393 + $0x8c] sm:$0xf]
        %v8564 = vld [vmem:[%s393 + $0x90] sm:$0xf]
        %v8565 = vld [vmem:[%s393 + $0x94] sm:$0xf]
        %v8566 = vld [vmem:[%s393 + $0x98] sm:$0xf]
        %v8567 = vld [vmem:[%s393 + $0x9c] sm:$0xf]
        %v8568 = vld [vmem:[%s393 + $0xa0] sm:$0xf]
        %v8569 = vld [vmem:[%s393 + $0xa4] sm:$0xf]
        %v8570 = vld [vmem:[%s393 + $0xa8] sm:$0xf]
        %v8571 = vld [vmem:[%s393 + $0xac] sm:$0xf]
        %v8572 = vld [vmem:[%s393 + $0xb0] sm:$0xf]
        %v8573 = vld [vmem:[%s393 + $0xb4] sm:$0xf]
        %v8574 = vld [vmem:[%s393 + $0xb8] sm:$0xf]
        %v8575 = vld [vmem:[%s393 + $0xbc] sm:$0xf]
        %v8576 = vld [vmem:[%s393 + $0xc0] sm:$0xf]
        %v8577 = vld [vmem:[%s393 + $0xc4] sm:$0xf]
        %v8578 = vld [vmem:[%s393 + $0xc8] sm:$0xf]
        %v8579 = vld [vmem:[%s393 + $0xcc] sm:$0xf]
        %v8580 = vld [vmem:[%s393 + $0xd0] sm:$0xf]
        %v8581 = vld [vmem:[%s393 + $0xd4] sm:$0xf]
        %v8582 = vld [vmem:[%s393 + $0xd8] sm:$0xf]
        %v8583 = vld [vmem:[%s393 + $0xdc] sm:$0xf]
        %v8584 = vld [vmem:[%s393 + $0xe0] sm:$0xf]
        %v8585 = vld [vmem:[%s393 + $0xe4] sm:$0xf]
        %v8586 = vld [vmem:[%s393 + $0xe8] sm:$0xf]
        %v8587 = vld [vmem:[%s393 + $0xec] sm:$0xf]
        %v8588 = vld [vmem:[%s393 + $0xf0] sm:$0xf]
        %v8589 = vld [vmem:[%s393 + $0xf4] sm:$0xf]
        %v8590 = vld [vmem:[%s393 + $0xf8] sm:$0xf]
        %v8591 = vld [vmem:[%s393 + $0xfc] sm:$0xf]
        %v8592 = vld [vmem:[%s393 + $0x100] sm:$0xf]
        %v8593 = vld [vmem:[%s393 + $0x104] sm:$0xf]
        %v8594 = vld [vmem:[%s393 + $0x108] sm:$0xf]
        %v8595 = vld [vmem:[%s393 + $0x10c] sm:$0xf]
        %v8596 = vld [vmem:[%s393 + $0x110] sm:$0xf]
        %v8597 = vld [vmem:[%s393 + $0x114] sm:$0xf]
        %v8598 = vld [vmem:[%s393 + $0x118] sm:$0xf]
        %v8599 = vld [vmem:[%s393 + $0x11c] sm:$0xf]
        %v8600 = vld [vmem:[%s393 + $0x120] sm:$0xf]
        %v8601 = vld [vmem:[%s393 + $0x124] sm:$0xf]
        %v8602 = vld [vmem:[%s393 + $0x128] sm:$0xf]
        %v8603 = vld [vmem:[%s393 + $0x12c] sm:$0xf]
        %v8604 = vld [vmem:[%s393 + $0x130] sm:$0xf]
        %v8605 = vld [vmem:[%s393 + $0x134] sm:$0xf]
        %v8606 = vld [vmem:[%s393 + $0x138] sm:$0xf]
        %v8607 = vld [vmem:[%s393 + $0x13c] sm:$0xf]
        %v8608 = vld [vmem:[%s393 + $0x140] sm:$0xf]
        %v8609 = vld [vmem:[%s393 + $0x144] sm:$0xf]
        %v8610 = vld [vmem:[%s393 + $0x148] sm:$0xf]
        %v8611 = vld [vmem:[%s393 + $0x14c] sm:$0xf]
        %v8612 = vld [vmem:[%s393 + $0x150] sm:$0xf]
        %v8613 = vld [vmem:[%s393 + $0x154] sm:$0xf]
        %v8614 = vld [vmem:[%s393 + $0x158] sm:$0xf]
        %v8615 = vld [vmem:[%s393 + $0x15c] sm:$0xf]
        %v8616 = vld [vmem:[%s393 + $0x160] sm:$0xf]
        %v8617 = vld [vmem:[%s393 + $0x164] sm:$0xf]
        %v8618 = vld [vmem:[%s393 + $0x168] sm:$0xf]
        %v8619 = vld [vmem:[%s393 + $0x16c] sm:$0xf]
        %v8620 = vld [vmem:[%s393 + $0x170] sm:$0xf]
        %v8621 = vld [vmem:[%s393 + $0x174] sm:$0xf]
        %v8622 = vld [vmem:[%s393 + $0x178] sm:$0xf]
        %v8623 = vld [vmem:[%s393 + $0x17c] sm:$0xf]
        %v8624 = vld [vmem:[%s393 + $0x180] sm:$0xf]
        %v8625 = vld [vmem:[%s393 + $0x184] sm:$0xf]
        %v8626 = vld [vmem:[%s393 + $0x188] sm:$0xf]
        %v8627 = vld [vmem:[%s393 + $0x18c] sm:$0xf]
        %v8628 = vld [vmem:[%s393 + $0x190] sm:$0xf]
        %v8629 = vld [vmem:[%s393 + $0x194] sm:$0xf]
        %v8630 = vld [vmem:[%s393 + $0x198] sm:$0xf]
        %v8631 = vld [vmem:[%s393 + $0x19c] sm:$0xf]
        %v8632 = vld [vmem:[%s393 + $0x1a0] sm:$0xf]
        %v8633 = vld [vmem:[%s393 + $0x1a4] sm:$0xf]
        %v8634 = vld [vmem:[%s393 + $0x1a8] sm:$0xf]
        %v8635 = vld [vmem:[%s393 + $0x1ac] sm:$0xf]
        %v8636 = vld [vmem:[%s393 + $0x1b0] sm:$0xf]
        %v8637 = vld [vmem:[%s393 + $0x1b4] sm:$0xf]
        %v8638 = vld [vmem:[%s393 + $0x1b8] sm:$0xf]
        %v8639 = vld [vmem:[%s393 + $0x1bc] sm:$0xf]
        %v8640 = vld [vmem:[%s393 + $0x1c0] sm:$0xf]
        %v8641 = vld [vmem:[%s393 + $0x1c4] sm:$0xf]
        %v8642 = vld [vmem:[%s393 + $0x1c8] sm:$0xf]
        %v8643 = vld [vmem:[%s393 + $0x1cc] sm:$0xf]
        %v8644 = vld [vmem:[%s393 + $0x1d0] sm:$0xf]
        %v8645 = vld [vmem:[%s393 + $0x1d4] sm:$0xf]
        %v8646 = vld [vmem:[%s393 + $0x1d8] sm:$0xf]
        %v8647 = vld [vmem:[%s393 + $0x1dc] sm:$0xf]
        %v8648 = vld [vmem:[%s393 + $0x1e0] sm:$0xf]
        %v8649 = vld [vmem:[%s393 + $0x1e4] sm:$0xf]
        %v8650 = vld [vmem:[%s393 + $0x1e8] sm:$0xf]
        %v8651 = vld [vmem:[%s393 + $0x1ec] sm:$0xf]
        %v8652 = vld [vmem:[%s393 + $0x1f0] sm:$0xf]
        %v8653 = vld [vmem:[%s393 + $0x1f4] sm:$0xf]
        %v8654 = vld [vmem:[%s393 + $0x1f8] sm:$0xf]
        %v8655 = vld [vmem:[%s393 + $0x1fc] sm:$0xf]
        %v8784 = vunpack.c.l.b16 %v8528
        %v8785 = vunpack.c.l.b16 %v8529
        %v8786 = vunpack.c.l.b16 %v8530
        %v8787 = vunpack.c.l.b16 %v8531
        %v8788 = vunpack.c.l.b16 %v8532
        %v8789 = vunpack.c.l.b16 %v8533
        %v8790 = vunpack.c.l.b16 %v8534
        %v8791 = vunpack.c.l.b16 %v8535
        %v8792 = vunpack.c.l.b16 %v8536
        %v8793 = vunpack.c.l.b16 %v8537
        %v8794 = vunpack.c.l.b16 %v8538
        %v8795 = vunpack.c.l.b16 %v8539
        %v8796 = vunpack.c.l.b16 %v8540
        %v8797 = vunpack.c.l.b16 %v8541
        %v8798 = vunpack.c.l.b16 %v8542
        %v8799 = vunpack.c.l.b16 %v8543
        %v8800 = vunpack.c.l.b16 %v8544
        %v8801 = vunpack.c.l.b16 %v8545
        %v8802 = vunpack.c.l.b16 %v8546
        %v8803 = vunpack.c.l.b16 %v8547
        %v8804 = vunpack.c.l.b16 %v8548
        %v8805 = vunpack.c.l.b16 %v8549
        %v8806 = vunpack.c.l.b16 %v8550
        %v8807 = vunpack.c.l.b16 %v8551
        %v8808 = vunpack.c.l.b16 %v8552
        %v8809 = vunpack.c.l.b16 %v8553
        %v8810 = vunpack.c.l.b16 %v8554
        %v8811 = vunpack.c.l.b16 %v8555
        %v8812 = vunpack.c.l.b16 %v8556
        %v8813 = vunpack.c.l.b16 %v8557
        %v8814 = vunpack.c.l.b16 %v8558
        %v8815 = vunpack.c.l.b16 %v8559
        %v8816 = vunpack.c.l.b16 %v8560
        %v8817 = vunpack.c.l.b16 %v8561
        %v8818 = vunpack.c.l.b16 %v8562
        %v8819 = vunpack.c.l.b16 %v8563
        %v8820 = vunpack.c.l.b16 %v8564
        %v8821 = vunpack.c.l.b16 %v8565
        %v8822 = vunpack.c.l.b16 %v8566
        %v8823 = vunpack.c.l.b16 %v8567
        %v8824 = vunpack.c.l.b16 %v8568
        %v8825 = vunpack.c.l.b16 %v8569
        %v8826 = vunpack.c.l.b16 %v8570
        %v8827 = vunpack.c.l.b16 %v8571
        %v8828 = vunpack.c.l.b16 %v8572
        %v8829 = vunpack.c.l.b16 %v8573
        %v8830 = vunpack.c.l.b16 %v8574
        %v8831 = vunpack.c.l.b16 %v8575
        %v8832 = vunpack.c.l.b16 %v8576
        %v8833 = vunpack.c.l.b16 %v8577
        %v8834 = vunpack.c.l.b16 %v8578
        %v8835 = vunpack.c.l.b16 %v8579
        %v8836 = vunpack.c.l.b16 %v8580
        %v8837 = vunpack.c.l.b16 %v8581
        %v8838 = vunpack.c.l.b16 %v8582
        %v8839 = vunpack.c.l.b16 %v8583
        %v8840 = vunpack.c.l.b16 %v8584
        %v8841 = vunpack.c.l.b16 %v8585
        %v8842 = vunpack.c.l.b16 %v8586
        %v8843 = vunpack.c.l.b16 %v8587
        %v8844 = vunpack.c.l.b16 %v8588
        %v8845 = vunpack.c.l.b16 %v8589
        %v8846 = vunpack.c.l.b16 %v8590
        %v8847 = vunpack.c.l.b16 %v8591
        %v8848 = vunpack.c.l.b16 %v8592
        %v8849 = vunpack.c.l.b16 %v8593
        %v8850 = vunpack.c.l.b16 %v8594
        %v8851 = vunpack.c.l.b16 %v8595
        %v8852 = vunpack.c.l.b16 %v8596
        %v8853 = vunpack.c.l.b16 %v8597
        %v8854 = vunpack.c.l.b16 %v8598
        %v8855 = vunpack.c.l.b16 %v8599
        %v8856 = vunpack.c.l.b16 %v8600
        %v8857 = vunpack.c.l.b16 %v8601
        %v8858 = vunpack.c.l.b16 %v8602
        %v8859 = vunpack.c.l.b16 %v8603
        %v8860 = vunpack.c.l.b16 %v8604
        %v8861 = vunpack.c.l.b16 %v8605
        %v8862 = vunpack.c.l.b16 %v8606
        %v8863 = vunpack.c.l.b16 %v8607
        %v8864 = vunpack.c.l.b16 %v8608
        %v8865 = vunpack.c.l.b16 %v8609
        %v8866 = vunpack.c.l.b16 %v8610
        %v8867 = vunpack.c.l.b16 %v8611
        %v8868 = vunpack.c.l.b16 %v8612
        %v8869 = vunpack.c.l.b16 %v8613
        %v8870 = vunpack.c.l.b16 %v8614
        %v8871 = vunpack.c.l.b16 %v8615
        %v8872 = vunpack.c.l.b16 %v8616
        %v8873 = vunpack.c.l.b16 %v8617
        %v8874 = vunpack.c.l.b16 %v8618
        %v8875 = vunpack.c.l.b16 %v8619
        %v8876 = vunpack.c.l.b16 %v8620
        %v8877 = vunpack.c.l.b16 %v8621
        %v8878 = vunpack.c.l.b16 %v8622
        %v8879 = vunpack.c.l.b16 %v8623
        %v8880 = vunpack.c.l.b16 %v8624
        %v8881 = vunpack.c.l.b16 %v8625
        %v8882 = vunpack.c.l.b16 %v8626
        %v8883 = vunpack.c.l.b16 %v8627
        %v8884 = vunpack.c.l.b16 %v8628
        %v8885 = vunpack.c.l.b16 %v8629
        %v8886 = vunpack.c.l.b16 %v8630
        %v8887 = vunpack.c.l.b16 %v8631
        %v8888 = vunpack.c.l.b16 %v8632
        %v8889 = vunpack.c.l.b16 %v8633
        %v8890 = vunpack.c.l.b16 %v8634
        %v8891 = vunpack.c.l.b16 %v8635
        %v8892 = vunpack.c.l.b16 %v8636
        %v8893 = vunpack.c.l.b16 %v8637
        %v8894 = vunpack.c.l.b16 %v8638
        %v8895 = vunpack.c.l.b16 %v8639
        %v8896 = vunpack.c.l.b16 %v8640
        %v8897 = vunpack.c.l.b16 %v8641
        %v8898 = vunpack.c.l.b16 %v8642
        %v8899 = vunpack.c.l.b16 %v8643
        %v8900 = vunpack.c.l.b16 %v8644
        %v8901 = vunpack.c.l.b16 %v8645
        %v8902 = vunpack.c.l.b16 %v8646
        %v8903 = vunpack.c.l.b16 %v8647
        %v8904 = vunpack.c.l.b16 %v8648
        %v8905 = vunpack.c.l.b16 %v8649
        %v8906 = vunpack.c.l.b16 %v8650
        %v8907 = vunpack.c.l.b16 %v8651
        %v8908 = vunpack.c.l.b16 %v8652
        %v8909 = vunpack.c.l.b16 %v8653
        %v8910 = vunpack.c.l.b16 %v8654
        %v8911 = vunpack.c.l.b16 %v8655
        %v8912 = vpack.c.b16 %v8785, %v8784
        %v8913 = vpack.c.b16 %v8787, %v8786
        %v8914 = vpack.c.b16 %v8789, %v8788
        %v8915 = vpack.c.b16 %v8791, %v8790
        %v8916 = vpack.c.b16 %v8793, %v8792
        %v8917 = vpack.c.b16 %v8795, %v8794
        %v8918 = vpack.c.b16 %v8797, %v8796
        %v8919 = vpack.c.b16 %v8799, %v8798
        %v8920 = vpack.c.b16 %v8801, %v8800
        %v8921 = vpack.c.b16 %v8803, %v8802
        %v8922 = vpack.c.b16 %v8805, %v8804
        %v8923 = vpack.c.b16 %v8807, %v8806
        %v8924 = vpack.c.b16 %v8809, %v8808
        %v8925 = vpack.c.b16 %v8811, %v8810
        %v8926 = vpack.c.b16 %v8813, %v8812
        %v8927 = vpack.c.b16 %v8815, %v8814
        %v8928 = vpack.c.b16 %v8817, %v8816
        %v8929 = vpack.c.b16 %v8819, %v8818
        %v8930 = vpack.c.b16 %v8821, %v8820
        %v8931 = vpack.c.b16 %v8823, %v8822
        %v8932 = vpack.c.b16 %v8825, %v8824
        %v8933 = vpack.c.b16 %v8827, %v8826
        %v8934 = vpack.c.b16 %v8829, %v8828
        %v8935 = vpack.c.b16 %v8831, %v8830
        %v8936 = vpack.c.b16 %v8833, %v8832
        %v8937 = vpack.c.b16 %v8835, %v8834
        %v8938 = vpack.c.b16 %v8837, %v8836
        %v8939 = vpack.c.b16 %v8839, %v8838
        %v8940 = vpack.c.b16 %v8841, %v8840
        %v8941 = vpack.c.b16 %v8843, %v8842
        %v8942 = vpack.c.b16 %v8845, %v8844
        %v8943 = vpack.c.b16 %v8847, %v8846
        %v8944 = vpack.c.b16 %v8849, %v8848
        %v8945 = vpack.c.b16 %v8851, %v8850
        %v8946 = vpack.c.b16 %v8853, %v8852
        %v8947 = vpack.c.b16 %v8855, %v8854
        %v8948 = vpack.c.b16 %v8857, %v8856
        %v8949 = vpack.c.b16 %v8859, %v8858
        %v8950 = vpack.c.b16 %v8861, %v8860
        %v8951 = vpack.c.b16 %v8863, %v8862
        %v8952 = vpack.c.b16 %v8865, %v8864
        %v8953 = vpack.c.b16 %v8867, %v8866
        %v8954 = vpack.c.b16 %v8869, %v8868
        %v8955 = vpack.c.b16 %v8871, %v8870
        %v8956 = vpack.c.b16 %v8873, %v8872
        %v8957 = vpack.c.b16 %v8875, %v8874
        %v8958 = vpack.c.b16 %v8877, %v8876
        %v8959 = vpack.c.b16 %v8879, %v8878
        %v8960 = vpack.c.b16 %v8881, %v8880
        %v8961 = vpack.c.b16 %v8883, %v8882
        %v8962 = vpack.c.b16 %v8885, %v8884
        %v8963 = vpack.c.b16 %v8887, %v8886
        %v8964 = vpack.c.b16 %v8889, %v8888
        %v8965 = vpack.c.b16 %v8891, %v8890
        %v8966 = vpack.c.b16 %v8893, %v8892
        %v8967 = vpack.c.b16 %v8895, %v8894
        %v8968 = vpack.c.b16 %v8897, %v8896
        %v8969 = vpack.c.b16 %v8899, %v8898
        %v8970 = vpack.c.b16 %v8901, %v8900
        %v8971 = vpack.c.b16 %v8903, %v8902
        %v8972 = vpack.c.b16 %v8905, %v8904
        %v8973 = vpack.c.b16 %v8907, %v8906
        %v8974 = vpack.c.b16 %v8909, %v8908
        %v8975 = vpack.c.b16 %v8911, %v8910
        %9040 = vmatprep.subr.bf16.mxu0 0
        %9041 = vmatpush1.bf16.msra.mxu0 %v8912
        %9042 = vmatprep.subr.bf16.mxu0 0
        %9043 = vmatpush1.bf16.msra.mxu0 %v8913
        %9044 = vmatprep.subr.bf16.mxu0 0
        %9045 = vmatpush1.bf16.msra.mxu0 %v8914
        %9046 = vmatprep.subr.bf16.mxu0 0
        %9047 = vmatpush1.bf16.msra.mxu0 %v8915
        %9048 = vmatprep.subr.bf16.mxu0 0
        %9049 = vmatpush1.bf16.msra.mxu0 %v8916
        %9050 = vmatprep.subr.bf16.mxu0 0
        %9051 = vmatpush1.bf16.msra.mxu0 %v8917
        %9052 = vmatprep.subr.bf16.mxu0 0
        %9053 = vmatpush1.bf16.msra.mxu0 %v8918
        %9054 = vmatprep.subr.bf16.mxu0 0
        %9055 = vmatpush1.bf16.msra.mxu0 %v8919
        %9056 = vmatprep.subr.bf16.mxu0 0
        %9057 = vmatpush1.bf16.msra.mxu0 %v8920
        %9058 = vmatprep.subr.bf16.mxu0 0
        %9059 = vmatpush1.bf16.msra.mxu0 %v8921
        %9060 = vmatprep.subr.bf16.mxu0 0
        %9061 = vmatpush1.bf16.msra.mxu0 %v8922
        %9062 = vmatprep.subr.bf16.mxu0 0
        %9063 = vmatpush1.bf16.msra.mxu0 %v8923
        %9064 = vmatprep.subr.bf16.mxu0 0
        %9065 = vmatpush1.bf16.msra.mxu0 %v8924
        %9066 = vmatprep.subr.bf16.mxu0 0
        %9067 = vmatpush1.bf16.msra.mxu0 %v8925
        %9068 = vmatprep.subr.bf16.mxu0 0
        %9069 = vmatpush1.bf16.msra.mxu0 %v8926
        %9070 = vmatprep.subr.bf16.mxu0 0
        %9071 = vmatpush1.bf16.msra.mxu0 %v8927
        %9072 = vmatprep.mubr.bf16.mxu0 %v8521
        %9073 = vmatmul.mubr.bf16.gmra.mrb[0].mxu0 %v8520
        %v9074 = vpop.f32.mrb[0].mxu0
        %v9075 = vadd.f32 0.0, %v9074
        %v9076 = vpop.f32.mrb[0].mxu0
        %v9077 = vpop.f32.mrb[0].mxu0
        %v9078 = vpop.f32.mrb[0].mxu0
        %9079 = vdwg.mxu0
        %9080 = vmatprep.subr.bf16.mxu0 0
        %9081 = vmatpush1.bf16.msra.mxu0 %v8928
        %9082 = vmatprep.subr.bf16.mxu0 0
        %9083 = vmatpush1.bf16.msra.mxu0 %v8929
        %9084 = vmatprep.subr.bf16.mxu0 0
        %9085 = vmatpush1.bf16.msra.mxu0 %v8930
        %9086 = vmatprep.subr.bf16.mxu0 0
        %9087 = vmatpush1.bf16.msra.mxu0 %v8931
        %9088 = vmatprep.subr.bf16.mxu0 0
        %9089 = vmatpush1.bf16.msra.mxu0 %v8932
        %9090 = vmatprep.subr.bf16.mxu0 0
        %9091 = vmatpush1.bf16.msra.mxu0 %v8933
        %9092 = vmatprep.subr.bf16.mxu0 0
        %9093 = vmatpush1.bf16.msra.mxu0 %v8934
        %9094 = vmatprep.subr.bf16.mxu0 0
        %9095 = vmatpush1.bf16.msra.mxu0 %v8935
        %9096 = vmatprep.subr.bf16.mxu0 0
        %9097 = vmatpush1.bf16.msra.mxu0 %v8936
        %9098 = vmatprep.subr.bf16.mxu0 0
        %9099 = vmatpush1.bf16.msra.mxu0 %v8937
        %9100 = vmatprep.subr.bf16.mxu0 0
        %9101 = vmatpush1.bf16.msra.mxu0 %v8938
        %9102 = vmatprep.subr.bf16.mxu0 0
        %9103 = vmatpush1.bf16.msra.mxu0 %v8939
        %9104 = vmatprep.subr.bf16.mxu0 0
        %9105 = vmatpush1.bf16.msra.mxu0 %v8940
        %9106 = vmatprep.subr.bf16.mxu0 0
        %9107 = vmatpush1.bf16.msra.mxu0 %v8941
        %9108 = vmatprep.subr.bf16.mxu0 0
        %9109 = vmatpush1.bf16.msra.mxu0 %v8942
        %9110 = vmatprep.subr.bf16.mxu0 0
        %9111 = vmatpush1.bf16.msra.mxu0 %v8943
        %9112 = vmatprep.mubr.bf16.mxu0 %v8523
        %9113 = vmatmul.mubr.bf16.gmra.mrb[0].mxu0 %v8522
        %v9114 = vpop.f32.mrb[0].mxu0
        %v9115 = vadd.f32 %v9075, %v9114
        %v9116 = vpop.f32.mrb[0].mxu0
        %v9117 = vpop.f32.mrb[0].mxu0
        %v9118 = vpop.f32.mrb[0].mxu0
        %9119 = vdwg.mxu0
        %9120 = vmatprep.subr.bf16.mxu0 0
        %9121 = vmatpush1.bf16.msra.mxu0 %v8944
        %9122 = vmatprep.subr.bf16.mxu0 0
        %9123 = vmatpush1.bf16.msra.mxu0 %v8945
        %9124 = vmatprep.subr.bf16.mxu0 0
        %9125 = vmatpush1.bf16.msra.mxu0 %v8946
        %9126 = vmatprep.subr.bf16.mxu0 0
        %9127 = vmatpush1.bf16.msra.mxu0 %v8947
        %9128 = vmatprep.subr.bf16.mxu0 0
        %9129 = vmatpush1.bf16.msra.mxu0 %v8948
        %9130 = vmatprep.subr.bf16.mxu0 0
        %9131 = vmatpush1.bf16.msra.mxu0 %v8949
        %9132 = vmatprep.subr.bf16.mxu0 0
        %9133 = vmatpush1.bf16.msra.mxu0 %v8950
        %9134 = vmatprep.subr.bf16.mxu0 0
        %9135 = vmatpush1.bf16.msra.mxu0 %v8951
        %9136 = vmatprep.subr.bf16.mxu0 0
        %9137 = vmatpush1.bf16.msra.mxu0 %v8952
        %9138 = vmatprep.subr.bf16.mxu0 0
        %9139 = vmatpush1.bf16.msra.mxu0 %v8953
        %9140 = vmatprep.subr.bf16.mxu0 0
        %9141 = vmatpush1.bf16.msra.mxu0 %v8954
        %9142 = vmatprep.subr.bf16.mxu0 0
        %9143 = vmatpush1.bf16.msra.mxu0 %v8955
        %9144 = vmatprep.subr.bf16.mxu0 0
        %9145 = vmatpush1.bf16.msra.mxu0 %v8956
        %9146 = vmatprep.subr.bf16.mxu0 0
        %9147 = vmatpush1.bf16.msra.mxu0 %v8957
        %9148 = vmatprep.subr.bf16.mxu0 0
        %9149 = vmatpush1.bf16.msra.mxu0 %v8958
        %9150 = vmatprep.subr.bf16.mxu0 0
        %9151 = vmatpush1.bf16.msra.mxu0 %v8959
        %9152 = vmatprep.mubr.bf16.mxu0 %v8525
        %9153 = vmatmul.mubr.bf16.gmra.mrb[0].mxu0 %v8524
        %v9154 = vpop.f32.mrb[0].mxu0
        %v9155 = vadd.f32 %v9115, %v9154
        %v9156 = vpop.f32.mrb[0].mxu0
        %v9157 = vpop.f32.mrb[0].mxu0
        %v9158 = vpop.f32.mrb[0].mxu0
        %9159 = vdwg.mxu0
        %9160 = vmatprep.subr.bf16.mxu0 0
        %9161 = vmatpush1.bf16.msra.mxu0 %v8960
        %9162 = vmatprep.subr.bf16.mxu0 0
        %9163 = vmatpush1.bf16.msra.mxu0 %v8961
        %9164 = vmatprep.subr.bf16.mxu0 0
        %9165 = vmatpush1.bf16.msra.mxu0 %v8962
        %9166 = vmatprep.subr.bf16.mxu0 0
        %9167 = vmatpush1.bf16.msra.mxu0 %v8963
        %9168 = vmatprep.subr.bf16.mxu0 0
        %9169 = vmatpush1.bf16.msra.mxu0 %v8964
        %9170 = vmatprep.subr.bf16.mxu0 0
        %9171 = vmatpush1.bf16.msra.mxu0 %v8965
        %9172 = vmatprep.subr.bf16.mxu0 0
        %9173 = vmatpush1.bf16.msra.mxu0 %v8966
        %9174 = vmatprep.subr.bf16.mxu0 0
        %9175 = vmatpush1.bf16.msra.mxu0 %v8967
        %9176 = vmatprep.subr.bf16.mxu0 0
        %9177 = vmatpush1.bf16.msra.mxu0 %v8968
        %9178 = vmatprep.subr.bf16.mxu0 0
        %9179 = vmatpush1.bf16.msra.mxu0 %v8969
        %9180 = vmatprep.subr.bf16.mxu0 0
        %9181 = vmatpush1.bf16.msra.mxu0 %v8970
        %9182 = vmatprep.subr.bf16.mxu0 0
        %9183 = vmatpush1.bf16.msra.mxu0 %v8971
        %9184 = vmatprep.subr.bf16.mxu0 0
        %9185 = vmatpush1.bf16.msra.mxu0 %v8972
        %9186 = vmatprep.subr.bf16.mxu0 0
        %9187 = vmatpush1.bf16.msra.mxu0 %v8973
        %9188 = vmatprep.subr.bf16.mxu0 0
        %9189 = vmatpush1.bf16.msra.mxu0 %v8974
        %9190 = vmatprep.subr.bf16.mxu0 0
        %9191 = vmatpush1.bf16.msra.mxu0 %v8975
        %9192 = vmatprep.mubr.bf16.mxu0 %v8527
        %9193 = vmatmul.mubr.bf16.gmra.mrb[0].mxu0 %v8526
        %v9194 = vpop.f32.mrb[0].mxu0
        %v9195 = vadd.f32 %v9155, %v9194
        %v9196 = vpop.f32.mrb[0].mxu0
        %v9197 = vpop.f32.mrb[0].mxu0
        %v9198 = vpop.f32.mrb[0].mxu0
        %9199 = vdwg.mxu0
        %v9200 = vadd.f32 %v8519, %v9195
        %vm9201 = vcmask 72704
        %9202 = vst.msk [vmem:[#allocation3] sm:$0xff] %vm9201, %v9200
        // Predicated region
        $region69: #{tpu_custom_call.1} parent=43 // pred_check
          %p9203 = pneg %p397
        $region70: #{tpu_custom_call.1} parent=43 // pred_check_branch
          %9205 = sbr.rel (%p9203) target = $region72
        $region71: #{tpu_custom_call.1} parent=43 // pred_region
          %v9206 = vld [vmem:[#allocation3] sm:$0xff]
          %9207 = vst.msk [vmem:[%s383] sm:$0xff] %vm9201, %v9206
        $region72: #{tpu_custom_call.1} parent=43 // pred_fallthru
          _
        %s9208 = sand.u32 %s192, 1
        %s9209 = scalar_lea.sflag [#allocation6], %s9208
        %s9210 = sand.u32 %s192, 1
        %s9211 = smul.addr %s9210, 8
        %s9212 = scalar_lea.vmem [#allocation13], %s9211
        // Predicated region
        $region73: #{tpu_custom_call.1} parent=43 // pred_check
          %p9213 = pneg %p202
        $region74: #{tpu_custom_call.1} parent=43 // pred_check_branch
          %9215 = sbr.rel (%p9213) target = $region76
        $region75: #{tpu_custom_call.1} parent=43 // pred_region
          %s9217 = ssub.s32 128, 128
          %9218 = vsyncadd %s9209, %s9217
          %s9219 = smul.addr %s29, 128
          %s9220 = scalar_lea.hbm %s6, %s9219
          %s9222 = sshll.u32 %s9212, 4
          %s9223 = int_to_ptr.vmem [resolvable:$true] %s9222
          %9225 = dma.vmem_to_hbm [thread:$0]  %s9223, 128, %s9220, %s9209
        $region76: #{tpu_custom_call.1} parent=43 // pred_fallthru
          _
      $region44: #{tpu_custom_call.1} parent=5 // pred_fallthru
        _
      %p9226 = scmp.le.s32.totalorder 2, %s20
      // Predicated region
      $region77: #{tpu_custom_call.1} parent=5 // pred_check
        %p9227 = pneg %p9226
      $region78: #{tpu_custom_call.1} parent=5 // pred_check_branch
        %9229 = sbr.rel (%p9227) target = $region80
      $region79: #{tpu_custom_call.1} parent=5 // pred_region
        %s9230 = ssub.s32 %s20, 2
        // Predicated region
        $region81: #{tpu_custom_call.1} parent=79 // pred_check
          %p9231 = pneg %p208
        $region82: #{tpu_custom_call.1} parent=79 // pred_check_branch
          %9233 = sbr.rel (%p9231) target = $region84
        $region83: #{tpu_custom_call.1} parent=79 // pred_region
          %s9234 = sand.u32 %s193, 1
          %s9235 = scalar_lea.sflag [#allocation6], %s9234
          %s9236 = sand.u32 %s193, 1
          %s9237 = smul.addr %s9236, 8
          %s9238 = scalar_lea.vmem [#allocation13], %s9237
          %9239 = dma.done %s9235, 128
        $region84: #{tpu_custom_call.1} parent=79 // pred_fallthru
          _
      $region80: #{tpu_custom_call.1} parent=5 // pred_fallthru
        _
    $region6: #{tpu_custom_call.1} parent=1 // loop_footer
      %s24 = sadd.s32 1, %s20
    $region7: #{tpu_custom_call.1} parent=1 // loop_footer_branch
      %19 = sbr.rel target = $region3
    $region8: #{tpu_custom_call.1} parent=1 // loop_exit
      _
    %9240 = vsyncpa [#allocation5], 1
    %s9241 = scalar_lea.sflag [#allocation5], 1
    %9242 = vsyncpa %s9241, 1
    %9243 = vsyncpa [#allocation8], 1
    %9244 = vsyncpa [#allocation11], 1
    %s9245 = scalar_lea.sflag [#allocation11], 1
    %9246 = vsyncpa %s9245, 1
    %9247 = vsyncpa [#allocation6], 1
    %s9248 = scalar_lea.sflag [#allocation6], 1
    %9249 = vsyncpa %s9248, 1

</llo_original>
